<compile_context>
chip_gen: v7x
topology: tpu7x:2x2x1
jax: 0.10.0
libtpu: 0.0.40
codegen_flags: <defaults>
</compile_context>

<pallas_src>
import jax
import jax.numpy as jnp
from jax.experimental import pallas as pl
from jax.experimental.pallas import tpu as pltpu


# ------------------------------- Pallas kernels ------------------------------


def stage1_kernel(up_ref, down_ref, wup_ref, bup_ref, w1_ref, b1_ref,
                  y_ref, stats_ref, xp_ref):
    """Fused ConvTranspose2d(2,2,s=2) + concat + pad + Conv2d(3x3) + bias.

    up_ref   : (1, H, W, Cin_up)       one image of the low-res input
    down_ref : (1, 2H, 2W, Cdown)      skip connection
    wup_ref  : (Cin_up, 4*Cup)         transposed-conv weight, cols = (di, dj, co)
    bup_ref  : (1, 4*Cup)              transposed-conv bias tiled 4x
    w1_ref   : (9*Ccat, Cout)          conv1 weight in im2col layout (ky, kx, cin)
    b1_ref   : (1, Cout)
    y_ref    : (1, 2H, 2W, Cout)       pre-BN conv1 output
    stats_ref: (1, 2, Cout)            per-image [sum; sumsq] for BatchNorm
    xp_ref   : (2H+2, 2W+2, Ccat)      VMEM scratch: padded concat input
    """
    _, H, W, Cin_up = up_ref.shape
    _, H2, W2, Cdown = down_ref.shape
    Cup = bup_ref.shape[-1] // 4
    Ccat = xp_ref.shape[-1]
    Cout = y_ref.shape[-1]
    M2 = H2 * W2

    # Zero the padded scratch every step (border must be 0; scratch is reused
    # across grid iterations and across megacore cores).
    xp_ref[...] = jnp.zeros(xp_ref.shape, xp_ref.dtype)

    # Skip connection occupies channels [Cup:Ccat] of the concatenated input.
    xp_ref[1:1 + H2, 1:1 + W2, Cup:Ccat] = down_ref[...].reshape(H2, W2, Cdown)

    # ConvTranspose2d(k=2, s=2): one matmul Cin_up -> 4*Cup per pixel, then
    # interleave the 4 kernel positions spatially, entirely inside VMEM.
    up_flat = up_ref[...].reshape(H * W, Cin_up)
    u4 = jnp.dot(up_flat, wup_ref[...],
                 preferred_element_type=jnp.float32) + bup_ref[...]
    rows = []
    for di in range(2):
        cols = []
        for dj in range(2):
            c0 = (di * 2 + dj) * Cup
            cols.append(u4[:, c0:c0 + Cup].reshape(H, W, 1, Cup))
        # (H, W, 2, Cup) -> (H, 1, 2W, Cup): even/odd output columns interleaved
        rows.append(jnp.concatenate(cols, axis=2).reshape(H, 1, W2, Cup))
    # (H, 2, 2W, Cup) -> (2H, 2W, Cup): even/odd output rows interleaved
    ups = jnp.concatenate(rows, axis=1).reshape(H2, W2, Cup)
    xp_ref[1:1 + H2, 1:1 + W2, 0:Cup] = ups

    # Conv2d(3x3, pad=1): im2col slab -> single fat-K matmul on the MXU.
    taps = []
    for ky in range(3):
        for kx in range(3):
            taps.append(xp_ref[ky:ky + H2, kx:kx + W2, :].reshape(M2, Ccat))
    patches = jnp.concatenate(taps, axis=1)                      # (M2, 9*Ccat)
    acc = jnp.dot(patches, w1_ref[...],
                  preferred_element_type=jnp.float32) + b1_ref[...]

    # Per-image BatchNorm partials via a ones-vector MXU matmul (keeps the
    # reduction off the VPU/XLU path and keeps the N grid axis parallel).
    ones = jnp.ones((1, M2), jnp.float32)
    s1 = jnp.dot(ones, acc, preferred_element_type=jnp.float32)
    s2 = jnp.dot(ones, acc * acc, preferred_element_type=jnp.float32)
    stats_ref[...] = jnp.concatenate([s1, s2], axis=0).reshape(1, 2, Cout)

    y_ref[...] = acc.reshape(1, H2, W2, Cout)


def stage2_kernel(x_ref, scale_ref, shift_ref, w_ref, b_ref,
                  y_ref, stats_ref, xp_ref):
    """Fused BN1(scale/shift) + ReLU + pad + Conv2d(3x3) + bias (pre-BN output)."""
    _, H2, W2, Cin = x_ref.shape
    Cout = y_ref.shape[-1]
    M2 = H2 * W2

    a = jnp.maximum(x_ref[...].reshape(M2, Cin) * scale_ref[...]
                    + shift_ref[...], 0.0)

    xp_ref[...] = jnp.zeros(xp_ref.shape, xp_ref.dtype)
    xp_ref[1:1 + H2, 1:1 + W2, :] = a.reshape(H2, W2, Cin)

    taps = []
    for ky in range(3):
        for kx in range(3):
            taps.append(xp_ref[ky:ky + H2, kx:kx + W2, :].reshape(M2, Cin))
    patches = jnp.concatenate(taps, axis=1)                      # (M2, 9*Cin)
    acc = jnp.dot(patches, w_ref[...],
                  preferred_element_type=jnp.float32) + b_ref[...]

    ones = jnp.ones((1, M2), jnp.float32)
    s1 = jnp.dot(ones, acc, preferred_element_type=jnp.float32)
    s2 = jnp.dot(ones, acc * acc, preferred_element_type=jnp.float32)
    stats_ref[...] = jnp.concatenate([s1, s2], axis=0).reshape(1, 2, Cout)

    y_ref[...] = acc.reshape(1, H2, W2, Cout)


def bn_relu_kernel(x_ref, scale_ref, shift_ref, o_ref):
    """Elementwise BN2(scale/shift) + ReLU."""
    _, H2, W2, C = x_ref.shape
    a = jnp.maximum(x_ref[...].reshape(H2 * W2, C) * scale_ref[...]
                    + shift_ref[...], 0.0)
    o_ref[...] = a.reshape(1, H2, W2, C)


# ------------------------------ wrapper helpers -------------------------------


def _compiler_params():
    # batch axis is fully parallel (per-image BN partials, scratch fully
    # rewritten each step) -> v7x can split it across its 2 TensorCores.
    # vmem limit kept below v7x's 64 MiB physical VMEM.
    return pltpu.CompilerParams(
        dimension_semantics=("parallel",),
        vmem_limit_bytes=48 * 1024 * 1024,
    )


def _full_spec(shape):
    """Whole-array block, same every grid step (weights / small vectors)."""
    nd = len(shape)
    return pl.BlockSpec(shape, lambda n: (0,) * nd)


def _bn_affine(stats, gamma, beta, m_total, eps=1e-5):
    """Reduce per-image (sum, sumsq) partials -> BN scale/shift vectors."""
    s = jnp.sum(stats[:, 0, :], axis=0)
    sq = jnp.sum(stats[:, 1, :], axis=0)
    mean = s / m_total
    var = jnp.maximum(sq / m_total - mean * mean, 0.0)
    scale = gamma * jax.lax.rsqrt(var + eps)
    shift = beta - mean * scale
    return scale.reshape(1, -1), shift.reshape(1, -1)


def prepare_params(params):
    """One-time weight preprocessing (hoisted out of the forward path)."""
    w_up, b_up = params["up_w"], params["up_b"]        # torch ConvTranspose2d layout
    cin_up, cup = w_up.shape[0], w_up.shape[1]
    wup4 = jnp.transpose(w_up, (0, 2, 3, 1)).reshape(cin_up, 4 * cup)
    bup4 = jnp.tile(b_up, 4).reshape(1, 4 * cup)

    def prep_conv(w, b, g, bt):                        # torch Conv2d layout (O,I,3,3)
        cout, cin = w.shape[0], w.shape[1]
        w_im2col = jnp.transpose(w, (2, 3, 1, 0)).reshape(9 * cin, cout)
        return (w_im2col, b.reshape(1, cout), g, bt)

    return {"wup4": wup4, "bup4": bup4,
            "cb1": prep_conv(*params["cb1"]),
            "cb2": prep_conv(*params["cb2"])}


def up_block_forward(up_x_nchw, down_x_nchw, prep):
    """Full UpBlock forward.  Inputs/outputs in NCHW (PyTorch convention)."""
    up = jnp.transpose(up_x_nchw, (0, 2, 3, 1))        # -> NHWC
    down = jnp.transpose(down_x_nchw, (0, 2, 3, 1))    # -> NHWC
    N, H, W, Cin_up = up.shape
    H2, W2 = 2 * H, 2 * W
    Cdown = down.shape[-1]

    wup4, bup4 = prep["wup4"], prep["bup4"]
    Cup = bup4.shape[-1] // 4
    Ccat = Cup + Cdown
    w1, b1, g1, bt1 = prep["cb1"]
    w2, b2, g2, bt2 = prep["cb2"]
    C1, C2 = w1.shape[-1], w2.shape[-1]
    M_total = N * H2 * W2
    cp = _compiler_params()

    # ---- stage 1: upsample + concat + pad + conv1 (pre-BN) -------------------
    y1, st1 = pl.pallas_call(
        stage1_kernel,
        grid=(N,),
        in_specs=[
            pl.BlockSpec((1, H, W, Cin_up), lambda n: (n, 0, 0, 0)),
            pl.BlockSpec((1, H2, W2, Cdown), lambda n: (n, 0, 0, 0)),
            _full_spec(wup4.shape),
            _full_spec(bup4.shape),
            _full_spec(w1.shape),
            _full_spec(b1.shape),
        ],
        out_specs=(
            pl.BlockSpec((1, H2, W2, C1), lambda n: (n, 0, 0, 0)),
            pl.BlockSpec((1, 2, C1), lambda n: (n, 0, 0)),
        ),
        out_shape=(jax.ShapeDtypeStruct((N, H2, W2, C1), jnp.float32),
                   jax.ShapeDtypeStruct((N, 2, C1), jnp.float32)),
        scratch_shapes=[pltpu.VMEM((H2 + 2, W2 + 2, Ccat), jnp.float32)],
        compiler_params=cp,
    )(up, down, wup4, bup4, w1, b1)

    scale1, shift1 = _bn_affine(st1, g1, bt1, M_total)

    # ---- stage 2: BN1 + ReLU + pad + conv2 (pre-BN) --------------------------
    y2, st2 = pl.pallas_call(
        stage2_kernel,
        grid=(N,),
        in_specs=[
            pl.BlockSpec((1, H2, W2, C1), lambda n: (n, 0, 0, 0)),
            _full_spec(scale1.shape),
            _full_spec(shift1.shape),
            _full_spec(w2.shape),
            _full_spec(b2.shape),
        ],
        out_specs=(
            pl.BlockSpec((1, H2, W2, C2), lambda n: (n, 0, 0, 0)),
            pl.BlockSpec((1, 2, C2), lambda n: (n, 0, 0)),
        ),
        out_shape=(jax.ShapeDtypeStruct((N, H2, W2, C2), jnp.float32),
                   jax.ShapeDtypeStruct((N, 2, C2), jnp.float32)),
        scratch_shapes=[pltpu.VMEM((H2 + 2, W2 + 2, C1), jnp.float32)],
        compiler_params=cp,
    )(y1, scale1, shift1, w2, b2)

    scale2, shift2 = _bn_affine(st2, g2, bt2, M_total)

    # ---- stage 3: BN2 + ReLU --------------------------------------------------
    out = pl.pallas_call(
        bn_relu_kernel,
        grid=(N,),
        in_specs=[
            pl.BlockSpec((1, H2, W2, C2), lambda n: (n, 0, 0, 0)),
            _full_spec(scale2.shape),
            _full_spec(shift2.shape),
        ],
        out_specs=pl.BlockSpec((1, H2, W2, C2), lambda n: (n, 0, 0, 0)),
        out_shape=jax.ShapeDtypeStruct((N, H2, W2, C2), jnp.float32),
        compiler_params=cp,
    )(y2, scale2, shift2)

    return jnp.transpose(out, (0, 3, 1, 2))            # -> NCHW


# ------------------------------ pure-JAX reference ----------------------------


def _ref_forward(up_x_nchw, down_x_nchw, params):
    up = jnp.transpose(up_x_nchw, (0, 2, 3, 1))
    down = jnp.transpose(down_x_nchw, (0, 2, 3, 1))

    w_t, b_t = params["up_w"], params["up_b"]
    N, H, W, _ = up.shape
    Cout = w_t.shape[1]
    y = jnp.einsum("nhwi,iokl->nhkwlo", up, w_t)
    x = y.reshape(N, 2 * H, 2 * W, Cout) + b_t
    x = jnp.concatenate([x, down], axis=-1)

    for (w, b, g, bt) in (params["cb1"], params["cb2"]):
        w_hwio = jnp.transpose(w, (2, 3, 1, 0))
        x = jax.lax.conv_general_dilated(
            x, w_hwio, (1, 1), "SAME",
            dimension_numbers=("NHWC", "HWIO", "NHWC")) + b
        mean = jnp.mean(x, axis=(0, 1, 2), keepdims=True)
        var = jnp.mean((x - mean) ** 2, axis=(0, 1, 2), keepdims=True)
        x = (x - mean) * jax.lax.rsqrt(var + 1e-5) * g + bt
        x = jnp.maximum(x, 0.0)

    return jnp.transpose(x, (0, 3, 1, 2))


# ------------------------------------ main ------------------------------------

if __name__ == "__main__":
    # UpBlock(in_channels=8, out_channels=4): up_x has 8 channels at half
    # resolution, down_x has 4 channels at full resolution.
    IN_C, OUT_C = 8, 4
    UP_CIN, UP_COUT = IN_C, OUT_C
    N, H, W = 2, 8, 8                      # up_x spatial; output spatial = 16x16

    key = jax.random.PRNGKey(0)
    ks = jax.random.split(key, 12)

    def nrm(k, shape, scale=0.1):
        return (scale * jax.random.normal(k, shape)).astype(jnp.float32)

    params = {
        "up_w": nrm(ks[0], (UP_CIN, UP_COUT, 2, 2)),   # torch ConvTranspose2d layout
        "up_b": nrm(ks[1], (UP_COUT,)),
        "cb1": (nrm(ks[2], (OUT_C, IN_C, 3, 3)), nrm(ks[3], (OUT_C,)),
                1.0 + nrm(ks[4], (OUT_C,)), nrm(ks[5], (OUT_C,))),
        "cb2": (nrm(ks[6], (OUT_C, OUT_C, 3, 3)), nrm(ks[7], (OUT_C,)),
                1.0 + nrm(ks[8], (OUT_C,)), nrm(ks[9], (OUT_C,))),
    }

    up_x = jax.random.normal(ks[10], (N, UP_CIN, H, W), jnp.float32)           # NCHW
    down_x = jax.random.normal(ks[11], (N, IN_C - OUT_C, 2 * H, 2 * W),
                               jnp.float32)                                     # NCHW

    prep = prepare_params(params)          # one-time weight prep (hoisted)
    fwd = jax.jit(up_block_forward)

    out = jax.block_until_ready(fwd(up_x, down_x, prep))
    ref = jax.block_until_ready(_ref_forward(up_x, down_x, params))

    assert out.shape == (N, OUT_C, 2 * H, 2 * W), out.shape
    max_err = float(jnp.max(jnp.abs(out - ref)))
    assert jnp.allclose(out, ref, atol=2e-2, rtol=2e-2), max_err

    print("KERNEL_OK")
</pallas_src>

<mosaic_0001>
module attributes {stable_mosaic.version = 11 : i64} {
  func.func @stage1_kernel(%arg0: i32, %arg1: memref<1x8x8x8xf32, #tpu.memory_space<vmem>>, %arg2: memref<1x16x16x4xf32, #tpu.memory_space<vmem>>, %arg3: memref<8x16xf32, #tpu.memory_space<vmem>>, %arg4: memref<1x16xf32, #tpu.memory_space<vmem>>, %arg5: memref<72x4xf32, #tpu.memory_space<vmem>>, %arg6: memref<1x4xf32, #tpu.memory_space<vmem>>, %arg7: memref<1x16x16x4xf32, #tpu.memory_space<vmem>>, %arg8: memref<1x2x4xf32, #tpu.memory_space<vmem>>, %arg9: memref<18x18x8xf32, #tpu.memory_space<vmem>>) attributes {dimension_semantics = [#tpu.dimension_semantics<parallel>], iteration_bounds = array<i64: 2>, scalar_prefetch = 0 : i64, scratch_operands = 1 : i64, tpu.core_type = #tpu.core_type<tc>, window_params = [{transform_indices = @transform_0, window_bounds = array<i64: 1, 8, 8, 8>}, {transform_indices = @transform_1, window_bounds = array<i64: 1, 16, 16, 4>}, {pipeline_mode = #tpu.pipeline_mode<synchronous>, transform_indices = @transform_2, window_bounds = array<i64: 8, 16>}, {pipeline_mode = #tpu.pipeline_mode<synchronous>, transform_indices = @transform_3, window_bounds = array<i64: 1, 16>}, {pipeline_mode = #tpu.pipeline_mode<synchronous>, transform_indices = @transform_4, window_bounds = array<i64: 72, 4>}, {pipeline_mode = #tpu.pipeline_mode<synchronous>, transform_indices = @transform_5, window_bounds = array<i64: 1, 4>}, {transform_indices = @transform_6, window_bounds = array<i64: 1, 16, 16, 4>}, {transform_indices = @transform_7, window_bounds = array<i64: 1, 2, 4>}]} {
    %cst = arith.constant 0.000000e+00 : f32
    %0 = vector.broadcast %cst : f32 to vector<18x18x8xf32>
    %c0 = arith.constant 0 : index
    %c0_0 = arith.constant 0 : index
    %c0_1 = arith.constant 0 : index
    %1 = vector.load %arg9[%c0, %c0_0, %c0_1] : memref<18x18x8xf32, #tpu.memory_space<vmem>>, vector<18x18x8xf32>
    tpu.vector_store %arg9[%c0, %c0_0, %c0_1], %0 {strides = array<i32>} : memref<18x18x8xf32, #tpu.memory_space<vmem>>, vector<18x18x8xf32>,
    %c0_2 = arith.constant 0 : index
    %c0_3 = arith.constant 0 : index
    %c0_4 = arith.constant 0 : index
    %c0_5 = arith.constant 0 : index
    %2 = vector.load %arg2[%c0_2, %c0_3, %c0_4, %c0_5] : memref<1x16x16x4xf32, #tpu.memory_space<vmem>>, vector<1x16x16x4xf32>
    %3 = vector.shape_cast %2 : vector<1x16x16x4xf32> to vector<16x16x4xf32>
    %c1 = arith.constant 1 : index
    %c1_6 = arith.constant 1 : index
    %c4 = arith.constant 4 : index
    %4 = vector.load %arg9[%c1, %c1_6, %c4] : memref<18x18x8xf32, #tpu.memory_space<vmem>>, vector<16x16x4xf32>
    tpu.vector_store %arg9[%c1, %c1_6, %c4], %3 {strides = array<i32>} : memref<18x18x8xf32, #tpu.memory_space<vmem>>, vector<16x16x4xf32>,
    %c0_7 = arith.constant 0 : index
    %c0_8 = arith.constant 0 : index
    %c0_9 = arith.constant 0 : index
    %c0_10 = arith.constant 0 : index
    %5 = vector.load %arg1[%c0_7, %c0_8, %c0_9, %c0_10] : memref<1x8x8x8xf32, #tpu.memory_space<vmem>>, vector<1x8x8x8xf32>
    %6 = vector.shape_cast %5 : vector<1x8x8x8xf32> to vector<64x8xf32>
    %c0_11 = arith.constant 0 : index
    %c0_12 = arith.constant 0 : index
    %7 = vector.load %arg3[%c0_11, %c0_12] : memref<8x16xf32, #tpu.memory_space<vmem>>, vector<8x16xf32>
    %cst_13 = arith.constant dense<0.000000e+00> : vector<64x16xf32>
    %8 = tpu.matmul %6, %7, %cst_13 {dimension_numbers = #tpu.dot_dimension_numbers<[1], [0], [0], [1], [0, 0, 1, 1], [], []>} : vector<64x8xf32>, vector<8x16xf32>, vector<64x16xf32> -> vector<64x16xf32>
    %c0_14 = arith.constant 0 : index
    %c0_15 = arith.constant 0 : index
    %9 = vector.load %arg4[%c0_14, %c0_15] : memref<1x16xf32, #tpu.memory_space<vmem>>, vector<1x16xf32>
    %10 = vector.broadcast %9 : vector<1x16xf32> to vector<64x16xf32>
    %11 = arith.addf %8, %10 : vector<64x16xf32>
    %12 = vector.extract_strided_slice %11 {offsets = [0, 0], sizes = [64, 4], strides = [1, 1]} : vector<64x16xf32> to vector<64x4xf32>
    %13 = vector.shape_cast %12 : vector<64x4xf32> to vector<8x8x1x4xf32>
    %14 = vector.extract_strided_slice %11 {offsets = [0, 4], sizes = [64, 4], strides = [1, 1]} : vector<64x16xf32> to vector<64x4xf32>
    %15 = vector.shape_cast %14 : vector<64x4xf32> to vector<8x8x1x4xf32>
    %16 = tpu.concatenate %13, %15 in 2 : vector<8x8x1x4xf32>, vector<8x8x1x4xf32> -> vector<8x8x2x4xf32>
    %17 = vector.shape_cast %16 : vector<8x8x2x4xf32> to vector<8x1x16x4xf32>
    %18 = vector.extract_strided_slice %11 {offsets = [0, 8], sizes = [64, 4], strides = [1, 1]} : vector<64x16xf32> to vector<64x4xf32>
    %19 = vector.shape_cast %18 : vector<64x4xf32> to vector<8x8x1x4xf32>
    %20 = vector.extract_strided_slice %11 {offsets = [0, 12], sizes = [64, 4], strides = [1, 1]} : vector<64x16xf32> to vector<64x4xf32>
    %21 = vector.shape_cast %20 : vector<64x4xf32> to vector<8x8x1x4xf32>
    %22 = tpu.concatenate %19, %21 in 2 : vector<8x8x1x4xf32>, vector<8x8x1x4xf32> -> vector<8x8x2x4xf32>
    %23 = vector.shape_cast %22 : vector<8x8x2x4xf32> to vector<8x1x16x4xf32>
    %24 = tpu.concatenate %17, %23 in 1 : vector<8x1x16x4xf32>, vector<8x1x16x4xf32> -> vector<8x2x16x4xf32>
    %25 = vector.shape_cast %24 : vector<8x2x16x4xf32> to vector<16x16x4xf32>
    %c1_16 = arith.constant 1 : index
    %c1_17 = arith.constant 1 : index
    %c0_18 = arith.constant 0 : index
    %26 = vector.load %arg9[%c1_16, %c1_17, %c0_18] : memref<18x18x8xf32, #tpu.memory_space<vmem>>, vector<16x16x4xf32>
    tpu.vector_store %arg9[%c1_16, %c1_17, %c0_18], %25 {strides = array<i32>} : memref<18x18x8xf32, #tpu.memory_space<vmem>>, vector<16x16x4xf32>,
    %c0_19 = arith.constant 0 : index
    %c0_20 = arith.constant 0 : index
    %c0_21 = arith.constant 0 : index
    %27 = vector.load %arg9[%c0_19, %c0_20, %c0_21] : memref<18x18x8xf32, #tpu.memory_space<vmem>>, vector<16x16x8xf32>
    %28 = vector.shape_cast %27 : vector<16x16x8xf32> to vector<256x8xf32>
    %c0_22 = arith.constant 0 : index
    %c1_23 = arith.constant 1 : index
    %c0_24 = arith.constant 0 : index
    %29 = vector.load %arg9[%c0_22, %c1_23, %c0_24] : memref<18x18x8xf32, #tpu.memory_space<vmem>>, vector<16x16x8xf32>
    %30 = vector.shape_cast %29 : vector<16x16x8xf32> to vector<256x8xf32>
    %c0_25 = arith.constant 0 : index
    %c2 = arith.constant 2 : index
    %c0_26 = arith.constant 0 : index
    %31 = vector.load %arg9[%c0_25, %c2, %c0_26] : memref<18x18x8xf32, #tpu.memory_space<vmem>>, vector<16x16x8xf32>
    %32 = vector.shape_cast %31 : vector<16x16x8xf32> to vector<256x8xf32>
    %c1_27 = arith.constant 1 : index
    %c0_28 = arith.constant 0 : index
    %c0_29 = arith.constant 0 : index
    %33 = vector.load %arg9[%c1_27, %c0_28, %c0_29] : memref<18x18x8xf32, #tpu.memory_space<vmem>>, vector<16x16x8xf32>
    %34 = vector.shape_cast %33 : vector<16x16x8xf32> to vector<256x8xf32>
    %c1_30 = arith.constant 1 : index
    %c1_31 = arith.constant 1 : index
    %c0_32 = arith.constant 0 : index
    %35 = vector.load %arg9[%c1_30, %c1_31, %c0_32] : memref<18x18x8xf32, #tpu.memory_space<vmem>>, vector<16x16x8xf32>
    %36 = vector.shape_cast %35 : vector<16x16x8xf32> to vector<256x8xf32>
    %c1_33 = arith.constant 1 : index
    %c2_34 = arith.constant 2 : index
    %c0_35 = arith.constant 0 : index
    %37 = vector.load %arg9[%c1_33, %c2_34, %c0_35] : memref<18x18x8xf32, #tpu.memory_space<vmem>>, vector<16x16x8xf32>
    %38 = vector.shape_cast %37 : vector<16x16x8xf32> to vector<256x8xf32>
    %c2_36 = arith.constant 2 : index
    %c0_37 = arith.constant 0 : index
    %c0_38 = arith.constant 0 : index
    %39 = vector.load %arg9[%c2_36, %c0_37, %c0_38] : memref<18x18x8xf32, #tpu.memory_space<vmem>>, vector<16x16x8xf32>
    %40 = vector.shape_cast %39 : vector<16x16x8xf32> to vector<256x8xf32>
    %c2_39 = arith.constant 2 : index
    %c1_40 = arith.constant 1 : index
    %c0_41 = arith.constant 0 : index
    %41 = vector.load %arg9[%c2_39, %c1_40, %c0_41] : memref<18x18x8xf32, #tpu.memory_space<vmem>>, vector<16x16x8xf32>
    %42 = vector.shape_cast %41 : vector<16x16x8xf32> to vector<256x8xf32>
    %c2_42 = arith.constant 2 : index
    %c2_43 = arith.constant 2 : index
    %c0_44 = arith.constant 0 : index
    %43 = vector.load %arg9[%c2_42, %c2_43, %c0_44] : memref<18x18x8xf32, #tpu.memory_space<vmem>>, vector<16x16x8xf32>
    %44 = vector.shape_cast %43 : vector<16x16x8xf32> to vector<256x8xf32>
    %45 = tpu.concatenate %28, %30, %32, %34, %36, %38, %40, %42, %44 in 1 : vector<256x8xf32>, vector<256x8xf32>, vector<256x8xf32>, vector<256x8xf32>, vector<256x8xf32>, vector<256x8xf32>, vector<256x8xf32>, vector<256x8xf32>, vector<256x8xf32> -> vector<256x72xf32>
    %c0_45 = arith.constant 0 : index
    %c0_46 = arith.constant 0 : index
    %46 = vector.load %arg5[%c0_45, %c0_46] : memref<72x4xf32, #tpu.memory_space<vmem>>, vector<72x4xf32>
    %cst_47 = arith.constant dense<0.000000e+00> : vector<256x4xf32>
    %47 = tpu.matmul %45, %46, %cst_47 {dimension_numbers = #tpu.dot_dimension_numbers<[1], [0], [0], [1], [0, 0, 1, 1], [], []>} : vector<256x72xf32>, vector<72x4xf32>, vector<256x4xf32> -> vector<256x4xf32>
    %c0_48 = arith.constant 0 : index
    %c0_49 = arith.constant 0 : index
    %48 = vector.load %arg6[%c0_48, %c0_49] : memref<1x4xf32, #tpu.memory_space<vmem>>, vector<1x4xf32>
    %49 = vector.broadcast %48 : vector<1x4xf32> to vector<256x4xf32>
    %50 = arith.addf %47, %49 : vector<256x4xf32>
    %cst_50 = arith.constant 1.000000e+00 : f32
    %51 = vector.broadcast %cst_50 : f32 to vector<1x256xf32>
    %cst_51 = arith.constant dense<0.000000e+00> : vector<1x4xf32>
    %52 = tpu.matmul %51, %50, %cst_51 {dimension_numbers = #tpu.dot_dimension_numbers<[1], [0], [0], [1], [0, 0, 1, 1], [], []>} : vector<1x256xf32>, vector<256x4xf32>, vector<1x4xf32> -> vector<1x4xf32>
    %53 = arith.mulf %50, %50 : vector<256x4xf32>
    %cst_52 = arith.constant dense<0.000000e+00> : vector<1x4xf32>
    %54 = tpu.matmul %51, %53, %cst_52 {dimension_numbers = #tpu.dot_dimension_numbers<[1], [0], [0], [1], [0, 0, 1, 1], [], []>} : vector<1x256xf32>, vector<256x4xf32>, vector<1x4xf32> -> vector<1x4xf32>
    %55 = tpu.concatenate %52, %54 in 0 : vector<1x4xf32>, vector<1x4xf32> -> vector<2x4xf32>
    %56 = vector.shape_cast %55 : vector<2x4xf32> to vector<1x2x4xf32>
    %c0_53 = arith.constant 0 : index
    %c0_54 = arith.constant 0 : index
    %c0_55 = arith.constant 0 : index
    %57 = vector.load %arg8[%c0_53, %c0_54, %c0_55] : memref<1x2x4xf32, #tpu.memory_space<vmem>>, vector<1x2x4xf32>
    tpu.vector_store %arg8[%c0_53, %c0_54, %c0_55], %56 {strides = array<i32>} : memref<1x2x4xf32, #tpu.memory_space<vmem>>, vector<1x2x4xf32>,
    %58 = vector.shape_cast %50 : vector<256x4xf32> to vector<1x16x16x4xf32>
    %c0_56 = arith.constant 0 : index
    %c0_57 = arith.constant 0 : index
    %c0_58 = arith.constant 0 : index
    %c0_59 = arith.constant 0 : index
    %59 = vector.load %arg7[%c0_56, %c0_57, %c0_58, %c0_59] : memref<1x16x16x4xf32, #tpu.memory_space<vmem>>, vector<1x16x16x4xf32>
    tpu.vector_store %arg7[%c0_56, %c0_57, %c0_58, %c0_59], %58 {strides = array<i32>} : memref<1x16x16x4xf32, #tpu.memory_space<vmem>>, vector<1x16x16x4xf32>,
    return
  }
  func.func @transform_0(%arg0: i32) -> (i32, i32, i32, i32) {
    %c0_i32 = arith.constant 0 : i32
    %c0_i32_0 = arith.constant 0 : i32
    %c0_i32_1 = arith.constant 0 : i32
    %c0_i32_2 = arith.constant 0 : i32
    return %arg0, %c0_i32, %c0_i32_0, %c0_i32_1 : i32, i32, i32, i32
  }
  func.func @transform_1(%arg0: i32) -> (i32, i32, i32, i32) {
    %c0_i32 = arith.constant 0 : i32
    %c0_i32_0 = arith.constant 0 : i32
    %c0_i32_1 = arith.constant 0 : i32
    %c0_i32_2 = arith.constant 0 : i32
    return %arg0, %c0_i32, %c0_i32_0, %c0_i32_1 : i32, i32, i32, i32
  }
  func.func @transform_2(%arg0: i32) -> (i32, i32) {
    %c0_i32 = arith.constant 0 : i32
    %c0_i32_0 = arith.constant 0 : i32
    %c0_i32_1 = arith.constant 0 : i32
    return %c0_i32, %c0_i32_0 : i32, i32
  }
  func.func @transform_3(%arg0: i32) -> (i32, i32) {
    %c0_i32 = arith.constant 0 : i32
    %c0_i32_0 = arith.constant 0 : i32
    %c0_i32_1 = arith.constant 0 : i32
    return %c0_i32, %c0_i32_0 : i32, i32
  }
  func.func @transform_4(%arg0: i32) -> (i32, i32) {
    %c0_i32 = arith.constant 0 : i32
    %c0_i32_0 = arith.constant 0 : i32
    %c0_i32_1 = arith.constant 0 : i32
    return %c0_i32, %c0_i32_0 : i32, i32
  }
  func.func @transform_5(%arg0: i32) -> (i32, i32) {
    %c0_i32 = arith.constant 0 : i32
    %c0_i32_0 = arith.constant 0 : i32
    %c0_i32_1 = arith.constant 0 : i32
    return %c0_i32, %c0_i32_0 : i32, i32
  }
  func.func @transform_6(%arg0: i32) -> (i32, i32, i32, i32) {
    %c0_i32 = arith.constant 0 : i32
    %c0_i32_0 = arith.constant 0 : i32
    %c0_i32_1 = arith.constant 0 : i32
    %c0_i32_2 = arith.constant 0 : i32
    return %arg0, %c0_i32, %c0_i32_0, %c0_i32_1 : i32, i32, i32, i32
  }
  func.func @transform_7(%arg0: i32) -> (i32, i32, i32) {
    %c0_i32 = arith.constant 0 : i32
    %c0_i32_0 = arith.constant 0 : i32
    %c0_i32_1 = arith.constant 0 : i32
    return %arg0, %c0_i32, %c0_i32_0 : i32, i32, i32
  }
}

module attributes {stable_mosaic.version = 11 : i64} {
  func.func @stage2_kernel(%arg0: i32, %arg1: memref<1x16x16x4xf32, #tpu.memory_space<vmem>>, %arg2: memref<1x4xf32, #tpu.memory_space<vmem>>, %arg3: memref<1x4xf32, #tpu.memory_space<vmem>>, %arg4: memref<36x4xf32, #tpu.memory_space<vmem>>, %arg5: memref<1x4xf32, #tpu.memory_space<vmem>>, %arg6: memref<1x16x16x4xf32, #tpu.memory_space<vmem>>, %arg7: memref<1x2x4xf32, #tpu.memory_space<vmem>>, %arg8: memref<18x18x4xf32, #tpu.memory_space<vmem>>) attributes {dimension_semantics = [#tpu.dimension_semantics<parallel>], iteration_bounds = array<i64: 2>, scalar_prefetch = 0 : i64, scratch_operands = 1 : i64, tpu.core_type = #tpu.core_type<tc>, window_params = [{transform_indices = @transform_0, window_bounds = array<i64: 1, 16, 16, 4>}, {pipeline_mode = #tpu.pipeline_mode<synchronous>, transform_indices = @transform_1, window_bounds = array<i64: 1, 4>}, {pipeline_mode = #tpu.pipeline_mode<synchronous>, transform_indices = @transform_2, window_bounds = array<i64: 1, 4>}, {pipeline_mode = #tpu.pipeline_mode<synchronous>, transform_indices = @transform_3, window_bounds = array<i64: 36, 4>}, {pipeline_mode = #tpu.pipeline_mode<synchronous>, transform_indices = @transform_4, window_bounds = array<i64: 1, 4>}, {transform_indices = @transform_5, window_bounds = array<i64: 1, 16, 16, 4>}, {transform_indices = @transform_6, window_bounds = array<i64: 1, 2, 4>}]} {
    %c0 = arith.constant 0 : index
    %c0_0 = arith.constant 0 : index
    %c0_1 = arith.constant 0 : index
    %c0_2 = arith.constant 0 : index
    %0 = vector.load %arg1[%c0, %c0_0, %c0_1, %c0_2] : memref<1x16x16x4xf32, #tpu.memory_space<vmem>>, vector<1x16x16x4xf32>
    %1 = vector.shape_cast %0 : vector<1x16x16x4xf32> to vector<256x4xf32>
    %c0_3 = arith.constant 0 : index
    %c0_4 = arith.constant 0 : index
    %2 = vector.load %arg2[%c0_3, %c0_4] : memref<1x4xf32, #tpu.memory_space<vmem>>, vector<1x4xf32>
    %3 = vector.broadcast %2 : vector<1x4xf32> to vector<256x4xf32>
    %4 = arith.mulf %1, %3 : vector<256x4xf32>
    %c0_5 = arith.constant 0 : index
    %c0_6 = arith.constant 0 : index
    %5 = vector.load %arg3[%c0_5, %c0_6] : memref<1x4xf32, #tpu.memory_space<vmem>>, vector<1x4xf32>
    %6 = vector.broadcast %5 : vector<1x4xf32> to vector<256x4xf32>
    %7 = arith.addf %4, %6 : vector<256x4xf32>
    %cst = arith.constant 0.000000e+00 : f32
    %8 = vector.broadcast %cst : f32 to vector<256x4xf32>
    %9 = arith.maximumf %7, %8 : vector<256x4xf32>
    %cst_7 = arith.constant 0.000000e+00 : f32
    %10 = vector.broadcast %cst_7 : f32 to vector<18x18x4xf32>
    %c0_8 = arith.constant 0 : index
    %c0_9 = arith.constant 0 : index
    %c0_10 = arith.constant 0 : index
    %11 = vector.load %arg8[%c0_8, %c0_9, %c0_10] : memref<18x18x4xf32, #tpu.memory_space<vmem>>, vector<18x18x4xf32>
    tpu.vector_store %arg8[%c0_8, %c0_9, %c0_10], %10 {strides = array<i32>} : memref<18x18x4xf32, #tpu.memory_space<vmem>>, vector<18x18x4xf32>,
    %12 = vector.shape_cast %9 : vector<256x4xf32> to vector<16x16x4xf32>
    %c1 = arith.constant 1 : index
    %c1_11 = arith.constant 1 : index
    %c0_12 = arith.constant 0 : index
    %13 = vector.load %arg8[%c1, %c1_11, %c0_12] : memref<18x18x4xf32, #tpu.memory_space<vmem>>, vector<16x16x4xf32>
    tpu.vector_store %arg8[%c1, %c1_11, %c0_12], %12 {strides = array<i32>} : memref<18x18x4xf32, #tpu.memory_space<vmem>>, vector<16x16x4xf32>,
    %c0_13 = arith.constant 0 : index
    %c0_14 = arith.constant 0 : index
    %c0_15 = arith.constant 0 : index
    %14 = vector.load %arg8[%c0_13, %c0_14, %c0_15] : memref<18x18x4xf32, #tpu.memory_space<vmem>>, vector<16x16x4xf32>
    %15 = vector.shape_cast %14 : vector<16x16x4xf32> to vector<256x4xf32>
    %c0_16 = arith.constant 0 : index
    %c1_17 = arith.constant 1 : index
    %c0_18 = arith.constant 0 : index
    %16 = vector.load %arg8[%c0_16, %c1_17, %c0_18] : memref<18x18x4xf32, #tpu.memory_space<vmem>>, vector<16x16x4xf32>
    %17 = vector.shape_cast %16 : vector<16x16x4xf32> to vector<256x4xf32>
    %c0_19 = arith.constant 0 : index
    %c2 = arith.constant 2 : index
    %c0_20 = arith.constant 0 : index
    %18 = vector.load %arg8[%c0_19, %c2, %c0_20] : memref<18x18x4xf32, #tpu.memory_space<vmem>>, vector<16x16x4xf32>
    %19 = vector.shape_cast %18 : vector<16x16x4xf32> to vector<256x4xf32>
    %c1_21 = arith.constant 1 : index
    %c0_22 = arith.constant 0 : index
    %c0_23 = arith.constant 0 : index
    %20 = vector.load %arg8[%c1_21, %c0_22, %c0_23] : memref<18x18x4xf32, #tpu.memory_space<vmem>>, vector<16x16x4xf32>
    %21 = vector.shape_cast %20 : vector<16x16x4xf32> to vector<256x4xf32>
    %c1_24 = arith.constant 1 : index
    %c1_25 = arith.constant 1 : index
    %c0_26 = arith.constant 0 : index
    %22 = vector.load %arg8[%c1_24, %c1_25, %c0_26] : memref<18x18x4xf32, #tpu.memory_space<vmem>>, vector<16x16x4xf32>
    %23 = vector.shape_cast %22 : vector<16x16x4xf32> to vector<256x4xf32>
    %c1_27 = arith.constant 1 : index
    %c2_28 = arith.constant 2 : index
    %c0_29 = arith.constant 0 : index
    %24 = vector.load %arg8[%c1_27, %c2_28, %c0_29] : memref<18x18x4xf32, #tpu.memory_space<vmem>>, vector<16x16x4xf32>
    %25 = vector.shape_cast %24 : vector<16x16x4xf32> to vector<256x4xf32>
    %c2_30 = arith.constant 2 : index
    %c0_31 = arith.constant 0 : index
    %c0_32 = arith.constant 0 : index
    %26 = vector.load %arg8[%c2_30, %c0_31, %c0_32] : memref<18x18x4xf32, #tpu.memory_space<vmem>>, vector<16x16x4xf32>
    %27 = vector.shape_cast %26 : vector<16x16x4xf32> to vector<256x4xf32>
    %c2_33 = arith.constant 2 : index
    %c1_34 = arith.constant 1 : index
    %c0_35 = arith.constant 0 : index
    %28 = vector.load %arg8[%c2_33, %c1_34, %c0_35] : memref<18x18x4xf32, #tpu.memory_space<vmem>>, vector<16x16x4xf32>
    %29 = vector.shape_cast %28 : vector<16x16x4xf32> to vector<256x4xf32>
    %c2_36 = arith.constant 2 : index
    %c2_37 = arith.constant 2 : index
    %c0_38 = arith.constant 0 : index
    %30 = vector.load %arg8[%c2_36, %c2_37, %c0_38] : memref<18x18x4xf32, #tpu.memory_space<vmem>>, vector<16x16x4xf32>
    %31 = vector.shape_cast %30 : vector<16x16x4xf32> to vector<256x4xf32>
    %32 = tpu.concatenate %15, %17, %19, %21, %23, %25, %27, %29, %31 in 1 : vector<256x4xf32>, vector<256x4xf32>, vector<256x4xf32>, vector<256x4xf32>, vector<256x4xf32>, vector<256x4xf32>, vector<256x4xf32>, vector<256x4xf32>, vector<256x4xf32> -> vector<256x36xf32>
    %c0_39 = arith.constant 0 : index
    %c0_40 = arith.constant 0 : index
    %33 = vector.load %arg4[%c0_39, %c0_40] : memref<36x4xf32, #tpu.memory_space<vmem>>, vector<36x4xf32>
    %cst_41 = arith.constant dense<0.000000e+00> : vector<256x4xf32>
    %34 = tpu.matmul %32, %33, %cst_41 {dimension_numbers = #tpu.dot_dimension_numbers<[1], [0], [0], [1], [0, 0, 1, 1], [], []>} : vector<256x36xf32>, vector<36x4xf32>, vector<256x4xf32> -> vector<256x4xf32>
    %c0_42 = arith.constant 0 : index
    %c0_43 = arith.constant 0 : index
    %35 = vector.load %arg5[%c0_42, %c0_43] : memref<1x4xf32, #tpu.memory_space<vmem>>, vector<1x4xf32>
    %36 = vector.broadcast %35 : vector<1x4xf32> to vector<256x4xf32>
    %37 = arith.addf %34, %36 : vector<256x4xf32>
    %cst_44 = arith.constant 1.000000e+00 : f32
    %38 = vector.broadcast %cst_44 : f32 to vector<1x256xf32>
    %cst_45 = arith.constant dense<0.000000e+00> : vector<1x4xf32>
    %39 = tpu.matmul %38, %37, %cst_45 {dimension_numbers = #tpu.dot_dimension_numbers<[1], [0], [0], [1], [0, 0, 1, 1], [], []>} : vector<1x256xf32>, vector<256x4xf32>, vector<1x4xf32> -> vector<1x4xf32>
    %40 = arith.mulf %37, %37 : vector<256x4xf32>
    %cst_46 = arith.constant dense<0.000000e+00> : vector<1x4xf32>
    %41 = tpu.matmul %38, %40, %cst_46 {dimension_numbers = #tpu.dot_dimension_numbers<[1], [0], [0], [1], [0, 0, 1, 1], [], []>} : vector<1x256xf32>, vector<256x4xf32>, vector<1x4xf32> -> vector<1x4xf32>
    %42 = tpu.concatenate %39, %41 in 0 : vector<1x4xf32>, vector<1x4xf32> -> vector<2x4xf32>
    %43 = vector.shape_cast %42 : vector<2x4xf32> to vector<1x2x4xf32>
    %c0_47 = arith.constant 0 : index
    %c0_48 = arith.constant 0 : index
    %c0_49 = arith.constant 0 : index
    %44 = vector.load %arg7[%c0_47, %c0_48, %c0_49] : memref<1x2x4xf32, #tpu.memory_space<vmem>>, vector<1x2x4xf32>
    tpu.vector_store %arg7[%c0_47, %c0_48, %c0_49], %43 {strides = array<i32>} : memref<1x2x4xf32, #tpu.memory_space<vmem>>, vector<1x2x4xf32>,
    %45 = vector.shape_cast %37 : vector<256x4xf32> to vector<1x16x16x4xf32>
    %c0_50 = arith.constant 0 : index
    %c0_51 = arith.constant 0 : index
    %c0_52 = arith.constant 0 : index
    %c0_53 = arith.constant 0 : index
    %46 = vector.load %arg6[%c0_50, %c0_51, %c0_52, %c0_53] : memref<1x16x16x4xf32, #tpu.memory_space<vmem>>, vector<1x16x16x4xf32>
    tpu.vector_store %arg6[%c0_50, %c0_51, %c0_52, %c0_53], %45 {strides = array<i32>} : memref<1x16x16x4xf32, #tpu.memory_space<vmem>>, vector<1x16x16x4xf32>,
    return
  }
  func.func @transform_0(%arg0: i32) -> (i32, i32, i32, i32) {
    %c0_i32 = arith.constant 0 : i32
    %c0_i32_0 = arith.constant 0 : i32
    %c0_i32_1 = arith.constant 0 : i32
    %c0_i32_2 = arith.constant 0 : i32
    return %arg0, %c0_i32, %c0_i32_0, %c0_i32_1 : i32, i32, i32, i32
  }
  func.func @transform_1(%arg0: i32) -> (i32, i32) {
    %c0_i32 = arith.constant 0 : i32
    %c0_i32_0 = arith.constant 0 : i32
    %c0_i32_1 = arith.constant 0 : i32
    return %c0_i32, %c0_i32_0 : i32, i32
  }
  func.func @transform_2(%arg0: i32) -> (i32, i32) {
    %c0_i32 = arith.constant 0 : i32
    %c0_i32_0 = arith.constant 0 : i32
    %c0_i32_1 = arith.constant 0 : i32
    return %c0_i32, %c0_i32_0 : i32, i32
  }
  func.func @transform_3(%arg0: i32) -> (i32, i32) {
    %c0_i32 = arith.constant 0 : i32
    %c0_i32_0 = arith.constant 0 : i32
    %c0_i32_1 = arith.constant 0 : i32
    return %c0_i32, %c0_i32_0 : i32, i32
  }
  func.func @transform_4(%arg0: i32) -> (i32, i32) {
    %c0_i32 = arith.constant 0 : i32
    %c0_i32_0 = arith.constant 0 : i32
    %c0_i32_1 = arith.constant 0 : i32
    return %c0_i32, %c0_i32_0 : i32, i32
  }
  func.func @transform_5(%arg0: i32) -> (i32, i32, i32, i32) {
    %c0_i32 = arith.constant 0 : i32
    %c0_i32_0 = arith.constant 0 : i32
    %c0_i32_1 = arith.constant 0 : i32
    %c0_i32_2 = arith.constant 0 : i32
    return %arg0, %c0_i32, %c0_i32_0, %c0_i32_1 : i32, i32, i32, i32
  }
  func.func @transform_6(%arg0: i32) -> (i32, i32, i32) {
    %c0_i32 = arith.constant 0 : i32
    %c0_i32_0 = arith.constant 0 : i32
    %c0_i32_1 = arith.constant 0 : i32
    return %arg0, %c0_i32, %c0_i32_0 : i32, i32, i32
  }
}

module attributes {stable_mosaic.version = 11 : i64} {
  func.func @bn_relu_kernel(%arg0: i32, %arg1: memref<1x16x16x4xf32, #tpu.memory_space<vmem>>, %arg2: memref<1x4xf32, #tpu.memory_space<vmem>>, %arg3: memref<1x4xf32, #tpu.memory_space<vmem>>, %arg4: memref<1x16x16x4xf32, #tpu.memory_space<vmem>>) attributes {dimension_semantics = [#tpu.dimension_semantics<parallel>], iteration_bounds = array<i64: 2>, scalar_prefetch = 0 : i64, scratch_operands = 0 : i64, tpu.core_type = #tpu.core_type<tc>, window_params = [{transform_indices = @transform_0, window_bounds = array<i64: 1, 16, 16, 4>}, {pipeline_mode = #tpu.pipeline_mode<synchronous>, transform_indices = @transform_1, window_bounds = array<i64: 1, 4>}, {pipeline_mode = #tpu.pipeline_mode<synchronous>, transform_indices = @transform_2, window_bounds = array<i64: 1, 4>}, {transform_indices = @transform_3, window_bounds = array<i64: 1, 16, 16, 4>}]} {
    %c0 = arith.constant 0 : index
    %c0_0 = arith.constant 0 : index
    %c0_1 = arith.constant 0 : index
    %c0_2 = arith.constant 0 : index
    %0 = vector.load %arg1[%c0, %c0_0, %c0_1, %c0_2] : memref<1x16x16x4xf32, #tpu.memory_space<vmem>>, vector<1x16x16x4xf32>
    %1 = vector.shape_cast %0 : vector<1x16x16x4xf32> to vector<256x4xf32>
    %c0_3 = arith.constant 0 : index
    %c0_4 = arith.constant 0 : index
    %2 = vector.load %arg2[%c0_3, %c0_4] : memref<1x4xf32, #tpu.memory_space<vmem>>, vector<1x4xf32>
    %3 = vector.broadcast %2 : vector<1x4xf32> to vector<256x4xf32>
    %4 = arith.mulf %1, %3 : vector<256x4xf32>
    %c0_5 = arith.constant 0 : index
    %c0_6 = arith.constant 0 : index
    %5 = vector.load %arg3[%c0_5, %c0_6] : memref<1x4xf32, #tpu.memory_space<vmem>>, vector<1x4xf32>
    %6 = vector.broadcast %5 : vector<1x4xf32> to vector<256x4xf32>
    %7 = arith.addf %4, %6 : vector<256x4xf32>
    %cst = arith.constant 0.000000e+00 : f32
    %8 = vector.broadcast %cst : f32 to vector<256x4xf32>
    %9 = arith.maximumf %7, %8 : vector<256x4xf32>
    %10 = vector.shape_cast %9 : vector<256x4xf32> to vector<1x16x16x4xf32>
    %c0_7 = arith.constant 0 : index
    %c0_8 = arith.constant 0 : index
    %c0_9 = arith.constant 0 : index
    %c0_10 = arith.constant 0 : index
    %11 = vector.load %arg4[%c0_7, %c0_8, %c0_9, %c0_10] : memref<1x16x16x4xf32, #tpu.memory_space<vmem>>, vector<1x16x16x4xf32>
    tpu.vector_store %arg4[%c0_7, %c0_8, %c0_9, %c0_10], %10 {strides = array<i32>} : memref<1x16x16x4xf32, #tpu.memory_space<vmem>>, vector<1x16x16x4xf32>,
    return
  }
  func.func @transform_0(%arg0: i32) -> (i32, i32, i32, i32) {
    %c0_i32 = arith.constant 0 : i32
    %c0_i32_0 = arith.constant 0 : i32
    %c0_i32_1 = arith.constant 0 : i32
    %c0_i32_2 = arith.constant 0 : i32
    return %arg0, %c0_i32, %c0_i32_0, %c0_i32_1 : i32, i32, i32, i32
  }
  func.func @transform_1(%arg0: i32) -> (i32, i32) {
    %c0_i32 = arith.constant 0 : i32
    %c0_i32_0 = arith.constant 0 : i32
    %c0_i32_1 = arith.constant 0 : i32
    return %c0_i32, %c0_i32_0 : i32, i32
  }
  func.func @transform_2(%arg0: i32) -> (i32, i32) {
    %c0_i32 = arith.constant 0 : i32
    %c0_i32_0 = arith.constant 0 : i32
    %c0_i32_1 = arith.constant 0 : i32
    return %c0_i32, %c0_i32_0 : i32, i32
  }
  func.func @transform_3(%arg0: i32) -> (i32, i32, i32, i32) {
    %c0_i32 = arith.constant 0 : i32
    %c0_i32_0 = arith.constant 0 : i32
    %c0_i32_1 = arith.constant 0 : i32
    %c0_i32_2 = arith.constant 0 : i32
    return %arg0, %c0_i32, %c0_i32_0, %c0_i32_1 : i32, i32, i32, i32
  }
}

</mosaic_0001>

<llo_original>
// kernel: up_block_forward.5
$region0: #{up_block_forward.5}
  #allocation0 [shape = 'u32[]', space=smem, size = 0x4, offset = 0x4, fixed_abs, tag = 'smem constant byte address 0x4 - core index']
  #allocation1 [shape = 'u32[144,128]{1,0:T(1,128)}', space=vmem, size = 0x12000, scoped, tag = 'internal scratch']
  %s0 = inlined_call_operand.vmem [shape: f32[2,16,16,4], index: 0, kind: input, shape index: {}]
  %s1 = inlined_call_operand.vmem [shape: f32[1,4], index: 1, kind: input, shape index: {}]
  %s2 = inlined_call_operand.vmem [shape: f32[1,4], index: 2, kind: input, shape index: {}]
  %s3 = inlined_call_operand.vmem [shape: f32[2,16,16,4], index: 3, kind: output, shape index: {}]
  %s4 = sld [smem:[#allocation0]]
  $region45: #{up_block_forward.5} parent=0
    _
  %s6 = ssub.s32 1, %s4
  %s7 = scalar_select 0, %s6, %s4
  loop: start=0, step=1, limit=4
  $region2: #{up_block_forward.5} parent=0 // loop_pre_header
    _
  $region3: #{up_block_forward.5} parent=0 // loop_header
    %s9 = sphi 0, %s13
    %p10 = scmp.ge.s32.totalorder %s9, 4
    %s19 = sphi 0, %s21
    %s22 = sphi 0, %s19
    %s23 = sphi 0, %s22
    %s39 = sphi 0, %s23
    %s43 = sphi 0, %s43
    %s45 = sphi 0, %s43
    %s46 = sphi 0, %s45
    %s60 = sphi 0, %s46
    %s64 = sphi 0, %s64
    %s66 = sphi 0, %s64
    %s67 = sphi 0, %s66
    %s81 = sphi 0, %s67
    %s87 = sphi 0, %s89
    %s90 = sphi 0, %s87
    %s91 = sphi 0, %s90
    %s107 = sphi 0, %s91
  $region4: #{up_block_forward.5} parent=0 // loop_header_branch
    %12 = sbr.rel (%p10) target = $region8
  $region5: #{up_block_forward.5} parent=0 // loop_body
    %s14 = ssub.s32 %s9, 1
    %s15 = ssub.s32 %s9, 2
    %s16 = sadd.s32 %s9, 1
    %s17 = ssub.s32 %s9, %s16
    %p18 = scmp.eq.s32.totalorder %s17, 0
    %s20 = sadd.s32 %s19, 1
    %s21 = scalar_select %p18, %s19, %s20
    %p24 = pneg %p18
    %p25 = scmp.eq.s32.totalorder %s9, 1
    %p26 = por %p24, %p25
    %p27 = scmp.ne.s32.totalorder %s19, %s22
    %p28 = scmp.eq.s32.totalorder %s9, 0
    %p29 = por %p27, %p28
    %p30 = scmp.ne.s32.totalorder %s19, %s22
    %p31 = scmp.eq.s32.totalorder %s14, 1
    %p32 = por %p30, %p31
    %p33 = scmp.ne.s32.totalorder %s22, %s23
    %p34 = scmp.eq.s32.totalorder %s14, 0
    %p35 = por %p33, %p34
    %p36 = scmp.ne.s32.totalorder %s22, %s23
    %p37 = scmp.eq.s32.totalorder %s15, 1
    %p38 = por %p36, %p37
    %p40 = scmp.ne.s32.totalorder %s23, %s39
    %p41 = scmp.eq.s32.totalorder %s15, 0
    %p42 = por %p40, %p41
    %s44 = sadd.s32 %s43, 1
    %p47 = scmp.eq.s32.totalorder %s9, 1
    %p48 = scmp.ne.s32.totalorder %s43, %s45
    %p49 = scmp.eq.s32.totalorder %s9, 0
    %p50 = por %p48, %p49
    %p51 = scmp.ne.s32.totalorder %s43, %s45
    %p52 = scmp.eq.s32.totalorder %s14, 1
    %p53 = por %p51, %p52
    %p54 = scmp.ne.s32.totalorder %s45, %s46
    %p55 = scmp.eq.s32.totalorder %s14, 0
    %p56 = por %p54, %p55
    %p57 = scmp.ne.s32.totalorder %s45, %s46
    %p58 = scmp.eq.s32.totalorder %s15, 1
    %p59 = por %p57, %p58
    %p61 = scmp.ne.s32.totalorder %s46, %s60
    %p62 = scmp.eq.s32.totalorder %s15, 0
    %p63 = por %p61, %p62
    %s65 = sadd.s32 %s64, 1
    %p68 = scmp.eq.s32.totalorder %s9, 1
    %p69 = scmp.ne.s32.totalorder %s64, %s66
    %p70 = scmp.eq.s32.totalorder %s9, 0
    %p71 = por %p69, %p70
    %p72 = scmp.ne.s32.totalorder %s64, %s66
    %p73 = scmp.eq.s32.totalorder %s14, 1
    %p74 = por %p72, %p73
    %p75 = scmp.ne.s32.totalorder %s66, %s67
    %p76 = scmp.eq.s32.totalorder %s14, 0
    %p77 = por %p75, %p76
    %p78 = scmp.ne.s32.totalorder %s66, %s67
    %p79 = scmp.eq.s32.totalorder %s15, 1
    %p80 = por %p78, %p79
    %p82 = scmp.ne.s32.totalorder %s67, %s81
    %p83 = scmp.eq.s32.totalorder %s15, 0
    %p84 = por %p82, %p83
    %s85 = ssub.s32 %s9, %s16
    %p86 = scmp.eq.s32.totalorder %s85, 0
    %s88 = sadd.s32 %s87, 1
    %s89 = scalar_select %p86, %s87, %s88
    %p92 = pneg %p86
    %p93 = scmp.eq.s32.totalorder %s9, 1
    %p94 = por %p92, %p93
    %p95 = scmp.ne.s32.totalorder %s87, %s90
    %p96 = scmp.eq.s32.totalorder %s9, 0
    %p97 = por %p95, %p96
    %p98 = scmp.ne.s32.totalorder %s87, %s90
    %p99 = scmp.eq.s32.totalorder %s14, 1
    %p100 = por %p98, %p99
    %p101 = scmp.ne.s32.totalorder %s90, %s91
    %p102 = scmp.eq.s32.totalorder %s14, 0
    %p103 = por %p101, %p102
    %p104 = scmp.ne.s32.totalorder %s90, %s91
    %p105 = scmp.eq.s32.totalorder %s15, 1
    %p106 = por %p104, %p105
    %p108 = scmp.ne.s32.totalorder %s91, %s107
    %p109 = scmp.eq.s32.totalorder %s15, 0
    %p110 = por %p108, %p109
    %p111 = scmp.le.s32.totalorder 1, %s9
    %p112 = scmp.lt.s32.totalorder %s9, 3
    %p113 = pnand %p111, %p112
    %p114 = pneg %p113
    // Predicated region
    $region9: #{up_block_forward.5} parent=5 // pred_check
      _
    $region10: #{up_block_forward.5} parent=5 // pred_check_branch
      %116 = sbr.rel (%p113) target = $region12
    $region11: #{up_block_forward.5} parent=5 // pred_region
      %s117 = ssub.s32 %s9, 1
      // Predicated region
      $region13: #{up_block_forward.5} parent=11 // pred_check
        %p118 = pneg %p56
      $region14: #{up_block_forward.5} parent=11 // pred_check_branch
        %120 = sbr.rel (%p118) target = $region16
      $region15: #{up_block_forward.5} parent=11 // pred_region
        _
      $region16: #{up_block_forward.5} parent=11 // pred_fallthru
        _
      // Predicated region
      $region17: #{up_block_forward.5} parent=11 // pred_check
        %p121 = pneg %p77
      $region18: #{up_block_forward.5} parent=11 // pred_check_branch
        %123 = sbr.rel (%p121) target = $region20
      $region19: #{up_block_forward.5} parent=11 // pred_region
        _
      $region20: #{up_block_forward.5} parent=11 // pred_fallthru
        _
    $region12: #{up_block_forward.5} parent=5 // pred_fallthru
      _
    %p124 = scmp.lt.s32.totalorder %s9, 2
    // Predicated region
    $region21: #{up_block_forward.5} parent=5 // pred_check
      %p125 = pneg %p124
    $region22: #{up_block_forward.5} parent=5 // pred_check_branch
      %127 = sbr.rel (%p125) target = $region24
    $region23: #{up_block_forward.5} parent=5 // pred_region
      // Predicated region
      $region25: #{up_block_forward.5} parent=23 // pred_check
        %p128 = pneg %p29
      $region26: #{up_block_forward.5} parent=23 // pred_check_branch
        %130 = sbr.rel (%p128) target = $region28
      $region27: #{up_block_forward.5} parent=23 // pred_region
        %p131 = scmp.lt.s32.totalorder %s9, 1
        %s132 = scalar_select %p131, %s9, 1
        %s133 = smul.addr %s132, 32
        %s134 = smul.addr %s133, 8
        %s135 = scalar_lea.vmem %s0, %s134
      $region28: #{up_block_forward.5} parent=23 // pred_fallthru
        _
    $region24: #{up_block_forward.5} parent=5 // pred_fallthru
      _
    %p136 = scmp.le.s32.totalorder 1, %s9
    %p137 = scmp.lt.s32.totalorder %s9, 3
    %p138 = pnand %p136, %p137
    %p139 = pneg %p138
    // Predicated region
    $region29: #{up_block_forward.5} parent=5 // pred_check
      _
    $region30: #{up_block_forward.5} parent=5 // pred_check_branch
      %141 = sbr.rel (%p138) target = $region32
    $region31: #{up_block_forward.5} parent=5 // pred_region
      %s142 = ssub.s32 %s9, 1
      %p143 = scmp.lt.s32.totalorder %s14, 1
      %s144 = scalar_select %p143, %s14, 1
      %s145 = smul.addr %s144, 32
      %s146 = smul.addr %s145, 8
      %s147 = scalar_lea.vmem %s0, %s146
      %p148 = pneg %p35
      %p149 = pneg %p32
      %p150 = pneg %p56
      %p151 = pneg %p53
      %p152 = pneg %p77
      %p153 = pneg %p74
      %p154 = pneg %p103
      %p155 = pneg %p100
      %p156 = scmp.lt.s32.totalorder %s14, 1
      %s157 = scalar_select %p156, %s14, 1
      %s158 = smul.addr %s157, 32
      %s159 = smul.addr %s158, 8
      %s160 = scalar_lea.vmem %s3, %s159
      %p161 = scmp.lt.s32.totalorder %s14, 1
      %s162 = scalar_select %p161, %s14, 1
      %s163 = smul.addr %s162, 32
      %s164 = smul.addr %s163, 8
      %s165 = scalar_lea.vmem %s0, %s164
      %p166 = scmp.lt.s32.totalorder %s14, 1
      %s167 = scalar_select %p166, %s14, 1
      %s168 = smul.addr %s167, 32
      %s169 = smul.addr %s168, 8
      %s170 = scalar_lea.vmem %s3, %s169
      %v171 = vld [vmem:[%s165] sm:$0xff]
      %v172 = vld [vmem:[%s165 + $0x8] sm:$0xff]
      %v173 = vld [vmem:[%s165 + $0x10] sm:$0xff]
      %v174 = vld [vmem:[%s165 + $0x18] sm:$0xff]
      %v175 = vld [vmem:[%s165 + $0x20] sm:$0xff]
      %v176 = vld [vmem:[%s165 + $0x28] sm:$0xff]
      %v177 = vld [vmem:[%s165 + $0x30] sm:$0xff]
      %v178 = vld [vmem:[%s165 + $0x38] sm:$0xff]
      %v179 = vld [vmem:[%s165 + $0x40] sm:$0xff]
      %v180 = vld [vmem:[%s165 + $0x48] sm:$0xff]
      %v181 = vld [vmem:[%s165 + $0x50] sm:$0xff]
      %v182 = vld [vmem:[%s165 + $0x58] sm:$0xff]
      %v183 = vld [vmem:[%s165 + $0x60] sm:$0xff]
      %v184 = vld [vmem:[%s165 + $0x68] sm:$0xff]
      %v185 = vld [vmem:[%s165 + $0x70] sm:$0xff]
      %v186 = vld [vmem:[%s165 + $0x78] sm:$0xff]
      %v187 = vld [vmem:[%s165 + $0x80] sm:$0xff]
      %v188 = vld [vmem:[%s165 + $0x88] sm:$0xff]
      %v189 = vld [vmem:[%s165 + $0x90] sm:$0xff]
      %v190 = vld [vmem:[%s165 + $0x98] sm:$0xff]
      %v191 = vld [vmem:[%s165 + $0xa0] sm:$0xff]
      %v192 = vld [vmem:[%s165 + $0xa8] sm:$0xff]
      %v193 = vld [vmem:[%s165 + $0xb0] sm:$0xff]
      %v194 = vld [vmem:[%s165 + $0xb8] sm:$0xff]
      %v195 = vld [vmem:[%s165 + $0xc0] sm:$0xff]
      %v196 = vld [vmem:[%s165 + $0xc8] sm:$0xff]
      %v197 = vld [vmem:[%s165 + $0xd0] sm:$0xff]
      %v198 = vld [vmem:[%s165 + $0xd8] sm:$0xff]
      %v199 = vld [vmem:[%s165 + $0xe0] sm:$0xff]
      %v200 = vld [vmem:[%s165 + $0xe8] sm:$0xff]
      %v201 = vld [vmem:[%s165 + $0xf0] sm:$0xff]
      %v202 = vld [vmem:[%s165 + $0xf8] sm:$0xff]
      %v203 = vld [vmem:[%s1] sm:$0x1]
      %v205 = vlaneseq
      %v206 = vshrl.u32 %v205, 7
      %v207 = vsub.s32 0, %v206
      %v208 = vrot.slane %v203, %v207
      %v210 = vmul.f32 %v171, %v208
      %v211 = vmul.f32 %v172, %v208
      %v212 = vmul.f32 %v173, %v208
      %v213 = vmul.f32 %v174, %v208
      %v214 = vmul.f32 %v175, %v208
      %v215 = vmul.f32 %v176, %v208
      %v216 = vmul.f32 %v177, %v208
      %v217 = vmul.f32 %v178, %v208
      %v218 = vmul.f32 %v179, %v208
      %v219 = vmul.f32 %v180, %v208
      %v220 = vmul.f32 %v181, %v208
      %v221 = vmul.f32 %v182, %v208
      %v222 = vmul.f32 %v183, %v208
      %v223 = vmul.f32 %v184, %v208
      %v224 = vmul.f32 %v185, %v208
      %v225 = vmul.f32 %v186, %v208
      %v226 = vmul.f32 %v187, %v208
      %v227 = vmul.f32 %v188, %v208
      %v228 = vmul.f32 %v189, %v208
      %v229 = vmul.f32 %v190, %v208
      %v230 = vmul.f32 %v191, %v208
      %v231 = vmul.f32 %v192, %v208
      %v232 = vmul.f32 %v193, %v208
      %v233 = vmul.f32 %v194, %v208
      %v234 = vmul.f32 %v195, %v208
      %v235 = vmul.f32 %v196, %v208
      %v236 = vmul.f32 %v197, %v208
      %v237 = vmul.f32 %v198, %v208
      %v238 = vmul.f32 %v199, %v208
      %v239 = vmul.f32 %v200, %v208
      %v240 = vmul.f32 %v201, %v208
      %v241 = vmul.f32 %v202, %v208
      %v242 = vld [vmem:[%s2] sm:$0x1]
      %v244 = vlaneseq
      %v245 = vshrl.u32 %v244, 7
      %v246 = vsub.s32 0, %v245
      %v247 = vrot.slane %v242, %v246
      %v249 = vadd.f32 %v210, %v247
      %v250 = vadd.f32 %v211, %v247
      %v251 = vadd.f32 %v212, %v247
      %v252 = vadd.f32 %v213, %v247
      %v253 = vadd.f32 %v214, %v247
      %v254 = vadd.f32 %v215, %v247
      %v255 = vadd.f32 %v216, %v247
      %v256 = vadd.f32 %v217, %v247
      %v257 = vadd.f32 %v218, %v247
      %v258 = vadd.f32 %v219, %v247
      %v259 = vadd.f32 %v220, %v247
      %v260 = vadd.f32 %v221, %v247
      %v261 = vadd.f32 %v222, %v247
      %v262 = vadd.f32 %v223, %v247
      %v263 = vadd.f32 %v224, %v247
      %v264 = vadd.f32 %v225, %v247
      %v265 = vadd.f32 %v226, %v247
      %v266 = vadd.f32 %v227, %v247
      %v267 = vadd.f32 %v228, %v247
      %v268 = vadd.f32 %v229, %v247
      %v269 = vadd.f32 %v230, %v247
      %v270 = vadd.f32 %v231, %v247
      %v271 = vadd.f32 %v232, %v247
      %v272 = vadd.f32 %v233, %v247
      %v273 = vadd.f32 %v234, %v247
      %v274 = vadd.f32 %v235, %v247
      %v275 = vadd.f32 %v236, %v247
      %v276 = vadd.f32 %v237, %v247
      %v277 = vadd.f32 %v238, %v247
      %v278 = vadd.f32 %v239, %v247
      %v279 = vadd.f32 %v240, %v247
      %v280 = vadd.f32 %v241, %v247
      %v281 = vmax.f32 %v249, 0.0
      %v282 = vmax.f32 %v250, 0.0
      %v283 = vmax.f32 %v251, 0.0
      %v284 = vmax.f32 %v252, 0.0
      %v285 = vmax.f32 %v253, 0.0
      %v286 = vmax.f32 %v254, 0.0
      %v287 = vmax.f32 %v255, 0.0
      %v288 = vmax.f32 %v256, 0.0
      %v289 = vmax.f32 %v257, 0.0
      %v290 = vmax.f32 %v258, 0.0
      %v291 = vmax.f32 %v259, 0.0
      %v292 = vmax.f32 %v260, 0.0
      %v293 = vmax.f32 %v261, 0.0
      %v294 = vmax.f32 %v262, 0.0
      %v295 = vmax.f32 %v263, 0.0
      %v296 = vmax.f32 %v264, 0.0
      %v297 = vmax.f32 %v265, 0.0
      %v298 = vmax.f32 %v266, 0.0
      %v299 = vmax.f32 %v267, 0.0
      %v300 = vmax.f32 %v268, 0.0
      %v301 = vmax.f32 %v269, 0.0
      %v302 = vmax.f32 %v270, 0.0
      %v303 = vmax.f32 %v271, 0.0
      %v304 = vmax.f32 %v272, 0.0
      %v305 = vmax.f32 %v273, 0.0
      %v306 = vmax.f32 %v274, 0.0
      %v307 = vmax.f32 %v275, 0.0
      %v308 = vmax.f32 %v276, 0.0
      %v309 = vmax.f32 %v277, 0.0
      %v310 = vmax.f32 %v278, 0.0
      %v311 = vmax.f32 %v279, 0.0
      %v312 = vmax.f32 %v280, 0.0
      %vm313 = vcmask 31744
      %314 = vst.msk [vmem:[%s170] sm:$0xff] %vm313, %v281
      %315 = vst.msk [vmem:[%s170 + $0x8] sm:$0xff] %vm313, %v282
      %316 = vst.msk [vmem:[%s170 + $0x10] sm:$0xff] %vm313, %v283
      %317 = vst.msk [vmem:[%s170 + $0x18] sm:$0xff] %vm313, %v284
      %318 = vst.msk [vmem:[%s170 + $0x20] sm:$0xff] %vm313, %v285
      %319 = vst.msk [vmem:[%s170 + $0x28] sm:$0xff] %vm313, %v286
      %320 = vst.msk [vmem:[%s170 + $0x30] sm:$0xff] %vm313, %v287
      %321 = vst.msk [vmem:[%s170 + $0x38] sm:$0xff] %vm313, %v288
      %322 = vst.msk [vmem:[%s170 + $0x40] sm:$0xff] %vm313, %v289
      %323 = vst.msk [vmem:[%s170 + $0x48] sm:$0xff] %vm313, %v290
      %324 = vst.msk [vmem:[%s170 + $0x50] sm:$0xff] %vm313, %v291
      %325 = vst.msk [vmem:[%s170 + $0x58] sm:$0xff] %vm313, %v292
      %326 = vst.msk [vmem:[%s170 + $0x60] sm:$0xff] %vm313, %v293
      %327 = vst.msk [vmem:[%s170 + $0x68] sm:$0xff] %vm313, %v294
      %328 = vst.msk [vmem:[%s170 + $0x70] sm:$0xff] %vm313, %v295
      %329 = vst.msk [vmem:[%s170 + $0x78] sm:$0xff] %vm313, %v296
      %330 = vst.msk [vmem:[%s170 + $0x80] sm:$0xff] %vm313, %v297
      %331 = vst.msk [vmem:[%s170 + $0x88] sm:$0xff] %vm313, %v298
      %332 = vst.msk [vmem:[%s170 + $0x90] sm:$0xff] %vm313, %v299
      %333 = vst.msk [vmem:[%s170 + $0x98] sm:$0xff] %vm313, %v300
      %334 = vst.msk [vmem:[%s170 + $0xa0] sm:$0xff] %vm313, %v301
      %335 = vst.msk [vmem:[%s170 + $0xa8] sm:$0xff] %vm313, %v302
      %336 = vst.msk [vmem:[%s170 + $0xb0] sm:$0xff] %vm313, %v303
      %337 = vst.msk [vmem:[%s170 + $0xb8] sm:$0xff] %vm313, %v304
      %338 = vst.msk [vmem:[%s170 + $0xc0] sm:$0xff] %vm313, %v305
      %339 = vst.msk [vmem:[%s170 + $0xc8] sm:$0xff] %vm313, %v306
      %340 = vst.msk [vmem:[%s170 + $0xd0] sm:$0xff] %vm313, %v307
      %341 = vst.msk [vmem:[%s170 + $0xd8] sm:$0xff] %vm313, %v308
      %342 = vst.msk [vmem:[%s170 + $0xe0] sm:$0xff] %vm313, %v309
      %343 = vst.msk [vmem:[%s170 + $0xe8] sm:$0xff] %vm313, %v310
      %344 = vst.msk [vmem:[%s170 + $0xf0] sm:$0xff] %vm313, %v311
      %345 = vst.msk [vmem:[%s170 + $0xf8] sm:$0xff] %vm313, %v312
      %p346 = scmp.lt.s32.totalorder %s14, 1
      %s347 = scalar_select %p346, %s14, 1
      %s348 = smul.addr %s347, 32
      %s349 = smul.addr %s348, 8
      %s350 = scalar_lea.vmem %s3, %s349
      // Predicated region
      $region33: #{up_block_forward.5} parent=31 // pred_check
        %p351 = pneg %p100
      $region34: #{up_block_forward.5} parent=31 // pred_check_branch
        %353 = sbr.rel (%p351) target = $region36
      $region35: #{up_block_forward.5} parent=31 // pred_region
        _
      $region36: #{up_block_forward.5} parent=31 // pred_fallthru
        _
    $region32: #{up_block_forward.5} parent=5 // pred_fallthru
      _
    %p354 = scmp.le.s32.totalorder 2, %s9
    // Predicated region
    $region37: #{up_block_forward.5} parent=5 // pred_check
      %p355 = pneg %p354
    $region38: #{up_block_forward.5} parent=5 // pred_check_branch
      %357 = sbr.rel (%p355) target = $region40
    $region39: #{up_block_forward.5} parent=5 // pred_region
      %s358 = ssub.s32 %s9, 2
      // Predicated region
      $region41: #{up_block_forward.5} parent=39 // pred_check
        %p359 = pneg %p106
      $region42: #{up_block_forward.5} parent=39 // pred_check_branch
        %361 = sbr.rel (%p359) target = $region44
      $region43: #{up_block_forward.5} parent=39 // pred_region
        %p362 = scmp.lt.s32.totalorder %s15, 1
        %s363 = scalar_select %p362, %s15, 1
        %s364 = smul.addr %s363, 32
        %s365 = smul.addr %s364, 8
        %s366 = scalar_lea.vmem %s3, %s365
      $region44: #{up_block_forward.5} parent=39 // pred_fallthru
        _
    $region40: #{up_block_forward.5} parent=5 // pred_fallthru
      _
  $region6: #{up_block_forward.5} parent=0 // loop_footer
    %s13 = sadd.s32 1, %s9
  $region7: #{up_block_forward.5} parent=0 // loop_footer_branch
    %8 = sbr.rel target = $region3
  $region8: #{up_block_forward.5} parent=0 // loop_exit
    _

// kernel: up_block_forward.4
$region0: #{up_block_forward.4}
  #allocation0 [shape = 'u32[]', space=smem, size = 0x4, offset = 0x4, fixed_abs, tag = 'smem constant byte address 0x4 - core index']
  #allocation1 [shape = 'u32[144,128]{1,0:T(1,128)}', space=vmem, size = 0x12000, scoped, tag = 'internal scratch']
  #allocation2 [shape = 'f32[18,18,4]{2,1,0:T(8,128)}', space=vmem, size = 0x36000, scoped, tag = 'scratch operand']
  %s0 = inlined_call_operand.vmem [shape: f32[2,16,16,4], index: 0, kind: input, shape index: {}]
  %s1 = inlined_call_operand.vmem [shape: f32[1,4], index: 1, kind: input, shape index: {}]
  %s2 = inlined_call_operand.vmem [shape: f32[1,4], index: 2, kind: input, shape index: {}]
  %s3 = inlined_call_operand.vmem [shape: f32[36,4], index: 3, kind: input, shape index: {}]
  %s4 = inlined_call_operand.vmem [shape: f32[1,4], index: 4, kind: input, shape index: {}]
  %s5 = inlined_call_operand.vmem [shape: f32[2,16,16,4], index: 5, kind: output, shape index: {0}]
  %s6 = inlined_call_operand.vmem [shape: f32[2,2,4], index: 6, kind: output, shape index: {1}]
  %7 = xla_tuple %s5, %s6
  %s8 = sld [smem:[#allocation0]]
  $region61: #{up_block_forward.4} parent=0
    _
  %s10 = ssub.s32 1, %s8
  %s11 = scalar_select 0, %s10, %s8
  loop: start=0, step=1, limit=4
  $region2: #{up_block_forward.4} parent=0 // loop_pre_header
    _
  $region3: #{up_block_forward.4} parent=0 // loop_header
    %s13 = sphi 0, %s17
    %p14 = scmp.ge.s32.totalorder %s13, 4
    %s23 = sphi 0, %s25
    %s26 = sphi 0, %s23
    %s27 = sphi 0, %s26
    %s43 = sphi 0, %s27
    %s47 = sphi 0, %s47
    %s49 = sphi 0, %s47
    %s50 = sphi 0, %s49
    %s64 = sphi 0, %s50
    %s68 = sphi 0, %s68
    %s70 = sphi 0, %s68
    %s71 = sphi 0, %s70
    %s85 = sphi 0, %s71
    %s89 = sphi 0, %s89
    %s91 = sphi 0, %s89
    %s92 = sphi 0, %s91
    %s106 = sphi 0, %s92
    %s110 = sphi 0, %s110
    %s112 = sphi 0, %s110
    %s113 = sphi 0, %s112
    %s127 = sphi 0, %s113
    %s133 = sphi 0, %s135
    %s136 = sphi 0, %s133
    %s137 = sphi 0, %s136
    %s153 = sphi 0, %s137
    %s159 = sphi 0, %s161
    %s162 = sphi 0, %s159
    %s163 = sphi 0, %s162
    %s179 = sphi 0, %s163
  $region4: #{up_block_forward.4} parent=0 // loop_header_branch
    %16 = sbr.rel (%p14) target = $region8
  $region5: #{up_block_forward.4} parent=0 // loop_body
    %s18 = ssub.s32 %s13, 1
    %s19 = ssub.s32 %s13, 2
    %s20 = sadd.s32 %s13, 1
    %s21 = ssub.s32 %s13, %s20
    %p22 = scmp.eq.s32.totalorder %s21, 0
    %s24 = sadd.s32 %s23, 1
    %s25 = scalar_select %p22, %s23, %s24
    %p28 = pneg %p22
    %p29 = scmp.eq.s32.totalorder %s13, 1
    %p30 = por %p28, %p29
    %p31 = scmp.ne.s32.totalorder %s23, %s26
    %p32 = scmp.eq.s32.totalorder %s13, 0
    %p33 = por %p31, %p32
    %p34 = scmp.ne.s32.totalorder %s23, %s26
    %p35 = scmp.eq.s32.totalorder %s18, 1
    %p36 = por %p34, %p35
    %p37 = scmp.ne.s32.totalorder %s26, %s27
    %p38 = scmp.eq.s32.totalorder %s18, 0
    %p39 = por %p37, %p38
    %p40 = scmp.ne.s32.totalorder %s26, %s27
    %p41 = scmp.eq.s32.totalorder %s19, 1
    %p42 = por %p40, %p41
    %p44 = scmp.ne.s32.totalorder %s27, %s43
    %p45 = scmp.eq.s32.totalorder %s19, 0
    %p46 = por %p44, %p45
    %s48 = sadd.s32 %s47, 1
    %p51 = scmp.eq.s32.totalorder %s13, 1
    %p52 = scmp.ne.s32.totalorder %s47, %s49
    %p53 = scmp.eq.s32.totalorder %s13, 0
    %p54 = por %p52, %p53
    %p55 = scmp.ne.s32.totalorder %s47, %s49
    %p56 = scmp.eq.s32.totalorder %s18, 1
    %p57 = por %p55, %p56
    %p58 = scmp.ne.s32.totalorder %s49, %s50
    %p59 = scmp.eq.s32.totalorder %s18, 0
    %p60 = por %p58, %p59
    %p61 = scmp.ne.s32.totalorder %s49, %s50
    %p62 = scmp.eq.s32.totalorder %s19, 1
    %p63 = por %p61, %p62
    %p65 = scmp.ne.s32.totalorder %s50, %s64
    %p66 = scmp.eq.s32.totalorder %s19, 0
    %p67 = por %p65, %p66
    %s69 = sadd.s32 %s68, 1
    %p72 = scmp.eq.s32.totalorder %s13, 1
    %p73 = scmp.ne.s32.totalorder %s68, %s70
    %p74 = scmp.eq.s32.totalorder %s13, 0
    %p75 = por %p73, %p74
    %p76 = scmp.ne.s32.totalorder %s68, %s70
    %p77 = scmp.eq.s32.totalorder %s18, 1
    %p78 = por %p76, %p77
    %p79 = scmp.ne.s32.totalorder %s70, %s71
    %p80 = scmp.eq.s32.totalorder %s18, 0
    %p81 = por %p79, %p80
    %p82 = scmp.ne.s32.totalorder %s70, %s71
    %p83 = scmp.eq.s32.totalorder %s19, 1
    %p84 = por %p82, %p83
    %p86 = scmp.ne.s32.totalorder %s71, %s85
    %p87 = scmp.eq.s32.totalorder %s19, 0
    %p88 = por %p86, %p87
    %s90 = sadd.s32 %s89, 1
    %p93 = scmp.eq.s32.totalorder %s13, 1
    %p94 = scmp.ne.s32.totalorder %s89, %s91
    %p95 = scmp.eq.s32.totalorder %s13, 0
    %p96 = por %p94, %p95
    %p97 = scmp.ne.s32.totalorder %s89, %s91
    %p98 = scmp.eq.s32.totalorder %s18, 1
    %p99 = por %p97, %p98
    %p100 = scmp.ne.s32.totalorder %s91, %s92
    %p101 = scmp.eq.s32.totalorder %s18, 0
    %p102 = por %p100, %p101
    %p103 = scmp.ne.s32.totalorder %s91, %s92
    %p104 = scmp.eq.s32.totalorder %s19, 1
    %p105 = por %p103, %p104
    %p107 = scmp.ne.s32.totalorder %s92, %s106
    %p108 = scmp.eq.s32.totalorder %s19, 0
    %p109 = por %p107, %p108
    %s111 = sadd.s32 %s110, 1
    %p114 = scmp.eq.s32.totalorder %s13, 1
    %p115 = scmp.ne.s32.totalorder %s110, %s112
    %p116 = scmp.eq.s32.totalorder %s13, 0
    %p117 = por %p115, %p116
    %p118 = scmp.ne.s32.totalorder %s110, %s112
    %p119 = scmp.eq.s32.totalorder %s18, 1
    %p120 = por %p118, %p119
    %p121 = scmp.ne.s32.totalorder %s112, %s113
    %p122 = scmp.eq.s32.totalorder %s18, 0
    %p123 = por %p121, %p122
    %p124 = scmp.ne.s32.totalorder %s112, %s113
    %p125 = scmp.eq.s32.totalorder %s19, 1
    %p126 = por %p124, %p125
    %p128 = scmp.ne.s32.totalorder %s113, %s127
    %p129 = scmp.eq.s32.totalorder %s19, 0
    %p130 = por %p128, %p129
    %s131 = ssub.s32 %s13, %s20
    %p132 = scmp.eq.s32.totalorder %s131, 0
    %s134 = sadd.s32 %s133, 1
    %s135 = scalar_select %p132, %s133, %s134
    %p138 = pneg %p132
    %p139 = scmp.eq.s32.totalorder %s13, 1
    %p140 = por %p138, %p139
    %p141 = scmp.ne.s32.totalorder %s133, %s136
    %p142 = scmp.eq.s32.totalorder %s13, 0
    %p143 = por %p141, %p142
    %p144 = scmp.ne.s32.totalorder %s133, %s136
    %p145 = scmp.eq.s32.totalorder %s18, 1
    %p146 = por %p144, %p145
    %p147 = scmp.ne.s32.totalorder %s136, %s137
    %p148 = scmp.eq.s32.totalorder %s18, 0
    %p149 = por %p147, %p148
    %p150 = scmp.ne.s32.totalorder %s136, %s137
    %p151 = scmp.eq.s32.totalorder %s19, 1
    %p152 = por %p150, %p151
    %p154 = scmp.ne.s32.totalorder %s137, %s153
    %p155 = scmp.eq.s32.totalorder %s19, 0
    %p156 = por %p154, %p155
    %s157 = ssub.s32 %s13, %s20
    %p158 = scmp.eq.s32.totalorder %s157, 0
    %s160 = sadd.s32 %s159, 1
    %s161 = scalar_select %p158, %s159, %s160
    %p164 = pneg %p158
    %p165 = scmp.eq.s32.totalorder %s13, 1
    %p166 = por %p164, %p165
    %p167 = scmp.ne.s32.totalorder %s159, %s162
    %p168 = scmp.eq.s32.totalorder %s13, 0
    %p169 = por %p167, %p168
    %p170 = scmp.ne.s32.totalorder %s159, %s162
    %p171 = scmp.eq.s32.totalorder %s18, 1
    %p172 = por %p170, %p171
    %p173 = scmp.ne.s32.totalorder %s162, %s163
    %p174 = scmp.eq.s32.totalorder %s18, 0
    %p175 = por %p173, %p174
    %p176 = scmp.ne.s32.totalorder %s162, %s163
    %p177 = scmp.eq.s32.totalorder %s19, 1
    %p178 = por %p176, %p177
    %p180 = scmp.ne.s32.totalorder %s163, %s179
    %p181 = scmp.eq.s32.totalorder %s19, 0
    %p182 = por %p180, %p181
    %p183 = scmp.le.s32.totalorder 1, %s13
    %p184 = scmp.lt.s32.totalorder %s13, 3
    %p185 = pnand %p183, %p184
    %p186 = pneg %p185
    // Predicated region
    $region9: #{up_block_forward.4} parent=5 // pred_check
      _
    $region10: #{up_block_forward.4} parent=5 // pred_check_branch
      %188 = sbr.rel (%p185) target = $region12
    $region11: #{up_block_forward.4} parent=5 // pred_region
      %s189 = ssub.s32 %s13, 1
      // Predicated region
      $region13: #{up_block_forward.4} parent=11 // pred_check
        %p190 = pneg %p60
      $region14: #{up_block_forward.4} parent=11 // pred_check_branch
        %192 = sbr.rel (%p190) target = $region16
      $region15: #{up_block_forward.4} parent=11 // pred_region
        _
      $region16: #{up_block_forward.4} parent=11 // pred_fallthru
        _
      // Predicated region
      $region17: #{up_block_forward.4} parent=11 // pred_check
        %p193 = pneg %p81
      $region18: #{up_block_forward.4} parent=11 // pred_check_branch
        %195 = sbr.rel (%p193) target = $region20
      $region19: #{up_block_forward.4} parent=11 // pred_region
        _
      $region20: #{up_block_forward.4} parent=11 // pred_fallthru
        _
      // Predicated region
      $region21: #{up_block_forward.4} parent=11 // pred_check
        %p196 = pneg %p102
      $region22: #{up_block_forward.4} parent=11 // pred_check_branch
        %198 = sbr.rel (%p196) target = $region24
      $region23: #{up_block_forward.4} parent=11 // pred_region
        _
      $region24: #{up_block_forward.4} parent=11 // pred_fallthru
        _
      // Predicated region
      $region25: #{up_block_forward.4} parent=11 // pred_check
        %p199 = pneg %p123
      $region26: #{up_block_forward.4} parent=11 // pred_check_branch
        %201 = sbr.rel (%p199) target = $region28
      $region27: #{up_block_forward.4} parent=11 // pred_region
        _
      $region28: #{up_block_forward.4} parent=11 // pred_fallthru
        _
    $region12: #{up_block_forward.4} parent=5 // pred_fallthru
      _
    %p202 = scmp.lt.s32.totalorder %s13, 2
    // Predicated region
    $region29: #{up_block_forward.4} parent=5 // pred_check
      %p203 = pneg %p202
    $region30: #{up_block_forward.4} parent=5 // pred_check_branch
      %205 = sbr.rel (%p203) target = $region32
    $region31: #{up_block_forward.4} parent=5 // pred_region
      // Predicated region
      $region33: #{up_block_forward.4} parent=31 // pred_check
        %p206 = pneg %p33
      $region34: #{up_block_forward.4} parent=31 // pred_check_branch
        %208 = sbr.rel (%p206) target = $region36
      $region35: #{up_block_forward.4} parent=31 // pred_region
        %p209 = scmp.lt.s32.totalorder %s13, 1
        %s210 = scalar_select %p209, %s13, 1
        %s211 = smul.addr %s210, 32
        %s212 = smul.addr %s211, 8
        %s213 = scalar_lea.vmem %s0, %s212
      $region36: #{up_block_forward.4} parent=31 // pred_fallthru
        _
    $region32: #{up_block_forward.4} parent=5 // pred_fallthru
      _
    %p214 = scmp.le.s32.totalorder 1, %s13
    %p215 = scmp.lt.s32.totalorder %s13, 3
    %p216 = pnand %p214, %p215
    %p217 = pneg %p216
    // Predicated region
    $region37: #{up_block_forward.4} parent=5 // pred_check
      _
    $region38: #{up_block_forward.4} parent=5 // pred_check_branch
      %219 = sbr.rel (%p216) target = $region40
    $region39: #{up_block_forward.4} parent=5 // pred_region
      %s220 = ssub.s32 %s13, 1
      %p221 = scmp.lt.s32.totalorder %s18, 1
      %s222 = scalar_select %p221, %s18, 1
      %s223 = smul.addr %s222, 32
      %s224 = smul.addr %s223, 8
      %s225 = scalar_lea.vmem %s0, %s224
      %p226 = pneg %p39
      %p227 = pneg %p36
      %p228 = pneg %p60
      %p229 = pneg %p57
      %p230 = pneg %p81
      %p231 = pneg %p78
      %p232 = pneg %p102
      %p233 = pneg %p99
      %p234 = pneg %p123
      %p235 = pneg %p120
      %p236 = pneg %p149
      %p237 = pneg %p146
      %p238 = scmp.lt.s32.totalorder %s18, 1
      %s239 = scalar_select %p238, %s18, 1
      %s240 = smul.addr %s239, 32
      %s241 = smul.addr %s240, 8
      %s242 = scalar_lea.vmem %s5, %s241
      %p243 = pneg %p175
      %p244 = pneg %p172
      %p245 = scmp.lt.s32.totalorder %s18, 1
      %s246 = scalar_select %p245, %s18, 1
      %s247 = smul.addr %s246, 2
      %s248 = scalar_lea.vmem %s6, %s247
      %p249 = scmp.lt.s32.totalorder %s18, 1
      %s250 = scalar_select %p249, %s18, 1
      %s251 = smul.addr %s250, 32
      %s252 = smul.addr %s251, 8
      %s253 = scalar_lea.vmem %s0, %s252
      %p254 = scmp.lt.s32.totalorder %s18, 1
      %s255 = scalar_select %p254, %s18, 1
      %s256 = smul.addr %s255, 32
      %s257 = smul.addr %s256, 8
      %s258 = scalar_lea.vmem %s5, %s257
      %p259 = scmp.lt.s32.totalorder %s18, 1
      %s260 = scalar_select %p259, %s18, 1
      %s261 = smul.addr %s260, 2
      %s262 = scalar_lea.vmem %s6, %s261
      %v263 = vld [vmem:[%s253] sm:$0xff]
      %v264 = vld [vmem:[%s253 + $0x8] sm:$0xff]
      %v265 = vld [vmem:[%s253 + $0x10] sm:$0xff]
      %v266 = vld [vmem:[%s253 + $0x18] sm:$0xff]
      %v267 = vld [vmem:[%s253 + $0x20] sm:$0xff]
      %v268 = vld [vmem:[%s253 + $0x28] sm:$0xff]
      %v269 = vld [vmem:[%s253 + $0x30] sm:$0xff]
      %v270 = vld [vmem:[%s253 + $0x38] sm:$0xff]
      %v271 = vld [vmem:[%s253 + $0x40] sm:$0xff]
      %v272 = vld [vmem:[%s253 + $0x48] sm:$0xff]
      %v273 = vld [vmem:[%s253 + $0x50] sm:$0xff]
      %v274 = vld [vmem:[%s253 + $0x58] sm:$0xff]
      %v275 = vld [vmem:[%s253 + $0x60] sm:$0xff]
      %v276 = vld [vmem:[%s253 + $0x68] sm:$0xff]
      %v277 = vld [vmem:[%s253 + $0x70] sm:$0xff]
      %v278 = vld [vmem:[%s253 + $0x78] sm:$0xff]
      %v279 = vld [vmem:[%s253 + $0x80] sm:$0xff]
      %v280 = vld [vmem:[%s253 + $0x88] sm:$0xff]
      %v281 = vld [vmem:[%s253 + $0x90] sm:$0xff]
      %v282 = vld [vmem:[%s253 + $0x98] sm:$0xff]
      %v283 = vld [vmem:[%s253 + $0xa0] sm:$0xff]
      %v284 = vld [vmem:[%s253 + $0xa8] sm:$0xff]
      %v285 = vld [vmem:[%s253 + $0xb0] sm:$0xff]
      %v286 = vld [vmem:[%s253 + $0xb8] sm:$0xff]
      %v287 = vld [vmem:[%s253 + $0xc0] sm:$0xff]
      %v288 = vld [vmem:[%s253 + $0xc8] sm:$0xff]
      %v289 = vld [vmem:[%s253 + $0xd0] sm:$0xff]
      %v290 = vld [vmem:[%s253 + $0xd8] sm:$0xff]
      %v291 = vld [vmem:[%s253 + $0xe0] sm:$0xff]
      %v292 = vld [vmem:[%s253 + $0xe8] sm:$0xff]
      %v293 = vld [vmem:[%s253 + $0xf0] sm:$0xff]
      %v294 = vld [vmem:[%s253 + $0xf8] sm:$0xff]
      %v295 = vld [vmem:[%s1] sm:$0x1]
      %v297 = vlaneseq
      %v298 = vshrl.u32 %v297, 7
      %v299 = vsub.s32 0, %v298
      %v300 = vrot.slane %v295, %v299
      %v302 = vmul.f32 %v263, %v300
      %v303 = vmul.f32 %v264, %v300
      %v304 = vmul.f32 %v265, %v300
      %v305 = vmul.f32 %v266, %v300
      %v306 = vmul.f32 %v267, %v300
      %v307 = vmul.f32 %v268, %v300
      %v308 = vmul.f32 %v269, %v300
      %v309 = vmul.f32 %v270, %v300
      %v310 = vmul.f32 %v271, %v300
      %v311 = vmul.f32 %v272, %v300
      %v312 = vmul.f32 %v273, %v300
      %v313 = vmul.f32 %v274, %v300
      %v314 = vmul.f32 %v275, %v300
      %v315 = vmul.f32 %v276, %v300
      %v316 = vmul.f32 %v277, %v300
      %v317 = vmul.f32 %v278, %v300
      %v318 = vmul.f32 %v279, %v300
      %v319 = vmul.f32 %v280, %v300
      %v320 = vmul.f32 %v281, %v300
      %v321 = vmul.f32 %v282, %v300
      %v322 = vmul.f32 %v283, %v300
      %v323 = vmul.f32 %v284, %v300
      %v324 = vmul.f32 %v285, %v300
      %v325 = vmul.f32 %v286, %v300
      %v326 = vmul.f32 %v287, %v300
      %v327 = vmul.f32 %v288, %v300
      %v328 = vmul.f32 %v289, %v300
      %v329 = vmul.f32 %v290, %v300
      %v330 = vmul.f32 %v291, %v300
      %v331 = vmul.f32 %v292, %v300
      %v332 = vmul.f32 %v293, %v300
      %v333 = vmul.f32 %v294, %v300
      %v334 = vld [vmem:[%s2] sm:$0x1]
      %v336 = vlaneseq
      %v337 = vshrl.u32 %v336, 7
      %v338 = vsub.s32 0, %v337
      %v339 = vrot.slane %v334, %v338
      %v341 = vadd.f32 %v302, %v339
      %v342 = vadd.f32 %v303, %v339
      %v343 = vadd.f32 %v304, %v339
      %v344 = vadd.f32 %v305, %v339
      %v345 = vadd.f32 %v306, %v339
      %v346 = vadd.f32 %v307, %v339
      %v347 = vadd.f32 %v308, %v339
      %v348 = vadd.f32 %v309, %v339
      %v349 = vadd.f32 %v310, %v339
      %v350 = vadd.f32 %v311, %v339
      %v351 = vadd.f32 %v312, %v339
      %v352 = vadd.f32 %v313, %v339
      %v353 = vadd.f32 %v314, %v339
      %v354 = vadd.f32 %v315, %v339
      %v355 = vadd.f32 %v316, %v339
      %v356 = vadd.f32 %v317, %v339
      %v357 = vadd.f32 %v318, %v339
      %v358 = vadd.f32 %v319, %v339
      %v359 = vadd.f32 %v320, %v339
      %v360 = vadd.f32 %v321, %v339
      %v361 = vadd.f32 %v322, %v339
      %v362 = vadd.f32 %v323, %v339
      %v363 = vadd.f32 %v324, %v339
      %v364 = vadd.f32 %v325, %v339
      %v365 = vadd.f32 %v326, %v339
      %v366 = vadd.f32 %v327, %v339
      %v367 = vadd.f32 %v328, %v339
      %v368 = vadd.f32 %v329, %v339
      %v369 = vadd.f32 %v330, %v339
      %v370 = vadd.f32 %v331, %v339
      %v371 = vadd.f32 %v332, %v339
      %v372 = vadd.f32 %v333, %v339
      %v373 = vmax.f32 %v341, 0.0
      %v374 = vmax.f32 %v342, 0.0
      %v375 = vmax.f32 %v343, 0.0
      %v376 = vmax.f32 %v344, 0.0
      %v377 = vmax.f32 %v345, 0.0
      %v378 = vmax.f32 %v346, 0.0
      %v379 = vmax.f32 %v347, 0.0
      %v380 = vmax.f32 %v348, 0.0
      %v381 = vmax.f32 %v349, 0.0
      %v382 = vmax.f32 %v350, 0.0
      %v383 = vmax.f32 %v351, 0.0
      %v384 = vmax.f32 %v352, 0.0
      %v385 = vmax.f32 %v353, 0.0
      %v386 = vmax.f32 %v354, 0.0
      %v387 = vmax.f32 %v355, 0.0
      %v388 = vmax.f32 %v356, 0.0
      %v389 = vmax.f32 %v357, 0.0
      %v390 = vmax.f32 %v358, 0.0
      %v391 = vmax.f32 %v359, 0.0
      %v392 = vmax.f32 %v360, 0.0
      %v393 = vmax.f32 %v361, 0.0
      %v394 = vmax.f32 %v362, 0.0
      %v395 = vmax.f32 %v363, 0.0
      %v396 = vmax.f32 %v364, 0.0
      %v397 = vmax.f32 %v365, 0.0
      %v398 = vmax.f32 %v366, 0.0
      %v399 = vmax.f32 %v367, 0.0
      %v400 = vmax.f32 %v368, 0.0
      %v401 = vmax.f32 %v369, 0.0
      %v402 = vmax.f32 %v370, 0.0
      %v403 = vmax.f32 %v371, 0.0
      %v404 = vmax.f32 %v372, 0.0
      %vm405 = vcmask 31744
      %406 = vst.msk [vmem:[#allocation2] sm:$0xff] %vm405, 0.0
      %407 = vst.msk [vmem:[#allocation2 + $0x8] sm:$0xff] %vm405, 0.0
      %vm408 = vcmask 25600
      %409 = vst.msk [vmem:[#allocation2 + $0x10] sm:$0x3] %vm408, 0.0
      %410 = vst.msk [vmem:[#allocation2 + $0x18] sm:$0xff] %vm405, 0.0
      %411 = vst.msk [vmem:[#allocation2 + $0x20] sm:$0xff] %vm405, 0.0
      %412 = vst.msk [vmem:[#allocation2 + $0x28] sm:$0x3] %vm408, 0.0
      %413 = vst.msk [vmem:[#allocation2 + $0x30] sm:$0xff] %vm405, 0.0
      %414 = vst.msk [vmem:[#allocation2 + $0x38] sm:$0xff] %vm405, 0.0
      %415 = vst.msk [vmem:[#allocation2 + $0x40] sm:$0x3] %vm408, 0.0
      %416 = vst.msk [vmem:[#allocation2 + $0x48] sm:$0xff] %vm405, 0.0
      %417 = vst.msk [vmem:[#allocation2 + $0x50] sm:$0xff] %vm405, 0.0
      %418 = vst.msk [vmem:[#allocation2 + $0x58] sm:$0x3] %vm408, 0.0
      %419 = vst.msk [vmem:[#allocation2 + $0x60] sm:$0xff] %vm405, 0.0
      %420 = vst.msk [vmem:[#allocation2 + $0x68] sm:$0xff] %vm405, 0.0
      %421 = vst.msk [vmem:[#allocation2 + $0x70] sm:$0x3] %vm408, 0.0
      %422 = vst.msk [vmem:[#allocation2 + $0x78] sm:$0xff] %vm405, 0.0
      %423 = vst.msk [vmem:[#allocation2 + $0x80] sm:$0xff] %vm405, 0.0
      %424 = vst.msk [vmem:[#allocation2 + $0x88] sm:$0x3] %vm408, 0.0
      %425 = vst.msk [vmem:[#allocation2 + $0x90] sm:$0xff] %vm405, 0.0
      %426 = vst.msk [vmem:[#allocation2 + $0x98] sm:$0xff] %vm405, 0.0
      %427 = vst.msk [vmem:[#allocation2 + $0xa0] sm:$0x3] %vm408, 0.0
      %428 = vst.msk [vmem:[#allocation2 + $0xa8] sm:$0xff] %vm405, 0.0
      %429 = vst.msk [vmem:[#allocation2 + $0xb0] sm:$0xff] %vm405, 0.0
      %430 = vst.msk [vmem:[#allocation2 + $0xb8] sm:$0x3] %vm408, 0.0
      %431 = vst.msk [vmem:[#allocation2 + $0xc0] sm:$0xff] %vm405, 0.0
      %432 = vst.msk [vmem:[#allocation2 + $0xc8] sm:$0xff] %vm405, 0.0
      %433 = vst.msk [vmem:[#allocation2 + $0xd0] sm:$0x3] %vm408, 0.0
      %434 = vst.msk [vmem:[#allocation2 + $0xd8] sm:$0xff] %vm405, 0.0
      %435 = vst.msk [vmem:[#allocation2 + $0xe0] sm:$0xff] %vm405, 0.0
      %436 = vst.msk [vmem:[#allocation2 + $0xe8] sm:$0x3] %vm408, 0.0
      %437 = vst.msk [vmem:[#allocation2 + $0xf0] sm:$0xff] %vm405, 0.0
      %438 = vst.msk [vmem:[#allocation2 + $0xf8] sm:$0xff] %vm405, 0.0
      %439 = vst.msk [vmem:[#allocation2 + $0x100] sm:$0x3] %vm408, 0.0
      %440 = vst.msk [vmem:[#allocation2 + $0x108] sm:$0xff] %vm405, 0.0
      %441 = vst.msk [vmem:[#allocation2 + $0x110] sm:$0xff] %vm405, 0.0
      %442 = vst.msk [vmem:[#allocation2 + $0x118] sm:$0x3] %vm408, 0.0
      %443 = vst.msk [vmem:[#allocation2 + $0x120] sm:$0xff] %vm405, 0.0
      %444 = vst.msk [vmem:[#allocation2 + $0x128] sm:$0xff] %vm405, 0.0
      %445 = vst.msk [vmem:[#allocation2 + $0x130] sm:$0x3] %vm408, 0.0
      %446 = vst.msk [vmem:[#allocation2 + $0x138] sm:$0xff] %vm405, 0.0
      %447 = vst.msk [vmem:[#allocation2 + $0x140] sm:$0xff] %vm405, 0.0
      %448 = vst.msk [vmem:[#allocation2 + $0x148] sm:$0x3] %vm408, 0.0
      %449 = vst.msk [vmem:[#allocation2 + $0x150] sm:$0xff] %vm405, 0.0
      %450 = vst.msk [vmem:[#allocation2 + $0x158] sm:$0xff] %vm405, 0.0
      %451 = vst.msk [vmem:[#allocation2 + $0x160] sm:$0x3] %vm408, 0.0
      %452 = vst.msk [vmem:[#allocation2 + $0x168] sm:$0xff] %vm405, 0.0
      %453 = vst.msk [vmem:[#allocation2 + $0x170] sm:$0xff] %vm405, 0.0
      %454 = vst.msk [vmem:[#allocation2 + $0x178] sm:$0x3] %vm408, 0.0
      %455 = vst.msk [vmem:[#allocation2 + $0x180] sm:$0xff] %vm405, 0.0
      %456 = vst.msk [vmem:[#allocation2 + $0x188] sm:$0xff] %vm405, 0.0
      %457 = vst.msk [vmem:[#allocation2 + $0x190] sm:$0x3] %vm408, 0.0
      %458 = vst.msk [vmem:[#allocation2 + $0x198] sm:$0xff] %vm405, 0.0
      %459 = vst.msk [vmem:[#allocation2 + $0x1a0] sm:$0xff] %vm405, 0.0
      %460 = vst.msk [vmem:[#allocation2 + $0x1a8] sm:$0x3] %vm408, 0.0
      %s461 = scalar_lea.vmem [#allocation2], 24
      %462 = vst.msk [vmem:[%s461 + $0x1] sm:$0xff] %vm405, %v373
      %463 = vst.msk [vmem:[%s461 + $0x9] sm:$0xff] %vm405, %v374
      %464 = vst.msk [vmem:[%s461 + $0x19] sm:$0xff] %vm405, %v375
      %465 = vst.msk [vmem:[%s461 + $0x21] sm:$0xff] %vm405, %v376
      %466 = vst.msk [vmem:[%s461 + $0x31] sm:$0xff] %vm405, %v377
      %467 = vst.msk [vmem:[%s461 + $0x39] sm:$0xff] %vm405, %v378
      %468 = vst.msk [vmem:[%s461 + $0x49] sm:$0xff] %vm405, %v379
      %469 = vst.msk [vmem:[%s461 + $0x51] sm:$0xff] %vm405, %v380
      %470 = vst.msk [vmem:[%s461 + $0x61] sm:$0xff] %vm405, %v381
      %471 = vst.msk [vmem:[%s461 + $0x69] sm:$0xff] %vm405, %v382
      %472 = vst.msk [vmem:[%s461 + $0x79] sm:$0xff] %vm405, %v383
      %473 = vst.msk [vmem:[%s461 + $0x81] sm:$0xff] %vm405, %v384
      %474 = vst.msk [vmem:[%s461 + $0x91] sm:$0xff] %vm405, %v385
      %475 = vst.msk [vmem:[%s461 + $0x99] sm:$0xff] %vm405, %v386
      %476 = vst.msk [vmem:[%s461 + $0xa9] sm:$0xff] %vm405, %v387
      %477 = vst.msk [vmem:[%s461 + $0xb1] sm:$0xff] %vm405, %v388
      %478 = vst.msk [vmem:[%s461 + $0xc1] sm:$0xff] %vm405, %v389
      %479 = vst.msk [vmem:[%s461 + $0xc9] sm:$0xff] %vm405, %v390
      %480 = vst.msk [vmem:[%s461 + $0xd9] sm:$0xff] %vm405, %v391
      %481 = vst.msk [vmem:[%s461 + $0xe1] sm:$0xff] %vm405, %v392
      %482 = vst.msk [vmem:[%s461 + $0xf1] sm:$0xff] %vm405, %v393
      %483 = vst.msk [vmem:[%s461 + $0xf9] sm:$0xff] %vm405, %v394
      %484 = vst.msk [vmem:[%s461 + $0x109] sm:$0xff] %vm405, %v395
      %485 = vst.msk [vmem:[%s461 + $0x111] sm:$0xff] %vm405, %v396
      %486 = vst.msk [vmem:[%s461 + $0x121] sm:$0xff] %vm405, %v397
      %487 = vst.msk [vmem:[%s461 + $0x129] sm:$0xff] %vm405, %v398
      %488 = vst.msk [vmem:[%s461 + $0x139] sm:$0xff] %vm405, %v399
      %489 = vst.msk [vmem:[%s461 + $0x141] sm:$0xff] %vm405, %v400
      %490 = vst.msk [vmem:[%s461 + $0x151] sm:$0xff] %vm405, %v401
      %491 = vst.msk [vmem:[%s461 + $0x159] sm:$0xff] %vm405, %v402
      %492 = vst.msk [vmem:[%s461 + $0x169] sm:$0xff] %vm405, %v403
      %493 = vst.msk [vmem:[%s461 + $0x171] sm:$0xff] %vm405, %v404
      %v494 = vld [vmem:[#allocation2] sm:$0xff]
      %v495 = vld [vmem:[#allocation2 + $0x8] sm:$0xff]
      %v496 = vld [vmem:[#allocation2 + $0x18] sm:$0xff]
      %v497 = vld [vmem:[#allocation2 + $0x20] sm:$0xff]
      %v498 = vld [vmem:[#allocation2 + $0x30] sm:$0xff]
      %v499 = vld [vmem:[#allocation2 + $0x38] sm:$0xff]
      %v500 = vld [vmem:[#allocation2 + $0x48] sm:$0xff]
      %v501 = vld [vmem:[#allocation2 + $0x50] sm:$0xff]
      %v502 = vld [vmem:[#allocation2 + $0x60] sm:$0xff]
      %v503 = vld [vmem:[#allocation2 + $0x68] sm:$0xff]
      %v504 = vld [vmem:[#allocation2 + $0x78] sm:$0xff]
      %v505 = vld [vmem:[#allocation2 + $0x80] sm:$0xff]
      %v506 = vld [vmem:[#allocation2 + $0x90] sm:$0xff]
      %v507 = vld [vmem:[#allocation2 + $0x98] sm:$0xff]
      %v508 = vld [vmem:[#allocation2 + $0xa8] sm:$0xff]
      %v509 = vld [vmem:[#allocation2 + $0xb0] sm:$0xff]
      %v510 = vld [vmem:[#allocation2 + $0xc0] sm:$0xff]
      %v511 = vld [vmem:[#allocation2 + $0xc8] sm:$0xff]
      %v512 = vld [vmem:[#allocation2 + $0xd8] sm:$0xff]
      %v513 = vld [vmem:[#allocation2 + $0xe0] sm:$0xff]
      %v514 = vld [vmem:[#allocation2 + $0xf0] sm:$0xff]
      %v515 = vld [vmem:[#allocation2 + $0xf8] sm:$0xff]
      %v516 = vld [vmem:[#allocation2 + $0x108] sm:$0xff]
      %v517 = vld [vmem:[#allocation2 + $0x110] sm:$0xff]
      %v518 = vld [vmem:[#allocation2 + $0x120] sm:$0xff]
      %v519 = vld [vmem:[#allocation2 + $0x128] sm:$0xff]
      %v520 = vld [vmem:[#allocation2 + $0x138] sm:$0xff]
      %v521 = vld [vmem:[#allocation2 + $0x140] sm:$0xff]
      %v522 = vld [vmem:[#allocation2 + $0x150] sm:$0xff]
      %v523 = vld [vmem:[#allocation2 + $0x158] sm:$0xff]
      %v524 = vld [vmem:[#allocation2 + $0x168] sm:$0xff]
      %v525 = vld [vmem:[#allocation2 + $0x170] sm:$0xff]
      %v526 = vld [vmem:[#allocation2 + $0x1] sm:$0xff]
      %v527 = vld [vmem:[#allocation2 + $0x9] sm:$0xff]
      %v528 = vld [vmem:[#allocation2 + $0x19] sm:$0xff]
      %v529 = vld [vmem:[#allocation2 + $0x21] sm:$0xff]
      %v530 = vld [vmem:[#allocation2 + $0x31] sm:$0xff]
      %v531 = vld [vmem:[#allocation2 + $0x39] sm:$0xff]
      %v532 = vld [vmem:[#allocation2 + $0x49] sm:$0xff]
      %v533 = vld [vmem:[#allocation2 + $0x51] sm:$0xff]
      %v534 = vld [vmem:[#allocation2 + $0x61] sm:$0xff]
      %v535 = vld [vmem:[#allocation2 + $0x69] sm:$0xff]
      %v536 = vld [vmem:[#allocation2 + $0x79] sm:$0xff]
      %v537 = vld [vmem:[#allocation2 + $0x81] sm:$0xff]
      %v538 = vld [vmem:[#allocation2 + $0x91] sm:$0xff]
      %v539 = vld [vmem:[#allocation2 + $0x99] sm:$0xff]
      %v540 = vld [vmem:[#allocation2 + $0xa9] sm:$0xff]
      %v541 = vld [vmem:[#allocation2 + $0xb1] sm:$0xff]
      %v542 = vld [vmem:[#allocation2 + $0xc1] sm:$0xff]
      %v543 = vld [vmem:[#allocation2 + $0xc9] sm:$0xff]
      %v544 = vld [vmem:[#allocation2 + $0xd9] sm:$0xff]
      %v545 = vld [vmem:[#allocation2 + $0xe1] sm:$0xff]
      %v546 = vld [vmem:[#allocation2 + $0xf1] sm:$0xff]
      %v547 = vld [vmem:[#allocation2 + $0xf9] sm:$0xff]
      %v548 = vld [vmem:[#allocation2 + $0x109] sm:$0xff]
      %v549 = vld [vmem:[#allocation2 + $0x111] sm:$0xff]
      %v550 = vld [vmem:[#allocation2 + $0x121] sm:$0xff]
      %v551 = vld [vmem:[#allocation2 + $0x129] sm:$0xff]
      %v552 = vld [vmem:[#allocation2 + $0x139] sm:$0xff]
      %v553 = vld [vmem:[#allocation2 + $0x141] sm:$0xff]
      %v554 = vld [vmem:[#allocation2 + $0x151] sm:$0xff]
      %v555 = vld [vmem:[#allocation2 + $0x159] sm:$0xff]
      %v556 = vld [vmem:[#allocation2 + $0x169] sm:$0xff]
      %v557 = vld [vmem:[#allocation2 + $0x171] sm:$0xff]
      %v558 = vld [vmem:[#allocation2 + $0x2] sm:$0xff]
      %v559 = vld [vmem:[#allocation2 + $0xa] sm:$0xff]
      %v560 = vld [vmem:[#allocation2 + $0x1a] sm:$0xff]
      %v561 = vld [vmem:[#allocation2 + $0x22] sm:$0xff]
      %v562 = vld [vmem:[#allocation2 + $0x32] sm:$0xff]
      %v563 = vld [vmem:[#allocation2 + $0x3a] sm:$0xff]
      %v564 = vld [vmem:[#allocation2 + $0x4a] sm:$0xff]
      %v565 = vld [vmem:[#allocation2 + $0x52] sm:$0xff]
      %v566 = vld [vmem:[#allocation2 + $0x62] sm:$0xff]
      %v567 = vld [vmem:[#allocation2 + $0x6a] sm:$0xff]
      %v568 = vld [vmem:[#allocation2 + $0x7a] sm:$0xff]
      %v569 = vld [vmem:[#allocation2 + $0x82] sm:$0xff]
      %v570 = vld [vmem:[#allocation2 + $0x92] sm:$0xff]
      %v571 = vld [vmem:[#allocation2 + $0x9a] sm:$0xff]
      %v572 = vld [vmem:[#allocation2 + $0xaa] sm:$0xff]
      %v573 = vld [vmem:[#allocation2 + $0xb2] sm:$0xff]
      %v574 = vld [vmem:[#allocation2 + $0xc2] sm:$0xff]
      %v575 = vld [vmem:[#allocation2 + $0xca] sm:$0xff]
      %v576 = vld [vmem:[#allocation2 + $0xda] sm:$0xff]
      %v577 = vld [vmem:[#allocation2 + $0xe2] sm:$0xff]
      %v578 = vld [vmem:[#allocation2 + $0xf2] sm:$0xff]
      %v579 = vld [vmem:[#allocation2 + $0xfa] sm:$0xff]
      %v580 = vld [vmem:[#allocation2 + $0x10a] sm:$0xff]
      %v581 = vld [vmem:[#allocation2 + $0x112] sm:$0xff]
      %v582 = vld [vmem:[#allocation2 + $0x122] sm:$0xff]
      %v583 = vld [vmem:[#allocation2 + $0x12a] sm:$0xff]
      %v584 = vld [vmem:[#allocation2 + $0x13a] sm:$0xff]
      %v585 = vld [vmem:[#allocation2 + $0x142] sm:$0xff]
      %v586 = vld [vmem:[#allocation2 + $0x152] sm:$0xff]
      %v587 = vld [vmem:[#allocation2 + $0x15a] sm:$0xff]
      %v588 = vld [vmem:[#allocation2 + $0x16a] sm:$0xff]
      %v589 = vld [vmem:[#allocation2 + $0x172] sm:$0xff]
      %v590 = vld [vmem:[%s461] sm:$0xff]
      %v591 = vld [vmem:[%s461 + $0x8] sm:$0xff]
      %v592 = vld [vmem:[%s461 + $0x18] sm:$0xff]
      %v593 = vld [vmem:[%s461 + $0x20] sm:$0xff]
      %v594 = vld [vmem:[%s461 + $0x30] sm:$0xff]
      %v595 = vld [vmem:[%s461 + $0x38] sm:$0xff]
      %v596 = vld [vmem:[%s461 + $0x48] sm:$0xff]
      %v597 = vld [vmem:[%s461 + $0x50] sm:$0xff]
      %v598 = vld [vmem:[%s461 + $0x60] sm:$0xff]
      %v599 = vld [vmem:[%s461 + $0x68] sm:$0xff]
      %v600 = vld [vmem:[%s461 + $0x78] sm:$0xff]
      %v601 = vld [vmem:[%s461 + $0x80] sm:$0xff]
      %v602 = vld [vmem:[%s461 + $0x90] sm:$0xff]
      %v603 = vld [vmem:[%s461 + $0x98] sm:$0xff]
      %v604 = vld [vmem:[%s461 + $0xa8] sm:$0xff]
      %v605 = vld [vmem:[%s461 + $0xb0] sm:$0xff]
      %v606 = vld [vmem:[%s461 + $0xc0] sm:$0xff]
      %v607 = vld [vmem:[%s461 + $0xc8] sm:$0xff]
      %v608 = vld [vmem:[%s461 + $0xd8] sm:$0xff]
      %v609 = vld [vmem:[%s461 + $0xe0] sm:$0xff]
      %v610 = vld [vmem:[%s461 + $0xf0] sm:$0xff]
      %v611 = vld [vmem:[%s461 + $0xf8] sm:$0xff]
      %v612 = vld [vmem:[%s461 + $0x108] sm:$0xff]
      %v613 = vld [vmem:[%s461 + $0x110] sm:$0xff]
      %v614 = vld [vmem:[%s461 + $0x120] sm:$0xff]
      %v615 = vld [vmem:[%s461 + $0x128] sm:$0xff]
      %v616 = vld [vmem:[%s461 + $0x138] sm:$0xff]
      %v617 = vld [vmem:[%s461 + $0x140] sm:$0xff]
      %v618 = vld [vmem:[%s461 + $0x150] sm:$0xff]
      %v619 = vld [vmem:[%s461 + $0x158] sm:$0xff]
      %v620 = vld [vmem:[%s461 + $0x168] sm:$0xff]
      %v621 = vld [vmem:[%s461 + $0x170] sm:$0xff]
      %v622 = vld [vmem:[%s461 + $0x1] sm:$0xff]
      %v623 = vld [vmem:[%s461 + $0x9] sm:$0xff]
      %v624 = vld [vmem:[%s461 + $0x19] sm:$0xff]
      %v625 = vld [vmem:[%s461 + $0x21] sm:$0xff]
      %v626 = vld [vmem:[%s461 + $0x31] sm:$0xff]
      %v627 = vld [vmem:[%s461 + $0x39] sm:$0xff]
      %v628 = vld [vmem:[%s461 + $0x49] sm:$0xff]
      %v629 = vld [vmem:[%s461 + $0x51] sm:$0xff]
      %v630 = vld [vmem:[%s461 + $0x61] sm:$0xff]
      %v631 = vld [vmem:[%s461 + $0x69] sm:$0xff]
      %v632 = vld [vmem:[%s461 + $0x79] sm:$0xff]
      %v633 = vld [vmem:[%s461 + $0x81] sm:$0xff]
      %v634 = vld [vmem:[%s461 + $0x91] sm:$0xff]
      %v635 = vld [vmem:[%s461 + $0x99] sm:$0xff]
      %v636 = vld [vmem:[%s461 + $0xa9] sm:$0xff]
      %v637 = vld [vmem:[%s461 + $0xb1] sm:$0xff]
      %v638 = vld [vmem:[%s461 + $0xc1] sm:$0xff]
      %v639 = vld [vmem:[%s461 + $0xc9] sm:$0xff]
      %v640 = vld [vmem:[%s461 + $0xd9] sm:$0xff]
      %v641 = vld [vmem:[%s461 + $0xe1] sm:$0xff]
      %v642 = vld [vmem:[%s461 + $0xf1] sm:$0xff]
      %v643 = vld [vmem:[%s461 + $0xf9] sm:$0xff]
      %v644 = vld [vmem:[%s461 + $0x109] sm:$0xff]
      %v645 = vld [vmem:[%s461 + $0x111] sm:$0xff]
      %v646 = vld [vmem:[%s461 + $0x121] sm:$0xff]
      %v647 = vld [vmem:[%s461 + $0x129] sm:$0xff]
      %v648 = vld [vmem:[%s461 + $0x139] sm:$0xff]
      %v649 = vld [vmem:[%s461 + $0x141] sm:$0xff]
      %v650 = vld [vmem:[%s461 + $0x151] sm:$0xff]
      %v651 = vld [vmem:[%s461 + $0x159] sm:$0xff]
      %v652 = vld [vmem:[%s461 + $0x169] sm:$0xff]
      %v653 = vld [vmem:[%s461 + $0x171] sm:$0xff]
      %v654 = vld [vmem:[%s461 + $0x2] sm:$0xff]
      %v655 = vld [vmem:[%s461 + $0xa] sm:$0xff]
      %v656 = vld [vmem:[%s461 + $0x1a] sm:$0xff]
      %v657 = vld [vmem:[%s461 + $0x22] sm:$0xff]
      %v658 = vld [vmem:[%s461 + $0x32] sm:$0xff]
      %v659 = vld [vmem:[%s461 + $0x3a] sm:$0xff]
      %v660 = vld [vmem:[%s461 + $0x4a] sm:$0xff]
      %v661 = vld [vmem:[%s461 + $0x52] sm:$0xff]
      %v662 = vld [vmem:[%s461 + $0x62] sm:$0xff]
      %v663 = vld [vmem:[%s461 + $0x6a] sm:$0xff]
      %v664 = vld [vmem:[%s461 + $0x7a] sm:$0xff]
      %v665 = vld [vmem:[%s461 + $0x82] sm:$0xff]
      %v666 = vld [vmem:[%s461 + $0x92] sm:$0xff]
      %v667 = vld [vmem:[%s461 + $0x9a] sm:$0xff]
      %v668 = vld [vmem:[%s461 + $0xaa] sm:$0xff]
      %v669 = vld [vmem:[%s461 + $0xb2] sm:$0xff]
      %v670 = vld [vmem:[%s461 + $0xc2] sm:$0xff]
      %v671 = vld [vmem:[%s461 + $0xca] sm:$0xff]
      %v672 = vld [vmem:[%s461 + $0xda] sm:$0xff]
      %v673 = vld [vmem:[%s461 + $0xe2] sm:$0xff]
      %v674 = vld [vmem:[%s461 + $0xf2] sm:$0xff]
      %v675 = vld [vmem:[%s461 + $0xfa] sm:$0xff]
      %v676 = vld [vmem:[%s461 + $0x10a] sm:$0xff]
      %v677 = vld [vmem:[%s461 + $0x112] sm:$0xff]
      %v678 = vld [vmem:[%s461 + $0x122] sm:$0xff]
      %v679 = vld [vmem:[%s461 + $0x12a] sm:$0xff]
      %v680 = vld [vmem:[%s461 + $0x13a] sm:$0xff]
      %v681 = vld [vmem:[%s461 + $0x142] sm:$0xff]
      %v682 = vld [vmem:[%s461 + $0x152] sm:$0xff]
      %v683 = vld [vmem:[%s461 + $0x15a] sm:$0xff]
      %v684 = vld [vmem:[%s461 + $0x16a] sm:$0xff]
      %v685 = vld [vmem:[%s461 + $0x172] sm:$0xff]
      %s686 = scalar_lea.vmem [#allocation2], 48
      %v687 = vld [vmem:[%s686] sm:$0xff]
      %v688 = vld [vmem:[%s686 + $0x8] sm:$0xff]
      %v689 = vld [vmem:[%s686 + $0x18] sm:$0xff]
      %v690 = vld [vmem:[%s686 + $0x20] sm:$0xff]
      %v691 = vld [vmem:[%s686 + $0x30] sm:$0xff]
      %v692 = vld [vmem:[%s686 + $0x38] sm:$0xff]
      %v693 = vld [vmem:[%s686 + $0x48] sm:$0xff]
      %v694 = vld [vmem:[%s686 + $0x50] sm:$0xff]
      %v695 = vld [vmem:[%s686 + $0x60] sm:$0xff]
      %v696 = vld [vmem:[%s686 + $0x68] sm:$0xff]
      %v697 = vld [vmem:[%s686 + $0x78] sm:$0xff]
      %v698 = vld [vmem:[%s686 + $0x80] sm:$0xff]
      %v699 = vld [vmem:[%s686 + $0x90] sm:$0xff]
      %v700 = vld [vmem:[%s686 + $0x98] sm:$0xff]
      %v701 = vld [vmem:[%s686 + $0xa8] sm:$0xff]
      %v702 = vld [vmem:[%s686 + $0xb0] sm:$0xff]
      %v703 = vld [vmem:[%s686 + $0xc0] sm:$0xff]
      %v704 = vld [vmem:[%s686 + $0xc8] sm:$0xff]
      %v705 = vld [vmem:[%s686 + $0xd8] sm:$0xff]
      %v706 = vld [vmem:[%s686 + $0xe0] sm:$0xff]
      %v707 = vld [vmem:[%s686 + $0xf0] sm:$0xff]
      %v708 = vld [vmem:[%s686 + $0xf8] sm:$0xff]
      %v709 = vld [vmem:[%s686 + $0x108] sm:$0xff]
      %v710 = vld [vmem:[%s686 + $0x110] sm:$0xff]
      %v711 = vld [vmem:[%s686 + $0x120] sm:$0xff]
      %v712 = vld [vmem:[%s686 + $0x128] sm:$0xff]
      %v713 = vld [vmem:[%s686 + $0x138] sm:$0xff]
      %v714 = vld [vmem:[%s686 + $0x140] sm:$0xff]
      %v715 = vld [vmem:[%s686 + $0x150] sm:$0xff]
      %v716 = vld [vmem:[%s686 + $0x158] sm:$0xff]
      %v717 = vld [vmem:[%s686 + $0x168] sm:$0xff]
      %v718 = vld [vmem:[%s686 + $0x170] sm:$0xff]
      %v719 = vld [vmem:[%s686 + $0x1] sm:$0xff]
      %v720 = vld [vmem:[%s686 + $0x9] sm:$0xff]
      %v721 = vld [vmem:[%s686 + $0x19] sm:$0xff]
      %v722 = vld [vmem:[%s686 + $0x21] sm:$0xff]
      %v723 = vld [vmem:[%s686 + $0x31] sm:$0xff]
      %v724 = vld [vmem:[%s686 + $0x39] sm:$0xff]
      %v725 = vld [vmem:[%s686 + $0x49] sm:$0xff]
      %v726 = vld [vmem:[%s686 + $0x51] sm:$0xff]
      %v727 = vld [vmem:[%s686 + $0x61] sm:$0xff]
      %v728 = vld [vmem:[%s686 + $0x69] sm:$0xff]
      %v729 = vld [vmem:[%s686 + $0x79] sm:$0xff]
      %v730 = vld [vmem:[%s686 + $0x81] sm:$0xff]
      %v731 = vld [vmem:[%s686 + $0x91] sm:$0xff]
      %v732 = vld [vmem:[%s686 + $0x99] sm:$0xff]
      %v733 = vld [vmem:[%s686 + $0xa9] sm:$0xff]
      %v734 = vld [vmem:[%s686 + $0xb1] sm:$0xff]
      %v735 = vld [vmem:[%s686 + $0xc1] sm:$0xff]
      %v736 = vld [vmem:[%s686 + $0xc9] sm:$0xff]
      %v737 = vld [vmem:[%s686 + $0xd9] sm:$0xff]
      %v738 = vld [vmem:[%s686 + $0xe1] sm:$0xff]
      %v739 = vld [vmem:[%s686 + $0xf1] sm:$0xff]
      %v740 = vld [vmem:[%s686 + $0xf9] sm:$0xff]
      %v741 = vld [vmem:[%s686 + $0x109] sm:$0xff]
      %v742 = vld [vmem:[%s686 + $0x111] sm:$0xff]
      %v743 = vld [vmem:[%s686 + $0x121] sm:$0xff]
      %v744 = vld [vmem:[%s686 + $0x129] sm:$0xff]
      %v745 = vld [vmem:[%s686 + $0x139] sm:$0xff]
      %v746 = vld [vmem:[%s686 + $0x141] sm:$0xff]
      %v747 = vld [vmem:[%s686 + $0x151] sm:$0xff]
      %v748 = vld [vmem:[%s686 + $0x159] sm:$0xff]
      %v749 = vld [vmem:[%s686 + $0x169] sm:$0xff]
      %v750 = vld [vmem:[%s686 + $0x171] sm:$0xff]
      %v751 = vld [vmem:[%s686 + $0x2] sm:$0xff]
      %v752 = vld [vmem:[%s686 + $0xa] sm:$0xff]
      %v753 = vld [vmem:[%s686 + $0x1a] sm:$0xff]
      %v754 = vld [vmem:[%s686 + $0x22] sm:$0xff]
      %v755 = vld [vmem:[%s686 + $0x32] sm:$0xff]
      %v756 = vld [vmem:[%s686 + $0x3a] sm:$0xff]
      %v757 = vld [vmem:[%s686 + $0x4a] sm:$0xff]
      %v758 = vld [vmem:[%s686 + $0x52] sm:$0xff]
      %v759 = vld [vmem:[%s686 + $0x62] sm:$0xff]
      %v760 = vld [vmem:[%s686 + $0x6a] sm:$0xff]
      %v761 = vld [vmem:[%s686 + $0x7a] sm:$0xff]
      %v762 = vld [vmem:[%s686 + $0x82] sm:$0xff]
      %v763 = vld [vmem:[%s686 + $0x92] sm:$0xff]
      %v764 = vld [vmem:[%s686 + $0x9a] sm:$0xff]
      %v765 = vld [vmem:[%s686 + $0xaa] sm:$0xff]
      %v766 = vld [vmem:[%s686 + $0xb2] sm:$0xff]
      %v767 = vld [vmem:[%s686 + $0xc2] sm:$0xff]
      %v768 = vld [vmem:[%s686 + $0xca] sm:$0xff]
      %v769 = vld [vmem:[%s686 + $0xda] sm:$0xff]
      %v770 = vld [vmem:[%s686 + $0xe2] sm:$0xff]
      %v771 = vld [vmem:[%s686 + $0xf2] sm:$0xff]
      %v772 = vld [vmem:[%s686 + $0xfa] sm:$0xff]
      %v773 = vld [vmem:[%s686 + $0x10a] sm:$0xff]
      %v774 = vld [vmem:[%s686 + $0x112] sm:$0xff]
      %v775 = vld [vmem:[%s686 + $0x122] sm:$0xff]
      %v776 = vld [vmem:[%s686 + $0x12a] sm:$0xff]
      %v777 = vld [vmem:[%s686 + $0x13a] sm:$0xff]
      %v778 = vld [vmem:[%s686 + $0x142] sm:$0xff]
      %v779 = vld [vmem:[%s686 + $0x152] sm:$0xff]
      %v780 = vld [vmem:[%s686 + $0x15a] sm:$0xff]
      %v781 = vld [vmem:[%s686 + $0x16a] sm:$0xff]
      %v782 = vld [vmem:[%s686 + $0x172] sm:$0xff]
      %815 = vrot.lane.b32.xlu0 %v526, 4
      %v816 = vpop.permute.xlu0 %815
      %817 = vrot.lane.b32.xlu0 %v527, 4
      %v818 = vpop.permute.xlu0 %817
      %819 = vrot.lane.b32.xlu0 %v528, 4
      %v820 = vpop.permute.xlu0 %819
      %821 = vrot.lane.b32.xlu0 %v529, 4
      %v822 = vpop.permute.xlu0 %821
      %823 = vrot.lane.b32.xlu0 %v530, 4
      %v824 = vpop.permute.xlu0 %823
      %825 = vrot.lane.b32.xlu0 %v531, 4
      %v826 = vpop.permute.xlu0 %825
      %827 = vrot.lane.b32.xlu0 %v532, 4
      %v828 = vpop.permute.xlu0 %827
      %829 = vrot.lane.b32.xlu0 %v533, 4
      %v830 = vpop.permute.xlu0 %829
      %831 = vrot.lane.b32.xlu0 %v534, 4
      %v832 = vpop.permute.xlu0 %831
      %833 = vrot.lane.b32.xlu0 %v535, 4
      %v834 = vpop.permute.xlu0 %833
      %835 = vrot.lane.b32.xlu0 %v536, 4
      %v836 = vpop.permute.xlu0 %835
      %837 = vrot.lane.b32.xlu0 %v537, 4
      %v838 = vpop.permute.xlu0 %837
      %839 = vrot.lane.b32.xlu0 %v538, 4
      %v840 = vpop.permute.xlu0 %839
      %841 = vrot.lane.b32.xlu0 %v539, 4
      %v842 = vpop.permute.xlu0 %841
      %843 = vrot.lane.b32.xlu0 %v540, 4
      %v844 = vpop.permute.xlu0 %843
      %845 = vrot.lane.b32.xlu0 %v541, 4
      %v846 = vpop.permute.xlu0 %845
      %847 = vrot.lane.b32.xlu0 %v542, 4
      %v848 = vpop.permute.xlu0 %847
      %849 = vrot.lane.b32.xlu0 %v543, 4
      %v850 = vpop.permute.xlu0 %849
      %851 = vrot.lane.b32.xlu0 %v544, 4
      %v852 = vpop.permute.xlu0 %851
      %853 = vrot.lane.b32.xlu0 %v545, 4
      %v854 = vpop.permute.xlu0 %853
      %855 = vrot.lane.b32.xlu0 %v546, 4
      %v856 = vpop.permute.xlu0 %855
      %857 = vrot.lane.b32.xlu0 %v547, 4
      %v858 = vpop.permute.xlu0 %857
      %859 = vrot.lane.b32.xlu0 %v548, 4
      %v860 = vpop.permute.xlu0 %859
      %861 = vrot.lane.b32.xlu0 %v549, 4
      %v862 = vpop.permute.xlu0 %861
      %863 = vrot.lane.b32.xlu0 %v550, 4
      %v864 = vpop.permute.xlu0 %863
      %865 = vrot.lane.b32.xlu0 %v551, 4
      %v866 = vpop.permute.xlu0 %865
      %867 = vrot.lane.b32.xlu0 %v552, 4
      %v868 = vpop.permute.xlu0 %867
      %869 = vrot.lane.b32.xlu0 %v553, 4
      %v870 = vpop.permute.xlu0 %869
      %871 = vrot.lane.b32.xlu0 %v554, 4
      %v872 = vpop.permute.xlu0 %871
      %873 = vrot.lane.b32.xlu0 %v555, 4
      %v874 = vpop.permute.xlu0 %873
      %875 = vrot.lane.b32.xlu0 %v556, 4
      %v876 = vpop.permute.xlu0 %875
      %877 = vrot.lane.b32.xlu0 %v557, 4
      %v878 = vpop.permute.xlu0 %877
      %943 = vrot.lane.b32.xlu0 %v558, 8
      %v944 = vpop.permute.xlu0 %943
      %945 = vrot.lane.b32.xlu0 %v559, 8
      %v946 = vpop.permute.xlu0 %945
      %947 = vrot.lane.b32.xlu0 %v560, 8
      %v948 = vpop.permute.xlu0 %947
      %949 = vrot.lane.b32.xlu0 %v561, 8
      %v950 = vpop.permute.xlu0 %949
      %951 = vrot.lane.b32.xlu0 %v562, 8
      %v952 = vpop.permute.xlu0 %951
      %953 = vrot.lane.b32.xlu0 %v563, 8
      %v954 = vpop.permute.xlu0 %953
      %955 = vrot.lane.b32.xlu0 %v564, 8
      %v956 = vpop.permute.xlu0 %955
      %957 = vrot.lane.b32.xlu0 %v565, 8
      %v958 = vpop.permute.xlu0 %957
      %959 = vrot.lane.b32.xlu0 %v566, 8
      %v960 = vpop.permute.xlu0 %959
      %961 = vrot.lane.b32.xlu0 %v567, 8
      %v962 = vpop.permute.xlu0 %961
      %963 = vrot.lane.b32.xlu0 %v568, 8
      %v964 = vpop.permute.xlu0 %963
      %965 = vrot.lane.b32.xlu0 %v569, 8
      %v966 = vpop.permute.xlu0 %965
      %967 = vrot.lane.b32.xlu0 %v570, 8
      %v968 = vpop.permute.xlu0 %967
      %969 = vrot.lane.b32.xlu0 %v571, 8
      %v970 = vpop.permute.xlu0 %969
      %971 = vrot.lane.b32.xlu0 %v572, 8
      %v972 = vpop.permute.xlu0 %971
      %973 = vrot.lane.b32.xlu0 %v573, 8
      %v974 = vpop.permute.xlu0 %973
      %975 = vrot.lane.b32.xlu0 %v574, 8
      %v976 = vpop.permute.xlu0 %975
      %977 = vrot.lane.b32.xlu0 %v575, 8
      %v978 = vpop.permute.xlu0 %977
      %979 = vrot.lane.b32.xlu0 %v576, 8
      %v980 = vpop.permute.xlu0 %979
      %981 = vrot.lane.b32.xlu0 %v577, 8
      %v982 = vpop.permute.xlu0 %981
      %983 = vrot.lane.b32.xlu0 %v578, 8
      %v984 = vpop.permute.xlu0 %983
      %985 = vrot.lane.b32.xlu0 %v579, 8
      %v986 = vpop.permute.xlu0 %985
      %987 = vrot.lane.b32.xlu0 %v580, 8
      %v988 = vpop.permute.xlu0 %987
      %989 = vrot.lane.b32.xlu0 %v581, 8
      %v990 = vpop.permute.xlu0 %989
      %991 = vrot.lane.b32.xlu0 %v582, 8
      %v992 = vpop.permute.xlu0 %991
      %993 = vrot.lane.b32.xlu0 %v583, 8
      %v994 = vpop.permute.xlu0 %993
      %995 = vrot.lane.b32.xlu0 %v584, 8
      %v996 = vpop.permute.xlu0 %995
      %997 = vrot.lane.b32.xlu0 %v585, 8
      %v998 = vpop.permute.xlu0 %997
      %999 = vrot.lane.b32.xlu0 %v586, 8
      %v1000 = vpop.permute.xlu0 %999
      %1001 = vrot.lane.b32.xlu0 %v587, 8
      %v1002 = vpop.permute.xlu0 %1001
      %1003 = vrot.lane.b32.xlu0 %v588, 8
      %v1004 = vpop.permute.xlu0 %1003
      %1005 = vrot.lane.b32.xlu0 %v589, 8
      %v1006 = vpop.permute.xlu0 %1005
      %1071 = vrot.lane.b32.xlu0 %v590, 12
      %v1072 = vpop.permute.xlu0 %1071
      %1073 = vrot.lane.b32.xlu0 %v591, 12
      %v1074 = vpop.permute.xlu0 %1073
      %1075 = vrot.lane.b32.xlu0 %v592, 12
      %v1076 = vpop.permute.xlu0 %1075
      %1077 = vrot.lane.b32.xlu0 %v593, 12
      %v1078 = vpop.permute.xlu0 %1077
      %1079 = vrot.lane.b32.xlu0 %v594, 12
      %v1080 = vpop.permute.xlu0 %1079
      %1081 = vrot.lane.b32.xlu0 %v595, 12
      %v1082 = vpop.permute.xlu0 %1081
      %1083 = vrot.lane.b32.xlu0 %v596, 12
      %v1084 = vpop.permute.xlu0 %1083
      %1085 = vrot.lane.b32.xlu0 %v597, 12
      %v1086 = vpop.permute.xlu0 %1085
      %1087 = vrot.lane.b32.xlu0 %v598, 12
      %v1088 = vpop.permute.xlu0 %1087
      %1089 = vrot.lane.b32.xlu0 %v599, 12
      %v1090 = vpop.permute.xlu0 %1089
      %1091 = vrot.lane.b32.xlu0 %v600, 12
      %v1092 = vpop.permute.xlu0 %1091
      %1093 = vrot.lane.b32.xlu0 %v601, 12
      %v1094 = vpop.permute.xlu0 %1093
      %1095 = vrot.lane.b32.xlu0 %v602, 12
      %v1096 = vpop.permute.xlu0 %1095
      %1097 = vrot.lane.b32.xlu0 %v603, 12
      %v1098 = vpop.permute.xlu0 %1097
      %1099 = vrot.lane.b32.xlu0 %v604, 12
      %v1100 = vpop.permute.xlu0 %1099
      %1101 = vrot.lane.b32.xlu0 %v605, 12
      %v1102 = vpop.permute.xlu0 %1101
      %1103 = vrot.lane.b32.xlu0 %v606, 12
      %v1104 = vpop.permute.xlu0 %1103
      %1105 = vrot.lane.b32.xlu0 %v607, 12
      %v1106 = vpop.permute.xlu0 %1105
      %1107 = vrot.lane.b32.xlu0 %v608, 12
      %v1108 = vpop.permute.xlu0 %1107
      %1109 = vrot.lane.b32.xlu0 %v609, 12
      %v1110 = vpop.permute.xlu0 %1109
      %1111 = vrot.lane.b32.xlu0 %v610, 12
      %v1112 = vpop.permute.xlu0 %1111
      %1113 = vrot.lane.b32.xlu0 %v611, 12
      %v1114 = vpop.permute.xlu0 %1113
      %1115 = vrot.lane.b32.xlu0 %v612, 12
      %v1116 = vpop.permute.xlu0 %1115
      %1117 = vrot.lane.b32.xlu0 %v613, 12
      %v1118 = vpop.permute.xlu0 %1117
      %1119 = vrot.lane.b32.xlu0 %v614, 12
      %v1120 = vpop.permute.xlu0 %1119
      %1121 = vrot.lane.b32.xlu0 %v615, 12
      %v1122 = vpop.permute.xlu0 %1121
      %1123 = vrot.lane.b32.xlu0 %v616, 12
      %v1124 = vpop.permute.xlu0 %1123
      %1125 = vrot.lane.b32.xlu0 %v617, 12
      %v1126 = vpop.permute.xlu0 %1125
      %1127 = vrot.lane.b32.xlu0 %v618, 12
      %v1128 = vpop.permute.xlu0 %1127
      %1129 = vrot.lane.b32.xlu0 %v619, 12
      %v1130 = vpop.permute.xlu0 %1129
      %1131 = vrot.lane.b32.xlu0 %v620, 12
      %v1132 = vpop.permute.xlu0 %1131
      %1133 = vrot.lane.b32.xlu0 %v621, 12
      %v1134 = vpop.permute.xlu0 %1133
      %1199 = vrot.lane.b32.xlu0 %v622, 16
      %v1200 = vpop.permute.xlu0 %1199
      %1201 = vrot.lane.b32.xlu0 %v623, 16
      %v1202 = vpop.permute.xlu0 %1201
      %1203 = vrot.lane.b32.xlu0 %v624, 16
      %v1204 = vpop.permute.xlu0 %1203
      %1205 = vrot.lane.b32.xlu0 %v625, 16
      %v1206 = vpop.permute.xlu0 %1205
      %1207 = vrot.lane.b32.xlu0 %v626, 16
      %v1208 = vpop.permute.xlu0 %1207
      %1209 = vrot.lane.b32.xlu0 %v627, 16
      %v1210 = vpop.permute.xlu0 %1209
      %1211 = vrot.lane.b32.xlu0 %v628, 16
      %v1212 = vpop.permute.xlu0 %1211
      %1213 = vrot.lane.b32.xlu0 %v629, 16
      %v1214 = vpop.permute.xlu0 %1213
      %1215 = vrot.lane.b32.xlu0 %v630, 16
      %v1216 = vpop.permute.xlu0 %1215
      %1217 = vrot.lane.b32.xlu0 %v631, 16
      %v1218 = vpop.permute.xlu0 %1217
      %1219 = vrot.lane.b32.xlu0 %v632, 16
      %v1220 = vpop.permute.xlu0 %1219
      %1221 = vrot.lane.b32.xlu0 %v633, 16
      %v1222 = vpop.permute.xlu0 %1221
      %1223 = vrot.lane.b32.xlu0 %v634, 16
      %v1224 = vpop.permute.xlu0 %1223
      %1225 = vrot.lane.b32.xlu0 %v635, 16
      %v1226 = vpop.permute.xlu0 %1225
      %1227 = vrot.lane.b32.xlu0 %v636, 16
      %v1228 = vpop.permute.xlu0 %1227
      %1229 = vrot.lane.b32.xlu0 %v637, 16
      %v1230 = vpop.permute.xlu0 %1229
      %1231 = vrot.lane.b32.xlu0 %v638, 16
      %v1232 = vpop.permute.xlu0 %1231
      %1233 = vrot.lane.b32.xlu0 %v639, 16
      %v1234 = vpop.permute.xlu0 %1233
      %1235 = vrot.lane.b32.xlu0 %v640, 16
      %v1236 = vpop.permute.xlu0 %1235
      %1237 = vrot.lane.b32.xlu0 %v641, 16
      %v1238 = vpop.permute.xlu0 %1237
      %1239 = vrot.lane.b32.xlu0 %v642, 16
      %v1240 = vpop.permute.xlu0 %1239
      %1241 = vrot.lane.b32.xlu0 %v643, 16
      %v1242 = vpop.permute.xlu0 %1241
      %1243 = vrot.lane.b32.xlu0 %v644, 16
      %v1244 = vpop.permute.xlu0 %1243
      %1245 = vrot.lane.b32.xlu0 %v645, 16
      %v1246 = vpop.permute.xlu0 %1245
      %1247 = vrot.lane.b32.xlu0 %v646, 16
      %v1248 = vpop.permute.xlu0 %1247
      %1249 = vrot.lane.b32.xlu0 %v647, 16
      %v1250 = vpop.permute.xlu0 %1249
      %1251 = vrot.lane.b32.xlu0 %v648, 16
      %v1252 = vpop.permute.xlu0 %1251
      %1253 = vrot.lane.b32.xlu0 %v649, 16
      %v1254 = vpop.permute.xlu0 %1253
      %1255 = vrot.lane.b32.xlu0 %v650, 16
      %v1256 = vpop.permute.xlu0 %1255
      %1257 = vrot.lane.b32.xlu0 %v651, 16
      %v1258 = vpop.permute.xlu0 %1257
      %1259 = vrot.lane.b32.xlu0 %v652, 16
      %v1260 = vpop.permute.xlu0 %1259
      %1261 = vrot.lane.b32.xlu0 %v653, 16
      %v1262 = vpop.permute.xlu0 %1261
      %1327 = vrot.lane.b32.xlu0 %v654, 20
      %v1328 = vpop.permute.xlu0 %1327
      %1329 = vrot.lane.b32.xlu0 %v655, 20
      %v1330 = vpop.permute.xlu0 %1329
      %1331 = vrot.lane.b32.xlu0 %v656, 20
      %v1332 = vpop.permute.xlu0 %1331
      %1333 = vrot.lane.b32.xlu0 %v657, 20
      %v1334 = vpop.permute.xlu0 %1333
      %1335 = vrot.lane.b32.xlu0 %v658, 20
      %v1336 = vpop.permute.xlu0 %1335
      %1337 = vrot.lane.b32.xlu0 %v659, 20
      %v1338 = vpop.permute.xlu0 %1337
      %1339 = vrot.lane.b32.xlu0 %v660, 20
      %v1340 = vpop.permute.xlu0 %1339
      %1341 = vrot.lane.b32.xlu0 %v661, 20
      %v1342 = vpop.permute.xlu0 %1341
      %1343 = vrot.lane.b32.xlu0 %v662, 20
      %v1344 = vpop.permute.xlu0 %1343
      %1345 = vrot.lane.b32.xlu0 %v663, 20
      %v1346 = vpop.permute.xlu0 %1345
      %1347 = vrot.lane.b32.xlu0 %v664, 20
      %v1348 = vpop.permute.xlu0 %1347
      %1349 = vrot.lane.b32.xlu0 %v665, 20
      %v1350 = vpop.permute.xlu0 %1349
      %1351 = vrot.lane.b32.xlu0 %v666, 20
      %v1352 = vpop.permute.xlu0 %1351
      %1353 = vrot.lane.b32.xlu0 %v667, 20
      %v1354 = vpop.permute.xlu0 %1353
      %1355 = vrot.lane.b32.xlu0 %v668, 20
      %v1356 = vpop.permute.xlu0 %1355
      %1357 = vrot.lane.b32.xlu0 %v669, 20
      %v1358 = vpop.permute.xlu0 %1357
      %1359 = vrot.lane.b32.xlu0 %v670, 20
      %v1360 = vpop.permute.xlu0 %1359
      %1361 = vrot.lane.b32.xlu0 %v671, 20
      %v1362 = vpop.permute.xlu0 %1361
      %1363 = vrot.lane.b32.xlu0 %v672, 20
      %v1364 = vpop.permute.xlu0 %1363
      %1365 = vrot.lane.b32.xlu0 %v673, 20
      %v1366 = vpop.permute.xlu0 %1365
      %1367 = vrot.lane.b32.xlu0 %v674, 20
      %v1368 = vpop.permute.xlu0 %1367
      %1369 = vrot.lane.b32.xlu0 %v675, 20
      %v1370 = vpop.permute.xlu0 %1369
      %1371 = vrot.lane.b32.xlu0 %v676, 20
      %v1372 = vpop.permute.xlu0 %1371
      %1373 = vrot.lane.b32.xlu0 %v677, 20
      %v1374 = vpop.permute.xlu0 %1373
      %1375 = vrot.lane.b32.xlu0 %v678, 20
      %v1376 = vpop.permute.xlu0 %1375
      %1377 = vrot.lane.b32.xlu0 %v679, 20
      %v1378 = vpop.permute.xlu0 %1377
      %1379 = vrot.lane.b32.xlu0 %v680, 20
      %v1380 = vpop.permute.xlu0 %1379
      %1381 = vrot.lane.b32.xlu0 %v681, 20
      %v1382 = vpop.permute.xlu0 %1381
      %1383 = vrot.lane.b32.xlu0 %v682, 20
      %v1384 = vpop.permute.xlu0 %1383
      %1385 = vrot.lane.b32.xlu0 %v683, 20
      %v1386 = vpop.permute.xlu0 %1385
      %1387 = vrot.lane.b32.xlu0 %v684, 20
      %v1388 = vpop.permute.xlu0 %1387
      %1389 = vrot.lane.b32.xlu0 %v685, 20
      %v1390 = vpop.permute.xlu0 %1389
      %1455 = vrot.lane.b32.xlu0 %v687, 24
      %v1456 = vpop.permute.xlu0 %1455
      %1457 = vrot.lane.b32.xlu0 %v688, 24
      %v1458 = vpop.permute.xlu0 %1457
      %1459 = vrot.lane.b32.xlu0 %v689, 24
      %v1460 = vpop.permute.xlu0 %1459
      %1461 = vrot.lane.b32.xlu0 %v690, 24
      %v1462 = vpop.permute.xlu0 %1461
      %1463 = vrot.lane.b32.xlu0 %v691, 24
      %v1464 = vpop.permute.xlu0 %1463
      %1465 = vrot.lane.b32.xlu0 %v692, 24
      %v1466 = vpop.permute.xlu0 %1465
      %1467 = vrot.lane.b32.xlu0 %v693, 24
      %v1468 = vpop.permute.xlu0 %1467
      %1469 = vrot.lane.b32.xlu0 %v694, 24
      %v1470 = vpop.permute.xlu0 %1469
      %1471 = vrot.lane.b32.xlu0 %v695, 24
      %v1472 = vpop.permute.xlu0 %1471
      %1473 = vrot.lane.b32.xlu0 %v696, 24
      %v1474 = vpop.permute.xlu0 %1473
      %1475 = vrot.lane.b32.xlu0 %v697, 24
      %v1476 = vpop.permute.xlu0 %1475
      %1477 = vrot.lane.b32.xlu0 %v698, 24
      %v1478 = vpop.permute.xlu0 %1477
      %1479 = vrot.lane.b32.xlu0 %v699, 24
      %v1480 = vpop.permute.xlu0 %1479
      %1481 = vrot.lane.b32.xlu0 %v700, 24
      %v1482 = vpop.permute.xlu0 %1481
      %1483 = vrot.lane.b32.xlu0 %v701, 24
      %v1484 = vpop.permute.xlu0 %1483
      %1485 = vrot.lane.b32.xlu0 %v702, 24
      %v1486 = vpop.permute.xlu0 %1485
      %1487 = vrot.lane.b32.xlu0 %v703, 24
      %v1488 = vpop.permute.xlu0 %1487
      %1489 = vrot.lane.b32.xlu0 %v704, 24
      %v1490 = vpop.permute.xlu0 %1489
      %1491 = vrot.lane.b32.xlu0 %v705, 24
      %v1492 = vpop.permute.xlu0 %1491
      %1493 = vrot.lane.b32.xlu0 %v706, 24
      %v1494 = vpop.permute.xlu0 %1493
      %1495 = vrot.lane.b32.xlu0 %v707, 24
      %v1496 = vpop.permute.xlu0 %1495
      %1497 = vrot.lane.b32.xlu0 %v708, 24
      %v1498 = vpop.permute.xlu0 %1497
      %1499 = vrot.lane.b32.xlu0 %v709, 24
      %v1500 = vpop.permute.xlu0 %1499
      %1501 = vrot.lane.b32.xlu0 %v710, 24
      %v1502 = vpop.permute.xlu0 %1501
      %1503 = vrot.lane.b32.xlu0 %v711, 24
      %v1504 = vpop.permute.xlu0 %1503
      %1505 = vrot.lane.b32.xlu0 %v712, 24
      %v1506 = vpop.permute.xlu0 %1505
      %1507 = vrot.lane.b32.xlu0 %v713, 24
      %v1508 = vpop.permute.xlu0 %1507
      %1509 = vrot.lane.b32.xlu0 %v714, 24
      %v1510 = vpop.permute.xlu0 %1509
      %1511 = vrot.lane.b32.xlu0 %v715, 24
      %v1512 = vpop.permute.xlu0 %1511
      %1513 = vrot.lane.b32.xlu0 %v716, 24
      %v1514 = vpop.permute.xlu0 %1513
      %1515 = vrot.lane.b32.xlu0 %v717, 24
      %v1516 = vpop.permute.xlu0 %1515
      %1517 = vrot.lane.b32.xlu0 %v718, 24
      %v1518 = vpop.permute.xlu0 %1517
      %1583 = vrot.lane.b32.xlu0 %v719, 28
      %v1584 = vpop.permute.xlu0 %1583
      %1585 = vrot.lane.b32.xlu0 %v720, 28
      %v1586 = vpop.permute.xlu0 %1585
      %1587 = vrot.lane.b32.xlu0 %v721, 28
      %v1588 = vpop.permute.xlu0 %1587
      %1589 = vrot.lane.b32.xlu0 %v722, 28
      %v1590 = vpop.permute.xlu0 %1589
      %1591 = vrot.lane.b32.xlu0 %v723, 28
      %v1592 = vpop.permute.xlu0 %1591
      %1593 = vrot.lane.b32.xlu0 %v724, 28
      %v1594 = vpop.permute.xlu0 %1593
      %1595 = vrot.lane.b32.xlu0 %v725, 28
      %v1596 = vpop.permute.xlu0 %1595
      %1597 = vrot.lane.b32.xlu0 %v726, 28
      %v1598 = vpop.permute.xlu0 %1597
      %1599 = vrot.lane.b32.xlu0 %v727, 28
      %v1600 = vpop.permute.xlu0 %1599
      %1601 = vrot.lane.b32.xlu0 %v728, 28
      %v1602 = vpop.permute.xlu0 %1601
      %1603 = vrot.lane.b32.xlu0 %v729, 28
      %v1604 = vpop.permute.xlu0 %1603
      %1605 = vrot.lane.b32.xlu0 %v730, 28
      %v1606 = vpop.permute.xlu0 %1605
      %1607 = vrot.lane.b32.xlu0 %v731, 28
      %v1608 = vpop.permute.xlu0 %1607
      %1609 = vrot.lane.b32.xlu0 %v732, 28
      %v1610 = vpop.permute.xlu0 %1609
      %1611 = vrot.lane.b32.xlu0 %v733, 28
      %v1612 = vpop.permute.xlu0 %1611
      %1613 = vrot.lane.b32.xlu0 %v734, 28
      %v1614 = vpop.permute.xlu0 %1613
      %1615 = vrot.lane.b32.xlu0 %v735, 28
      %v1616 = vpop.permute.xlu0 %1615
      %1617 = vrot.lane.b32.xlu0 %v736, 28
      %v1618 = vpop.permute.xlu0 %1617
      %1619 = vrot.lane.b32.xlu0 %v737, 28
      %v1620 = vpop.permute.xlu0 %1619
      %1621 = vrot.lane.b32.xlu0 %v738, 28
      %v1622 = vpop.permute.xlu0 %1621
      %1623 = vrot.lane.b32.xlu0 %v739, 28
      %v1624 = vpop.permute.xlu0 %1623
      %1625 = vrot.lane.b32.xlu0 %v740, 28
      %v1626 = vpop.permute.xlu0 %1625
      %1627 = vrot.lane.b32.xlu0 %v741, 28
      %v1628 = vpop.permute.xlu0 %1627
      %1629 = vrot.lane.b32.xlu0 %v742, 28
      %v1630 = vpop.permute.xlu0 %1629
      %1631 = vrot.lane.b32.xlu0 %v743, 28
      %v1632 = vpop.permute.xlu0 %1631
      %1633 = vrot.lane.b32.xlu0 %v744, 28
      %v1634 = vpop.permute.xlu0 %1633
      %1635 = vrot.lane.b32.xlu0 %v745, 28
      %v1636 = vpop.permute.xlu0 %1635
      %1637 = vrot.lane.b32.xlu0 %v746, 28
      %v1638 = vpop.permute.xlu0 %1637
      %1639 = vrot.lane.b32.xlu0 %v747, 28
      %v1640 = vpop.permute.xlu0 %1639
      %1641 = vrot.lane.b32.xlu0 %v748, 28
      %v1642 = vpop.permute.xlu0 %1641
      %1643 = vrot.lane.b32.xlu0 %v749, 28
      %v1644 = vpop.permute.xlu0 %1643
      %1645 = vrot.lane.b32.xlu0 %v750, 28
      %v1646 = vpop.permute.xlu0 %1645
      %1711 = vrot.lane.b32.xlu0 %v751, 32
      %v1712 = vpop.permute.xlu0 %1711
      %1713 = vrot.lane.b32.xlu0 %v752, 32
      %v1714 = vpop.permute.xlu0 %1713
      %1715 = vrot.lane.b32.xlu0 %v753, 32
      %v1716 = vpop.permute.xlu0 %1715
      %1717 = vrot.lane.b32.xlu0 %v754, 32
      %v1718 = vpop.permute.xlu0 %1717
      %1719 = vrot.lane.b32.xlu0 %v755, 32
      %v1720 = vpop.permute.xlu0 %1719
      %1721 = vrot.lane.b32.xlu0 %v756, 32
      %v1722 = vpop.permute.xlu0 %1721
      %1723 = vrot.lane.b32.xlu0 %v757, 32
      %v1724 = vpop.permute.xlu0 %1723
      %1725 = vrot.lane.b32.xlu0 %v758, 32
      %v1726 = vpop.permute.xlu0 %1725
      %1727 = vrot.lane.b32.xlu0 %v759, 32
      %v1728 = vpop.permute.xlu0 %1727
      %1729 = vrot.lane.b32.xlu0 %v760, 32
      %v1730 = vpop.permute.xlu0 %1729
      %1731 = vrot.lane.b32.xlu0 %v761, 32
      %v1732 = vpop.permute.xlu0 %1731
      %1733 = vrot.lane.b32.xlu0 %v762, 32
      %v1734 = vpop.permute.xlu0 %1733
      %1735 = vrot.lane.b32.xlu0 %v763, 32
      %v1736 = vpop.permute.xlu0 %1735
      %1737 = vrot.lane.b32.xlu0 %v764, 32
      %v1738 = vpop.permute.xlu0 %1737
      %1739 = vrot.lane.b32.xlu0 %v765, 32
      %v1740 = vpop.permute.xlu0 %1739
      %1741 = vrot.lane.b32.xlu0 %v766, 32
      %v1742 = vpop.permute.xlu0 %1741
      %1743 = vrot.lane.b32.xlu0 %v767, 32
      %v1744 = vpop.permute.xlu0 %1743
      %1745 = vrot.lane.b32.xlu0 %v768, 32
      %v1746 = vpop.permute.xlu0 %1745
      %1747 = vrot.lane.b32.xlu0 %v769, 32
      %v1748 = vpop.permute.xlu0 %1747
      %1749 = vrot.lane.b32.xlu0 %v770, 32
      %v1750 = vpop.permute.xlu0 %1749
      %1751 = vrot.lane.b32.xlu0 %v771, 32
      %v1752 = vpop.permute.xlu0 %1751
      %1753 = vrot.lane.b32.xlu0 %v772, 32
      %v1754 = vpop.permute.xlu0 %1753
      %1755 = vrot.lane.b32.xlu0 %v773, 32
      %v1756 = vpop.permute.xlu0 %1755
      %1757 = vrot.lane.b32.xlu0 %v774, 32
      %v1758 = vpop.permute.xlu0 %1757
      %1759 = vrot.lane.b32.xlu0 %v775, 32
      %v1760 = vpop.permute.xlu0 %1759
      %1761 = vrot.lane.b32.xlu0 %v776, 32
      %v1762 = vpop.permute.xlu0 %1761
      %1763 = vrot.lane.b32.xlu0 %v777, 32
      %v1764 = vpop.permute.xlu0 %1763
      %1765 = vrot.lane.b32.xlu0 %v778, 32
      %v1766 = vpop.permute.xlu0 %1765
      %1767 = vrot.lane.b32.xlu0 %v779, 32
      %v1768 = vpop.permute.xlu0 %1767
      %1769 = vrot.lane.b32.xlu0 %v780, 32
      %v1770 = vpop.permute.xlu0 %1769
      %1771 = vrot.lane.b32.xlu0 %v781, 32
      %v1772 = vpop.permute.xlu0 %1771
      %1773 = vrot.lane.b32.xlu0 %v782, 32
      %v1774 = vpop.permute.xlu0 %1773
      %v1807 = vsel %vm405, %v494, %v816
      %v1808 = vsel %vm405, %v495, %v818
      %v1809 = vsel %vm405, %v496, %v820
      %v1810 = vsel %vm405, %v497, %v822
      %v1811 = vsel %vm405, %v498, %v824
      %v1812 = vsel %vm405, %v499, %v826
      %v1813 = vsel %vm405, %v500, %v828
      %v1814 = vsel %vm405, %v501, %v830
      %v1815 = vsel %vm405, %v502, %v832
      %v1816 = vsel %vm405, %v503, %v834
      %v1817 = vsel %vm405, %v504, %v836
      %v1818 = vsel %vm405, %v505, %v838
      %v1819 = vsel %vm405, %v506, %v840
      %v1820 = vsel %vm405, %v507, %v842
      %v1821 = vsel %vm405, %v508, %v844
      %v1822 = vsel %vm405, %v509, %v846
      %v1823 = vsel %vm405, %v510, %v848
      %v1824 = vsel %vm405, %v511, %v850
      %v1825 = vsel %vm405, %v512, %v852
      %v1826 = vsel %vm405, %v513, %v854
      %v1827 = vsel %vm405, %v514, %v856
      %v1828 = vsel %vm405, %v515, %v858
      %v1829 = vsel %vm405, %v516, %v860
      %v1830 = vsel %vm405, %v517, %v862
      %v1831 = vsel %vm405, %v518, %v864
      %v1832 = vsel %vm405, %v519, %v866
      %v1833 = vsel %vm405, %v520, %v868
      %v1834 = vsel %vm405, %v521, %v870
      %v1835 = vsel %vm405, %v522, %v872
      %v1836 = vsel %vm405, %v523, %v874
      %v1837 = vsel %vm405, %v524, %v876
      %v1838 = vsel %vm405, %v525, %v878
      %vm1839 = vcmask 64512
      %v1840 = vsel %vm1839, %v1807, %v944
      %v1841 = vsel %vm1839, %v1808, %v946
      %v1842 = vsel %vm1839, %v1809, %v948
      %v1843 = vsel %vm1839, %v1810, %v950
      %v1844 = vsel %vm1839, %v1811, %v952
      %v1845 = vsel %vm1839, %v1812, %v954
      %v1846 = vsel %vm1839, %v1813, %v956
      %v1847 = vsel %vm1839, %v1814, %v958
      %v1848 = vsel %vm1839, %v1815, %v960
      %v1849 = vsel %vm1839, %v1816, %v962
      %v1850 = vsel %vm1839, %v1817, %v964
      %v1851 = vsel %vm1839, %v1818, %v966
      %v1852 = vsel %vm1839, %v1819, %v968
      %v1853 = vsel %vm1839, %v1820, %v970
      %v1854 = vsel %vm1839, %v1821, %v972
      %v1855 = vsel %vm1839, %v1822, %v974
      %v1856 = vsel %vm1839, %v1823, %v976
      %v1857 = vsel %vm1839, %v1824, %v978
      %v1858 = vsel %vm1839, %v1825, %v980
      %v1859 = vsel %vm1839, %v1826, %v982
      %v1860 = vsel %vm1839, %v1827, %v984
      %v1861 = vsel %vm1839, %v1828, %v986
      %v1862 = vsel %vm1839, %v1829, %v988
      %v1863 = vsel %vm1839, %v1830, %v990
      %v1864 = vsel %vm1839, %v1831, %v992
      %v1865 = vsel %vm1839, %v1832, %v994
      %v1866 = vsel %vm1839, %v1833, %v996
      %v1867 = vsel %vm1839, %v1834, %v998
      %v1868 = vsel %vm1839, %v1835, %v1000
      %v1869 = vsel %vm1839, %v1836, %v1002
      %v1870 = vsel %vm1839, %v1837, %v1004
      %v1871 = vsel %vm1839, %v1838, %v1006
      %vm1872 = vcmask 97280
      %v1873 = vsel %vm1872, %v1840, %v1072
      %v1874 = vsel %vm1872, %v1841, %v1074
      %v1875 = vsel %vm1872, %v1842, %v1076
      %v1876 = vsel %vm1872, %v1843, %v1078
      %v1877 = vsel %vm1872, %v1844, %v1080
      %v1878 = vsel %vm1872, %v1845, %v1082
      %v1879 = vsel %vm1872, %v1846, %v1084
      %v1880 = vsel %vm1872, %v1847, %v1086
      %v1881 = vsel %vm1872, %v1848, %v1088
      %v1882 = vsel %vm1872, %v1849, %v1090
      %v1883 = vsel %vm1872, %v1850, %v1092
      %v1884 = vsel %vm1872, %v1851, %v1094
      %v1885 = vsel %vm1872, %v1852, %v1096
      %v1886 = vsel %vm1872, %v1853, %v1098
      %v1887 = vsel %vm1872, %v1854, %v1100
      %v1888 = vsel %vm1872, %v1855, %v1102
      %v1889 = vsel %vm1872, %v1856, %v1104
      %v1890 = vsel %vm1872, %v1857, %v1106
      %v1891 = vsel %vm1872, %v1858, %v1108
      %v1892 = vsel %vm1872, %v1859, %v1110
      %v1893 = vsel %vm1872, %v1860, %v1112
      %v1894 = vsel %vm1872, %v1861, %v1114
      %v1895 = vsel %vm1872, %v1862, %v1116
      %v1896 = vsel %vm1872, %v1863, %v1118
      %v1897 = vsel %vm1872, %v1864, %v1120
      %v1898 = vsel %vm1872, %v1865, %v1122
      %v1899 = vsel %vm1872, %v1866, %v1124
      %v1900 = vsel %vm1872, %v1867, %v1126
      %v1901 = vsel %vm1872, %v1868, %v1128
      %v1902 = vsel %vm1872, %v1869, %v1130
      %v1903 = vsel %vm1872, %v1870, %v1132
      %v1904 = vsel %vm1872, %v1871, %v1134
      %vm1905 = vcmask 130048
      %v1906 = vsel %vm1905, %v1873, %v1200
      %v1907 = vsel %vm1905, %v1874, %v1202
      %v1908 = vsel %vm1905, %v1875, %v1204
      %v1909 = vsel %vm1905, %v1876, %v1206
      %v1910 = vsel %vm1905, %v1877, %v1208
      %v1911 = vsel %vm1905, %v1878, %v1210
      %v1912 = vsel %vm1905, %v1879, %v1212
      %v1913 = vsel %vm1905, %v1880, %v1214
      %v1914 = vsel %vm1905, %v1881, %v1216
      %v1915 = vsel %vm1905, %v1882, %v1218
      %v1916 = vsel %vm1905, %v1883, %v1220
      %v1917 = vsel %vm1905, %v1884, %v1222
      %v1918 = vsel %vm1905, %v1885, %v1224
      %v1919 = vsel %vm1905, %v1886, %v1226
      %v1920 = vsel %vm1905, %v1887, %v1228
      %v1921 = vsel %vm1905, %v1888, %v1230
      %v1922 = vsel %vm1905, %v1889, %v1232
      %v1923 = vsel %vm1905, %v1890, %v1234
      %v1924 = vsel %vm1905, %v1891, %v1236
      %v1925 = vsel %vm1905, %v1892, %v1238
      %v1926 = vsel %vm1905, %v1893, %v1240
      %v1927 = vsel %vm1905, %v1894, %v1242
      %v1928 = vsel %vm1905, %v1895, %v1244
      %v1929 = vsel %vm1905, %v1896, %v1246
      %v1930 = vsel %vm1905, %v1897, %v1248
      %v1931 = vsel %vm1905, %v1898, %v1250
      %v1932 = vsel %vm1905, %v1899, %v1252
      %v1933 = vsel %vm1905, %v1900, %v1254
      %v1934 = vsel %vm1905, %v1901, %v1256
      %v1935 = vsel %vm1905, %v1902, %v1258
      %v1936 = vsel %vm1905, %v1903, %v1260
      %v1937 = vsel %vm1905, %v1904, %v1262
      %vm1938 = vcmask 162816
      %v1939 = vsel %vm1938, %v1906, %v1328
      %v1940 = vsel %vm1938, %v1907, %v1330
      %v1941 = vsel %vm1938, %v1908, %v1332
      %v1942 = vsel %vm1938, %v1909, %v1334
      %v1943 = vsel %vm1938, %v1910, %v1336
      %v1944 = vsel %vm1938, %v1911, %v1338
      %v1945 = vsel %vm1938, %v1912, %v1340
      %v1946 = vsel %vm1938, %v1913, %v1342
      %v1947 = vsel %vm1938, %v1914, %v1344
      %v1948 = vsel %vm1938, %v1915, %v1346
      %v1949 = vsel %vm1938, %v1916, %v1348
      %v1950 = vsel %vm1938, %v1917, %v1350
      %v1951 = vsel %vm1938, %v1918, %v1352
      %v1952 = vsel %vm1938, %v1919, %v1354
      %v1953 = vsel %vm1938, %v1920, %v1356
      %v1954 = vsel %vm1938, %v1921, %v1358
      %v1955 = vsel %vm1938, %v1922, %v1360
      %v1956 = vsel %vm1938, %v1923, %v1362
      %v1957 = vsel %vm1938, %v1924, %v1364
      %v1958 = vsel %vm1938, %v1925, %v1366
      %v1959 = vsel %vm1938, %v1926, %v1368
      %v1960 = vsel %vm1938, %v1927, %v1370
      %v1961 = vsel %vm1938, %v1928, %v1372
      %v1962 = vsel %vm1938, %v1929, %v1374
      %v1963 = vsel %vm1938, %v1930, %v1376
      %v1964 = vsel %vm1938, %v1931, %v1378
      %v1965 = vsel %vm1938, %v1932, %v1380
      %v1966 = vsel %vm1938, %v1933, %v1382
      %v1967 = vsel %vm1938, %v1934, %v1384
      %v1968 = vsel %vm1938, %v1935, %v1386
      %v1969 = vsel %vm1938, %v1936, %v1388
      %v1970 = vsel %vm1938, %v1937, %v1390
      %vm1971 = vcmask 195584
      %v1972 = vsel %vm1971, %v1939, %v1456
      %v1973 = vsel %vm1971, %v1940, %v1458
      %v1974 = vsel %vm1971, %v1941, %v1460
      %v1975 = vsel %vm1971, %v1942, %v1462
      %v1976 = vsel %vm1971, %v1943, %v1464
      %v1977 = vsel %vm1971, %v1944, %v1466
      %v1978 = vsel %vm1971, %v1945, %v1468
      %v1979 = vsel %vm1971, %v1946, %v1470
      %v1980 = vsel %vm1971, %v1947, %v1472
      %v1981 = vsel %vm1971, %v1948, %v1474
      %v1982 = vsel %vm1971, %v1949, %v1476
      %v1983 = vsel %vm1971, %v1950, %v1478
      %v1984 = vsel %vm1971, %v1951, %v1480
      %v1985 = vsel %vm1971, %v1952, %v1482
      %v1986 = vsel %vm1971, %v1953, %v1484
      %v1987 = vsel %vm1971, %v1954, %v1486
      %v1988 = vsel %vm1971, %v1955, %v1488
      %v1989 = vsel %vm1971, %v1956, %v1490
      %v1990 = vsel %vm1971, %v1957, %v1492
      %v1991 = vsel %vm1971, %v1958, %v1494
      %v1992 = vsel %vm1971, %v1959, %v1496
      %v1993 = vsel %vm1971, %v1960, %v1498
      %v1994 = vsel %vm1971, %v1961, %v1500
      %v1995 = vsel %vm1971, %v1962, %v1502
      %v1996 = vsel %vm1971, %v1963, %v1504
      %v1997 = vsel %vm1971, %v1964, %v1506
      %v1998 = vsel %vm1971, %v1965, %v1508
      %v1999 = vsel %vm1971, %v1966, %v1510
      %v2000 = vsel %vm1971, %v1967, %v1512
      %v2001 = vsel %vm1971, %v1968, %v1514
      %v2002 = vsel %vm1971, %v1969, %v1516
      %v2003 = vsel %vm1971, %v1970, %v1518
      %vm2004 = vcmask 228352
      %v2005 = vsel %vm2004, %v1972, %v1584
      %v2006 = vsel %vm2004, %v1973, %v1586
      %v2007 = vsel %vm2004, %v1974, %v1588
      %v2008 = vsel %vm2004, %v1975, %v1590
      %v2009 = vsel %vm2004, %v1976, %v1592
      %v2010 = vsel %vm2004, %v1977, %v1594
      %v2011 = vsel %vm2004, %v1978, %v1596
      %v2012 = vsel %vm2004, %v1979, %v1598
      %v2013 = vsel %vm2004, %v1980, %v1600
      %v2014 = vsel %vm2004, %v1981, %v1602
      %v2015 = vsel %vm2004, %v1982, %v1604
      %v2016 = vsel %vm2004, %v1983, %v1606
      %v2017 = vsel %vm2004, %v1984, %v1608
      %v2018 = vsel %vm2004, %v1985, %v1610
      %v2019 = vsel %vm2004, %v1986, %v1612
      %v2020 = vsel %vm2004, %v1987, %v1614
      %v2021 = vsel %vm2004, %v1988, %v1616
      %v2022 = vsel %vm2004, %v1989, %v1618
      %v2023 = vsel %vm2004, %v1990, %v1620
      %v2024 = vsel %vm2004, %v1991, %v1622
      %v2025 = vsel %vm2004, %v1992, %v1624
      %v2026 = vsel %vm2004, %v1993, %v1626
      %v2027 = vsel %vm2004, %v1994, %v1628
      %v2028 = vsel %vm2004, %v1995, %v1630
      %v2029 = vsel %vm2004, %v1996, %v1632
      %v2030 = vsel %vm2004, %v1997, %v1634
      %v2031 = vsel %vm2004, %v1998, %v1636
      %v2032 = vsel %vm2004, %v1999, %v1638
      %v2033 = vsel %vm2004, %v2000, %v1640
      %v2034 = vsel %vm2004, %v2001, %v1642
      %v2035 = vsel %vm2004, %v2002, %v1644
      %v2036 = vsel %vm2004, %v2003, %v1646
      %vm2037 = vcmask 261120
      %v2038 = vsel %vm2037, %v2005, %v1712
      %v2039 = vsel %vm2037, %v2006, %v1714
      %v2040 = vsel %vm2037, %v2007, %v1716
      %v2041 = vsel %vm2037, %v2008, %v1718
      %v2042 = vsel %vm2037, %v2009, %v1720
      %v2043 = vsel %vm2037, %v2010, %v1722
      %v2044 = vsel %vm2037, %v2011, %v1724
      %v2045 = vsel %vm2037, %v2012, %v1726
      %v2046 = vsel %vm2037, %v2013, %v1728
      %v2047 = vsel %vm2037, %v2014, %v1730
      %v2048 = vsel %vm2037, %v2015, %v1732
      %v2049 = vsel %vm2037, %v2016, %v1734
      %v2050 = vsel %vm2037, %v2017, %v1736
      %v2051 = vsel %vm2037, %v2018, %v1738
      %v2052 = vsel %vm2037, %v2019, %v1740
      %v2053 = vsel %vm2037, %v2020, %v1742
      %v2054 = vsel %vm2037, %v2021, %v1744
      %v2055 = vsel %vm2037, %v2022, %v1746
      %v2056 = vsel %vm2037, %v2023, %v1748
      %v2057 = vsel %vm2037, %v2024, %v1750
      %v2058 = vsel %vm2037, %v2025, %v1752
      %v2059 = vsel %vm2037, %v2026, %v1754
      %v2060 = vsel %vm2037, %v2027, %v1756
      %v2061 = vsel %vm2037, %v2028, %v1758
      %v2062 = vsel %vm2037, %v2029, %v1760
      %v2063 = vsel %vm2037, %v2030, %v1762
      %v2064 = vsel %vm2037, %v2031, %v1764
      %v2065 = vsel %vm2037, %v2032, %v1766
      %v2066 = vsel %vm2037, %v2033, %v1768
      %v2067 = vsel %vm2037, %v2034, %v1770
      %v2068 = vsel %vm2037, %v2035, %v1772
      %v2069 = vsel %vm2037, %v2036, %v1774
      %v2070 = vld [vmem:[%s3] sm:$0xff]
      %v2071 = vld [vmem:[%s3 + $0x8] sm:$0xff]
      %v2072 = vld [vmem:[%s3 + $0x10] sm:$0xff]
      %v2073 = vld [vmem:[%s3 + $0x18] sm:$0xff]
      %v2074 = vld [vmem:[%s3 + $0x20] sm:$0xf]
      %v2075 = vld [vmem:[%s4] sm:$0x1]
      %v2077 = vlaneseq
      %v2078 = vshrl.u32 %v2077, 7
      %v2079 = vsub.s32 0, %v2078
      %v2080 = vrot.slane %v2075, %v2079
      %vm2082 = vcmask 293888
      %v2084 = vsel %vm2082, %v2038, 0
      %v2087 = vsel %vm2082, %v2039, 0
      %v2090 = vsel %vm2082, %v2040, 0
      %v2093 = vsel %vm2082, %v2041, 0
      %v2096 = vsel %vm2082, %v2042, 0
      %v2099 = vsel %vm2082, %v2043, 0
      %v2102 = vsel %vm2082, %v2044, 0
      %v2105 = vsel %vm2082, %v2045, 0
      %v2108 = vsel %vm2082, %v2046, 0
      %v2111 = vsel %vm2082, %v2047, 0
      %v2114 = vsel %vm2082, %v2048, 0
      %v2117 = vsel %vm2082, %v2049, 0
      %v2120 = vsel %vm2082, %v2050, 0
      %v2123 = vsel %vm2082, %v2051, 0
      %v2126 = vsel %vm2082, %v2052, 0
      %v2129 = vsel %vm2082, %v2053, 0
      %v2132 = vsel %vm2082, %v2054, 0
      %v2135 = vsel %vm2082, %v2055, 0
      %v2138 = vsel %vm2082, %v2056, 0
      %v2141 = vsel %vm2082, %v2057, 0
      %v2144 = vsel %vm2082, %v2058, 0
      %v2147 = vsel %vm2082, %v2059, 0
      %v2150 = vsel %vm2082, %v2060, 0
      %v2153 = vsel %vm2082, %v2061, 0
      %v2156 = vsel %vm2082, %v2062, 0
      %v2159 = vsel %vm2082, %v2063, 0
      %v2162 = vsel %vm2082, %v2064, 0
      %v2165 = vsel %vm2082, %v2065, 0
      %v2168 = vsel %vm2082, %v2066, 0
      %v2171 = vsel %vm2082, %v2067, 0
      %v2174 = vsel %vm2082, %v2068, 0
      %v2177 = vsel %vm2082, %v2069, 0
      %vm2179 = vcmask 1043456
      %v2181 = vsel %vm2179, %v2074, 0
      %2183 = vmatprep.subr.mxu0 0.0
      %2184 = vmatpush1.msra.mxu0 %v2070
      %2185 = vmatprep.subr.mxu0 0.0
      %2186 = vmatpush1.msra.mxu0 %v2071
      %2187 = vmatprep.subr.mxu0 0.0
      %2188 = vmatpush1.msra.mxu0 %v2072
      %2189 = vmatprep.subr.mxu0 0.0
      %2190 = vmatpush1.msra.mxu0 %v2073
      %2191 = vmatprep.subr.mxu0 0.0
      %2192 = vmatpush1.msra.mxu0 %v2181
      %2193 = vmatprep.subr.mxu0 0.0
      %2194 = vmatpush1.msra.mxu0 0.0
      %2195 = vmatprep.subr.mxu0 0.0
      %2196 = vmatpush1.msra.mxu0 0.0
      %2197 = vmatprep.subr.mxu0 0.0
      %2198 = vmatpush1.msra.mxu0 0.0
      %2199 = vmatprep.subr.mxu0 0.0
      %2200 = vmatpush1.msra.mxu0 0.0
      %2201 = vmatprep.subr.mxu0 0.0
      %2202 = vmatpush1.msra.mxu0 0.0
      %2203 = vmatprep.subr.mxu0 0.0
      %2204 = vmatpush1.msra.mxu0 0.0
      %2205 = vmatprep.subr.mxu0 0.0
      %2206 = vmatpush1.msra.mxu0 0.0
      %2207 = vmatprep.subr.mxu0 0.0
      %2208 = vmatpush1.msra.mxu0 0.0
      %2209 = vmatprep.subr.mxu0 0.0
      %2210 = vmatpush1.msra.mxu0 0.0
      %2211 = vmatprep.subr.mxu0 0.0
      %2212 = vmatpush1.msra.mxu0 0.0
      %2213 = vmatprep.subr.mxu0 0.0
      %2214 = vmatpush1.msra.mxu0 0.0
      %2215 = vmatprep.subr.mxu0 0.0
      %2216 = vmatpush1.msra.mxu0 0.0
      %2217 = vmatprep.subr.mxu0 0.0
      %2218 = vmatpush1.msra.mxu0 0.0
      %2219 = vmatprep.subr.mxu0 0.0
      %2220 = vmatpush1.msra.mxu0 0.0
      %2221 = vmatprep.subr.mxu0 0.0
      %2222 = vmatpush1.msra.mxu0 0.0
      %2223 = vmatprep.subr.mxu0 0.0
      %2224 = vmatpush1.msra.mxu0 0.0
      %2225 = vmatprep.subr.mxu0 0.0
      %2226 = vmatpush1.msra.mxu0 0.0
      %2227 = vmatprep.subr.mxu0 0.0
      %2228 = vmatpush1.msra.mxu0 0.0
      %2229 = vmatprep.subr.mxu0 0.0
      %2230 = vmatpush1.msra.mxu0 0.0
      %2231 = vmatprep.subr.mxu0 0.0
      %2232 = vmatpush1.msra.mxu0 0.0
      %2233 = vmatprep.subr.mxu0 0.0
      %2234 = vmatpush1.msra.mxu0 0.0
      %2235 = vmatprep.subr.mxu0 0.0
      %2236 = vmatpush1.msra.mxu0 0.0
      %2237 = vmatprep.subr.mxu0 0.0
      %2238 = vmatpush1.msra.mxu0 0.0
      %2239 = vmatprep.subr.mxu0 0.0
      %2240 = vmatpush1.msra.mxu0 0.0
      %2241 = vmatprep.subr.mxu0 0.0
      %2242 = vmatpush1.msra.mxu0 0.0
      %2243 = vmatprep.subr.mxu0 0.0
      %2244 = vmatpush1.msra.mxu0 0.0
      %2245 = vmatprep.subr.mxu0 0.0
      %2246 = vmatpush1.msra.mxu0 0.0
      %2247 = vmatprep.mubr.f32.mxu0 0.0
      %2248 = vmatmul.mubr.f32.gmra.mrb[0].mxu0 %v2084
      %v2249 = vpop.f32.mrb[0].mxu0
      %v2250 = vadd.f32 %v2080, %v2249
      %v2251 = vpop.f32.mrb[0].mxu0
      %2252 = vmatprep.mubr.f32.mxu0 0.0
      %2253 = vmatmul.mubr.f32.gmra.mrb[0].mxu0 %v2087
      %v2254 = vpop.f32.mrb[0].mxu0
      %v2255 = vadd.f32 %v2080, %v2254
      %v2256 = vpop.f32.mrb[0].mxu0
      %2257 = vmatprep.mubr.f32.mxu0 0.0
      %2258 = vmatmul.mubr.f32.gmra.mrb[0].mxu0 %v2090
      %v2259 = vpop.f32.mrb[0].mxu0
      %v2260 = vadd.f32 %v2080, %v2259
      %v2261 = vpop.f32.mrb[0].mxu0
      %2262 = vmatprep.mubr.f32.mxu0 0.0
      %2263 = vmatmul.mubr.f32.gmra.mrb[0].mxu0 %v2093
      %v2264 = vpop.f32.mrb[0].mxu0
      %v2265 = vadd.f32 %v2080, %v2264
      %v2266 = vpop.f32.mrb[0].mxu0
      %2267 = vmatprep.mubr.f32.mxu0 0.0
      %2268 = vmatmul.mubr.f32.gmra.mrb[0].mxu0 %v2096
      %v2269 = vpop.f32.mrb[0].mxu0
      %v2270 = vadd.f32 %v2080, %v2269
      %v2271 = vpop.f32.mrb[0].mxu0
      %2272 = vmatprep.mubr.f32.mxu0 0.0
      %2273 = vmatmul.mubr.f32.gmra.mrb[0].mxu0 %v2099
      %v2274 = vpop.f32.mrb[0].mxu0
      %v2275 = vadd.f32 %v2080, %v2274
      %v2276 = vpop.f32.mrb[0].mxu0
      %2277 = vmatprep.mubr.f32.mxu0 0.0
      %2278 = vmatmul.mubr.f32.gmra.mrb[0].mxu0 %v2102
      %v2279 = vpop.f32.mrb[0].mxu0
      %v2280 = vadd.f32 %v2080, %v2279
      %v2281 = vpop.f32.mrb[0].mxu0
      %2282 = vmatprep.mubr.f32.mxu0 0.0
      %2283 = vmatmul.mubr.f32.gmra.mrb[0].mxu0 %v2105
      %v2284 = vpop.f32.mrb[0].mxu0
      %v2285 = vadd.f32 %v2080, %v2284
      %v2286 = vpop.f32.mrb[0].mxu0
      %2287 = vmatprep.mubr.f32.mxu0 0.0
      %2288 = vmatmul.mubr.f32.gmra.mrb[0].mxu0 %v2108
      %v2289 = vpop.f32.mrb[0].mxu0
      %v2290 = vadd.f32 %v2080, %v2289
      %v2291 = vpop.f32.mrb[0].mxu0
      %2292 = vmatprep.mubr.f32.mxu0 0.0
      %2293 = vmatmul.mubr.f32.gmra.mrb[0].mxu0 %v2111
      %v2294 = vpop.f32.mrb[0].mxu0
      %v2295 = vadd.f32 %v2080, %v2294
      %v2296 = vpop.f32.mrb[0].mxu0
      %2297 = vmatprep.mubr.f32.mxu0 0.0
      %2298 = vmatmul.mubr.f32.gmra.mrb[0].mxu0 %v2114
      %v2299 = vpop.f32.mrb[0].mxu0
      %v2300 = vadd.f32 %v2080, %v2299
      %v2301 = vpop.f32.mrb[0].mxu0
      %2302 = vmatprep.mubr.f32.mxu0 0.0
      %2303 = vmatmul.mubr.f32.gmra.mrb[0].mxu0 %v2117
      %v2304 = vpop.f32.mrb[0].mxu0
      %v2305 = vadd.f32 %v2080, %v2304
      %v2306 = vpop.f32.mrb[0].mxu0
      %2307 = vmatprep.mubr.f32.mxu0 0.0
      %2308 = vmatmul.mubr.f32.gmra.mrb[0].mxu0 %v2120
      %v2309 = vpop.f32.mrb[0].mxu0
      %v2310 = vadd.f32 %v2080, %v2309
      %v2311 = vpop.f32.mrb[0].mxu0
      %2312 = vmatprep.mubr.f32.mxu0 0.0
      %2313 = vmatmul.mubr.f32.gmra.mrb[0].mxu0 %v2123
      %v2314 = vpop.f32.mrb[0].mxu0
      %v2315 = vadd.f32 %v2080, %v2314
      %v2316 = vpop.f32.mrb[0].mxu0
      %2317 = vmatprep.mubr.f32.mxu0 0.0
      %2318 = vmatmul.mubr.f32.gmra.mrb[0].mxu0 %v2126
      %v2319 = vpop.f32.mrb[0].mxu0
      %v2320 = vadd.f32 %v2080, %v2319
      %v2321 = vpop.f32.mrb[0].mxu0
      %2322 = vmatprep.mubr.f32.mxu0 0.0
      %2323 = vmatmul.mubr.f32.gmra.mrb[0].mxu0 %v2129
      %v2324 = vpop.f32.mrb[0].mxu0
      %v2325 = vadd.f32 %v2080, %v2324
      %v2326 = vpop.f32.mrb[0].mxu0
      %2327 = vmatprep.mubr.f32.mxu0 0.0
      %2328 = vmatmul.mubr.f32.gmra.mrb[0].mxu0 %v2132
      %v2329 = vpop.f32.mrb[0].mxu0
      %v2330 = vadd.f32 %v2080, %v2329
      %v2331 = vpop.f32.mrb[0].mxu0
      %2332 = vmatprep.mubr.f32.mxu0 0.0
      %2333 = vmatmul.mubr.f32.gmra.mrb[0].mxu0 %v2135
      %v2334 = vpop.f32.mrb[0].mxu0
      %v2335 = vadd.f32 %v2080, %v2334
      %v2336 = vpop.f32.mrb[0].mxu0
      %2337 = vmatprep.mubr.f32.mxu0 0.0
      %2338 = vmatmul.mubr.f32.gmra.mrb[0].mxu0 %v2138
      %v2339 = vpop.f32.mrb[0].mxu0
      %v2340 = vadd.f32 %v2080, %v2339
      %v2341 = vpop.f32.mrb[0].mxu0
      %2342 = vmatprep.mubr.f32.mxu0 0.0
      %2343 = vmatmul.mubr.f32.gmra.mrb[0].mxu0 %v2141
      %v2344 = vpop.f32.mrb[0].mxu0
      %v2345 = vadd.f32 %v2080, %v2344
      %v2346 = vpop.f32.mrb[0].mxu0
      %2347 = vmatprep.mubr.f32.mxu0 0.0
      %2348 = vmatmul.mubr.f32.gmra.mrb[0].mxu0 %v2144
      %v2349 = vpop.f32.mrb[0].mxu0
      %v2350 = vadd.f32 %v2080, %v2349
      %v2351 = vpop.f32.mrb[0].mxu0
      %2352 = vmatprep.mubr.f32.mxu0 0.0
      %2353 = vmatmul.mubr.f32.gmra.mrb[0].mxu0 %v2147
      %v2354 = vpop.f32.mrb[0].mxu0
      %v2355 = vadd.f32 %v2080, %v2354
      %v2356 = vpop.f32.mrb[0].mxu0
      %2357 = vmatprep.mubr.f32.mxu0 0.0
      %2358 = vmatmul.mubr.f32.gmra.mrb[0].mxu0 %v2150
      %v2359 = vpop.f32.mrb[0].mxu0
      %v2360 = vadd.f32 %v2080, %v2359
      %v2361 = vpop.f32.mrb[0].mxu0
      %2362 = vmatprep.mubr.f32.mxu0 0.0
      %2363 = vmatmul.mubr.f32.gmra.mrb[0].mxu0 %v2153
      %v2364 = vpop.f32.mrb[0].mxu0
      %v2365 = vadd.f32 %v2080, %v2364
      %v2366 = vpop.f32.mrb[0].mxu0
      %2367 = vmatprep.mubr.f32.mxu0 0.0
      %2368 = vmatmul.mubr.f32.gmra.mrb[0].mxu0 %v2156
      %v2369 = vpop.f32.mrb[0].mxu0
      %v2370 = vadd.f32 %v2080, %v2369
      %v2371 = vpop.f32.mrb[0].mxu0
      %2372 = vmatprep.mubr.f32.mxu0 0.0
      %2373 = vmatmul.mubr.f32.gmra.mrb[0].mxu0 %v2159
      %v2374 = vpop.f32.mrb[0].mxu0
      %v2375 = vadd.f32 %v2080, %v2374
      %v2376 = vpop.f32.mrb[0].mxu0
      %2377 = vmatprep.mubr.f32.mxu0 0.0
      %2378 = vmatmul.mubr.f32.gmra.mrb[0].mxu0 %v2162
      %v2379 = vpop.f32.mrb[0].mxu0
      %v2380 = vadd.f32 %v2080, %v2379
      %v2381 = vpop.f32.mrb[0].mxu0
      %2382 = vmatprep.mubr.f32.mxu0 0.0
      %2383 = vmatmul.mubr.f32.gmra.mrb[0].mxu0 %v2165
      %v2384 = vpop.f32.mrb[0].mxu0
      %v2385 = vadd.f32 %v2080, %v2384
      %v2386 = vpop.f32.mrb[0].mxu0
      %2387 = vmatprep.mubr.f32.mxu0 0.0
      %2388 = vmatmul.mubr.f32.gmra.mrb[0].mxu0 %v2168
      %v2389 = vpop.f32.mrb[0].mxu0
      %v2390 = vadd.f32 %v2080, %v2389
      %v2391 = vpop.f32.mrb[0].mxu0
      %2392 = vmatprep.mubr.f32.mxu0 0.0
      %2393 = vmatmul.mubr.f32.gmra.mrb[0].mxu0 %v2171
      %v2394 = vpop.f32.mrb[0].mxu0
      %v2395 = vadd.f32 %v2080, %v2394
      %v2396 = vpop.f32.mrb[0].mxu0
      %2397 = vmatprep.mubr.f32.mxu0 0.0
      %2398 = vmatmul.mubr.f32.gmra.mrb[0].mxu0 %v2174
      %v2399 = vpop.f32.mrb[0].mxu0
      %v2400 = vadd.f32 %v2080, %v2399
      %v2401 = vpop.f32.mrb[0].mxu0
      %2402 = vmatprep.mubr.f32.mxu0 0.0
      %2403 = vmatmul.mubr.f32.gmra.mrb[0].mxu0 %v2177
      %v2404 = vpop.f32.mrb[0].mxu0
      %v2405 = vadd.f32 %v2080, %v2404
      %v2406 = vpop.f32.mrb[0].mxu0
      %2407 = vdwg.mxu0
      %2408 = vmatprep.subr.mxu0 0.0
      %2409 = vmatpush1.msra.mxu0 %v2250
      %2410 = vmatprep.subr.mxu0 0.0
      %2411 = vmatpush1.msra.mxu0 %v2255
      %2412 = vmatprep.subr.mxu0 0.0
      %2413 = vmatpush1.msra.mxu0 %v2260
      %2414 = vmatprep.subr.mxu0 0.0
      %2415 = vmatpush1.msra.mxu0 %v2265
      %2416 = vmatprep.subr.mxu0 0.0
      %2417 = vmatpush1.msra.mxu0 %v2270
      %2418 = vmatprep.subr.mxu0 0.0
      %2419 = vmatpush1.msra.mxu0 %v2275
      %2420 = vmatprep.subr.mxu0 0.0
      %2421 = vmatpush1.msra.mxu0 %v2280
      %2422 = vmatprep.subr.mxu0 0.0
      %2423 = vmatpush1.msra.mxu0 %v2285
      %2424 = vmatprep.subr.mxu0 0.0
      %2425 = vmatpush1.msra.mxu0 %v2290
      %2426 = vmatprep.subr.mxu0 0.0
      %2427 = vmatpush1.msra.mxu0 %v2295
      %2428 = vmatprep.subr.mxu0 0.0
      %2429 = vmatpush1.msra.mxu0 %v2300
      %2430 = vmatprep.subr.mxu0 0.0
      %2431 = vmatpush1.msra.mxu0 %v2305
      %2432 = vmatprep.subr.mxu0 0.0
      %2433 = vmatpush1.msra.mxu0 %v2310
      %2434 = vmatprep.subr.mxu0 0.0
      %2435 = vmatpush1.msra.mxu0 %v2315
      %2436 = vmatprep.subr.mxu0 0.0
      %2437 = vmatpush1.msra.mxu0 %v2320
      %2438 = vmatprep.subr.mxu0 0.0
      %2439 = vmatpush1.msra.mxu0 %v2325
      %2440 = vmatprep.subr.mxu0 0.0
      %2441 = vmatpush1.msra.mxu0 %v2330
      %2442 = vmatprep.subr.mxu0 0.0
      %2443 = vmatpush1.msra.mxu0 %v2335
      %2444 = vmatprep.subr.mxu0 0.0
      %2445 = vmatpush1.msra.mxu0 %v2340
      %2446 = vmatprep.subr.mxu0 0.0
      %2447 = vmatpush1.msra.mxu0 %v2345
      %2448 = vmatprep.subr.mxu0 0.0
      %2449 = vmatpush1.msra.mxu0 %v2350
      %2450 = vmatprep.subr.mxu0 0.0
      %2451 = vmatpush1.msra.mxu0 %v2355
      %2452 = vmatprep.subr.mxu0 0.0
      %2453 = vmatpush1.msra.mxu0 %v2360
      %2454 = vmatprep.subr.mxu0 0.0
      %2455 = vmatpush1.msra.mxu0 %v2365
      %2456 = vmatprep.subr.mxu0 0.0
      %2457 = vmatpush1.msra.mxu0 %v2370
      %2458 = vmatprep.subr.mxu0 0.0
      %2459 = vmatpush1.msra.mxu0 %v2375
      %2460 = vmatprep.subr.mxu0 0.0
      %2461 = vmatpush1.msra.mxu0 %v2380
      %2462 = vmatprep.subr.mxu0 0.0
      %2463 = vmatpush1.msra.mxu0 %v2385
      %2464 = vmatprep.subr.mxu0 0.0
      %2465 = vmatpush1.msra.mxu0 %v2390
      %2466 = vmatprep.subr.mxu0 0.0
      %2467 = vmatpush1.msra.mxu0 %v2395
      %2468 = vmatprep.subr.mxu0 0.0
      %2469 = vmatpush1.msra.mxu0 %v2400
      %2470 = vmatprep.subr.mxu0 0.0
      %2471 = vmatpush1.msra.mxu0 %v2405
      %2472 = vmatprep.mubr.f32.mxu0 1.0
      %2473 = vmatmul.mubr.f32.gmra.mrb[0].mxu0 1.0
      %v2474 = vpop.f32.mrb[0].mxu0
      %v2475 = vadd.f32 0.0, %v2474
      %v2476 = vpop.f32.mrb[0].mxu0
      %2477 = vdwg.mxu0
      %v2478 = vmul.f32 %v2250, %v2250
      %v2479 = vmul.f32 %v2255, %v2255
      %v2480 = vmul.f32 %v2260, %v2260
      %v2481 = vmul.f32 %v2265, %v2265
      %v2482 = vmul.f32 %v2270, %v2270
      %v2483 = vmul.f32 %v2275, %v2275
      %v2484 = vmul.f32 %v2280, %v2280
      %v2485 = vmul.f32 %v2285, %v2285
      %v2486 = vmul.f32 %v2290, %v2290
      %v2487 = vmul.f32 %v2295, %v2295
      %v2488 = vmul.f32 %v2300, %v2300
      %v2489 = vmul.f32 %v2305, %v2305
      %v2490 = vmul.f32 %v2310, %v2310
      %v2491 = vmul.f32 %v2315, %v2315
      %v2492 = vmul.f32 %v2320, %v2320
      %v2493 = vmul.f32 %v2325, %v2325
      %v2494 = vmul.f32 %v2330, %v2330
      %v2495 = vmul.f32 %v2335, %v2335
      %v2496 = vmul.f32 %v2340, %v2340
      %v2497 = vmul.f32 %v2345, %v2345
      %v2498 = vmul.f32 %v2350, %v2350
      %v2499 = vmul.f32 %v2355, %v2355
      %v2500 = vmul.f32 %v2360, %v2360
      %v2501 = vmul.f32 %v2365, %v2365
      %v2502 = vmul.f32 %v2370, %v2370
      %v2503 = vmul.f32 %v2375, %v2375
      %v2504 = vmul.f32 %v2380, %v2380
      %v2505 = vmul.f32 %v2385, %v2385
      %v2506 = vmul.f32 %v2390, %v2390
      %v2507 = vmul.f32 %v2395, %v2395
      %v2508 = vmul.f32 %v2400, %v2400
      %v2509 = vmul.f32 %v2405, %v2405
      %2510 = vmatprep.subr.mxu0 0.0
      %2511 = vmatpush1.msra.mxu0 %v2478
      %2512 = vmatprep.subr.mxu0 0.0
      %2513 = vmatpush1.msra.mxu0 %v2479
      %2514 = vmatprep.subr.mxu0 0.0
      %2515 = vmatpush1.msra.mxu0 %v2480
      %2516 = vmatprep.subr.mxu0 0.0
      %2517 = vmatpush1.msra.mxu0 %v2481
      %2518 = vmatprep.subr.mxu0 0.0
      %2519 = vmatpush1.msra.mxu0 %v2482
      %2520 = vmatprep.subr.mxu0 0.0
      %2521 = vmatpush1.msra.mxu0 %v2483
      %2522 = vmatprep.subr.mxu0 0.0
      %2523 = vmatpush1.msra.mxu0 %v2484
      %2524 = vmatprep.subr.mxu0 0.0
      %2525 = vmatpush1.msra.mxu0 %v2485
      %2526 = vmatprep.subr.mxu0 0.0
      %2527 = vmatpush1.msra.mxu0 %v2486
      %2528 = vmatprep.subr.mxu0 0.0
      %2529 = vmatpush1.msra.mxu0 %v2487
      %2530 = vmatprep.subr.mxu0 0.0
      %2531 = vmatpush1.msra.mxu0 %v2488
      %2532 = vmatprep.subr.mxu0 0.0
      %2533 = vmatpush1.msra.mxu0 %v2489
      %2534 = vmatprep.subr.mxu0 0.0
      %2535 = vmatpush1.msra.mxu0 %v2490
      %2536 = vmatprep.subr.mxu0 0.0
      %2537 = vmatpush1.msra.mxu0 %v2491
      %2538 = vmatprep.subr.mxu0 0.0
      %2539 = vmatpush1.msra.mxu0 %v2492
      %2540 = vmatprep.subr.mxu0 0.0
      %2541 = vmatpush1.msra.mxu0 %v2493
      %2542 = vmatprep.subr.mxu0 0.0
      %2543 = vmatpush1.msra.mxu0 %v2494
      %2544 = vmatprep.subr.mxu0 0.0
      %2545 = vmatpush1.msra.mxu0 %v2495
      %2546 = vmatprep.subr.mxu0 0.0
      %2547 = vmatpush1.msra.mxu0 %v2496
      %2548 = vmatprep.subr.mxu0 0.0
      %2549 = vmatpush1.msra.mxu0 %v2497
      %2550 = vmatprep.subr.mxu0 0.0
      %2551 = vmatpush1.msra.mxu0 %v2498
      %2552 = vmatprep.subr.mxu0 0.0
      %2553 = vmatpush1.msra.mxu0 %v2499
      %2554 = vmatprep.subr.mxu0 0.0
      %2555 = vmatpush1.msra.mxu0 %v2500
      %2556 = vmatprep.subr.mxu0 0.0
      %2557 = vmatpush1.msra.mxu0 %v2501
      %2558 = vmatprep.subr.mxu0 0.0
      %2559 = vmatpush1.msra.mxu0 %v2502
      %2560 = vmatprep.subr.mxu0 0.0
      %2561 = vmatpush1.msra.mxu0 %v2503
      %2562 = vmatprep.subr.mxu0 0.0
      %2563 = vmatpush1.msra.mxu0 %v2504
      %2564 = vmatprep.subr.mxu0 0.0
      %2565 = vmatpush1.msra.mxu0 %v2505
      %2566 = vmatprep.subr.mxu0 0.0
      %2567 = vmatpush1.msra.mxu0 %v2506
      %2568 = vmatprep.subr.mxu0 0.0
      %2569 = vmatpush1.msra.mxu0 %v2507
      %2570 = vmatprep.subr.mxu0 0.0
      %2571 = vmatpush1.msra.mxu0 %v2508
      %2572 = vmatprep.subr.mxu0 0.0
      %2573 = vmatpush1.msra.mxu0 %v2509
      %2574 = vmatprep.mubr.f32.mxu0 1.0
      %2575 = vmatmul.mubr.f32.gmra.mrb[0].mxu0 1.0
      %v2576 = vpop.f32.mrb[0].mxu0
      %v2577 = vadd.f32 0.0, %v2576
      %v2578 = vpop.f32.mrb[0].mxu0
      %2579 = vdwg.mxu0
      %v2581 = vrot.slane %v2577, 7
      %vm2583 = vcmask 1040384
      %v2584 = vsel %vm2583, %v2475, %v2581
      %2585 = vst.msk [vmem:[%s262] sm:$0x3] %vm408, %v2584
      %2586 = vst.msk [vmem:[%s258] sm:$0xff] %vm405, %v2250
      %2587 = vst.msk [vmem:[%s258 + $0x8] sm:$0xff] %vm405, %v2255
      %2588 = vst.msk [vmem:[%s258 + $0x10] sm:$0xff] %vm405, %v2260
      %2589 = vst.msk [vmem:[%s258 + $0x18] sm:$0xff] %vm405, %v2265
      %2590 = vst.msk [vmem:[%s258 + $0x20] sm:$0xff] %vm405, %v2270
      %2591 = vst.msk [vmem:[%s258 + $0x28] sm:$0xff] %vm405, %v2275
      %2592 = vst.msk [vmem:[%s258 + $0x30] sm:$0xff] %vm405, %v2280
      %2593 = vst.msk [vmem:[%s258 + $0x38] sm:$0xff] %vm405, %v2285
      %2594 = vst.msk [vmem:[%s258 + $0x40] sm:$0xff] %vm405, %v2290
      %2595 = vst.msk [vmem:[%s258 + $0x48] sm:$0xff] %vm405, %v2295
      %2596 = vst.msk [vmem:[%s258 + $0x50] sm:$0xff] %vm405, %v2300
      %2597 = vst.msk [vmem:[%s258 + $0x58] sm:$0xff] %vm405, %v2305
      %2598 = vst.msk [vmem:[%s258 + $0x60] sm:$0xff] %vm405, %v2310
      %2599 = vst.msk [vmem:[%s258 + $0x68] sm:$0xff] %vm405, %v2315
      %2600 = vst.msk [vmem:[%s258 + $0x70] sm:$0xff] %vm405, %v2320
      %2601 = vst.msk [vmem:[%s258 + $0x78] sm:$0xff] %vm405, %v2325
      %2602 = vst.msk [vmem:[%s258 + $0x80] sm:$0xff] %vm405, %v2330
      %2603 = vst.msk [vmem:[%s258 + $0x88] sm:$0xff] %vm405, %v2335
      %2604 = vst.msk [vmem:[%s258 + $0x90] sm:$0xff] %vm405, %v2340
      %2605 = vst.msk [vmem:[%s258 + $0x98] sm:$0xff] %vm405, %v2345
      %2606 = vst.msk [vmem:[%s258 + $0xa0] sm:$0xff] %vm405, %v2350
      %2607 = vst.msk [vmem:[%s258 + $0xa8] sm:$0xff] %vm405, %v2355
      %2608 = vst.msk [vmem:[%s258 + $0xb0] sm:$0xff] %vm405, %v2360
      %2609 = vst.msk [vmem:[%s258 + $0xb8] sm:$0xff] %vm405, %v2365
      %2610 = vst.msk [vmem:[%s258 + $0xc0] sm:$0xff] %vm405, %v2370
      %2611 = vst.msk [vmem:[%s258 + $0xc8] sm:$0xff] %vm405, %v2375
      %2612 = vst.msk [vmem:[%s258 + $0xd0] sm:$0xff] %vm405, %v2380
      %2613 = vst.msk [vmem:[%s258 + $0xd8] sm:$0xff] %vm405, %v2385
      %2614 = vst.msk [vmem:[%s258 + $0xe0] sm:$0xff] %vm405, %v2390
      %2615 = vst.msk [vmem:[%s258 + $0xe8] sm:$0xff] %vm405, %v2395
      %2616 = vst.msk [vmem:[%s258 + $0xf0] sm:$0xff] %vm405, %v2400
      %2617 = vst.msk [vmem:[%s258 + $0xf8] sm:$0xff] %vm405, %v2405
      %p2618 = scmp.lt.s32.totalorder %s18, 1
      %s2619 = scalar_select %p2618, %s18, 1
      %s2620 = smul.addr %s2619, 32
      %s2621 = smul.addr %s2620, 8
      %s2622 = scalar_lea.vmem %s5, %s2621
      %p2623 = scmp.lt.s32.totalorder %s18, 1
      %s2624 = scalar_select %p2623, %s18, 1
      %s2625 = smul.addr %s2624, 2
      %s2626 = scalar_lea.vmem %s6, %s2625
      // Predicated region
      $region41: #{up_block_forward.4} parent=39 // pred_check
        %p2627 = pneg %p146
      $region42: #{up_block_forward.4} parent=39 // pred_check_branch
        %2629 = sbr.rel (%p2627) target = $region44
      $region43: #{up_block_forward.4} parent=39 // pred_region
        _
      $region44: #{up_block_forward.4} parent=39 // pred_fallthru
        _
      // Predicated region
      $region45: #{up_block_forward.4} parent=39 // pred_check
        %p2630 = pneg %p172
      $region46: #{up_block_forward.4} parent=39 // pred_check_branch
        %2632 = sbr.rel (%p2630) target = $region48
      $region47: #{up_block_forward.4} parent=39 // pred_region
        _
      $region48: #{up_block_forward.4} parent=39 // pred_fallthru
        _
    $region40: #{up_block_forward.4} parent=5 // pred_fallthru
      _
    %p2633 = scmp.le.s32.totalorder 2, %s13
    // Predicated region
    $region49: #{up_block_forward.4} parent=5 // pred_check
      %p2634 = pneg %p2633
    $region50: #{up_block_forward.4} parent=5 // pred_check_branch
      %2636 = sbr.rel (%p2634) target = $region52
    $region51: #{up_block_forward.4} parent=5 // pred_region
      %s2637 = ssub.s32 %s13, 2
      // Predicated region
      $region53: #{up_block_forward.4} parent=51 // pred_check
        %p2638 = pneg %p152
      $region54: #{up_block_forward.4} parent=51 // pred_check_branch
        %2640 = sbr.rel (%p2638) target = $region56
      $region55: #{up_block_forward.4} parent=51 // pred_region
        %p2641 = scmp.lt.s32.totalorder %s19, 1
        %s2642 = scalar_select %p2641, %s19, 1
        %s2643 = smul.addr %s2642, 32
        %s2644 = smul.addr %s2643, 8
        %s2645 = scalar_lea.vmem %s5, %s2644
      $region56: #{up_block_forward.4} parent=51 // pred_fallthru
        _
      // Predicated region
      $region57: #{up_block_forward.4} parent=51 // pred_check
        %p2646 = pneg %p178
      $region58: #{up_block_forward.4} parent=51 // pred_check_branch
        %2648 = sbr.rel (%p2646) target = $region60
      $region59: #{up_block_forward.4} parent=51 // pred_region
        %p2649 = scmp.lt.s32.totalorder %s19, 1
        %s2650 = scalar_select %p2649, %s19, 1
        %s2651 = smul.addr %s2650, 2
        %s2652 = scalar_lea.vmem %s6, %s2651
      $region60: #{up_block_forward.4} parent=51 // pred_fallthru
        _
    $region52: #{up_block_forward.4} parent=5 // pred_fallthru
      _
  $region6: #{up_block_forward.4} parent=0 // loop_footer
    %s17 = sadd.s32 1, %s13
  $region7: #{up_block_forward.4} parent=0 // loop_footer_branch
    %12 = sbr.rel target = $region3
  $region8: #{up_block_forward.4} parent=0 // loop_exit
    _

// kernel: up_block_forward.3
$region0: #{up_block_forward.3}
  #allocation0 [shape = 'u32[]', space=smem, size = 0x4, offset = 0x4, fixed_abs, tag = 'smem constant byte address 0x4 - core index']
  #allocation1 [shape = 'u32[144,128]{1,0:T(1,128)}', space=vmem, size = 0x12000, scoped, tag = 'internal scratch']
  #allocation2 [shape = 'f32[18,18,8]{2,1,0:T(8,128)}', space=vmem, size = 0x36000, scoped, tag = 'scratch operand']
  %s0 = inlined_call_operand.vmem [shape: f32[2,8,8,8], index: 0, kind: input, shape index: {}]
  %s1 = inlined_call_operand.vmem [shape: f32[2,16,16,4], index: 1, kind: input, shape index: {}]
  %s2 = inlined_call_operand.vmem [shape: f32[8,16], index: 2, kind: input, shape index: {}]
  %s3 = inlined_call_operand.vmem [shape: f32[1,16], index: 3, kind: input, shape index: {}]
  %s4 = inlined_call_operand.vmem [shape: f32[72,4], index: 4, kind: input, shape index: {}]
  %s5 = inlined_call_operand.vmem [shape: f32[1,4], index: 5, kind: input, shape index: {}]
  %s6 = inlined_call_operand.vmem [shape: f32[2,16,16,4], index: 6, kind: output, shape index: {0}]
  %s7 = inlined_call_operand.vmem [shape: f32[2,2,4], index: 7, kind: output, shape index: {1}]
  %8 = xla_tuple %s6, %s7
  %s9 = sld [smem:[#allocation0]]
  $region65: #{up_block_forward.3} parent=0
    _
  %s11 = ssub.s32 1, %s9
  %s12 = scalar_select 0, %s11, %s9
  loop: start=0, step=1, limit=4
  $region2: #{up_block_forward.3} parent=0 // loop_pre_header
    _
  $region3: #{up_block_forward.3} parent=0 // loop_header
    %s14 = sphi 0, %s18
    %p15 = scmp.ge.s32.totalorder %s14, 4
    %s24 = sphi 0, %s26
    %s27 = sphi 0, %s24
    %s28 = sphi 0, %s27
    %s44 = sphi 0, %s28
    %s50 = sphi 0, %s52
    %s53 = sphi 0, %s50
    %s54 = sphi 0, %s53
    %s70 = sphi 0, %s54
    %s74 = sphi 0, %s74
    %s76 = sphi 0, %s74
    %s77 = sphi 0, %s76
    %s91 = sphi 0, %s77
    %s95 = sphi 0, %s95
    %s97 = sphi 0, %s95
    %s98 = sphi 0, %s97
    %s112 = sphi 0, %s98
    %s116 = sphi 0, %s116
    %s118 = sphi 0, %s116
    %s119 = sphi 0, %s118
    %s133 = sphi 0, %s119
    %s137 = sphi 0, %s137
    %s139 = sphi 0, %s137
    %s140 = sphi 0, %s139
    %s154 = sphi 0, %s140
    %s160 = sphi 0, %s162
    %s163 = sphi 0, %s160
    %s164 = sphi 0, %s163
    %s180 = sphi 0, %s164
    %s186 = sphi 0, %s188
    %s189 = sphi 0, %s186
    %s190 = sphi 0, %s189
    %s206 = sphi 0, %s190
  $region4: #{up_block_forward.3} parent=0 // loop_header_branch
    %17 = sbr.rel (%p15) target = $region8
  $region5: #{up_block_forward.3} parent=0 // loop_body
    %s19 = ssub.s32 %s14, 1
    %s20 = ssub.s32 %s14, 2
    %s21 = sadd.s32 %s14, 1
    %s22 = ssub.s32 %s14, %s21
    %p23 = scmp.eq.s32.totalorder %s22, 0
    %s25 = sadd.s32 %s24, 1
    %s26 = scalar_select %p23, %s24, %s25
    %p29 = pneg %p23
    %p30 = scmp.eq.s32.totalorder %s14, 1
    %p31 = por %p29, %p30
    %p32 = scmp.ne.s32.totalorder %s24, %s27
    %p33 = scmp.eq.s32.totalorder %s14, 0
    %p34 = por %p32, %p33
    %p35 = scmp.ne.s32.totalorder %s24, %s27
    %p36 = scmp.eq.s32.totalorder %s19, 1
    %p37 = por %p35, %p36
    %p38 = scmp.ne.s32.totalorder %s27, %s28
    %p39 = scmp.eq.s32.totalorder %s19, 0
    %p40 = por %p38, %p39
    %p41 = scmp.ne.s32.totalorder %s27, %s28
    %p42 = scmp.eq.s32.totalorder %s20, 1
    %p43 = por %p41, %p42
    %p45 = scmp.ne.s32.totalorder %s28, %s44
    %p46 = scmp.eq.s32.totalorder %s20, 0
    %p47 = por %p45, %p46
    %s48 = ssub.s32 %s14, %s21
    %p49 = scmp.eq.s32.totalorder %s48, 0
    %s51 = sadd.s32 %s50, 1
    %s52 = scalar_select %p49, %s50, %s51
    %p55 = pneg %p49
    %p56 = scmp.eq.s32.totalorder %s14, 1
    %p57 = por %p55, %p56
    %p58 = scmp.ne.s32.totalorder %s50, %s53
    %p59 = scmp.eq.s32.totalorder %s14, 0
    %p60 = por %p58, %p59
    %p61 = scmp.ne.s32.totalorder %s50, %s53
    %p62 = scmp.eq.s32.totalorder %s19, 1
    %p63 = por %p61, %p62
    %p64 = scmp.ne.s32.totalorder %s53, %s54
    %p65 = scmp.eq.s32.totalorder %s19, 0
    %p66 = por %p64, %p65
    %p67 = scmp.ne.s32.totalorder %s53, %s54
    %p68 = scmp.eq.s32.totalorder %s20, 1
    %p69 = por %p67, %p68
    %p71 = scmp.ne.s32.totalorder %s54, %s70
    %p72 = scmp.eq.s32.totalorder %s20, 0
    %p73 = por %p71, %p72
    %s75 = sadd.s32 %s74, 1
    %p78 = scmp.eq.s32.totalorder %s14, 1
    %p79 = scmp.ne.s32.totalorder %s74, %s76
    %p80 = scmp.eq.s32.totalorder %s14, 0
    %p81 = por %p79, %p80
    %p82 = scmp.ne.s32.totalorder %s74, %s76
    %p83 = scmp.eq.s32.totalorder %s19, 1
    %p84 = por %p82, %p83
    %p85 = scmp.ne.s32.totalorder %s76, %s77
    %p86 = scmp.eq.s32.totalorder %s19, 0
    %p87 = por %p85, %p86
    %p88 = scmp.ne.s32.totalorder %s76, %s77
    %p89 = scmp.eq.s32.totalorder %s20, 1
    %p90 = por %p88, %p89
    %p92 = scmp.ne.s32.totalorder %s77, %s91
    %p93 = scmp.eq.s32.totalorder %s20, 0
    %p94 = por %p92, %p93
    %s96 = sadd.s32 %s95, 1
    %p99 = scmp.eq.s32.totalorder %s14, 1
    %p100 = scmp.ne.s32.totalorder %s95, %s97
    %p101 = scmp.eq.s32.totalorder %s14, 0
    %p102 = por %p100, %p101
    %p103 = scmp.ne.s32.totalorder %s95, %s97
    %p104 = scmp.eq.s32.totalorder %s19, 1
    %p105 = por %p103, %p104
    %p106 = scmp.ne.s32.totalorder %s97, %s98
    %p107 = scmp.eq.s32.totalorder %s19, 0
    %p108 = por %p106, %p107
    %p109 = scmp.ne.s32.totalorder %s97, %s98
    %p110 = scmp.eq.s32.totalorder %s20, 1
    %p111 = por %p109, %p110
    %p113 = scmp.ne.s32.totalorder %s98, %s112
    %p114 = scmp.eq.s32.totalorder %s20, 0
    %p115 = por %p113, %p114
    %s117 = sadd.s32 %s116, 1
    %p120 = scmp.eq.s32.totalorder %s14, 1
    %p121 = scmp.ne.s32.totalorder %s116, %s118
    %p122 = scmp.eq.s32.totalorder %s14, 0
    %p123 = por %p121, %p122
    %p124 = scmp.ne.s32.totalorder %s116, %s118
    %p125 = scmp.eq.s32.totalorder %s19, 1
    %p126 = por %p124, %p125
    %p127 = scmp.ne.s32.totalorder %s118, %s119
    %p128 = scmp.eq.s32.totalorder %s19, 0
    %p129 = por %p127, %p128
    %p130 = scmp.ne.s32.totalorder %s118, %s119
    %p131 = scmp.eq.s32.totalorder %s20, 1
    %p132 = por %p130, %p131
    %p134 = scmp.ne.s32.totalorder %s119, %s133
    %p135 = scmp.eq.s32.totalorder %s20, 0
    %p136 = por %p134, %p135
    %s138 = sadd.s32 %s137, 1
    %p141 = scmp.eq.s32.totalorder %s14, 1
    %p142 = scmp.ne.s32.totalorder %s137, %s139
    %p143 = scmp.eq.s32.totalorder %s14, 0
    %p144 = por %p142, %p143
    %p145 = scmp.ne.s32.totalorder %s137, %s139
    %p146 = scmp.eq.s32.totalorder %s19, 1
    %p147 = por %p145, %p146
    %p148 = scmp.ne.s32.totalorder %s139, %s140
    %p149 = scmp.eq.s32.totalorder %s19, 0
    %p150 = por %p148, %p149
    %p151 = scmp.ne.s32.totalorder %s139, %s140
    %p152 = scmp.eq.s32.totalorder %s20, 1
    %p153 = por %p151, %p152
    %p155 = scmp.ne.s32.totalorder %s140, %s154
    %p156 = scmp.eq.s32.totalorder %s20, 0
    %p157 = por %p155, %p156
    %s158 = ssub.s32 %s14, %s21
    %p159 = scmp.eq.s32.totalorder %s158, 0
    %s161 = sadd.s32 %s160, 1
    %s162 = scalar_select %p159, %s160, %s161
    %p165 = pneg %p159
    %p166 = scmp.eq.s32.totalorder %s14, 1
    %p167 = por %p165, %p166
    %p168 = scmp.ne.s32.totalorder %s160, %s163
    %p169 = scmp.eq.s32.totalorder %s14, 0
    %p170 = por %p168, %p169
    %p171 = scmp.ne.s32.totalorder %s160, %s163
    %p172 = scmp.eq.s32.totalorder %s19, 1
    %p173 = por %p171, %p172
    %p174 = scmp.ne.s32.totalorder %s163, %s164
    %p175 = scmp.eq.s32.totalorder %s19, 0
    %p176 = por %p174, %p175
    %p177 = scmp.ne.s32.totalorder %s163, %s164
    %p178 = scmp.eq.s32.totalorder %s20, 1
    %p179 = por %p177, %p178
    %p181 = scmp.ne.s32.totalorder %s164, %s180
    %p182 = scmp.eq.s32.totalorder %s20, 0
    %p183 = por %p181, %p182
    %s184 = ssub.s32 %s14, %s21
    %p185 = scmp.eq.s32.totalorder %s184, 0
    %s187 = sadd.s32 %s186, 1
    %s188 = scalar_select %p185, %s186, %s187
    %p191 = pneg %p185
    %p192 = scmp.eq.s32.totalorder %s14, 1
    %p193 = por %p191, %p192
    %p194 = scmp.ne.s32.totalorder %s186, %s189
    %p195 = scmp.eq.s32.totalorder %s14, 0
    %p196 = por %p194, %p195
    %p197 = scmp.ne.s32.totalorder %s186, %s189
    %p198 = scmp.eq.s32.totalorder %s19, 1
    %p199 = por %p197, %p198
    %p200 = scmp.ne.s32.totalorder %s189, %s190
    %p201 = scmp.eq.s32.totalorder %s19, 0
    %p202 = por %p200, %p201
    %p203 = scmp.ne.s32.totalorder %s189, %s190
    %p204 = scmp.eq.s32.totalorder %s20, 1
    %p205 = por %p203, %p204
    %p207 = scmp.ne.s32.totalorder %s190, %s206
    %p208 = scmp.eq.s32.totalorder %s20, 0
    %p209 = por %p207, %p208
    %p210 = scmp.le.s32.totalorder 1, %s14
    %p211 = scmp.lt.s32.totalorder %s14, 3
    %p212 = pnand %p210, %p211
    %p213 = pneg %p212
    // Predicated region
    $region9: #{up_block_forward.3} parent=5 // pred_check
      _
    $region10: #{up_block_forward.3} parent=5 // pred_check_branch
      %215 = sbr.rel (%p212) target = $region12
    $region11: #{up_block_forward.3} parent=5 // pred_region
      %s216 = ssub.s32 %s14, 1
      // Predicated region
      $region13: #{up_block_forward.3} parent=11 // pred_check
        %p217 = pneg %p87
      $region14: #{up_block_forward.3} parent=11 // pred_check_branch
        %219 = sbr.rel (%p217) target = $region16
      $region15: #{up_block_forward.3} parent=11 // pred_region
        _
      $region16: #{up_block_forward.3} parent=11 // pred_fallthru
        _
      // Predicated region
      $region17: #{up_block_forward.3} parent=11 // pred_check
        %p220 = pneg %p108
      $region18: #{up_block_forward.3} parent=11 // pred_check_branch
        %222 = sbr.rel (%p220) target = $region20
      $region19: #{up_block_forward.3} parent=11 // pred_region
        _
      $region20: #{up_block_forward.3} parent=11 // pred_fallthru
        _
      // Predicated region
      $region21: #{up_block_forward.3} parent=11 // pred_check
        %p223 = pneg %p129
      $region22: #{up_block_forward.3} parent=11 // pred_check_branch
        %225 = sbr.rel (%p223) target = $region24
      $region23: #{up_block_forward.3} parent=11 // pred_region
        _
      $region24: #{up_block_forward.3} parent=11 // pred_fallthru
        _
      // Predicated region
      $region25: #{up_block_forward.3} parent=11 // pred_check
        %p226 = pneg %p150
      $region26: #{up_block_forward.3} parent=11 // pred_check_branch
        %228 = sbr.rel (%p226) target = $region28
      $region27: #{up_block_forward.3} parent=11 // pred_region
        _
      $region28: #{up_block_forward.3} parent=11 // pred_fallthru
        _
    $region12: #{up_block_forward.3} parent=5 // pred_fallthru
      _
    %p229 = scmp.lt.s32.totalorder %s14, 2
    // Predicated region
    $region29: #{up_block_forward.3} parent=5 // pred_check
      %p230 = pneg %p229
    $region30: #{up_block_forward.3} parent=5 // pred_check_branch
      %232 = sbr.rel (%p230) target = $region32
    $region31: #{up_block_forward.3} parent=5 // pred_region
      // Predicated region
      $region33: #{up_block_forward.3} parent=31 // pred_check
        %p233 = pneg %p34
      $region34: #{up_block_forward.3} parent=31 // pred_check_branch
        %235 = sbr.rel (%p233) target = $region36
      $region35: #{up_block_forward.3} parent=31 // pred_region
        %p236 = scmp.lt.s32.totalorder %s14, 1
        %s237 = scalar_select %p236, %s14, 1
        %s238 = smul.addr %s237, 8
        %s239 = smul.addr %s238, 8
        %s240 = scalar_lea.vmem %s0, %s239
      $region36: #{up_block_forward.3} parent=31 // pred_fallthru
        _
      // Predicated region
      $region37: #{up_block_forward.3} parent=31 // pred_check
        %p241 = pneg %p60
      $region38: #{up_block_forward.3} parent=31 // pred_check_branch
        %243 = sbr.rel (%p241) target = $region40
      $region39: #{up_block_forward.3} parent=31 // pred_region
        %p244 = scmp.lt.s32.totalorder %s14, 1
        %s245 = scalar_select %p244, %s14, 1
        %s246 = smul.addr %s245, 32
        %s247 = smul.addr %s246, 8
        %s248 = scalar_lea.vmem %s1, %s247
      $region40: #{up_block_forward.3} parent=31 // pred_fallthru
        _
    $region32: #{up_block_forward.3} parent=5 // pred_fallthru
      _
    %p249 = scmp.le.s32.totalorder 1, %s14
    %p250 = scmp.lt.s32.totalorder %s14, 3
    %p251 = pnand %p249, %p250
    %p252 = pneg %p251
    // Predicated region
    $region41: #{up_block_forward.3} parent=5 // pred_check
      _
    $region42: #{up_block_forward.3} parent=5 // pred_check_branch
      %254 = sbr.rel (%p251) target = $region44
    $region43: #{up_block_forward.3} parent=5 // pred_region
      %s255 = ssub.s32 %s14, 1
      %p256 = scmp.lt.s32.totalorder %s19, 1
      %s257 = scalar_select %p256, %s19, 1
      %s258 = smul.addr %s257, 8
      %s259 = smul.addr %s258, 8
      %s260 = scalar_lea.vmem %s0, %s259
      %p261 = pneg %p40
      %p262 = pneg %p37
      %p263 = scmp.lt.s32.totalorder %s19, 1
      %s264 = scalar_select %p263, %s19, 1
      %s265 = smul.addr %s264, 32
      %s266 = smul.addr %s265, 8
      %s267 = scalar_lea.vmem %s1, %s266
      %p268 = pneg %p66
      %p269 = pneg %p63
      %p270 = pneg %p87
      %p271 = pneg %p84
      %p272 = pneg %p108
      %p273 = pneg %p105
      %p274 = pneg %p129
      %p275 = pneg %p126
      %p276 = pneg %p150
      %p277 = pneg %p147
      %p278 = pneg %p176
      %p279 = pneg %p173
      %p280 = scmp.lt.s32.totalorder %s19, 1
      %s281 = scalar_select %p280, %s19, 1
      %s282 = smul.addr %s281, 32
      %s283 = smul.addr %s282, 8
      %s284 = scalar_lea.vmem %s6, %s283
      %p285 = pneg %p202
      %p286 = pneg %p199
      %p287 = scmp.lt.s32.totalorder %s19, 1
      %s288 = scalar_select %p287, %s19, 1
      %s289 = smul.addr %s288, 2
      %s290 = scalar_lea.vmem %s7, %s289
      %p291 = scmp.lt.s32.totalorder %s19, 1
      %s292 = scalar_select %p291, %s19, 1
      %s293 = smul.addr %s292, 8
      %s294 = smul.addr %s293, 8
      %s295 = scalar_lea.vmem %s0, %s294
      %p296 = scmp.lt.s32.totalorder %s19, 1
      %s297 = scalar_select %p296, %s19, 1
      %s298 = smul.addr %s297, 32
      %s299 = smul.addr %s298, 8
      %s300 = scalar_lea.vmem %s1, %s299
      %p301 = scmp.lt.s32.totalorder %s19, 1
      %s302 = scalar_select %p301, %s19, 1
      %s303 = smul.addr %s302, 32
      %s304 = smul.addr %s303, 8
      %s305 = scalar_lea.vmem %s6, %s304
      %p306 = scmp.lt.s32.totalorder %s19, 1
      %s307 = scalar_select %p306, %s19, 1
      %s308 = smul.addr %s307, 2
      %s309 = scalar_lea.vmem %s7, %s308
      %vm310 = vcmask 64512
      %311 = vst.msk [vmem:[#allocation2] sm:$0xff] %vm310, 0.0
      %312 = vst.msk [vmem:[#allocation2 + $0x8] sm:$0xff] %vm310, 0.0
      %vm313 = vcmask 58368
      %314 = vst.msk [vmem:[#allocation2 + $0x10] sm:$0x3] %vm313, 0.0
      %315 = vst.msk [vmem:[#allocation2 + $0x18] sm:$0xff] %vm310, 0.0
      %316 = vst.msk [vmem:[#allocation2 + $0x20] sm:$0xff] %vm310, 0.0
      %317 = vst.msk [vmem:[#allocation2 + $0x28] sm:$0x3] %vm313, 0.0
      %318 = vst.msk [vmem:[#allocation2 + $0x30] sm:$0xff] %vm310, 0.0
      %319 = vst.msk [vmem:[#allocation2 + $0x38] sm:$0xff] %vm310, 0.0
      %320 = vst.msk [vmem:[#allocation2 + $0x40] sm:$0x3] %vm313, 0.0
      %321 = vst.msk [vmem:[#allocation2 + $0x48] sm:$0xff] %vm310, 0.0
      %322 = vst.msk [vmem:[#allocation2 + $0x50] sm:$0xff] %vm310, 0.0
      %323 = vst.msk [vmem:[#allocation2 + $0x58] sm:$0x3] %vm313, 0.0
      %324 = vst.msk [vmem:[#allocation2 + $0x60] sm:$0xff] %vm310, 0.0
      %325 = vst.msk [vmem:[#allocation2 + $0x68] sm:$0xff] %vm310, 0.0
      %326 = vst.msk [vmem:[#allocation2 + $0x70] sm:$0x3] %vm313, 0.0
      %327 = vst.msk [vmem:[#allocation2 + $0x78] sm:$0xff] %vm310, 0.0
      %328 = vst.msk [vmem:[#allocation2 + $0x80] sm:$0xff] %vm310, 0.0
      %329 = vst.msk [vmem:[#allocation2 + $0x88] sm:$0x3] %vm313, 0.0
      %330 = vst.msk [vmem:[#allocation2 + $0x90] sm:$0xff] %vm310, 0.0
      %331 = vst.msk [vmem:[#allocation2 + $0x98] sm:$0xff] %vm310, 0.0
      %332 = vst.msk [vmem:[#allocation2 + $0xa0] sm:$0x3] %vm313, 0.0
      %333 = vst.msk [vmem:[#allocation2 + $0xa8] sm:$0xff] %vm310, 0.0
      %334 = vst.msk [vmem:[#allocation2 + $0xb0] sm:$0xff] %vm310, 0.0
      %335 = vst.msk [vmem:[#allocation2 + $0xb8] sm:$0x3] %vm313, 0.0
      %336 = vst.msk [vmem:[#allocation2 + $0xc0] sm:$0xff] %vm310, 0.0
      %337 = vst.msk [vmem:[#allocation2 + $0xc8] sm:$0xff] %vm310, 0.0
      %338 = vst.msk [vmem:[#allocation2 + $0xd0] sm:$0x3] %vm313, 0.0
      %339 = vst.msk [vmem:[#allocation2 + $0xd8] sm:$0xff] %vm310, 0.0
      %340 = vst.msk [vmem:[#allocation2 + $0xe0] sm:$0xff] %vm310, 0.0
      %341 = vst.msk [vmem:[#allocation2 + $0xe8] sm:$0x3] %vm313, 0.0
      %342 = vst.msk [vmem:[#allocation2 + $0xf0] sm:$0xff] %vm310, 0.0
      %343 = vst.msk [vmem:[#allocation2 + $0xf8] sm:$0xff] %vm310, 0.0
      %344 = vst.msk [vmem:[#allocation2 + $0x100] sm:$0x3] %vm313, 0.0
      %345 = vst.msk [vmem:[#allocation2 + $0x108] sm:$0xff] %vm310, 0.0
      %346 = vst.msk [vmem:[#allocation2 + $0x110] sm:$0xff] %vm310, 0.0
      %347 = vst.msk [vmem:[#allocation2 + $0x118] sm:$0x3] %vm313, 0.0
      %348 = vst.msk [vmem:[#allocation2 + $0x120] sm:$0xff] %vm310, 0.0
      %349 = vst.msk [vmem:[#allocation2 + $0x128] sm:$0xff] %vm310, 0.0
      %350 = vst.msk [vmem:[#allocation2 + $0x130] sm:$0x3] %vm313, 0.0
      %351 = vst.msk [vmem:[#allocation2 + $0x138] sm:$0xff] %vm310, 0.0
      %352 = vst.msk [vmem:[#allocation2 + $0x140] sm:$0xff] %vm310, 0.0
      %353 = vst.msk [vmem:[#allocation2 + $0x148] sm:$0x3] %vm313, 0.0
      %354 = vst.msk [vmem:[#allocation2 + $0x150] sm:$0xff] %vm310, 0.0
      %355 = vst.msk [vmem:[#allocation2 + $0x158] sm:$0xff] %vm310, 0.0
      %356 = vst.msk [vmem:[#allocation2 + $0x160] sm:$0x3] %vm313, 0.0
      %357 = vst.msk [vmem:[#allocation2 + $0x168] sm:$0xff] %vm310, 0.0
      %358 = vst.msk [vmem:[#allocation2 + $0x170] sm:$0xff] %vm310, 0.0
      %359 = vst.msk [vmem:[#allocation2 + $0x178] sm:$0x3] %vm313, 0.0
      %360 = vst.msk [vmem:[#allocation2 + $0x180] sm:$0xff] %vm310, 0.0
      %361 = vst.msk [vmem:[#allocation2 + $0x188] sm:$0xff] %vm310, 0.0
      %362 = vst.msk [vmem:[#allocation2 + $0x190] sm:$0x3] %vm313, 0.0
      %363 = vst.msk [vmem:[#allocation2 + $0x198] sm:$0xff] %vm310, 0.0
      %364 = vst.msk [vmem:[#allocation2 + $0x1a0] sm:$0xff] %vm310, 0.0
      %365 = vst.msk [vmem:[#allocation2 + $0x1a8] sm:$0x3] %vm313, 0.0
      %v366 = vld [vmem:[%s300] sm:$0xff]
      %v367 = vld [vmem:[%s300 + $0x8] sm:$0xff]
      %v368 = vld [vmem:[%s300 + $0x10] sm:$0xff]
      %v369 = vld [vmem:[%s300 + $0x18] sm:$0xff]
      %v370 = vld [vmem:[%s300 + $0x20] sm:$0xff]
      %v371 = vld [vmem:[%s300 + $0x28] sm:$0xff]
      %v372 = vld [vmem:[%s300 + $0x30] sm:$0xff]
      %v373 = vld [vmem:[%s300 + $0x38] sm:$0xff]
      %v374 = vld [vmem:[%s300 + $0x40] sm:$0xff]
      %v375 = vld [vmem:[%s300 + $0x48] sm:$0xff]
      %v376 = vld [vmem:[%s300 + $0x50] sm:$0xff]
      %v377 = vld [vmem:[%s300 + $0x58] sm:$0xff]
      %v378 = vld [vmem:[%s300 + $0x60] sm:$0xff]
      %v379 = vld [vmem:[%s300 + $0x68] sm:$0xff]
      %v380 = vld [vmem:[%s300 + $0x70] sm:$0xff]
      %v381 = vld [vmem:[%s300 + $0x78] sm:$0xff]
      %v382 = vld [vmem:[%s300 + $0x80] sm:$0xff]
      %v383 = vld [vmem:[%s300 + $0x88] sm:$0xff]
      %v384 = vld [vmem:[%s300 + $0x90] sm:$0xff]
      %v385 = vld [vmem:[%s300 + $0x98] sm:$0xff]
      %v386 = vld [vmem:[%s300 + $0xa0] sm:$0xff]
      %v387 = vld [vmem:[%s300 + $0xa8] sm:$0xff]
      %v388 = vld [vmem:[%s300 + $0xb0] sm:$0xff]
      %v389 = vld [vmem:[%s300 + $0xb8] sm:$0xff]
      %v390 = vld [vmem:[%s300 + $0xc0] sm:$0xff]
      %v391 = vld [vmem:[%s300 + $0xc8] sm:$0xff]
      %v392 = vld [vmem:[%s300 + $0xd0] sm:$0xff]
      %v393 = vld [vmem:[%s300 + $0xd8] sm:$0xff]
      %v394 = vld [vmem:[%s300 + $0xe0] sm:$0xff]
      %v395 = vld [vmem:[%s300 + $0xe8] sm:$0xff]
      %v396 = vld [vmem:[%s300 + $0xf0] sm:$0xff]
      %v397 = vld [vmem:[%s300 + $0xf8] sm:$0xff]
      %430 = vrot.lane.b32.xlu0 %v366, 4
      %v431 = vpop.permute.xlu0 %430
      %432 = vrot.lane.b32.xlu0 %v367, 4
      %v433 = vpop.permute.xlu0 %432
      %434 = vrot.lane.b32.xlu0 %v368, 4
      %v435 = vpop.permute.xlu0 %434
      %436 = vrot.lane.b32.xlu0 %v369, 4
      %v437 = vpop.permute.xlu0 %436
      %438 = vrot.lane.b32.xlu0 %v370, 4
      %v439 = vpop.permute.xlu0 %438
      %440 = vrot.lane.b32.xlu0 %v371, 4
      %v441 = vpop.permute.xlu0 %440
      %442 = vrot.lane.b32.xlu0 %v372, 4
      %v443 = vpop.permute.xlu0 %442
      %444 = vrot.lane.b32.xlu0 %v373, 4
      %v445 = vpop.permute.xlu0 %444
      %446 = vrot.lane.b32.xlu0 %v374, 4
      %v447 = vpop.permute.xlu0 %446
      %448 = vrot.lane.b32.xlu0 %v375, 4
      %v449 = vpop.permute.xlu0 %448
      %450 = vrot.lane.b32.xlu0 %v376, 4
      %v451 = vpop.permute.xlu0 %450
      %452 = vrot.lane.b32.xlu0 %v377, 4
      %v453 = vpop.permute.xlu0 %452
      %454 = vrot.lane.b32.xlu0 %v378, 4
      %v455 = vpop.permute.xlu0 %454
      %456 = vrot.lane.b32.xlu0 %v379, 4
      %v457 = vpop.permute.xlu0 %456
      %458 = vrot.lane.b32.xlu0 %v380, 4
      %v459 = vpop.permute.xlu0 %458
      %460 = vrot.lane.b32.xlu0 %v381, 4
      %v461 = vpop.permute.xlu0 %460
      %462 = vrot.lane.b32.xlu0 %v382, 4
      %v463 = vpop.permute.xlu0 %462
      %464 = vrot.lane.b32.xlu0 %v383, 4
      %v465 = vpop.permute.xlu0 %464
      %466 = vrot.lane.b32.xlu0 %v384, 4
      %v467 = vpop.permute.xlu0 %466
      %468 = vrot.lane.b32.xlu0 %v385, 4
      %v469 = vpop.permute.xlu0 %468
      %470 = vrot.lane.b32.xlu0 %v386, 4
      %v471 = vpop.permute.xlu0 %470
      %472 = vrot.lane.b32.xlu0 %v387, 4
      %v473 = vpop.permute.xlu0 %472
      %474 = vrot.lane.b32.xlu0 %v388, 4
      %v475 = vpop.permute.xlu0 %474
      %476 = vrot.lane.b32.xlu0 %v389, 4
      %v477 = vpop.permute.xlu0 %476
      %478 = vrot.lane.b32.xlu0 %v390, 4
      %v479 = vpop.permute.xlu0 %478
      %480 = vrot.lane.b32.xlu0 %v391, 4
      %v481 = vpop.permute.xlu0 %480
      %482 = vrot.lane.b32.xlu0 %v392, 4
      %v483 = vpop.permute.xlu0 %482
      %484 = vrot.lane.b32.xlu0 %v393, 4
      %v485 = vpop.permute.xlu0 %484
      %486 = vrot.lane.b32.xlu0 %v394, 4
      %v487 = vpop.permute.xlu0 %486
      %488 = vrot.lane.b32.xlu0 %v395, 4
      %v489 = vpop.permute.xlu0 %488
      %490 = vrot.lane.b32.xlu0 %v396, 4
      %v491 = vpop.permute.xlu0 %490
      %492 = vrot.lane.b32.xlu0 %v397, 4
      %v493 = vpop.permute.xlu0 %492
      %s526 = scalar_lea.vmem [#allocation2], 24
      %vm527 = vcmask 64544
      %528 = vst.msk [vmem:[%s526 + $0x1] sm:$0xff] %vm527, %v431
      %529 = vst.msk [vmem:[%s526 + $0x9] sm:$0xff] %vm527, %v433
      %530 = vst.msk [vmem:[%s526 + $0x19] sm:$0xff] %vm527, %v435
      %531 = vst.msk [vmem:[%s526 + $0x21] sm:$0xff] %vm527, %v437
      %532 = vst.msk [vmem:[%s526 + $0x31] sm:$0xff] %vm527, %v439
      %533 = vst.msk [vmem:[%s526 + $0x39] sm:$0xff] %vm527, %v441
      %534 = vst.msk [vmem:[%s526 + $0x49] sm:$0xff] %vm527, %v443
      %535 = vst.msk [vmem:[%s526 + $0x51] sm:$0xff] %vm527, %v445
      %536 = vst.msk [vmem:[%s526 + $0x61] sm:$0xff] %vm527, %v447
      %537 = vst.msk [vmem:[%s526 + $0x69] sm:$0xff] %vm527, %v449
      %538 = vst.msk [vmem:[%s526 + $0x79] sm:$0xff] %vm527, %v451
      %539 = vst.msk [vmem:[%s526 + $0x81] sm:$0xff] %vm527, %v453
      %540 = vst.msk [vmem:[%s526 + $0x91] sm:$0xff] %vm527, %v455
      %541 = vst.msk [vmem:[%s526 + $0x99] sm:$0xff] %vm527, %v457
      %542 = vst.msk [vmem:[%s526 + $0xa9] sm:$0xff] %vm527, %v459
      %543 = vst.msk [vmem:[%s526 + $0xb1] sm:$0xff] %vm527, %v461
      %544 = vst.msk [vmem:[%s526 + $0xc1] sm:$0xff] %vm527, %v463
      %545 = vst.msk [vmem:[%s526 + $0xc9] sm:$0xff] %vm527, %v465
      %546 = vst.msk [vmem:[%s526 + $0xd9] sm:$0xff] %vm527, %v467
      %547 = vst.msk [vmem:[%s526 + $0xe1] sm:$0xff] %vm527, %v469
      %548 = vst.msk [vmem:[%s526 + $0xf1] sm:$0xff] %vm527, %v471
      %549 = vst.msk [vmem:[%s526 + $0xf9] sm:$0xff] %vm527, %v473
      %550 = vst.msk [vmem:[%s526 + $0x109] sm:$0xff] %vm527, %v475
      %551 = vst.msk [vmem:[%s526 + $0x111] sm:$0xff] %vm527, %v477
      %552 = vst.msk [vmem:[%s526 + $0x121] sm:$0xff] %vm527, %v479
      %553 = vst.msk [vmem:[%s526 + $0x129] sm:$0xff] %vm527, %v481
      %554 = vst.msk [vmem:[%s526 + $0x139] sm:$0xff] %vm527, %v483
      %555 = vst.msk [vmem:[%s526 + $0x141] sm:$0xff] %vm527, %v485
      %556 = vst.msk [vmem:[%s526 + $0x151] sm:$0xff] %vm527, %v487
      %557 = vst.msk [vmem:[%s526 + $0x159] sm:$0xff] %vm527, %v489
      %558 = vst.msk [vmem:[%s526 + $0x169] sm:$0xff] %vm527, %v491
      %559 = vst.msk [vmem:[%s526 + $0x171] sm:$0xff] %vm527, %v493
      %v560 = vld [vmem:[%s295] sm:$0xff]
      %v561 = vld [vmem:[%s295 + $0x8] sm:$0xff]
      %v562 = vld [vmem:[%s295 + $0x10] sm:$0xff]
      %v563 = vld [vmem:[%s295 + $0x18] sm:$0xff]
      %v564 = vld [vmem:[%s295 + $0x20] sm:$0xff]
      %v565 = vld [vmem:[%s295 + $0x28] sm:$0xff]
      %v566 = vld [vmem:[%s295 + $0x30] sm:$0xff]
      %v567 = vld [vmem:[%s295 + $0x38] sm:$0xff]
      %v568 = vld [vmem:[%s2] sm:$0xff]
      %v569 = vld [vmem:[%s3] sm:$0x1]
      %v571 = vlaneseq
      %v572 = vshrl.u32 %v571, 7
      %v573 = vsub.s32 0, %v572
      %v574 = vrot.slane %v569, %v573
      %v577 = vsel %vm310, %v560, 0
      %v580 = vsel %vm310, %v561, 0
      %v583 = vsel %vm310, %v562, 0
      %v586 = vsel %vm310, %v563, 0
      %v589 = vsel %vm310, %v564, 0
      %v592 = vsel %vm310, %v565, 0
      %v595 = vsel %vm310, %v566, 0
      %v598 = vsel %vm310, %v567, 0
      %600 = vmatprep.subr.mxu0 0.0
      %601 = vmatpush1.msra.mxu0 %v568
      %602 = vmatprep.subr.mxu0 0.0
      %603 = vmatpush1.msra.mxu0 0.0
      %604 = vmatprep.subr.mxu0 0.0
      %605 = vmatpush1.msra.mxu0 0.0
      %606 = vmatprep.subr.mxu0 0.0
      %607 = vmatpush1.msra.mxu0 0.0
      %608 = vmatprep.subr.mxu0 0.0
      %609 = vmatpush1.msra.mxu0 0.0
      %610 = vmatprep.subr.mxu0 0.0
      %611 = vmatpush1.msra.mxu0 0.0
      %612 = vmatprep.subr.mxu0 0.0
      %613 = vmatpush1.msra.mxu0 0.0
      %614 = vmatprep.subr.mxu0 0.0
      %615 = vmatpush1.msra.mxu0 0.0
      %616 = vmatprep.subr.mxu0 0.0
      %617 = vmatpush1.msra.mxu0 0.0
      %618 = vmatprep.subr.mxu0 0.0
      %619 = vmatpush1.msra.mxu0 0.0
      %620 = vmatprep.subr.mxu0 0.0
      %621 = vmatpush1.msra.mxu0 0.0
      %622 = vmatprep.subr.mxu0 0.0
      %623 = vmatpush1.msra.mxu0 0.0
      %624 = vmatprep.subr.mxu0 0.0
      %625 = vmatpush1.msra.mxu0 0.0
      %626 = vmatprep.subr.mxu0 0.0
      %627 = vmatpush1.msra.mxu0 0.0
      %628 = vmatprep.subr.mxu0 0.0
      %629 = vmatpush1.msra.mxu0 0.0
      %630 = vmatprep.subr.mxu0 0.0
      %631 = vmatpush1.msra.mxu0 0.0
      %632 = vmatprep.subr.mxu0 0.0
      %633 = vmatpush1.msra.mxu0 0.0
      %634 = vmatprep.subr.mxu0 0.0
      %635 = vmatpush1.msra.mxu0 0.0
      %636 = vmatprep.subr.mxu0 0.0
      %637 = vmatpush1.msra.mxu0 0.0
      %638 = vmatprep.subr.mxu0 0.0
      %639 = vmatpush1.msra.mxu0 0.0
      %640 = vmatprep.subr.mxu0 0.0
      %641 = vmatpush1.msra.mxu0 0.0
      %642 = vmatprep.subr.mxu0 0.0
      %643 = vmatpush1.msra.mxu0 0.0
      %644 = vmatprep.subr.mxu0 0.0
      %645 = vmatpush1.msra.mxu0 0.0
      %646 = vmatprep.subr.mxu0 0.0
      %647 = vmatpush1.msra.mxu0 0.0
      %648 = vmatprep.subr.mxu0 0.0
      %649 = vmatpush1.msra.mxu0 0.0
      %650 = vmatprep.subr.mxu0 0.0
      %651 = vmatpush1.msra.mxu0 0.0
      %652 = vmatprep.subr.mxu0 0.0
      %653 = vmatpush1.msra.mxu0 0.0
      %654 = vmatprep.subr.mxu0 0.0
      %655 = vmatpush1.msra.mxu0 0.0
      %656 = vmatprep.subr.mxu0 0.0
      %657 = vmatpush1.msra.mxu0 0.0
      %658 = vmatprep.subr.mxu0 0.0
      %659 = vmatpush1.msra.mxu0 0.0
      %660 = vmatprep.subr.mxu0 0.0
      %661 = vmatpush1.msra.mxu0 0.0
      %662 = vmatprep.subr.mxu0 0.0
      %663 = vmatpush1.msra.mxu0 0.0
      %664 = vmatprep.mubr.f32.mxu0 0.0
      %665 = vmatmul.mubr.f32.gmra.mrb[0].mxu0 %v577
      %v666 = vpop.f32.mrb[0].mxu0
      %v667 = vadd.f32 %v574, %v666
      %v668 = vpop.f32.mrb[0].mxu0
      %669 = vmatprep.mubr.f32.mxu0 0.0
      %670 = vmatmul.mubr.f32.gmra.mrb[0].mxu0 %v580
      %v671 = vpop.f32.mrb[0].mxu0
      %v672 = vadd.f32 %v574, %v671
      %v673 = vpop.f32.mrb[0].mxu0
      %674 = vmatprep.mubr.f32.mxu0 0.0
      %675 = vmatmul.mubr.f32.gmra.mrb[0].mxu0 %v583
      %v676 = vpop.f32.mrb[0].mxu0
      %v677 = vadd.f32 %v574, %v676
      %v678 = vpop.f32.mrb[0].mxu0
      %679 = vmatprep.mubr.f32.mxu0 0.0
      %680 = vmatmul.mubr.f32.gmra.mrb[0].mxu0 %v586
      %v681 = vpop.f32.mrb[0].mxu0
      %v682 = vadd.f32 %v574, %v681
      %v683 = vpop.f32.mrb[0].mxu0
      %684 = vmatprep.mubr.f32.mxu0 0.0
      %685 = vmatmul.mubr.f32.gmra.mrb[0].mxu0 %v589
      %v686 = vpop.f32.mrb[0].mxu0
      %v687 = vadd.f32 %v574, %v686
      %v688 = vpop.f32.mrb[0].mxu0
      %689 = vmatprep.mubr.f32.mxu0 0.0
      %690 = vmatmul.mubr.f32.gmra.mrb[0].mxu0 %v592
      %v691 = vpop.f32.mrb[0].mxu0
      %v692 = vadd.f32 %v574, %v691
      %v693 = vpop.f32.mrb[0].mxu0
      %694 = vmatprep.mubr.f32.mxu0 0.0
      %695 = vmatmul.mubr.f32.gmra.mrb[0].mxu0 %v595
      %v696 = vpop.f32.mrb[0].mxu0
      %v697 = vadd.f32 %v574, %v696
      %v698 = vpop.f32.mrb[0].mxu0
      %699 = vmatprep.mubr.f32.mxu0 0.0
      %700 = vmatmul.mubr.f32.gmra.mrb[0].mxu0 %v598
      %v701 = vpop.f32.mrb[0].mxu0
      %v702 = vadd.f32 %v574, %v701
      %v703 = vpop.f32.mrb[0].mxu0
      %704 = vdwg.mxu0
      %v713 = vcombine.high %v667, %v667
      %v715 = vunpack.c.l.s4 1966171168
      %v716 = vunpack.c.0.s8 %v715
      %v717 = vlaneseq
      %v718 = vshrl.u32 %v717, 7
      %v719 = vsub.s32 %v716, %v718
      %v720 = vrot.slane %v667, %v719
      %v722 = vunpack.c.l.s4 1966171168
      %v723 = vunpack.c.0.s8 %v722
      %v724 = vlaneseq
      %v725 = vshrl.u32 %v724, 7
      %v726 = vsub.s32 %v723, %v725
      %v727 = vrot.slane %v713, %v726
      %v728 = vcombine.high %v720, %v720
      %v729 = vcombine.high %v727, %v727
      %v731 = vunpack.c.l.s4 1966171168
      %v732 = vunpack.c.0.s8 %v731
      %v733 = vlaneseq
      %v734 = vshrl.u32 %v733, 7
      %v735 = vsub.s32 %v732, %v734
      %v736 = vrot.slane %v720, %v735
      %v738 = vunpack.c.l.s4 1966171168
      %v739 = vunpack.c.0.s8 %v738
      %v740 = vlaneseq
      %v741 = vshrl.u32 %v740, 7
      %v742 = vsub.s32 %v739, %v741
      %v743 = vrot.slane %v727, %v742
      %v745 = vunpack.c.l.s4 1966171168
      %v746 = vunpack.c.0.s8 %v745
      %v747 = vlaneseq
      %v748 = vshrl.u32 %v747, 7
      %v749 = vsub.s32 %v746, %v748
      %v750 = vrot.slane %v728, %v749
      %v752 = vunpack.c.l.s4 1966171168
      %v753 = vunpack.c.0.s8 %v752
      %v754 = vlaneseq
      %v755 = vshrl.u32 %v754, 7
      %v756 = vsub.s32 %v753, %v755
      %v757 = vrot.slane %v729, %v756
      %v758 = vcombine.high %v736, %v736
      %v759 = vcombine.high %v743, %v743
      %v760 = vcombine.high %v750, %v750
      %v761 = vcombine.high %v757, %v757
      %v762 = vcombine.high %v672, %v672
      %v764 = vunpack.c.l.s4 1966171168
      %v765 = vunpack.c.0.s8 %v764
      %v766 = vlaneseq
      %v767 = vshrl.u32 %v766, 7
      %v768 = vsub.s32 %v765, %v767
      %v769 = vrot.slane %v672, %v768
      %v771 = vunpack.c.l.s4 1966171168
      %v772 = vunpack.c.0.s8 %v771
      %v773 = vlaneseq
      %v774 = vshrl.u32 %v773, 7
      %v775 = vsub.s32 %v772, %v774
      %v776 = vrot.slane %v762, %v775
      %v777 = vcombine.high %v769, %v769
      %v778 = vcombine.high %v776, %v776
      %v780 = vunpack.c.l.s4 1966171168
      %v781 = vunpack.c.0.s8 %v780
      %v782 = vlaneseq
      %v783 = vshrl.u32 %v782, 7
      %v784 = vsub.s32 %v781, %v783
      %v785 = vrot.slane %v769, %v784
      %v787 = vunpack.c.l.s4 1966171168
      %v788 = vunpack.c.0.s8 %v787
      %v789 = vlaneseq
      %v790 = vshrl.u32 %v789, 7
      %v791 = vsub.s32 %v788, %v790
      %v792 = vrot.slane %v776, %v791
      %v794 = vunpack.c.l.s4 1966171168
      %v795 = vunpack.c.0.s8 %v794
      %v796 = vlaneseq
      %v797 = vshrl.u32 %v796, 7
      %v798 = vsub.s32 %v795, %v797
      %v799 = vrot.slane %v777, %v798
      %v801 = vunpack.c.l.s4 1966171168
      %v802 = vunpack.c.0.s8 %v801
      %v803 = vlaneseq
      %v804 = vshrl.u32 %v803, 7
      %v805 = vsub.s32 %v802, %v804
      %v806 = vrot.slane %v778, %v805
      %v807 = vcombine.high %v785, %v785
      %v808 = vcombine.high %v792, %v792
      %v809 = vcombine.high %v799, %v799
      %v810 = vcombine.high %v806, %v806
      %v811 = vcombine.high %v677, %v677
      %v813 = vunpack.c.l.s4 1966171168
      %v814 = vunpack.c.0.s8 %v813
      %v815 = vlaneseq
      %v816 = vshrl.u32 %v815, 7
      %v817 = vsub.s32 %v814, %v816
      %v818 = vrot.slane %v677, %v817
      %v820 = vunpack.c.l.s4 1966171168
      %v821 = vunpack.c.0.s8 %v820
      %v822 = vlaneseq
      %v823 = vshrl.u32 %v822, 7
      %v824 = vsub.s32 %v821, %v823
      %v825 = vrot.slane %v811, %v824
      %v826 = vcombine.high %v818, %v818
      %v827 = vcombine.high %v825, %v825
      %v829 = vunpack.c.l.s4 1966171168
      %v830 = vunpack.c.0.s8 %v829
      %v831 = vlaneseq
      %v832 = vshrl.u32 %v831, 7
      %v833 = vsub.s32 %v830, %v832
      %v834 = vrot.slane %v818, %v833
      %v836 = vunpack.c.l.s4 1966171168
      %v837 = vunpack.c.0.s8 %v836
      %v838 = vlaneseq
      %v839 = vshrl.u32 %v838, 7
      %v840 = vsub.s32 %v837, %v839
      %v841 = vrot.slane %v825, %v840
      %v843 = vunpack.c.l.s4 1966171168
      %v844 = vunpack.c.0.s8 %v843
      %v845 = vlaneseq
      %v846 = vshrl.u32 %v845, 7
      %v847 = vsub.s32 %v844, %v846
      %v848 = vrot.slane %v826, %v847
      %v850 = vunpack.c.l.s4 1966171168
      %v851 = vunpack.c.0.s8 %v850
      %v852 = vlaneseq
      %v853 = vshrl.u32 %v852, 7
      %v854 = vsub.s32 %v851, %v853
      %v855 = vrot.slane %v827, %v854
      %v856 = vcombine.high %v834, %v834
      %v857 = vcombine.high %v841, %v841
      %v858 = vcombine.high %v848, %v848
      %v859 = vcombine.high %v855, %v855
      %v860 = vcombine.high %v682, %v682
      %v862 = vunpack.c.l.s4 1966171168
      %v863 = vunpack.c.0.s8 %v862
      %v864 = vlaneseq
      %v865 = vshrl.u32 %v864, 7
      %v866 = vsub.s32 %v863, %v865
      %v867 = vrot.slane %v682, %v866
      %v869 = vunpack.c.l.s4 1966171168
      %v870 = vunpack.c.0.s8 %v869
      %v871 = vlaneseq
      %v872 = vshrl.u32 %v871, 7
      %v873 = vsub.s32 %v870, %v872
      %v874 = vrot.slane %v860, %v873
      %v875 = vcombine.high %v867, %v867
      %v876 = vcombine.high %v874, %v874
      %v878 = vunpack.c.l.s4 1966171168
      %v879 = vunpack.c.0.s8 %v878
      %v880 = vlaneseq
      %v881 = vshrl.u32 %v880, 7
      %v882 = vsub.s32 %v879, %v881
      %v883 = vrot.slane %v867, %v882
      %v885 = vunpack.c.l.s4 1966171168
      %v886 = vunpack.c.0.s8 %v885
      %v887 = vlaneseq
      %v888 = vshrl.u32 %v887, 7
      %v889 = vsub.s32 %v886, %v888
      %v890 = vrot.slane %v874, %v889
      %v892 = vunpack.c.l.s4 1966171168
      %v893 = vunpack.c.0.s8 %v892
      %v894 = vlaneseq
      %v895 = vshrl.u32 %v894, 7
      %v896 = vsub.s32 %v893, %v895
      %v897 = vrot.slane %v875, %v896
      %v899 = vunpack.c.l.s4 1966171168
      %v900 = vunpack.c.0.s8 %v899
      %v901 = vlaneseq
      %v902 = vshrl.u32 %v901, 7
      %v903 = vsub.s32 %v900, %v902
      %v904 = vrot.slane %v876, %v903
      %v905 = vcombine.high %v883, %v883
      %v906 = vcombine.high %v890, %v890
      %v907 = vcombine.high %v897, %v897
      %v908 = vcombine.high %v904, %v904
      %v909 = vcombine.high %v687, %v687
      %v911 = vunpack.c.l.s4 1966171168
      %v912 = vunpack.c.0.s8 %v911
      %v913 = vlaneseq
      %v914 = vshrl.u32 %v913, 7
      %v915 = vsub.s32 %v912, %v914
      %v916 = vrot.slane %v687, %v915
      %v918 = vunpack.c.l.s4 1966171168
      %v919 = vunpack.c.0.s8 %v918
      %v920 = vlaneseq
      %v921 = vshrl.u32 %v920, 7
      %v922 = vsub.s32 %v919, %v921
      %v923 = vrot.slane %v909, %v922
      %v924 = vcombine.high %v916, %v916
      %v925 = vcombine.high %v923, %v923
      %v927 = vunpack.c.l.s4 1966171168
      %v928 = vunpack.c.0.s8 %v927
      %v929 = vlaneseq
      %v930 = vshrl.u32 %v929, 7
      %v931 = vsub.s32 %v928, %v930
      %v932 = vrot.slane %v916, %v931
      %v934 = vunpack.c.l.s4 1966171168
      %v935 = vunpack.c.0.s8 %v934
      %v936 = vlaneseq
      %v937 = vshrl.u32 %v936, 7
      %v938 = vsub.s32 %v935, %v937
      %v939 = vrot.slane %v923, %v938
      %v941 = vunpack.c.l.s4 1966171168
      %v942 = vunpack.c.0.s8 %v941
      %v943 = vlaneseq
      %v944 = vshrl.u32 %v943, 7
      %v945 = vsub.s32 %v942, %v944
      %v946 = vrot.slane %v924, %v945
      %v948 = vunpack.c.l.s4 1966171168
      %v949 = vunpack.c.0.s8 %v948
      %v950 = vlaneseq
      %v951 = vshrl.u32 %v950, 7
      %v952 = vsub.s32 %v949, %v951
      %v953 = vrot.slane %v925, %v952
      %v954 = vcombine.high %v932, %v932
      %v955 = vcombine.high %v939, %v939
      %v956 = vcombine.high %v946, %v946
      %v957 = vcombine.high %v953, %v953
      %v958 = vcombine.high %v692, %v692
      %v960 = vunpack.c.l.s4 1966171168
      %v961 = vunpack.c.0.s8 %v960
      %v962 = vlaneseq
      %v963 = vshrl.u32 %v962, 7
      %v964 = vsub.s32 %v961, %v963
      %v965 = vrot.slane %v692, %v964
      %v967 = vunpack.c.l.s4 1966171168
      %v968 = vunpack.c.0.s8 %v967
      %v969 = vlaneseq
      %v970 = vshrl.u32 %v969, 7
      %v971 = vsub.s32 %v968, %v970
      %v972 = vrot.slane %v958, %v971
      %v973 = vcombine.high %v965, %v965
      %v974 = vcombine.high %v972, %v972
      %v976 = vunpack.c.l.s4 1966171168
      %v977 = vunpack.c.0.s8 %v976
      %v978 = vlaneseq
      %v979 = vshrl.u32 %v978, 7
      %v980 = vsub.s32 %v977, %v979
      %v981 = vrot.slane %v965, %v980
      %v983 = vunpack.c.l.s4 1966171168
      %v984 = vunpack.c.0.s8 %v983
      %v985 = vlaneseq
      %v986 = vshrl.u32 %v985, 7
      %v987 = vsub.s32 %v984, %v986
      %v988 = vrot.slane %v972, %v987
      %v990 = vunpack.c.l.s4 1966171168
      %v991 = vunpack.c.0.s8 %v990
      %v992 = vlaneseq
      %v993 = vshrl.u32 %v992, 7
      %v994 = vsub.s32 %v991, %v993
      %v995 = vrot.slane %v973, %v994
      %v997 = vunpack.c.l.s4 1966171168
      %v998 = vunpack.c.0.s8 %v997
      %v999 = vlaneseq
      %v1000 = vshrl.u32 %v999, 7
      %v1001 = vsub.s32 %v998, %v1000
      %v1002 = vrot.slane %v974, %v1001
      %v1003 = vcombine.high %v981, %v981
      %v1004 = vcombine.high %v988, %v988
      %v1005 = vcombine.high %v995, %v995
      %v1006 = vcombine.high %v1002, %v1002
      %v1007 = vcombine.high %v697, %v697
      %v1009 = vunpack.c.l.s4 1966171168
      %v1010 = vunpack.c.0.s8 %v1009
      %v1011 = vlaneseq
      %v1012 = vshrl.u32 %v1011, 7
      %v1013 = vsub.s32 %v1010, %v1012
      %v1014 = vrot.slane %v697, %v1013
      %v1016 = vunpack.c.l.s4 1966171168
      %v1017 = vunpack.c.0.s8 %v1016
      %v1018 = vlaneseq
      %v1019 = vshrl.u32 %v1018, 7
      %v1020 = vsub.s32 %v1017, %v1019
      %v1021 = vrot.slane %v1007, %v1020
      %v1022 = vcombine.high %v1014, %v1014
      %v1023 = vcombine.high %v1021, %v1021
      %v1025 = vunpack.c.l.s4 1966171168
      %v1026 = vunpack.c.0.s8 %v1025
      %v1027 = vlaneseq
      %v1028 = vshrl.u32 %v1027, 7
      %v1029 = vsub.s32 %v1026, %v1028
      %v1030 = vrot.slane %v1014, %v1029
      %v1032 = vunpack.c.l.s4 1966171168
      %v1033 = vunpack.c.0.s8 %v1032
      %v1034 = vlaneseq
      %v1035 = vshrl.u32 %v1034, 7
      %v1036 = vsub.s32 %v1033, %v1035
      %v1037 = vrot.slane %v1021, %v1036
      %v1039 = vunpack.c.l.s4 1966171168
      %v1040 = vunpack.c.0.s8 %v1039
      %v1041 = vlaneseq
      %v1042 = vshrl.u32 %v1041, 7
      %v1043 = vsub.s32 %v1040, %v1042
      %v1044 = vrot.slane %v1022, %v1043
      %v1046 = vunpack.c.l.s4 1966171168
      %v1047 = vunpack.c.0.s8 %v1046
      %v1048 = vlaneseq
      %v1049 = vshrl.u32 %v1048, 7
      %v1050 = vsub.s32 %v1047, %v1049
      %v1051 = vrot.slane %v1023, %v1050
      %v1052 = vcombine.high %v1030, %v1030
      %v1053 = vcombine.high %v1037, %v1037
      %v1054 = vcombine.high %v1044, %v1044
      %v1055 = vcombine.high %v1051, %v1051
      %v1056 = vcombine.high %v702, %v702
      %v1058 = vunpack.c.l.s4 1966171168
      %v1059 = vunpack.c.0.s8 %v1058
      %v1060 = vlaneseq
      %v1061 = vshrl.u32 %v1060, 7
      %v1062 = vsub.s32 %v1059, %v1061
      %v1063 = vrot.slane %v702, %v1062
      %v1065 = vunpack.c.l.s4 1966171168
      %v1066 = vunpack.c.0.s8 %v1065
      %v1067 = vlaneseq
      %v1068 = vshrl.u32 %v1067, 7
      %v1069 = vsub.s32 %v1066, %v1068
      %v1070 = vrot.slane %v1056, %v1069
      %v1071 = vcombine.high %v1063, %v1063
      %v1072 = vcombine.high %v1070, %v1070
      %v1074 = vunpack.c.l.s4 1966171168
      %v1075 = vunpack.c.0.s8 %v1074
      %v1076 = vlaneseq
      %v1077 = vshrl.u32 %v1076, 7
      %v1078 = vsub.s32 %v1075, %v1077
      %v1079 = vrot.slane %v1063, %v1078
      %v1081 = vunpack.c.l.s4 1966171168
      %v1082 = vunpack.c.0.s8 %v1081
      %v1083 = vlaneseq
      %v1084 = vshrl.u32 %v1083, 7
      %v1085 = vsub.s32 %v1082, %v1084
      %v1086 = vrot.slane %v1070, %v1085
      %v1088 = vunpack.c.l.s4 1966171168
      %v1089 = vunpack.c.0.s8 %v1088
      %v1090 = vlaneseq
      %v1091 = vshrl.u32 %v1090, 7
      %v1092 = vsub.s32 %v1089, %v1091
      %v1093 = vrot.slane %v1071, %v1092
      %v1095 = vunpack.c.l.s4 1966171168
      %v1096 = vunpack.c.0.s8 %v1095
      %v1097 = vlaneseq
      %v1098 = vshrl.u32 %v1097, 7
      %v1099 = vsub.s32 %v1096, %v1098
      %v1100 = vrot.slane %v1072, %v1099
      %v1101 = vcombine.high %v1079, %v1079
      %v1102 = vcombine.high %v1086, %v1086
      %v1103 = vcombine.high %v1093, %v1093
      %v1104 = vcombine.high %v1100, %v1100
      %v1169 = vlaneseq
      %v1170 = vshrl.u32 %v1169, 7
      %v1171 = vsub.s32 0, %v1170
      %v1172 = vrot.slane %v736, %v1171
      %v1173 = vlaneseq
      %v1174 = vshrl.u32 %v1173, 7
      %v1175 = vsub.s32 0, %v1174
      %v1176 = vrot.slane %v750, %v1175
      %v1177 = vlaneseq
      %v1178 = vshrl.u32 %v1177, 7
      %v1179 = vsub.s32 0, %v1178
      %v1180 = vrot.slane %v758, %v1179
      %v1181 = vlaneseq
      %v1182 = vshrl.u32 %v1181, 7
      %v1183 = vsub.s32 0, %v1182
      %v1184 = vrot.slane %v760, %v1183
      %v1185 = vlaneseq
      %v1186 = vshrl.u32 %v1185, 7
      %v1187 = vsub.s32 0, %v1186
      %v1188 = vrot.slane %v743, %v1187
      %v1189 = vlaneseq
      %v1190 = vshrl.u32 %v1189, 7
      %v1191 = vsub.s32 0, %v1190
      %v1192 = vrot.slane %v757, %v1191
      %v1193 = vlaneseq
      %v1194 = vshrl.u32 %v1193, 7
      %v1195 = vsub.s32 0, %v1194
      %v1196 = vrot.slane %v759, %v1195
      %v1197 = vlaneseq
      %v1198 = vshrl.u32 %v1197, 7
      %v1199 = vsub.s32 0, %v1198
      %v1200 = vrot.slane %v761, %v1199
      %v1201 = vlaneseq
      %v1202 = vshrl.u32 %v1201, 7
      %v1203 = vsub.s32 0, %v1202
      %v1204 = vrot.slane %v785, %v1203
      %v1205 = vlaneseq
      %v1206 = vshrl.u32 %v1205, 7
      %v1207 = vsub.s32 0, %v1206
      %v1208 = vrot.slane %v799, %v1207
      %v1209 = vlaneseq
      %v1210 = vshrl.u32 %v1209, 7
      %v1211 = vsub.s32 0, %v1210
      %v1212 = vrot.slane %v807, %v1211
      %v1213 = vlaneseq
      %v1214 = vshrl.u32 %v1213, 7
      %v1215 = vsub.s32 0, %v1214
      %v1216 = vrot.slane %v809, %v1215
      %v1217 = vlaneseq
      %v1218 = vshrl.u32 %v1217, 7
      %v1219 = vsub.s32 0, %v1218
      %v1220 = vrot.slane %v792, %v1219
      %v1221 = vlaneseq
      %v1222 = vshrl.u32 %v1221, 7
      %v1223 = vsub.s32 0, %v1222
      %v1224 = vrot.slane %v806, %v1223
      %v1225 = vlaneseq
      %v1226 = vshrl.u32 %v1225, 7
      %v1227 = vsub.s32 0, %v1226
      %v1228 = vrot.slane %v808, %v1227
      %v1229 = vlaneseq
      %v1230 = vshrl.u32 %v1229, 7
      %v1231 = vsub.s32 0, %v1230
      %v1232 = vrot.slane %v810, %v1231
      %v1233 = vlaneseq
      %v1234 = vshrl.u32 %v1233, 7
      %v1235 = vsub.s32 0, %v1234
      %v1236 = vrot.slane %v834, %v1235
      %v1237 = vlaneseq
      %v1238 = vshrl.u32 %v1237, 7
      %v1239 = vsub.s32 0, %v1238
      %v1240 = vrot.slane %v848, %v1239
      %v1241 = vlaneseq
      %v1242 = vshrl.u32 %v1241, 7
      %v1243 = vsub.s32 0, %v1242
      %v1244 = vrot.slane %v856, %v1243
      %v1245 = vlaneseq
      %v1246 = vshrl.u32 %v1245, 7
      %v1247 = vsub.s32 0, %v1246
      %v1248 = vrot.slane %v858, %v1247
      %v1249 = vlaneseq
      %v1250 = vshrl.u32 %v1249, 7
      %v1251 = vsub.s32 0, %v1250
      %v1252 = vrot.slane %v841, %v1251
      %v1253 = vlaneseq
      %v1254 = vshrl.u32 %v1253, 7
      %v1255 = vsub.s32 0, %v1254
      %v1256 = vrot.slane %v855, %v1255
      %v1257 = vlaneseq
      %v1258 = vshrl.u32 %v1257, 7
      %v1259 = vsub.s32 0, %v1258
      %v1260 = vrot.slane %v857, %v1259
      %v1261 = vlaneseq
      %v1262 = vshrl.u32 %v1261, 7
      %v1263 = vsub.s32 0, %v1262
      %v1264 = vrot.slane %v859, %v1263
      %v1265 = vlaneseq
      %v1266 = vshrl.u32 %v1265, 7
      %v1267 = vsub.s32 0, %v1266
      %v1268 = vrot.slane %v883, %v1267
      %v1269 = vlaneseq
      %v1270 = vshrl.u32 %v1269, 7
      %v1271 = vsub.s32 0, %v1270
      %v1272 = vrot.slane %v897, %v1271
      %v1273 = vlaneseq
      %v1274 = vshrl.u32 %v1273, 7
      %v1275 = vsub.s32 0, %v1274
      %v1276 = vrot.slane %v905, %v1275
      %v1277 = vlaneseq
      %v1278 = vshrl.u32 %v1277, 7
      %v1279 = vsub.s32 0, %v1278
      %v1280 = vrot.slane %v907, %v1279
      %v1281 = vlaneseq
      %v1282 = vshrl.u32 %v1281, 7
      %v1283 = vsub.s32 0, %v1282
      %v1284 = vrot.slane %v890, %v1283
      %v1285 = vlaneseq
      %v1286 = vshrl.u32 %v1285, 7
      %v1287 = vsub.s32 0, %v1286
      %v1288 = vrot.slane %v904, %v1287
      %v1289 = vlaneseq
      %v1290 = vshrl.u32 %v1289, 7
      %v1291 = vsub.s32 0, %v1290
      %v1292 = vrot.slane %v906, %v1291
      %v1293 = vlaneseq
      %v1294 = vshrl.u32 %v1293, 7
      %v1295 = vsub.s32 0, %v1294
      %v1296 = vrot.slane %v908, %v1295
      %v1297 = vlaneseq
      %v1298 = vshrl.u32 %v1297, 7
      %v1299 = vsub.s32 0, %v1298
      %v1300 = vrot.slane %v932, %v1299
      %v1301 = vlaneseq
      %v1302 = vshrl.u32 %v1301, 7
      %v1303 = vsub.s32 0, %v1302
      %v1304 = vrot.slane %v946, %v1303
      %v1305 = vlaneseq
      %v1306 = vshrl.u32 %v1305, 7
      %v1307 = vsub.s32 0, %v1306
      %v1308 = vrot.slane %v954, %v1307
      %v1309 = vlaneseq
      %v1310 = vshrl.u32 %v1309, 7
      %v1311 = vsub.s32 0, %v1310
      %v1312 = vrot.slane %v956, %v1311
      %v1313 = vlaneseq
      %v1314 = vshrl.u32 %v1313, 7
      %v1315 = vsub.s32 0, %v1314
      %v1316 = vrot.slane %v939, %v1315
      %v1317 = vlaneseq
      %v1318 = vshrl.u32 %v1317, 7
      %v1319 = vsub.s32 0, %v1318
      %v1320 = vrot.slane %v953, %v1319
      %v1321 = vlaneseq
      %v1322 = vshrl.u32 %v1321, 7
      %v1323 = vsub.s32 0, %v1322
      %v1324 = vrot.slane %v955, %v1323
      %v1325 = vlaneseq
      %v1326 = vshrl.u32 %v1325, 7
      %v1327 = vsub.s32 0, %v1326
      %v1328 = vrot.slane %v957, %v1327
      %v1329 = vlaneseq
      %v1330 = vshrl.u32 %v1329, 7
      %v1331 = vsub.s32 0, %v1330
      %v1332 = vrot.slane %v981, %v1331
      %v1333 = vlaneseq
      %v1334 = vshrl.u32 %v1333, 7
      %v1335 = vsub.s32 0, %v1334
      %v1336 = vrot.slane %v995, %v1335
      %v1337 = vlaneseq
      %v1338 = vshrl.u32 %v1337, 7
      %v1339 = vsub.s32 0, %v1338
      %v1340 = vrot.slane %v1003, %v1339
      %v1341 = vlaneseq
      %v1342 = vshrl.u32 %v1341, 7
      %v1343 = vsub.s32 0, %v1342
      %v1344 = vrot.slane %v1005, %v1343
      %v1345 = vlaneseq
      %v1346 = vshrl.u32 %v1345, 7
      %v1347 = vsub.s32 0, %v1346
      %v1348 = vrot.slane %v988, %v1347
      %v1349 = vlaneseq
      %v1350 = vshrl.u32 %v1349, 7
      %v1351 = vsub.s32 0, %v1350
      %v1352 = vrot.slane %v1002, %v1351
      %v1353 = vlaneseq
      %v1354 = vshrl.u32 %v1353, 7
      %v1355 = vsub.s32 0, %v1354
      %v1356 = vrot.slane %v1004, %v1355
      %v1357 = vlaneseq
      %v1358 = vshrl.u32 %v1357, 7
      %v1359 = vsub.s32 0, %v1358
      %v1360 = vrot.slane %v1006, %v1359
      %v1361 = vlaneseq
      %v1362 = vshrl.u32 %v1361, 7
      %v1363 = vsub.s32 0, %v1362
      %v1364 = vrot.slane %v1030, %v1363
      %v1365 = vlaneseq
      %v1366 = vshrl.u32 %v1365, 7
      %v1367 = vsub.s32 0, %v1366
      %v1368 = vrot.slane %v1044, %v1367
      %v1369 = vlaneseq
      %v1370 = vshrl.u32 %v1369, 7
      %v1371 = vsub.s32 0, %v1370
      %v1372 = vrot.slane %v1052, %v1371
      %v1373 = vlaneseq
      %v1374 = vshrl.u32 %v1373, 7
      %v1375 = vsub.s32 0, %v1374
      %v1376 = vrot.slane %v1054, %v1375
      %v1377 = vlaneseq
      %v1378 = vshrl.u32 %v1377, 7
      %v1379 = vsub.s32 0, %v1378
      %v1380 = vrot.slane %v1037, %v1379
      %v1381 = vlaneseq
      %v1382 = vshrl.u32 %v1381, 7
      %v1383 = vsub.s32 0, %v1382
      %v1384 = vrot.slane %v1051, %v1383
      %v1385 = vlaneseq
      %v1386 = vshrl.u32 %v1385, 7
      %v1387 = vsub.s32 0, %v1386
      %v1388 = vrot.slane %v1053, %v1387
      %v1389 = vlaneseq
      %v1390 = vshrl.u32 %v1389, 7
      %v1391 = vsub.s32 0, %v1390
      %v1392 = vrot.slane %v1055, %v1391
      %v1393 = vlaneseq
      %v1394 = vshrl.u32 %v1393, 7
      %v1395 = vsub.s32 0, %v1394
      %v1396 = vrot.slane %v1079, %v1395
      %v1397 = vlaneseq
      %v1398 = vshrl.u32 %v1397, 7
      %v1399 = vsub.s32 0, %v1398
      %v1400 = vrot.slane %v1093, %v1399
      %v1401 = vlaneseq
      %v1402 = vshrl.u32 %v1401, 7
      %v1403 = vsub.s32 0, %v1402
      %v1404 = vrot.slane %v1101, %v1403
      %v1405 = vlaneseq
      %v1406 = vshrl.u32 %v1405, 7
      %v1407 = vsub.s32 0, %v1406
      %v1408 = vrot.slane %v1103, %v1407
      %v1409 = vlaneseq
      %v1410 = vshrl.u32 %v1409, 7
      %v1411 = vsub.s32 0, %v1410
      %v1412 = vrot.slane %v1086, %v1411
      %v1413 = vlaneseq
      %v1414 = vshrl.u32 %v1413, 7
      %v1415 = vsub.s32 0, %v1414
      %v1416 = vrot.slane %v1100, %v1415
      %v1417 = vlaneseq
      %v1418 = vshrl.u32 %v1417, 7
      %v1419 = vsub.s32 0, %v1418
      %v1420 = vrot.slane %v1102, %v1419
      %v1421 = vlaneseq
      %v1422 = vshrl.u32 %v1421, 7
      %v1423 = vsub.s32 0, %v1422
      %v1424 = vrot.slane %v1104, %v1423
      %1425 = vrot.lane.b32.xlu0 %v1172, 124
      %v1426 = vpop.permute.xlu0 %1425
      %1427 = vrot.lane.b32.xlu0 %v1176, 124
      %v1428 = vpop.permute.xlu0 %1427
      %1429 = vrot.lane.b32.xlu0 %v1180, 124
      %v1430 = vpop.permute.xlu0 %1429
      %1431 = vrot.lane.b32.xlu0 %v1184, 124
      %v1432 = vpop.permute.xlu0 %1431
      %1433 = vrot.lane.b32.xlu0 %v1188, 124
      %v1434 = vpop.permute.xlu0 %1433
      %1435 = vrot.lane.b32.xlu0 %v1192, 124
      %v1436 = vpop.permute.xlu0 %1435
      %1437 = vrot.lane.b32.xlu0 %v1196, 124
      %v1438 = vpop.permute.xlu0 %1437
      %1439 = vrot.lane.b32.xlu0 %v1200, 124
      %v1440 = vpop.permute.xlu0 %1439
      %1441 = vrot.lane.b32.xlu0 %v1204, 124
      %v1442 = vpop.permute.xlu0 %1441
      %1443 = vrot.lane.b32.xlu0 %v1208, 124
      %v1444 = vpop.permute.xlu0 %1443
      %1445 = vrot.lane.b32.xlu0 %v1212, 124
      %v1446 = vpop.permute.xlu0 %1445
      %1447 = vrot.lane.b32.xlu0 %v1216, 124
      %v1448 = vpop.permute.xlu0 %1447
      %1449 = vrot.lane.b32.xlu0 %v1220, 124
      %v1450 = vpop.permute.xlu0 %1449
      %1451 = vrot.lane.b32.xlu0 %v1224, 124
      %v1452 = vpop.permute.xlu0 %1451
      %1453 = vrot.lane.b32.xlu0 %v1228, 124
      %v1454 = vpop.permute.xlu0 %1453
      %1455 = vrot.lane.b32.xlu0 %v1232, 124
      %v1456 = vpop.permute.xlu0 %1455
      %1457 = vrot.lane.b32.xlu0 %v1236, 124
      %v1458 = vpop.permute.xlu0 %1457
      %1459 = vrot.lane.b32.xlu0 %v1240, 124
      %v1460 = vpop.permute.xlu0 %1459
      %1461 = vrot.lane.b32.xlu0 %v1244, 124
      %v1462 = vpop.permute.xlu0 %1461
      %1463 = vrot.lane.b32.xlu0 %v1248, 124
      %v1464 = vpop.permute.xlu0 %1463
      %1465 = vrot.lane.b32.xlu0 %v1252, 124
      %v1466 = vpop.permute.xlu0 %1465
      %1467 = vrot.lane.b32.xlu0 %v1256, 124
      %v1468 = vpop.permute.xlu0 %1467
      %1469 = vrot.lane.b32.xlu0 %v1260, 124
      %v1470 = vpop.permute.xlu0 %1469
      %1471 = vrot.lane.b32.xlu0 %v1264, 124
      %v1472 = vpop.permute.xlu0 %1471
      %1473 = vrot.lane.b32.xlu0 %v1268, 124
      %v1474 = vpop.permute.xlu0 %1473
      %1475 = vrot.lane.b32.xlu0 %v1272, 124
      %v1476 = vpop.permute.xlu0 %1475
      %1477 = vrot.lane.b32.xlu0 %v1276, 124
      %v1478 = vpop.permute.xlu0 %1477
      %1479 = vrot.lane.b32.xlu0 %v1280, 124
      %v1480 = vpop.permute.xlu0 %1479
      %1481 = vrot.lane.b32.xlu0 %v1284, 124
      %v1482 = vpop.permute.xlu0 %1481
      %1483 = vrot.lane.b32.xlu0 %v1288, 124
      %v1484 = vpop.permute.xlu0 %1483
      %1485 = vrot.lane.b32.xlu0 %v1292, 124
      %v1486 = vpop.permute.xlu0 %1485
      %1487 = vrot.lane.b32.xlu0 %v1296, 124
      %v1488 = vpop.permute.xlu0 %1487
      %1489 = vrot.lane.b32.xlu0 %v1300, 124
      %v1490 = vpop.permute.xlu0 %1489
      %1491 = vrot.lane.b32.xlu0 %v1304, 124
      %v1492 = vpop.permute.xlu0 %1491
      %1493 = vrot.lane.b32.xlu0 %v1308, 124
      %v1494 = vpop.permute.xlu0 %1493
      %1495 = vrot.lane.b32.xlu0 %v1312, 124
      %v1496 = vpop.permute.xlu0 %1495
      %1497 = vrot.lane.b32.xlu0 %v1316, 124
      %v1498 = vpop.permute.xlu0 %1497
      %1499 = vrot.lane.b32.xlu0 %v1320, 124
      %v1500 = vpop.permute.xlu0 %1499
      %1501 = vrot.lane.b32.xlu0 %v1324, 124
      %v1502 = vpop.permute.xlu0 %1501
      %1503 = vrot.lane.b32.xlu0 %v1328, 124
      %v1504 = vpop.permute.xlu0 %1503
      %1505 = vrot.lane.b32.xlu0 %v1332, 124
      %v1506 = vpop.permute.xlu0 %1505
      %1507 = vrot.lane.b32.xlu0 %v1336, 124
      %v1508 = vpop.permute.xlu0 %1507
      %1509 = vrot.lane.b32.xlu0 %v1340, 124
      %v1510 = vpop.permute.xlu0 %1509
      %1511 = vrot.lane.b32.xlu0 %v1344, 124
      %v1512 = vpop.permute.xlu0 %1511
      %1513 = vrot.lane.b32.xlu0 %v1348, 124
      %v1514 = vpop.permute.xlu0 %1513
      %1515 = vrot.lane.b32.xlu0 %v1352, 124
      %v1516 = vpop.permute.xlu0 %1515
      %1517 = vrot.lane.b32.xlu0 %v1356, 124
      %v1518 = vpop.permute.xlu0 %1517
      %1519 = vrot.lane.b32.xlu0 %v1360, 124
      %v1520 = vpop.permute.xlu0 %1519
      %1521 = vrot.lane.b32.xlu0 %v1364, 124
      %v1522 = vpop.permute.xlu0 %1521
      %1523 = vrot.lane.b32.xlu0 %v1368, 124
      %v1524 = vpop.permute.xlu0 %1523
      %1525 = vrot.lane.b32.xlu0 %v1372, 124
      %v1526 = vpop.permute.xlu0 %1525
      %1527 = vrot.lane.b32.xlu0 %v1376, 124
      %v1528 = vpop.permute.xlu0 %1527
      %1529 = vrot.lane.b32.xlu0 %v1380, 124
      %v1530 = vpop.permute.xlu0 %1529
      %1531 = vrot.lane.b32.xlu0 %v1384, 124
      %v1532 = vpop.permute.xlu0 %1531
      %1533 = vrot.lane.b32.xlu0 %v1388, 124
      %v1534 = vpop.permute.xlu0 %1533
      %1535 = vrot.lane.b32.xlu0 %v1392, 124
      %v1536 = vpop.permute.xlu0 %1535
      %1537 = vrot.lane.b32.xlu0 %v1396, 124
      %v1538 = vpop.permute.xlu0 %1537
      %1539 = vrot.lane.b32.xlu0 %v1400, 124
      %v1540 = vpop.permute.xlu0 %1539
      %1541 = vrot.lane.b32.xlu0 %v1404, 124
      %v1542 = vpop.permute.xlu0 %1541
      %1543 = vrot.lane.b32.xlu0 %v1408, 124
      %v1544 = vpop.permute.xlu0 %1543
      %1545 = vrot.lane.b32.xlu0 %v1412, 124
      %v1546 = vpop.permute.xlu0 %1545
      %1547 = vrot.lane.b32.xlu0 %v1416, 124
      %v1548 = vpop.permute.xlu0 %1547
      %1549 = vrot.lane.b32.xlu0 %v1420, 124
      %v1550 = vpop.permute.xlu0 %1549
      %1551 = vrot.lane.b32.xlu0 %v1424, 124
      %v1552 = vpop.permute.xlu0 %1551
      %vm1617 = vcmask 1040384
      %v1618 = vsel %vm1617, %v736, %v1426
      %v1619 = vsel %vm1617, %v750, %v1428
      %v1620 = vsel %vm1617, %v758, %v1430
      %v1621 = vsel %vm1617, %v760, %v1432
      %v1622 = vsel %vm1617, %v743, %v1434
      %v1623 = vsel %vm1617, %v757, %v1436
      %v1624 = vsel %vm1617, %v759, %v1438
      %v1625 = vsel %vm1617, %v761, %v1440
      %v1626 = vsel %vm1617, %v785, %v1442
      %v1627 = vsel %vm1617, %v799, %v1444
      %v1628 = vsel %vm1617, %v807, %v1446
      %v1629 = vsel %vm1617, %v809, %v1448
      %v1630 = vsel %vm1617, %v792, %v1450
      %v1631 = vsel %vm1617, %v806, %v1452
      %v1632 = vsel %vm1617, %v808, %v1454
      %v1633 = vsel %vm1617, %v810, %v1456
      %v1634 = vsel %vm1617, %v834, %v1458
      %v1635 = vsel %vm1617, %v848, %v1460
      %v1636 = vsel %vm1617, %v856, %v1462
      %v1637 = vsel %vm1617, %v858, %v1464
      %v1638 = vsel %vm1617, %v841, %v1466
      %v1639 = vsel %vm1617, %v855, %v1468
      %v1640 = vsel %vm1617, %v857, %v1470
      %v1641 = vsel %vm1617, %v859, %v1472
      %v1642 = vsel %vm1617, %v883, %v1474
      %v1643 = vsel %vm1617, %v897, %v1476
      %v1644 = vsel %vm1617, %v905, %v1478
      %v1645 = vsel %vm1617, %v907, %v1480
      %v1646 = vsel %vm1617, %v890, %v1482
      %v1647 = vsel %vm1617, %v904, %v1484
      %v1648 = vsel %vm1617, %v906, %v1486
      %v1649 = vsel %vm1617, %v908, %v1488
      %v1650 = vsel %vm1617, %v932, %v1490
      %v1651 = vsel %vm1617, %v946, %v1492
      %v1652 = vsel %vm1617, %v954, %v1494
      %v1653 = vsel %vm1617, %v956, %v1496
      %v1654 = vsel %vm1617, %v939, %v1498
      %v1655 = vsel %vm1617, %v953, %v1500
      %v1656 = vsel %vm1617, %v955, %v1502
      %v1657 = vsel %vm1617, %v957, %v1504
      %v1658 = vsel %vm1617, %v981, %v1506
      %v1659 = vsel %vm1617, %v995, %v1508
      %v1660 = vsel %vm1617, %v1003, %v1510
      %v1661 = vsel %vm1617, %v1005, %v1512
      %v1662 = vsel %vm1617, %v988, %v1514
      %v1663 = vsel %vm1617, %v1002, %v1516
      %v1664 = vsel %vm1617, %v1004, %v1518
      %v1665 = vsel %vm1617, %v1006, %v1520
      %v1666 = vsel %vm1617, %v1030, %v1522
      %v1667 = vsel %vm1617, %v1044, %v1524
      %v1668 = vsel %vm1617, %v1052, %v1526
      %v1669 = vsel %vm1617, %v1054, %v1528
      %v1670 = vsel %vm1617, %v1037, %v1530
      %v1671 = vsel %vm1617, %v1051, %v1532
      %v1672 = vsel %vm1617, %v1053, %v1534
      %v1673 = vsel %vm1617, %v1055, %v1536
      %v1674 = vsel %vm1617, %v1079, %v1538
      %v1675 = vsel %vm1617, %v1093, %v1540
      %v1676 = vsel %vm1617, %v1101, %v1542
      %v1677 = vsel %vm1617, %v1103, %v1544
      %v1678 = vsel %vm1617, %v1086, %v1546
      %v1679 = vsel %vm1617, %v1100, %v1548
      %v1680 = vsel %vm1617, %v1102, %v1550
      %v1681 = vsel %vm1617, %v1104, %v1552
      %1746 = vrot.lane.b32.xlu0 %v1618, 120
      %v1747 = vpop.permute.xlu0 %1746
      %1748 = vrot.lane.b32.xlu0 %v1619, 120
      %v1749 = vpop.permute.xlu0 %1748
      %1750 = vrot.lane.b32.xlu0 %v1620, 120
      %v1751 = vpop.permute.xlu0 %1750
      %1752 = vrot.lane.b32.xlu0 %v1621, 120
      %v1753 = vpop.permute.xlu0 %1752
      %1754 = vrot.lane.b32.xlu0 %v1622, 120
      %v1755 = vpop.permute.xlu0 %1754
      %1756 = vrot.lane.b32.xlu0 %v1623, 120
      %v1757 = vpop.permute.xlu0 %1756
      %1758 = vrot.lane.b32.xlu0 %v1624, 120
      %v1759 = vpop.permute.xlu0 %1758
      %1760 = vrot.lane.b32.xlu0 %v1625, 120
      %v1761 = vpop.permute.xlu0 %1760
      %1762 = vrot.lane.b32.xlu0 %v1626, 120
      %v1763 = vpop.permute.xlu0 %1762
      %1764 = vrot.lane.b32.xlu0 %v1627, 120
      %v1765 = vpop.permute.xlu0 %1764
      %1766 = vrot.lane.b32.xlu0 %v1628, 120
      %v1767 = vpop.permute.xlu0 %1766
      %1768 = vrot.lane.b32.xlu0 %v1629, 120
      %v1769 = vpop.permute.xlu0 %1768
      %1770 = vrot.lane.b32.xlu0 %v1630, 120
      %v1771 = vpop.permute.xlu0 %1770
      %1772 = vrot.lane.b32.xlu0 %v1631, 120
      %v1773 = vpop.permute.xlu0 %1772
      %1774 = vrot.lane.b32.xlu0 %v1632, 120
      %v1775 = vpop.permute.xlu0 %1774
      %1776 = vrot.lane.b32.xlu0 %v1633, 120
      %v1777 = vpop.permute.xlu0 %1776
      %1778 = vrot.lane.b32.xlu0 %v1634, 120
      %v1779 = vpop.permute.xlu0 %1778
      %1780 = vrot.lane.b32.xlu0 %v1635, 120
      %v1781 = vpop.permute.xlu0 %1780
      %1782 = vrot.lane.b32.xlu0 %v1636, 120
      %v1783 = vpop.permute.xlu0 %1782
      %1784 = vrot.lane.b32.xlu0 %v1637, 120
      %v1785 = vpop.permute.xlu0 %1784
      %1786 = vrot.lane.b32.xlu0 %v1638, 120
      %v1787 = vpop.permute.xlu0 %1786
      %1788 = vrot.lane.b32.xlu0 %v1639, 120
      %v1789 = vpop.permute.xlu0 %1788
      %1790 = vrot.lane.b32.xlu0 %v1640, 120
      %v1791 = vpop.permute.xlu0 %1790
      %1792 = vrot.lane.b32.xlu0 %v1641, 120
      %v1793 = vpop.permute.xlu0 %1792
      %1794 = vrot.lane.b32.xlu0 %v1642, 120
      %v1795 = vpop.permute.xlu0 %1794
      %1796 = vrot.lane.b32.xlu0 %v1643, 120
      %v1797 = vpop.permute.xlu0 %1796
      %1798 = vrot.lane.b32.xlu0 %v1644, 120
      %v1799 = vpop.permute.xlu0 %1798
      %1800 = vrot.lane.b32.xlu0 %v1645, 120
      %v1801 = vpop.permute.xlu0 %1800
      %1802 = vrot.lane.b32.xlu0 %v1646, 120
      %v1803 = vpop.permute.xlu0 %1802
      %1804 = vrot.lane.b32.xlu0 %v1647, 120
      %v1805 = vpop.permute.xlu0 %1804
      %1806 = vrot.lane.b32.xlu0 %v1648, 120
      %v1807 = vpop.permute.xlu0 %1806
      %1808 = vrot.lane.b32.xlu0 %v1649, 120
      %v1809 = vpop.permute.xlu0 %1808
      %1810 = vrot.lane.b32.xlu0 %v1650, 120
      %v1811 = vpop.permute.xlu0 %1810
      %1812 = vrot.lane.b32.xlu0 %v1651, 120
      %v1813 = vpop.permute.xlu0 %1812
      %1814 = vrot.lane.b32.xlu0 %v1652, 120
      %v1815 = vpop.permute.xlu0 %1814
      %1816 = vrot.lane.b32.xlu0 %v1653, 120
      %v1817 = vpop.permute.xlu0 %1816
      %1818 = vrot.lane.b32.xlu0 %v1654, 120
      %v1819 = vpop.permute.xlu0 %1818
      %1820 = vrot.lane.b32.xlu0 %v1655, 120
      %v1821 = vpop.permute.xlu0 %1820
      %1822 = vrot.lane.b32.xlu0 %v1656, 120
      %v1823 = vpop.permute.xlu0 %1822
      %1824 = vrot.lane.b32.xlu0 %v1657, 120
      %v1825 = vpop.permute.xlu0 %1824
      %1826 = vrot.lane.b32.xlu0 %v1658, 120
      %v1827 = vpop.permute.xlu0 %1826
      %1828 = vrot.lane.b32.xlu0 %v1659, 120
      %v1829 = vpop.permute.xlu0 %1828
      %1830 = vrot.lane.b32.xlu0 %v1660, 120
      %v1831 = vpop.permute.xlu0 %1830
      %1832 = vrot.lane.b32.xlu0 %v1661, 120
      %v1833 = vpop.permute.xlu0 %1832
      %1834 = vrot.lane.b32.xlu0 %v1662, 120
      %v1835 = vpop.permute.xlu0 %1834
      %1836 = vrot.lane.b32.xlu0 %v1663, 120
      %v1837 = vpop.permute.xlu0 %1836
      %1838 = vrot.lane.b32.xlu0 %v1664, 120
      %v1839 = vpop.permute.xlu0 %1838
      %1840 = vrot.lane.b32.xlu0 %v1665, 120
      %v1841 = vpop.permute.xlu0 %1840
      %1842 = vrot.lane.b32.xlu0 %v1666, 120
      %v1843 = vpop.permute.xlu0 %1842
      %1844 = vrot.lane.b32.xlu0 %v1667, 120
      %v1845 = vpop.permute.xlu0 %1844
      %1846 = vrot.lane.b32.xlu0 %v1668, 120
      %v1847 = vpop.permute.xlu0 %1846
      %1848 = vrot.lane.b32.xlu0 %v1669, 120
      %v1849 = vpop.permute.xlu0 %1848
      %1850 = vrot.lane.b32.xlu0 %v1670, 120
      %v1851 = vpop.permute.xlu0 %1850
      %1852 = vrot.lane.b32.xlu0 %v1671, 120
      %v1853 = vpop.permute.xlu0 %1852
      %1854 = vrot.lane.b32.xlu0 %v1672, 120
      %v1855 = vpop.permute.xlu0 %1854
      %1856 = vrot.lane.b32.xlu0 %v1673, 120
      %v1857 = vpop.permute.xlu0 %1856
      %1858 = vrot.lane.b32.xlu0 %v1674, 120
      %v1859 = vpop.permute.xlu0 %1858
      %1860 = vrot.lane.b32.xlu0 %v1675, 120
      %v1861 = vpop.permute.xlu0 %1860
      %1862 = vrot.lane.b32.xlu0 %v1676, 120
      %v1863 = vpop.permute.xlu0 %1862
      %1864 = vrot.lane.b32.xlu0 %v1677, 120
      %v1865 = vpop.permute.xlu0 %1864
      %1866 = vrot.lane.b32.xlu0 %v1678, 120
      %v1867 = vpop.permute.xlu0 %1866
      %1868 = vrot.lane.b32.xlu0 %v1679, 120
      %v1869 = vpop.permute.xlu0 %1868
      %1870 = vrot.lane.b32.xlu0 %v1680, 120
      %v1871 = vpop.permute.xlu0 %1870
      %1872 = vrot.lane.b32.xlu0 %v1681, 120
      %v1873 = vpop.permute.xlu0 %1872
      %v1874 = vcombine.low %v1618, %v1619
      %v1875 = vcombine.low %v1620, %v1621
      %v1877 = vunpack.c.l.s4 1983009808
      %v1878 = vunpack.c.0.s8 %v1877
      %v1879 = vlaneseq
      %v1880 = vshrl.u32 %v1879, 7
      %v1881 = vsub.s32 %v1878, %v1880
      %v1882 = vrot.slane %v1874, %v1881
      %v1884 = vunpack.c.l.s4 1983009808
      %v1885 = vunpack.c.0.s8 %v1884
      %v1886 = vlaneseq
      %v1887 = vshrl.u32 %v1886, 7
      %v1888 = vsub.s32 %v1885, %v1887
      %v1889 = vrot.slane %v1875, %v1888
      %v1890 = vcombine.low %v1882, %v1889
      %v1891 = vcombine.low %v1622, %v1623
      %v1892 = vcombine.low %v1624, %v1625
      %v1894 = vunpack.c.l.s4 1983009808
      %v1895 = vunpack.c.0.s8 %v1894
      %v1896 = vlaneseq
      %v1897 = vshrl.u32 %v1896, 7
      %v1898 = vsub.s32 %v1895, %v1897
      %v1899 = vrot.slane %v1891, %v1898
      %v1901 = vunpack.c.l.s4 1983009808
      %v1902 = vunpack.c.0.s8 %v1901
      %v1903 = vlaneseq
      %v1904 = vshrl.u32 %v1903, 7
      %v1905 = vsub.s32 %v1902, %v1904
      %v1906 = vrot.slane %v1892, %v1905
      %v1907 = vcombine.low %v1899, %v1906
      %v1908 = vcombine.low %v1747, %v1749
      %v1909 = vcombine.low %v1751, %v1753
      %v1911 = vunpack.c.l.s4 1983009808
      %v1912 = vunpack.c.0.s8 %v1911
      %v1913 = vlaneseq
      %v1914 = vshrl.u32 %v1913, 7
      %v1915 = vsub.s32 %v1912, %v1914
      %v1916 = vrot.slane %v1908, %v1915
      %v1918 = vunpack.c.l.s4 1983009808
      %v1919 = vunpack.c.0.s8 %v1918
      %v1920 = vlaneseq
      %v1921 = vshrl.u32 %v1920, 7
      %v1922 = vsub.s32 %v1919, %v1921
      %v1923 = vrot.slane %v1909, %v1922
      %v1924 = vcombine.low %v1916, %v1923
      %v1925 = vcombine.low %v1755, %v1757
      %v1926 = vcombine.low %v1759, %v1761
      %v1928 = vunpack.c.l.s4 1983009808
      %v1929 = vunpack.c.0.s8 %v1928
      %v1930 = vlaneseq
      %v1931 = vshrl.u32 %v1930, 7
      %v1932 = vsub.s32 %v1929, %v1931
      %v1933 = vrot.slane %v1925, %v1932
      %v1935 = vunpack.c.l.s4 1983009808
      %v1936 = vunpack.c.0.s8 %v1935
      %v1937 = vlaneseq
      %v1938 = vshrl.u32 %v1937, 7
      %v1939 = vsub.s32 %v1936, %v1938
      %v1940 = vrot.slane %v1926, %v1939
      %v1941 = vcombine.low %v1933, %v1940
      %v1942 = vcombine.low %v1626, %v1627
      %v1943 = vcombine.low %v1628, %v1629
      %v1945 = vunpack.c.l.s4 1983009808
      %v1946 = vunpack.c.0.s8 %v1945
      %v1947 = vlaneseq
      %v1948 = vshrl.u32 %v1947, 7
      %v1949 = vsub.s32 %v1946, %v1948
      %v1950 = vrot.slane %v1942, %v1949
      %v1952 = vunpack.c.l.s4 1983009808
      %v1953 = vunpack.c.0.s8 %v1952
      %v1954 = vlaneseq
      %v1955 = vshrl.u32 %v1954, 7
      %v1956 = vsub.s32 %v1953, %v1955
      %v1957 = vrot.slane %v1943, %v1956
      %v1958 = vcombine.low %v1950, %v1957
      %v1959 = vcombine.low %v1630, %v1631
      %v1960 = vcombine.low %v1632, %v1633
      %v1962 = vunpack.c.l.s4 1983009808
      %v1963 = vunpack.c.0.s8 %v1962
      %v1964 = vlaneseq
      %v1965 = vshrl.u32 %v1964, 7
      %v1966 = vsub.s32 %v1963, %v1965
      %v1967 = vrot.slane %v1959, %v1966
      %v1969 = vunpack.c.l.s4 1983009808
      %v1970 = vunpack.c.0.s8 %v1969
      %v1971 = vlaneseq
      %v1972 = vshrl.u32 %v1971, 7
      %v1973 = vsub.s32 %v1970, %v1972
      %v1974 = vrot.slane %v1960, %v1973
      %v1975 = vcombine.low %v1967, %v1974
      %v1976 = vcombine.low %v1763, %v1765
      %v1977 = vcombine.low %v1767, %v1769
      %v1979 = vunpack.c.l.s4 1983009808
      %v1980 = vunpack.c.0.s8 %v1979
      %v1981 = vlaneseq
      %v1982 = vshrl.u32 %v1981, 7
      %v1983 = vsub.s32 %v1980, %v1982
      %v1984 = vrot.slane %v1976, %v1983
      %v1986 = vunpack.c.l.s4 1983009808
      %v1987 = vunpack.c.0.s8 %v1986
      %v1988 = vlaneseq
      %v1989 = vshrl.u32 %v1988, 7
      %v1990 = vsub.s32 %v1987, %v1989
      %v1991 = vrot.slane %v1977, %v1990
      %v1992 = vcombine.low %v1984, %v1991
      %v1993 = vcombine.low %v1771, %v1773
      %v1994 = vcombine.low %v1775, %v1777
      %v1996 = vunpack.c.l.s4 1983009808
      %v1997 = vunpack.c.0.s8 %v1996
      %v1998 = vlaneseq
      %v1999 = vshrl.u32 %v1998, 7
      %v2000 = vsub.s32 %v1997, %v1999
      %v2001 = vrot.slane %v1993, %v2000
      %v2003 = vunpack.c.l.s4 1983009808
      %v2004 = vunpack.c.0.s8 %v2003
      %v2005 = vlaneseq
      %v2006 = vshrl.u32 %v2005, 7
      %v2007 = vsub.s32 %v2004, %v2006
      %v2008 = vrot.slane %v1994, %v2007
      %v2009 = vcombine.low %v2001, %v2008
      %v2010 = vcombine.low %v1634, %v1635
      %v2011 = vcombine.low %v1636, %v1637
      %v2013 = vunpack.c.l.s4 1983009808
      %v2014 = vunpack.c.0.s8 %v2013
      %v2015 = vlaneseq
      %v2016 = vshrl.u32 %v2015, 7
      %v2017 = vsub.s32 %v2014, %v2016
      %v2018 = vrot.slane %v2010, %v2017
      %v2020 = vunpack.c.l.s4 1983009808
      %v2021 = vunpack.c.0.s8 %v2020
      %v2022 = vlaneseq
      %v2023 = vshrl.u32 %v2022, 7
      %v2024 = vsub.s32 %v2021, %v2023
      %v2025 = vrot.slane %v2011, %v2024
      %v2026 = vcombine.low %v2018, %v2025
      %v2027 = vcombine.low %v1638, %v1639
      %v2028 = vcombine.low %v1640, %v1641
      %v2030 = vunpack.c.l.s4 1983009808
      %v2031 = vunpack.c.0.s8 %v2030
      %v2032 = vlaneseq
      %v2033 = vshrl.u32 %v2032, 7
      %v2034 = vsub.s32 %v2031, %v2033
      %v2035 = vrot.slane %v2027, %v2034
      %v2037 = vunpack.c.l.s4 1983009808
      %v2038 = vunpack.c.0.s8 %v2037
      %v2039 = vlaneseq
      %v2040 = vshrl.u32 %v2039, 7
      %v2041 = vsub.s32 %v2038, %v2040
      %v2042 = vrot.slane %v2028, %v2041
      %v2043 = vcombine.low %v2035, %v2042
      %v2044 = vcombine.low %v1779, %v1781
      %v2045 = vcombine.low %v1783, %v1785
      %v2047 = vunpack.c.l.s4 1983009808
      %v2048 = vunpack.c.0.s8 %v2047
      %v2049 = vlaneseq
      %v2050 = vshrl.u32 %v2049, 7
      %v2051 = vsub.s32 %v2048, %v2050
      %v2052 = vrot.slane %v2044, %v2051
      %v2054 = vunpack.c.l.s4 1983009808
      %v2055 = vunpack.c.0.s8 %v2054
      %v2056 = vlaneseq
      %v2057 = vshrl.u32 %v2056, 7
      %v2058 = vsub.s32 %v2055, %v2057
      %v2059 = vrot.slane %v2045, %v2058
      %v2060 = vcombine.low %v2052, %v2059
      %v2061 = vcombine.low %v1787, %v1789
      %v2062 = vcombine.low %v1791, %v1793
      %v2064 = vunpack.c.l.s4 1983009808
      %v2065 = vunpack.c.0.s8 %v2064
      %v2066 = vlaneseq
      %v2067 = vshrl.u32 %v2066, 7
      %v2068 = vsub.s32 %v2065, %v2067
      %v2069 = vrot.slane %v2061, %v2068
      %v2071 = vunpack.c.l.s4 1983009808
      %v2072 = vunpack.c.0.s8 %v2071
      %v2073 = vlaneseq
      %v2074 = vshrl.u32 %v2073, 7
      %v2075 = vsub.s32 %v2072, %v2074
      %v2076 = vrot.slane %v2062, %v2075
      %v2077 = vcombine.low %v2069, %v2076
      %v2078 = vcombine.low %v1642, %v1643
      %v2079 = vcombine.low %v1644, %v1645
      %v2081 = vunpack.c.l.s4 1983009808
      %v2082 = vunpack.c.0.s8 %v2081
      %v2083 = vlaneseq
      %v2084 = vshrl.u32 %v2083, 7
      %v2085 = vsub.s32 %v2082, %v2084
      %v2086 = vrot.slane %v2078, %v2085
      %v2088 = vunpack.c.l.s4 1983009808
      %v2089 = vunpack.c.0.s8 %v2088
      %v2090 = vlaneseq
      %v2091 = vshrl.u32 %v2090, 7
      %v2092 = vsub.s32 %v2089, %v2091
      %v2093 = vrot.slane %v2079, %v2092
      %v2094 = vcombine.low %v2086, %v2093
      %v2095 = vcombine.low %v1646, %v1647
      %v2096 = vcombine.low %v1648, %v1649
      %v2098 = vunpack.c.l.s4 1983009808
      %v2099 = vunpack.c.0.s8 %v2098
      %v2100 = vlaneseq
      %v2101 = vshrl.u32 %v2100, 7
      %v2102 = vsub.s32 %v2099, %v2101
      %v2103 = vrot.slane %v2095, %v2102
      %v2105 = vunpack.c.l.s4 1983009808
      %v2106 = vunpack.c.0.s8 %v2105
      %v2107 = vlaneseq
      %v2108 = vshrl.u32 %v2107, 7
      %v2109 = vsub.s32 %v2106, %v2108
      %v2110 = vrot.slane %v2096, %v2109
      %v2111 = vcombine.low %v2103, %v2110
      %v2112 = vcombine.low %v1795, %v1797
      %v2113 = vcombine.low %v1799, %v1801
      %v2115 = vunpack.c.l.s4 1983009808
      %v2116 = vunpack.c.0.s8 %v2115
      %v2117 = vlaneseq
      %v2118 = vshrl.u32 %v2117, 7
      %v2119 = vsub.s32 %v2116, %v2118
      %v2120 = vrot.slane %v2112, %v2119
      %v2122 = vunpack.c.l.s4 1983009808
      %v2123 = vunpack.c.0.s8 %v2122
      %v2124 = vlaneseq
      %v2125 = vshrl.u32 %v2124, 7
      %v2126 = vsub.s32 %v2123, %v2125
      %v2127 = vrot.slane %v2113, %v2126
      %v2128 = vcombine.low %v2120, %v2127
      %v2129 = vcombine.low %v1803, %v1805
      %v2130 = vcombine.low %v1807, %v1809
      %v2132 = vunpack.c.l.s4 1983009808
      %v2133 = vunpack.c.0.s8 %v2132
      %v2134 = vlaneseq
      %v2135 = vshrl.u32 %v2134, 7
      %v2136 = vsub.s32 %v2133, %v2135
      %v2137 = vrot.slane %v2129, %v2136
      %v2139 = vunpack.c.l.s4 1983009808
      %v2140 = vunpack.c.0.s8 %v2139
      %v2141 = vlaneseq
      %v2142 = vshrl.u32 %v2141, 7
      %v2143 = vsub.s32 %v2140, %v2142
      %v2144 = vrot.slane %v2130, %v2143
      %v2145 = vcombine.low %v2137, %v2144
      %v2146 = vcombine.low %v1650, %v1651
      %v2147 = vcombine.low %v1652, %v1653
      %v2149 = vunpack.c.l.s4 1983009808
      %v2150 = vunpack.c.0.s8 %v2149
      %v2151 = vlaneseq
      %v2152 = vshrl.u32 %v2151, 7
      %v2153 = vsub.s32 %v2150, %v2152
      %v2154 = vrot.slane %v2146, %v2153
      %v2156 = vunpack.c.l.s4 1983009808
      %v2157 = vunpack.c.0.s8 %v2156
      %v2158 = vlaneseq
      %v2159 = vshrl.u32 %v2158, 7
      %v2160 = vsub.s32 %v2157, %v2159
      %v2161 = vrot.slane %v2147, %v2160
      %v2162 = vcombine.low %v2154, %v2161
      %v2163 = vcombine.low %v1654, %v1655
      %v2164 = vcombine.low %v1656, %v1657
      %v2166 = vunpack.c.l.s4 1983009808
      %v2167 = vunpack.c.0.s8 %v2166
      %v2168 = vlaneseq
      %v2169 = vshrl.u32 %v2168, 7
      %v2170 = vsub.s32 %v2167, %v2169
      %v2171 = vrot.slane %v2163, %v2170
      %v2173 = vunpack.c.l.s4 1983009808
      %v2174 = vunpack.c.0.s8 %v2173
      %v2175 = vlaneseq
      %v2176 = vshrl.u32 %v2175, 7
      %v2177 = vsub.s32 %v2174, %v2176
      %v2178 = vrot.slane %v2164, %v2177
      %v2179 = vcombine.low %v2171, %v2178
      %v2180 = vcombine.low %v1811, %v1813
      %v2181 = vcombine.low %v1815, %v1817
      %v2183 = vunpack.c.l.s4 1983009808
      %v2184 = vunpack.c.0.s8 %v2183
      %v2185 = vlaneseq
      %v2186 = vshrl.u32 %v2185, 7
      %v2187 = vsub.s32 %v2184, %v2186
      %v2188 = vrot.slane %v2180, %v2187
      %v2190 = vunpack.c.l.s4 1983009808
      %v2191 = vunpack.c.0.s8 %v2190
      %v2192 = vlaneseq
      %v2193 = vshrl.u32 %v2192, 7
      %v2194 = vsub.s32 %v2191, %v2193
      %v2195 = vrot.slane %v2181, %v2194
      %v2196 = vcombine.low %v2188, %v2195
      %v2197 = vcombine.low %v1819, %v1821
      %v2198 = vcombine.low %v1823, %v1825
      %v2200 = vunpack.c.l.s4 1983009808
      %v2201 = vunpack.c.0.s8 %v2200
      %v2202 = vlaneseq
      %v2203 = vshrl.u32 %v2202, 7
      %v2204 = vsub.s32 %v2201, %v2203
      %v2205 = vrot.slane %v2197, %v2204
      %v2207 = vunpack.c.l.s4 1983009808
      %v2208 = vunpack.c.0.s8 %v2207
      %v2209 = vlaneseq
      %v2210 = vshrl.u32 %v2209, 7
      %v2211 = vsub.s32 %v2208, %v2210
      %v2212 = vrot.slane %v2198, %v2211
      %v2213 = vcombine.low %v2205, %v2212
      %v2214 = vcombine.low %v1658, %v1659
      %v2215 = vcombine.low %v1660, %v1661
      %v2217 = vunpack.c.l.s4 1983009808
      %v2218 = vunpack.c.0.s8 %v2217
      %v2219 = vlaneseq
      %v2220 = vshrl.u32 %v2219, 7
      %v2221 = vsub.s32 %v2218, %v2220
      %v2222 = vrot.slane %v2214, %v2221
      %v2224 = vunpack.c.l.s4 1983009808
      %v2225 = vunpack.c.0.s8 %v2224
      %v2226 = vlaneseq
      %v2227 = vshrl.u32 %v2226, 7
      %v2228 = vsub.s32 %v2225, %v2227
      %v2229 = vrot.slane %v2215, %v2228
      %v2230 = vcombine.low %v2222, %v2229
      %v2231 = vcombine.low %v1662, %v1663
      %v2232 = vcombine.low %v1664, %v1665
      %v2234 = vunpack.c.l.s4 1983009808
      %v2235 = vunpack.c.0.s8 %v2234
      %v2236 = vlaneseq
      %v2237 = vshrl.u32 %v2236, 7
      %v2238 = vsub.s32 %v2235, %v2237
      %v2239 = vrot.slane %v2231, %v2238
      %v2241 = vunpack.c.l.s4 1983009808
      %v2242 = vunpack.c.0.s8 %v2241
      %v2243 = vlaneseq
      %v2244 = vshrl.u32 %v2243, 7
      %v2245 = vsub.s32 %v2242, %v2244
      %v2246 = vrot.slane %v2232, %v2245
      %v2247 = vcombine.low %v2239, %v2246
      %v2248 = vcombine.low %v1827, %v1829
      %v2249 = vcombine.low %v1831, %v1833
      %v2251 = vunpack.c.l.s4 1983009808
      %v2252 = vunpack.c.0.s8 %v2251
      %v2253 = vlaneseq
      %v2254 = vshrl.u32 %v2253, 7
      %v2255 = vsub.s32 %v2252, %v2254
      %v2256 = vrot.slane %v2248, %v2255
      %v2258 = vunpack.c.l.s4 1983009808
      %v2259 = vunpack.c.0.s8 %v2258
      %v2260 = vlaneseq
      %v2261 = vshrl.u32 %v2260, 7
      %v2262 = vsub.s32 %v2259, %v2261
      %v2263 = vrot.slane %v2249, %v2262
      %v2264 = vcombine.low %v2256, %v2263
      %v2265 = vcombine.low %v1835, %v1837
      %v2266 = vcombine.low %v1839, %v1841
      %v2268 = vunpack.c.l.s4 1983009808
      %v2269 = vunpack.c.0.s8 %v2268
      %v2270 = vlaneseq
      %v2271 = vshrl.u32 %v2270, 7
      %v2272 = vsub.s32 %v2269, %v2271
      %v2273 = vrot.slane %v2265, %v2272
      %v2275 = vunpack.c.l.s4 1983009808
      %v2276 = vunpack.c.0.s8 %v2275
      %v2277 = vlaneseq
      %v2278 = vshrl.u32 %v2277, 7
      %v2279 = vsub.s32 %v2276, %v2278
      %v2280 = vrot.slane %v2266, %v2279
      %v2281 = vcombine.low %v2273, %v2280
      %v2282 = vcombine.low %v1666, %v1667
      %v2283 = vcombine.low %v1668, %v1669
      %v2285 = vunpack.c.l.s4 1983009808
      %v2286 = vunpack.c.0.s8 %v2285
      %v2287 = vlaneseq
      %v2288 = vshrl.u32 %v2287, 7
      %v2289 = vsub.s32 %v2286, %v2288
      %v2290 = vrot.slane %v2282, %v2289
      %v2292 = vunpack.c.l.s4 1983009808
      %v2293 = vunpack.c.0.s8 %v2292
      %v2294 = vlaneseq
      %v2295 = vshrl.u32 %v2294, 7
      %v2296 = vsub.s32 %v2293, %v2295
      %v2297 = vrot.slane %v2283, %v2296
      %v2298 = vcombine.low %v2290, %v2297
      %v2299 = vcombine.low %v1670, %v1671
      %v2300 = vcombine.low %v1672, %v1673
      %v2302 = vunpack.c.l.s4 1983009808
      %v2303 = vunpack.c.0.s8 %v2302
      %v2304 = vlaneseq
      %v2305 = vshrl.u32 %v2304, 7
      %v2306 = vsub.s32 %v2303, %v2305
      %v2307 = vrot.slane %v2299, %v2306
      %v2309 = vunpack.c.l.s4 1983009808
      %v2310 = vunpack.c.0.s8 %v2309
      %v2311 = vlaneseq
      %v2312 = vshrl.u32 %v2311, 7
      %v2313 = vsub.s32 %v2310, %v2312
      %v2314 = vrot.slane %v2300, %v2313
      %v2315 = vcombine.low %v2307, %v2314
      %v2316 = vcombine.low %v1843, %v1845
      %v2317 = vcombine.low %v1847, %v1849
      %v2319 = vunpack.c.l.s4 1983009808
      %v2320 = vunpack.c.0.s8 %v2319
      %v2321 = vlaneseq
      %v2322 = vshrl.u32 %v2321, 7
      %v2323 = vsub.s32 %v2320, %v2322
      %v2324 = vrot.slane %v2316, %v2323
      %v2326 = vunpack.c.l.s4 1983009808
      %v2327 = vunpack.c.0.s8 %v2326
      %v2328 = vlaneseq
      %v2329 = vshrl.u32 %v2328, 7
      %v2330 = vsub.s32 %v2327, %v2329
      %v2331 = vrot.slane %v2317, %v2330
      %v2332 = vcombine.low %v2324, %v2331
      %v2333 = vcombine.low %v1851, %v1853
      %v2334 = vcombine.low %v1855, %v1857
      %v2336 = vunpack.c.l.s4 1983009808
      %v2337 = vunpack.c.0.s8 %v2336
      %v2338 = vlaneseq
      %v2339 = vshrl.u32 %v2338, 7
      %v2340 = vsub.s32 %v2337, %v2339
      %v2341 = vrot.slane %v2333, %v2340
      %v2343 = vunpack.c.l.s4 1983009808
      %v2344 = vunpack.c.0.s8 %v2343
      %v2345 = vlaneseq
      %v2346 = vshrl.u32 %v2345, 7
      %v2347 = vsub.s32 %v2344, %v2346
      %v2348 = vrot.slane %v2334, %v2347
      %v2349 = vcombine.low %v2341, %v2348
      %v2350 = vcombine.low %v1674, %v1675
      %v2351 = vcombine.low %v1676, %v1677
      %v2353 = vunpack.c.l.s4 1983009808
      %v2354 = vunpack.c.0.s8 %v2353
      %v2355 = vlaneseq
      %v2356 = vshrl.u32 %v2355, 7
      %v2357 = vsub.s32 %v2354, %v2356
      %v2358 = vrot.slane %v2350, %v2357
      %v2360 = vunpack.c.l.s4 1983009808
      %v2361 = vunpack.c.0.s8 %v2360
      %v2362 = vlaneseq
      %v2363 = vshrl.u32 %v2362, 7
      %v2364 = vsub.s32 %v2361, %v2363
      %v2365 = vrot.slane %v2351, %v2364
      %v2366 = vcombine.low %v2358, %v2365
      %v2367 = vcombine.low %v1678, %v1679
      %v2368 = vcombine.low %v1680, %v1681
      %v2370 = vunpack.c.l.s4 1983009808
      %v2371 = vunpack.c.0.s8 %v2370
      %v2372 = vlaneseq
      %v2373 = vshrl.u32 %v2372, 7
      %v2374 = vsub.s32 %v2371, %v2373
      %v2375 = vrot.slane %v2367, %v2374
      %v2377 = vunpack.c.l.s4 1983009808
      %v2378 = vunpack.c.0.s8 %v2377
      %v2379 = vlaneseq
      %v2380 = vshrl.u32 %v2379, 7
      %v2381 = vsub.s32 %v2378, %v2380
      %v2382 = vrot.slane %v2368, %v2381
      %v2383 = vcombine.low %v2375, %v2382
      %v2384 = vcombine.low %v1859, %v1861
      %v2385 = vcombine.low %v1863, %v1865
      %v2387 = vunpack.c.l.s4 1983009808
      %v2388 = vunpack.c.0.s8 %v2387
      %v2389 = vlaneseq
      %v2390 = vshrl.u32 %v2389, 7
      %v2391 = vsub.s32 %v2388, %v2390
      %v2392 = vrot.slane %v2384, %v2391
      %v2394 = vunpack.c.l.s4 1983009808
      %v2395 = vunpack.c.0.s8 %v2394
      %v2396 = vlaneseq
      %v2397 = vshrl.u32 %v2396, 7
      %v2398 = vsub.s32 %v2395, %v2397
      %v2399 = vrot.slane %v2385, %v2398
      %v2400 = vcombine.low %v2392, %v2399
      %v2401 = vcombine.low %v1867, %v1869
      %v2402 = vcombine.low %v1871, %v1873
      %v2404 = vunpack.c.l.s4 1983009808
      %v2405 = vunpack.c.0.s8 %v2404
      %v2406 = vlaneseq
      %v2407 = vshrl.u32 %v2406, 7
      %v2408 = vsub.s32 %v2405, %v2407
      %v2409 = vrot.slane %v2401, %v2408
      %v2411 = vunpack.c.l.s4 1983009808
      %v2412 = vunpack.c.0.s8 %v2411
      %v2413 = vlaneseq
      %v2414 = vshrl.u32 %v2413, 7
      %v2415 = vsub.s32 %v2412, %v2414
      %v2416 = vrot.slane %v2402, %v2415
      %v2417 = vcombine.low %v2409, %v2416
      %vm2450 = vcmask 31744
      %2451 = vst.msk [vmem:[%s526 + $0x1] sm:$0xff] %vm2450, %v1890
      %2452 = vst.msk [vmem:[%s526 + $0x9] sm:$0xff] %vm2450, %v1907
      %2453 = vst.msk [vmem:[%s526 + $0x19] sm:$0xff] %vm2450, %v1924
      %2454 = vst.msk [vmem:[%s526 + $0x21] sm:$0xff] %vm2450, %v1941
      %2455 = vst.msk [vmem:[%s526 + $0x31] sm:$0xff] %vm2450, %v1958
      %2456 = vst.msk [vmem:[%s526 + $0x39] sm:$0xff] %vm2450, %v1975
      %2457 = vst.msk [vmem:[%s526 + $0x49] sm:$0xff] %vm2450, %v1992
      %2458 = vst.msk [vmem:[%s526 + $0x51] sm:$0xff] %vm2450, %v2009
      %2459 = vst.msk [vmem:[%s526 + $0x61] sm:$0xff] %vm2450, %v2026
      %2460 = vst.msk [vmem:[%s526 + $0x69] sm:$0xff] %vm2450, %v2043
      %2461 = vst.msk [vmem:[%s526 + $0x79] sm:$0xff] %vm2450, %v2060
      %2462 = vst.msk [vmem:[%s526 + $0x81] sm:$0xff] %vm2450, %v2077
      %2463 = vst.msk [vmem:[%s526 + $0x91] sm:$0xff] %vm2450, %v2094
      %2464 = vst.msk [vmem:[%s526 + $0x99] sm:$0xff] %vm2450, %v2111
      %2465 = vst.msk [vmem:[%s526 + $0xa9] sm:$0xff] %vm2450, %v2128
      %2466 = vst.msk [vmem:[%s526 + $0xb1] sm:$0xff] %vm2450, %v2145
      %2467 = vst.msk [vmem:[%s526 + $0xc1] sm:$0xff] %vm2450, %v2162
      %2468 = vst.msk [vmem:[%s526 + $0xc9] sm:$0xff] %vm2450, %v2179
      %2469 = vst.msk [vmem:[%s526 + $0xd9] sm:$0xff] %vm2450, %v2196
      %2470 = vst.msk [vmem:[%s526 + $0xe1] sm:$0xff] %vm2450, %v2213
      %2471 = vst.msk [vmem:[%s526 + $0xf1] sm:$0xff] %vm2450, %v2230
      %2472 = vst.msk [vmem:[%s526 + $0xf9] sm:$0xff] %vm2450, %v2247
      %2473 = vst.msk [vmem:[%s526 + $0x109] sm:$0xff] %vm2450, %v2264
      %2474 = vst.msk [vmem:[%s526 + $0x111] sm:$0xff] %vm2450, %v2281
      %2475 = vst.msk [vmem:[%s526 + $0x121] sm:$0xff] %vm2450, %v2298
      %2476 = vst.msk [vmem:[%s526 + $0x129] sm:$0xff] %vm2450, %v2315
      %2477 = vst.msk [vmem:[%s526 + $0x139] sm:$0xff] %vm2450, %v2332
      %2478 = vst.msk [vmem:[%s526 + $0x141] sm:$0xff] %vm2450, %v2349
      %2479 = vst.msk [vmem:[%s526 + $0x151] sm:$0xff] %vm2450, %v2366
      %2480 = vst.msk [vmem:[%s526 + $0x159] sm:$0xff] %vm2450, %v2383
      %2481 = vst.msk [vmem:[%s526 + $0x169] sm:$0xff] %vm2450, %v2400
      %2482 = vst.msk [vmem:[%s526 + $0x171] sm:$0xff] %vm2450, %v2417
      %v2483 = vld [vmem:[#allocation2] sm:$0xff]
      %v2484 = vld [vmem:[#allocation2 + $0x8] sm:$0xff]
      %v2485 = vld [vmem:[#allocation2 + $0x18] sm:$0xff]
      %v2486 = vld [vmem:[#allocation2 + $0x20] sm:$0xff]
      %v2487 = vld [vmem:[#allocation2 + $0x30] sm:$0xff]
      %v2488 = vld [vmem:[#allocation2 + $0x38] sm:$0xff]
      %v2489 = vld [vmem:[#allocation2 + $0x48] sm:$0xff]
      %v2490 = vld [vmem:[#allocation2 + $0x50] sm:$0xff]
      %v2491 = vld [vmem:[#allocation2 + $0x60] sm:$0xff]
      %v2492 = vld [vmem:[#allocation2 + $0x68] sm:$0xff]
      %v2493 = vld [vmem:[#allocation2 + $0x78] sm:$0xff]
      %v2494 = vld [vmem:[#allocation2 + $0x80] sm:$0xff]
      %v2495 = vld [vmem:[#allocation2 + $0x90] sm:$0xff]
      %v2496 = vld [vmem:[#allocation2 + $0x98] sm:$0xff]
      %v2497 = vld [vmem:[#allocation2 + $0xa8] sm:$0xff]
      %v2498 = vld [vmem:[#allocation2 + $0xb0] sm:$0xff]
      %v2499 = vld [vmem:[#allocation2 + $0xc0] sm:$0xff]
      %v2500 = vld [vmem:[#allocation2 + $0xc8] sm:$0xff]
      %v2501 = vld [vmem:[#allocation2 + $0xd8] sm:$0xff]
      %v2502 = vld [vmem:[#allocation2 + $0xe0] sm:$0xff]
      %v2503 = vld [vmem:[#allocation2 + $0xf0] sm:$0xff]
      %v2504 = vld [vmem:[#allocation2 + $0xf8] sm:$0xff]
      %v2505 = vld [vmem:[#allocation2 + $0x108] sm:$0xff]
      %v2506 = vld [vmem:[#allocation2 + $0x110] sm:$0xff]
      %v2507 = vld [vmem:[#allocation2 + $0x120] sm:$0xff]
      %v2508 = vld [vmem:[#allocation2 + $0x128] sm:$0xff]
      %v2509 = vld [vmem:[#allocation2 + $0x138] sm:$0xff]
      %v2510 = vld [vmem:[#allocation2 + $0x140] sm:$0xff]
      %v2511 = vld [vmem:[#allocation2 + $0x150] sm:$0xff]
      %v2512 = vld [vmem:[#allocation2 + $0x158] sm:$0xff]
      %v2513 = vld [vmem:[#allocation2 + $0x168] sm:$0xff]
      %v2514 = vld [vmem:[#allocation2 + $0x170] sm:$0xff]
      %v2515 = vld [vmem:[#allocation2 + $0x1] sm:$0xff]
      %v2516 = vld [vmem:[#allocation2 + $0x9] sm:$0xff]
      %v2517 = vld [vmem:[#allocation2 + $0x19] sm:$0xff]
      %v2518 = vld [vmem:[#allocation2 + $0x21] sm:$0xff]
      %v2519 = vld [vmem:[#allocation2 + $0x31] sm:$0xff]
      %v2520 = vld [vmem:[#allocation2 + $0x39] sm:$0xff]
      %v2521 = vld [vmem:[#allocation2 + $0x49] sm:$0xff]
      %v2522 = vld [vmem:[#allocation2 + $0x51] sm:$0xff]
      %v2523 = vld [vmem:[#allocation2 + $0x61] sm:$0xff]
      %v2524 = vld [vmem:[#allocation2 + $0x69] sm:$0xff]
      %v2525 = vld [vmem:[#allocation2 + $0x79] sm:$0xff]
      %v2526 = vld [vmem:[#allocation2 + $0x81] sm:$0xff]
      %v2527 = vld [vmem:[#allocation2 + $0x91] sm:$0xff]
      %v2528 = vld [vmem:[#allocation2 + $0x99] sm:$0xff]
      %v2529 = vld [vmem:[#allocation2 + $0xa9] sm:$0xff]
      %v2530 = vld [vmem:[#allocation2 + $0xb1] sm:$0xff]
      %v2531 = vld [vmem:[#allocation2 + $0xc1] sm:$0xff]
      %v2532 = vld [vmem:[#allocation2 + $0xc9] sm:$0xff]
      %v2533 = vld [vmem:[#allocation2 + $0xd9] sm:$0xff]
      %v2534 = vld [vmem:[#allocation2 + $0xe1] sm:$0xff]
      %v2535 = vld [vmem:[#allocation2 + $0xf1] sm:$0xff]
      %v2536 = vld [vmem:[#allocation2 + $0xf9] sm:$0xff]
      %v2537 = vld [vmem:[#allocation2 + $0x109] sm:$0xff]
      %v2538 = vld [vmem:[#allocation2 + $0x111] sm:$0xff]
      %v2539 = vld [vmem:[#allocation2 + $0x121] sm:$0xff]
      %v2540 = vld [vmem:[#allocation2 + $0x129] sm:$0xff]
      %v2541 = vld [vmem:[#allocation2 + $0x139] sm:$0xff]
      %v2542 = vld [vmem:[#allocation2 + $0x141] sm:$0xff]
      %v2543 = vld [vmem:[#allocation2 + $0x151] sm:$0xff]
      %v2544 = vld [vmem:[#allocation2 + $0x159] sm:$0xff]
      %v2545 = vld [vmem:[#allocation2 + $0x169] sm:$0xff]
      %v2546 = vld [vmem:[#allocation2 + $0x171] sm:$0xff]
      %v2547 = vld [vmem:[#allocation2 + $0x2] sm:$0xff]
      %v2548 = vld [vmem:[#allocation2 + $0xa] sm:$0xff]
      %v2549 = vld [vmem:[#allocation2 + $0x1a] sm:$0xff]
      %v2550 = vld [vmem:[#allocation2 + $0x22] sm:$0xff]
      %v2551 = vld [vmem:[#allocation2 + $0x32] sm:$0xff]
      %v2552 = vld [vmem:[#allocation2 + $0x3a] sm:$0xff]
      %v2553 = vld [vmem:[#allocation2 + $0x4a] sm:$0xff]
      %v2554 = vld [vmem:[#allocation2 + $0x52] sm:$0xff]
      %v2555 = vld [vmem:[#allocation2 + $0x62] sm:$0xff]
      %v2556 = vld [vmem:[#allocation2 + $0x6a] sm:$0xff]
      %v2557 = vld [vmem:[#allocation2 + $0x7a] sm:$0xff]
      %v2558 = vld [vmem:[#allocation2 + $0x82] sm:$0xff]
      %v2559 = vld [vmem:[#allocation2 + $0x92] sm:$0xff]
      %v2560 = vld [vmem:[#allocation2 + $0x9a] sm:$0xff]
      %v2561 = vld [vmem:[#allocation2 + $0xaa] sm:$0xff]
      %v2562 = vld [vmem:[#allocation2 + $0xb2] sm:$0xff]
      %v2563 = vld [vmem:[#allocation2 + $0xc2] sm:$0xff]
      %v2564 = vld [vmem:[#allocation2 + $0xca] sm:$0xff]
      %v2565 = vld [vmem:[#allocation2 + $0xda] sm:$0xff]
      %v2566 = vld [vmem:[#allocation2 + $0xe2] sm:$0xff]
      %v2567 = vld [vmem:[#allocation2 + $0xf2] sm:$0xff]
      %v2568 = vld [vmem:[#allocation2 + $0xfa] sm:$0xff]
      %v2569 = vld [vmem:[#allocation2 + $0x10a] sm:$0xff]
      %v2570 = vld [vmem:[#allocation2 + $0x112] sm:$0xff]
      %v2571 = vld [vmem:[#allocation2 + $0x122] sm:$0xff]
      %v2572 = vld [vmem:[#allocation2 + $0x12a] sm:$0xff]
      %v2573 = vld [vmem:[#allocation2 + $0x13a] sm:$0xff]
      %v2574 = vld [vmem:[#allocation2 + $0x142] sm:$0xff]
      %v2575 = vld [vmem:[#allocation2 + $0x152] sm:$0xff]
      %v2576 = vld [vmem:[#allocation2 + $0x15a] sm:$0xff]
      %v2577 = vld [vmem:[#allocation2 + $0x16a] sm:$0xff]
      %v2578 = vld [vmem:[#allocation2 + $0x172] sm:$0xff]
      %v2579 = vld [vmem:[%s526] sm:$0xff]
      %v2580 = vld [vmem:[%s526 + $0x8] sm:$0xff]
      %v2581 = vld [vmem:[%s526 + $0x18] sm:$0xff]
      %v2582 = vld [vmem:[%s526 + $0x20] sm:$0xff]
      %v2583 = vld [vmem:[%s526 + $0x30] sm:$0xff]
      %v2584 = vld [vmem:[%s526 + $0x38] sm:$0xff]
      %v2585 = vld [vmem:[%s526 + $0x48] sm:$0xff]
      %v2586 = vld [vmem:[%s526 + $0x50] sm:$0xff]
      %v2587 = vld [vmem:[%s526 + $0x60] sm:$0xff]
      %v2588 = vld [vmem:[%s526 + $0x68] sm:$0xff]
      %v2589 = vld [vmem:[%s526 + $0x78] sm:$0xff]
      %v2590 = vld [vmem:[%s526 + $0x80] sm:$0xff]
      %v2591 = vld [vmem:[%s526 + $0x90] sm:$0xff]
      %v2592 = vld [vmem:[%s526 + $0x98] sm:$0xff]
      %v2593 = vld [vmem:[%s526 + $0xa8] sm:$0xff]
      %v2594 = vld [vmem:[%s526 + $0xb0] sm:$0xff]
      %v2595 = vld [vmem:[%s526 + $0xc0] sm:$0xff]
      %v2596 = vld [vmem:[%s526 + $0xc8] sm:$0xff]
      %v2597 = vld [vmem:[%s526 + $0xd8] sm:$0xff]
      %v2598 = vld [vmem:[%s526 + $0xe0] sm:$0xff]
      %v2599 = vld [vmem:[%s526 + $0xf0] sm:$0xff]
      %v2600 = vld [vmem:[%s526 + $0xf8] sm:$0xff]
      %v2601 = vld [vmem:[%s526 + $0x108] sm:$0xff]
      %v2602 = vld [vmem:[%s526 + $0x110] sm:$0xff]
      %v2603 = vld [vmem:[%s526 + $0x120] sm:$0xff]
      %v2604 = vld [vmem:[%s526 + $0x128] sm:$0xff]
      %v2605 = vld [vmem:[%s526 + $0x138] sm:$0xff]
      %v2606 = vld [vmem:[%s526 + $0x140] sm:$0xff]
      %v2607 = vld [vmem:[%s526 + $0x150] sm:$0xff]
      %v2608 = vld [vmem:[%s526 + $0x158] sm:$0xff]
      %v2609 = vld [vmem:[%s526 + $0x168] sm:$0xff]
      %v2610 = vld [vmem:[%s526 + $0x170] sm:$0xff]
      %v2611 = vld [vmem:[%s526 + $0x1] sm:$0xff]
      %v2612 = vld [vmem:[%s526 + $0x9] sm:$0xff]
      %v2613 = vld [vmem:[%s526 + $0x19] sm:$0xff]
      %v2614 = vld [vmem:[%s526 + $0x21] sm:$0xff]
      %v2615 = vld [vmem:[%s526 + $0x31] sm:$0xff]
      %v2616 = vld [vmem:[%s526 + $0x39] sm:$0xff]
      %v2617 = vld [vmem:[%s526 + $0x49] sm:$0xff]
      %v2618 = vld [vmem:[%s526 + $0x51] sm:$0xff]
      %v2619 = vld [vmem:[%s526 + $0x61] sm:$0xff]
      %v2620 = vld [vmem:[%s526 + $0x69] sm:$0xff]
      %v2621 = vld [vmem:[%s526 + $0x79] sm:$0xff]
      %v2622 = vld [vmem:[%s526 + $0x81] sm:$0xff]
      %v2623 = vld [vmem:[%s526 + $0x91] sm:$0xff]
      %v2624 = vld [vmem:[%s526 + $0x99] sm:$0xff]
      %v2625 = vld [vmem:[%s526 + $0xa9] sm:$0xff]
      %v2626 = vld [vmem:[%s526 + $0xb1] sm:$0xff]
      %v2627 = vld [vmem:[%s526 + $0xc1] sm:$0xff]
      %v2628 = vld [vmem:[%s526 + $0xc9] sm:$0xff]
      %v2629 = vld [vmem:[%s526 + $0xd9] sm:$0xff]
      %v2630 = vld [vmem:[%s526 + $0xe1] sm:$0xff]
      %v2631 = vld [vmem:[%s526 + $0xf1] sm:$0xff]
      %v2632 = vld [vmem:[%s526 + $0xf9] sm:$0xff]
      %v2633 = vld [vmem:[%s526 + $0x109] sm:$0xff]
      %v2634 = vld [vmem:[%s526 + $0x111] sm:$0xff]
      %v2635 = vld [vmem:[%s526 + $0x121] sm:$0xff]
      %v2636 = vld [vmem:[%s526 + $0x129] sm:$0xff]
      %v2637 = vld [vmem:[%s526 + $0x139] sm:$0xff]
      %v2638 = vld [vmem:[%s526 + $0x141] sm:$0xff]
      %v2639 = vld [vmem:[%s526 + $0x151] sm:$0xff]
      %v2640 = vld [vmem:[%s526 + $0x159] sm:$0xff]
      %v2641 = vld [vmem:[%s526 + $0x169] sm:$0xff]
      %v2642 = vld [vmem:[%s526 + $0x171] sm:$0xff]
      %v2643 = vld [vmem:[%s526 + $0x2] sm:$0xff]
      %v2644 = vld [vmem:[%s526 + $0xa] sm:$0xff]
      %v2645 = vld [vmem:[%s526 + $0x1a] sm:$0xff]
      %v2646 = vld [vmem:[%s526 + $0x22] sm:$0xff]
      %v2647 = vld [vmem:[%s526 + $0x32] sm:$0xff]
      %v2648 = vld [vmem:[%s526 + $0x3a] sm:$0xff]
      %v2649 = vld [vmem:[%s526 + $0x4a] sm:$0xff]
      %v2650 = vld [vmem:[%s526 + $0x52] sm:$0xff]
      %v2651 = vld [vmem:[%s526 + $0x62] sm:$0xff]
      %v2652 = vld [vmem:[%s526 + $0x6a] sm:$0xff]
      %v2653 = vld [vmem:[%s526 + $0x7a] sm:$0xff]
      %v2654 = vld [vmem:[%s526 + $0x82] sm:$0xff]
      %v2655 = vld [vmem:[%s526 + $0x92] sm:$0xff]
      %v2656 = vld [vmem:[%s526 + $0x9a] sm:$0xff]
      %v2657 = vld [vmem:[%s526 + $0xaa] sm:$0xff]
      %v2658 = vld [vmem:[%s526 + $0xb2] sm:$0xff]
      %v2659 = vld [vmem:[%s526 + $0xc2] sm:$0xff]
      %v2660 = vld [vmem:[%s526 + $0xca] sm:$0xff]
      %v2661 = vld [vmem:[%s526 + $0xda] sm:$0xff]
      %v2662 = vld [vmem:[%s526 + $0xe2] sm:$0xff]
      %v2663 = vld [vmem:[%s526 + $0xf2] sm:$0xff]
      %v2664 = vld [vmem:[%s526 + $0xfa] sm:$0xff]
      %v2665 = vld [vmem:[%s526 + $0x10a] sm:$0xff]
      %v2666 = vld [vmem:[%s526 + $0x112] sm:$0xff]
      %v2667 = vld [vmem:[%s526 + $0x122] sm:$0xff]
      %v2668 = vld [vmem:[%s526 + $0x12a] sm:$0xff]
      %v2669 = vld [vmem:[%s526 + $0x13a] sm:$0xff]
      %v2670 = vld [vmem:[%s526 + $0x142] sm:$0xff]
      %v2671 = vld [vmem:[%s526 + $0x152] sm:$0xff]
      %v2672 = vld [vmem:[%s526 + $0x15a] sm:$0xff]
      %v2673 = vld [vmem:[%s526 + $0x16a] sm:$0xff]
      %v2674 = vld [vmem:[%s526 + $0x172] sm:$0xff]
      %s2675 = scalar_lea.vmem [#allocation2], 48
      %v2676 = vld [vmem:[%s2675] sm:$0xff]
      %v2677 = vld [vmem:[%s2675 + $0x8] sm:$0xff]
      %v2678 = vld [vmem:[%s2675 + $0x18] sm:$0xff]
      %v2679 = vld [vmem:[%s2675 + $0x20] sm:$0xff]
      %v2680 = vld [vmem:[%s2675 + $0x30] sm:$0xff]
      %v2681 = vld [vmem:[%s2675 + $0x38] sm:$0xff]
      %v2682 = vld [vmem:[%s2675 + $0x48] sm:$0xff]
      %v2683 = vld [vmem:[%s2675 + $0x50] sm:$0xff]
      %v2684 = vld [vmem:[%s2675 + $0x60] sm:$0xff]
      %v2685 = vld [vmem:[%s2675 + $0x68] sm:$0xff]
      %v2686 = vld [vmem:[%s2675 + $0x78] sm:$0xff]
      %v2687 = vld [vmem:[%s2675 + $0x80] sm:$0xff]
      %v2688 = vld [vmem:[%s2675 + $0x90] sm:$0xff]
      %v2689 = vld [vmem:[%s2675 + $0x98] sm:$0xff]
      %v2690 = vld [vmem:[%s2675 + $0xa8] sm:$0xff]
      %v2691 = vld [vmem:[%s2675 + $0xb0] sm:$0xff]
      %v2692 = vld [vmem:[%s2675 + $0xc0] sm:$0xff]
      %v2693 = vld [vmem:[%s2675 + $0xc8] sm:$0xff]
      %v2694 = vld [vmem:[%s2675 + $0xd8] sm:$0xff]
      %v2695 = vld [vmem:[%s2675 + $0xe0] sm:$0xff]
      %v2696 = vld [vmem:[%s2675 + $0xf0] sm:$0xff]
      %v2697 = vld [vmem:[%s2675 + $0xf8] sm:$0xff]
      %v2698 = vld [vmem:[%s2675 + $0x108] sm:$0xff]
      %v2699 = vld [vmem:[%s2675 + $0x110] sm:$0xff]
      %v2700 = vld [vmem:[%s2675 + $0x120] sm:$0xff]
      %v2701 = vld [vmem:[%s2675 + $0x128] sm:$0xff]
      %v2702 = vld [vmem:[%s2675 + $0x138] sm:$0xff]
      %v2703 = vld [vmem:[%s2675 + $0x140] sm:$0xff]
      %v2704 = vld [vmem:[%s2675 + $0x150] sm:$0xff]
      %v2705 = vld [vmem:[%s2675 + $0x158] sm:$0xff]
      %v2706 = vld [vmem:[%s2675 + $0x168] sm:$0xff]
      %v2707 = vld [vmem:[%s2675 + $0x170] sm:$0xff]
      %v2708 = vld [vmem:[%s2675 + $0x1] sm:$0xff]
      %v2709 = vld [vmem:[%s2675 + $0x9] sm:$0xff]
      %v2710 = vld [vmem:[%s2675 + $0x19] sm:$0xff]
      %v2711 = vld [vmem:[%s2675 + $0x21] sm:$0xff]
      %v2712 = vld [vmem:[%s2675 + $0x31] sm:$0xff]
      %v2713 = vld [vmem:[%s2675 + $0x39] sm:$0xff]
      %v2714 = vld [vmem:[%s2675 + $0x49] sm:$0xff]
      %v2715 = vld [vmem:[%s2675 + $0x51] sm:$0xff]
      %v2716 = vld [vmem:[%s2675 + $0x61] sm:$0xff]
      %v2717 = vld [vmem:[%s2675 + $0x69] sm:$0xff]
      %v2718 = vld [vmem:[%s2675 + $0x79] sm:$0xff]
      %v2719 = vld [vmem:[%s2675 + $0x81] sm:$0xff]
      %v2720 = vld [vmem:[%s2675 + $0x91] sm:$0xff]
      %v2721 = vld [vmem:[%s2675 + $0x99] sm:$0xff]
      %v2722 = vld [vmem:[%s2675 + $0xa9] sm:$0xff]
      %v2723 = vld [vmem:[%s2675 + $0xb1] sm:$0xff]
      %v2724 = vld [vmem:[%s2675 + $0xc1] sm:$0xff]
      %v2725 = vld [vmem:[%s2675 + $0xc9] sm:$0xff]
      %v2726 = vld [vmem:[%s2675 + $0xd9] sm:$0xff]
      %v2727 = vld [vmem:[%s2675 + $0xe1] sm:$0xff]
      %v2728 = vld [vmem:[%s2675 + $0xf1] sm:$0xff]
      %v2729 = vld [vmem:[%s2675 + $0xf9] sm:$0xff]
      %v2730 = vld [vmem:[%s2675 + $0x109] sm:$0xff]
      %v2731 = vld [vmem:[%s2675 + $0x111] sm:$0xff]
      %v2732 = vld [vmem:[%s2675 + $0x121] sm:$0xff]
      %v2733 = vld [vmem:[%s2675 + $0x129] sm:$0xff]
      %v2734 = vld [vmem:[%s2675 + $0x139] sm:$0xff]
      %v2735 = vld [vmem:[%s2675 + $0x141] sm:$0xff]
      %v2736 = vld [vmem:[%s2675 + $0x151] sm:$0xff]
      %v2737 = vld [vmem:[%s2675 + $0x159] sm:$0xff]
      %v2738 = vld [vmem:[%s2675 + $0x169] sm:$0xff]
      %v2739 = vld [vmem:[%s2675 + $0x171] sm:$0xff]
      %v2740 = vld [vmem:[%s2675 + $0x2] sm:$0xff]
      %v2741 = vld [vmem:[%s2675 + $0xa] sm:$0xff]
      %v2742 = vld [vmem:[%s2675 + $0x1a] sm:$0xff]
      %v2743 = vld [vmem:[%s2675 + $0x22] sm:$0xff]
      %v2744 = vld [vmem:[%s2675 + $0x32] sm:$0xff]
      %v2745 = vld [vmem:[%s2675 + $0x3a] sm:$0xff]
      %v2746 = vld [vmem:[%s2675 + $0x4a] sm:$0xff]
      %v2747 = vld [vmem:[%s2675 + $0x52] sm:$0xff]
      %v2748 = vld [vmem:[%s2675 + $0x62] sm:$0xff]
      %v2749 = vld [vmem:[%s2675 + $0x6a] sm:$0xff]
      %v2750 = vld [vmem:[%s2675 + $0x7a] sm:$0xff]
      %v2751 = vld [vmem:[%s2675 + $0x82] sm:$0xff]
      %v2752 = vld [vmem:[%s2675 + $0x92] sm:$0xff]
      %v2753 = vld [vmem:[%s2675 + $0x9a] sm:$0xff]
      %v2754 = vld [vmem:[%s2675 + $0xaa] sm:$0xff]
      %v2755 = vld [vmem:[%s2675 + $0xb2] sm:$0xff]
      %v2756 = vld [vmem:[%s2675 + $0xc2] sm:$0xff]
      %v2757 = vld [vmem:[%s2675 + $0xca] sm:$0xff]
      %v2758 = vld [vmem:[%s2675 + $0xda] sm:$0xff]
      %v2759 = vld [vmem:[%s2675 + $0xe2] sm:$0xff]
      %v2760 = vld [vmem:[%s2675 + $0xf2] sm:$0xff]
      %v2761 = vld [vmem:[%s2675 + $0xfa] sm:$0xff]
      %v2762 = vld [vmem:[%s2675 + $0x10a] sm:$0xff]
      %v2763 = vld [vmem:[%s2675 + $0x112] sm:$0xff]
      %v2764 = vld [vmem:[%s2675 + $0x122] sm:$0xff]
      %v2765 = vld [vmem:[%s2675 + $0x12a] sm:$0xff]
      %v2766 = vld [vmem:[%s2675 + $0x13a] sm:$0xff]
      %v2767 = vld [vmem:[%s2675 + $0x142] sm:$0xff]
      %v2768 = vld [vmem:[%s2675 + $0x152] sm:$0xff]
      %v2769 = vld [vmem:[%s2675 + $0x15a] sm:$0xff]
      %v2770 = vld [vmem:[%s2675 + $0x16a] sm:$0xff]
      %v2771 = vld [vmem:[%s2675 + $0x172] sm:$0xff]
      %2804 = vrot.lane.b32.xlu0 %v2515, 8
      %v2805 = vpop.permute.xlu0 %2804
      %2806 = vrot.lane.b32.xlu0 %v2516, 8
      %v2807 = vpop.permute.xlu0 %2806
      %2808 = vrot.lane.b32.xlu0 %v2517, 8
      %v2809 = vpop.permute.xlu0 %2808
      %2810 = vrot.lane.b32.xlu0 %v2518, 8
      %v2811 = vpop.permute.xlu0 %2810
      %2812 = vrot.lane.b32.xlu0 %v2519, 8
      %v2813 = vpop.permute.xlu0 %2812
      %2814 = vrot.lane.b32.xlu0 %v2520, 8
      %v2815 = vpop.permute.xlu0 %2814
      %2816 = vrot.lane.b32.xlu0 %v2521, 8
      %v2817 = vpop.permute.xlu0 %2816
      %2818 = vrot.lane.b32.xlu0 %v2522, 8
      %v2819 = vpop.permute.xlu0 %2818
      %2820 = vrot.lane.b32.xlu0 %v2523, 8
      %v2821 = vpop.permute.xlu0 %2820
      %2822 = vrot.lane.b32.xlu0 %v2524, 8
      %v2823 = vpop.permute.xlu0 %2822
      %2824 = vrot.lane.b32.xlu0 %v2525, 8
      %v2825 = vpop.permute.xlu0 %2824
      %2826 = vrot.lane.b32.xlu0 %v2526, 8
      %v2827 = vpop.permute.xlu0 %2826
      %2828 = vrot.lane.b32.xlu0 %v2527, 8
      %v2829 = vpop.permute.xlu0 %2828
      %2830 = vrot.lane.b32.xlu0 %v2528, 8
      %v2831 = vpop.permute.xlu0 %2830
      %2832 = vrot.lane.b32.xlu0 %v2529, 8
      %v2833 = vpop.permute.xlu0 %2832
      %2834 = vrot.lane.b32.xlu0 %v2530, 8
      %v2835 = vpop.permute.xlu0 %2834
      %2836 = vrot.lane.b32.xlu0 %v2531, 8
      %v2837 = vpop.permute.xlu0 %2836
      %2838 = vrot.lane.b32.xlu0 %v2532, 8
      %v2839 = vpop.permute.xlu0 %2838
      %2840 = vrot.lane.b32.xlu0 %v2533, 8
      %v2841 = vpop.permute.xlu0 %2840
      %2842 = vrot.lane.b32.xlu0 %v2534, 8
      %v2843 = vpop.permute.xlu0 %2842
      %2844 = vrot.lane.b32.xlu0 %v2535, 8
      %v2845 = vpop.permute.xlu0 %2844
      %2846 = vrot.lane.b32.xlu0 %v2536, 8
      %v2847 = vpop.permute.xlu0 %2846
      %2848 = vrot.lane.b32.xlu0 %v2537, 8
      %v2849 = vpop.permute.xlu0 %2848
      %2850 = vrot.lane.b32.xlu0 %v2538, 8
      %v2851 = vpop.permute.xlu0 %2850
      %2852 = vrot.lane.b32.xlu0 %v2539, 8
      %v2853 = vpop.permute.xlu0 %2852
      %2854 = vrot.lane.b32.xlu0 %v2540, 8
      %v2855 = vpop.permute.xlu0 %2854
      %2856 = vrot.lane.b32.xlu0 %v2541, 8
      %v2857 = vpop.permute.xlu0 %2856
      %2858 = vrot.lane.b32.xlu0 %v2542, 8
      %v2859 = vpop.permute.xlu0 %2858
      %2860 = vrot.lane.b32.xlu0 %v2543, 8
      %v2861 = vpop.permute.xlu0 %2860
      %2862 = vrot.lane.b32.xlu0 %v2544, 8
      %v2863 = vpop.permute.xlu0 %2862
      %2864 = vrot.lane.b32.xlu0 %v2545, 8
      %v2865 = vpop.permute.xlu0 %2864
      %2866 = vrot.lane.b32.xlu0 %v2546, 8
      %v2867 = vpop.permute.xlu0 %2866
      %2932 = vrot.lane.b32.xlu0 %v2547, 16
      %v2933 = vpop.permute.xlu0 %2932
      %2934 = vrot.lane.b32.xlu0 %v2548, 16
      %v2935 = vpop.permute.xlu0 %2934
      %2936 = vrot.lane.b32.xlu0 %v2549, 16
      %v2937 = vpop.permute.xlu0 %2936
      %2938 = vrot.lane.b32.xlu0 %v2550, 16
      %v2939 = vpop.permute.xlu0 %2938
      %2940 = vrot.lane.b32.xlu0 %v2551, 16
      %v2941 = vpop.permute.xlu0 %2940
      %2942 = vrot.lane.b32.xlu0 %v2552, 16
      %v2943 = vpop.permute.xlu0 %2942
      %2944 = vrot.lane.b32.xlu0 %v2553, 16
      %v2945 = vpop.permute.xlu0 %2944
      %2946 = vrot.lane.b32.xlu0 %v2554, 16
      %v2947 = vpop.permute.xlu0 %2946
      %2948 = vrot.lane.b32.xlu0 %v2555, 16
      %v2949 = vpop.permute.xlu0 %2948
      %2950 = vrot.lane.b32.xlu0 %v2556, 16
      %v2951 = vpop.permute.xlu0 %2950
      %2952 = vrot.lane.b32.xlu0 %v2557, 16
      %v2953 = vpop.permute.xlu0 %2952
      %2954 = vrot.lane.b32.xlu0 %v2558, 16
      %v2955 = vpop.permute.xlu0 %2954
      %2956 = vrot.lane.b32.xlu0 %v2559, 16
      %v2957 = vpop.permute.xlu0 %2956
      %2958 = vrot.lane.b32.xlu0 %v2560, 16
      %v2959 = vpop.permute.xlu0 %2958
      %2960 = vrot.lane.b32.xlu0 %v2561, 16
      %v2961 = vpop.permute.xlu0 %2960
      %2962 = vrot.lane.b32.xlu0 %v2562, 16
      %v2963 = vpop.permute.xlu0 %2962
      %2964 = vrot.lane.b32.xlu0 %v2563, 16
      %v2965 = vpop.permute.xlu0 %2964
      %2966 = vrot.lane.b32.xlu0 %v2564, 16
      %v2967 = vpop.permute.xlu0 %2966
      %2968 = vrot.lane.b32.xlu0 %v2565, 16
      %v2969 = vpop.permute.xlu0 %2968
      %2970 = vrot.lane.b32.xlu0 %v2566, 16
      %v2971 = vpop.permute.xlu0 %2970
      %2972 = vrot.lane.b32.xlu0 %v2567, 16
      %v2973 = vpop.permute.xlu0 %2972
      %2974 = vrot.lane.b32.xlu0 %v2568, 16
      %v2975 = vpop.permute.xlu0 %2974
      %2976 = vrot.lane.b32.xlu0 %v2569, 16
      %v2977 = vpop.permute.xlu0 %2976
      %2978 = vrot.lane.b32.xlu0 %v2570, 16
      %v2979 = vpop.permute.xlu0 %2978
      %2980 = vrot.lane.b32.xlu0 %v2571, 16
      %v2981 = vpop.permute.xlu0 %2980
      %2982 = vrot.lane.b32.xlu0 %v2572, 16
      %v2983 = vpop.permute.xlu0 %2982
      %2984 = vrot.lane.b32.xlu0 %v2573, 16
      %v2985 = vpop.permute.xlu0 %2984
      %2986 = vrot.lane.b32.xlu0 %v2574, 16
      %v2987 = vpop.permute.xlu0 %2986
      %2988 = vrot.lane.b32.xlu0 %v2575, 16
      %v2989 = vpop.permute.xlu0 %2988
      %2990 = vrot.lane.b32.xlu0 %v2576, 16
      %v2991 = vpop.permute.xlu0 %2990
      %2992 = vrot.lane.b32.xlu0 %v2577, 16
      %v2993 = vpop.permute.xlu0 %2992
      %2994 = vrot.lane.b32.xlu0 %v2578, 16
      %v2995 = vpop.permute.xlu0 %2994
      %3060 = vrot.lane.b32.xlu0 %v2579, 24
      %v3061 = vpop.permute.xlu0 %3060
      %3062 = vrot.lane.b32.xlu0 %v2580, 24
      %v3063 = vpop.permute.xlu0 %3062
      %3064 = vrot.lane.b32.xlu0 %v2581, 24
      %v3065 = vpop.permute.xlu0 %3064
      %3066 = vrot.lane.b32.xlu0 %v2582, 24
      %v3067 = vpop.permute.xlu0 %3066
      %3068 = vrot.lane.b32.xlu0 %v2583, 24
      %v3069 = vpop.permute.xlu0 %3068
      %3070 = vrot.lane.b32.xlu0 %v2584, 24
      %v3071 = vpop.permute.xlu0 %3070
      %3072 = vrot.lane.b32.xlu0 %v2585, 24
      %v3073 = vpop.permute.xlu0 %3072
      %3074 = vrot.lane.b32.xlu0 %v2586, 24
      %v3075 = vpop.permute.xlu0 %3074
      %3076 = vrot.lane.b32.xlu0 %v2587, 24
      %v3077 = vpop.permute.xlu0 %3076
      %3078 = vrot.lane.b32.xlu0 %v2588, 24
      %v3079 = vpop.permute.xlu0 %3078
      %3080 = vrot.lane.b32.xlu0 %v2589, 24
      %v3081 = vpop.permute.xlu0 %3080
      %3082 = vrot.lane.b32.xlu0 %v2590, 24
      %v3083 = vpop.permute.xlu0 %3082
      %3084 = vrot.lane.b32.xlu0 %v2591, 24
      %v3085 = vpop.permute.xlu0 %3084
      %3086 = vrot.lane.b32.xlu0 %v2592, 24
      %v3087 = vpop.permute.xlu0 %3086
      %3088 = vrot.lane.b32.xlu0 %v2593, 24
      %v3089 = vpop.permute.xlu0 %3088
      %3090 = vrot.lane.b32.xlu0 %v2594, 24
      %v3091 = vpop.permute.xlu0 %3090
      %3092 = vrot.lane.b32.xlu0 %v2595, 24
      %v3093 = vpop.permute.xlu0 %3092
      %3094 = vrot.lane.b32.xlu0 %v2596, 24
      %v3095 = vpop.permute.xlu0 %3094
      %3096 = vrot.lane.b32.xlu0 %v2597, 24
      %v3097 = vpop.permute.xlu0 %3096
      %3098 = vrot.lane.b32.xlu0 %v2598, 24
      %v3099 = vpop.permute.xlu0 %3098
      %3100 = vrot.lane.b32.xlu0 %v2599, 24
      %v3101 = vpop.permute.xlu0 %3100
      %3102 = vrot.lane.b32.xlu0 %v2600, 24
      %v3103 = vpop.permute.xlu0 %3102
      %3104 = vrot.lane.b32.xlu0 %v2601, 24
      %v3105 = vpop.permute.xlu0 %3104
      %3106 = vrot.lane.b32.xlu0 %v2602, 24
      %v3107 = vpop.permute.xlu0 %3106
      %3108 = vrot.lane.b32.xlu0 %v2603, 24
      %v3109 = vpop.permute.xlu0 %3108
      %3110 = vrot.lane.b32.xlu0 %v2604, 24
      %v3111 = vpop.permute.xlu0 %3110
      %3112 = vrot.lane.b32.xlu0 %v2605, 24
      %v3113 = vpop.permute.xlu0 %3112
      %3114 = vrot.lane.b32.xlu0 %v2606, 24
      %v3115 = vpop.permute.xlu0 %3114
      %3116 = vrot.lane.b32.xlu0 %v2607, 24
      %v3117 = vpop.permute.xlu0 %3116
      %3118 = vrot.lane.b32.xlu0 %v2608, 24
      %v3119 = vpop.permute.xlu0 %3118
      %3120 = vrot.lane.b32.xlu0 %v2609, 24
      %v3121 = vpop.permute.xlu0 %3120
      %3122 = vrot.lane.b32.xlu0 %v2610, 24
      %v3123 = vpop.permute.xlu0 %3122
      %3188 = vrot.lane.b32.xlu0 %v2611, 32
      %v3189 = vpop.permute.xlu0 %3188
      %3190 = vrot.lane.b32.xlu0 %v2612, 32
      %v3191 = vpop.permute.xlu0 %3190
      %3192 = vrot.lane.b32.xlu0 %v2613, 32
      %v3193 = vpop.permute.xlu0 %3192
      %3194 = vrot.lane.b32.xlu0 %v2614, 32
      %v3195 = vpop.permute.xlu0 %3194
      %3196 = vrot.lane.b32.xlu0 %v2615, 32
      %v3197 = vpop.permute.xlu0 %3196
      %3198 = vrot.lane.b32.xlu0 %v2616, 32
      %v3199 = vpop.permute.xlu0 %3198
      %3200 = vrot.lane.b32.xlu0 %v2617, 32
      %v3201 = vpop.permute.xlu0 %3200
      %3202 = vrot.lane.b32.xlu0 %v2618, 32
      %v3203 = vpop.permute.xlu0 %3202
      %3204 = vrot.lane.b32.xlu0 %v2619, 32
      %v3205 = vpop.permute.xlu0 %3204
      %3206 = vrot.lane.b32.xlu0 %v2620, 32
      %v3207 = vpop.permute.xlu0 %3206
      %3208 = vrot.lane.b32.xlu0 %v2621, 32
      %v3209 = vpop.permute.xlu0 %3208
      %3210 = vrot.lane.b32.xlu0 %v2622, 32
      %v3211 = vpop.permute.xlu0 %3210
      %3212 = vrot.lane.b32.xlu0 %v2623, 32
      %v3213 = vpop.permute.xlu0 %3212
      %3214 = vrot.lane.b32.xlu0 %v2624, 32
      %v3215 = vpop.permute.xlu0 %3214
      %3216 = vrot.lane.b32.xlu0 %v2625, 32
      %v3217 = vpop.permute.xlu0 %3216
      %3218 = vrot.lane.b32.xlu0 %v2626, 32
      %v3219 = vpop.permute.xlu0 %3218
      %3220 = vrot.lane.b32.xlu0 %v2627, 32
      %v3221 = vpop.permute.xlu0 %3220
      %3222 = vrot.lane.b32.xlu0 %v2628, 32
      %v3223 = vpop.permute.xlu0 %3222
      %3224 = vrot.lane.b32.xlu0 %v2629, 32
      %v3225 = vpop.permute.xlu0 %3224
      %3226 = vrot.lane.b32.xlu0 %v2630, 32
      %v3227 = vpop.permute.xlu0 %3226
      %3228 = vrot.lane.b32.xlu0 %v2631, 32
      %v3229 = vpop.permute.xlu0 %3228
      %3230 = vrot.lane.b32.xlu0 %v2632, 32
      %v3231 = vpop.permute.xlu0 %3230
      %3232 = vrot.lane.b32.xlu0 %v2633, 32
      %v3233 = vpop.permute.xlu0 %3232
      %3234 = vrot.lane.b32.xlu0 %v2634, 32
      %v3235 = vpop.permute.xlu0 %3234
      %3236 = vrot.lane.b32.xlu0 %v2635, 32
      %v3237 = vpop.permute.xlu0 %3236
      %3238 = vrot.lane.b32.xlu0 %v2636, 32
      %v3239 = vpop.permute.xlu0 %3238
      %3240 = vrot.lane.b32.xlu0 %v2637, 32
      %v3241 = vpop.permute.xlu0 %3240
      %3242 = vrot.lane.b32.xlu0 %v2638, 32
      %v3243 = vpop.permute.xlu0 %3242
      %3244 = vrot.lane.b32.xlu0 %v2639, 32
      %v3245 = vpop.permute.xlu0 %3244
      %3246 = vrot.lane.b32.xlu0 %v2640, 32
      %v3247 = vpop.permute.xlu0 %3246
      %3248 = vrot.lane.b32.xlu0 %v2641, 32
      %v3249 = vpop.permute.xlu0 %3248
      %3250 = vrot.lane.b32.xlu0 %v2642, 32
      %v3251 = vpop.permute.xlu0 %3250
      %3316 = vrot.lane.b32.xlu0 %v2643, 40
      %v3317 = vpop.permute.xlu0 %3316
      %3318 = vrot.lane.b32.xlu0 %v2644, 40
      %v3319 = vpop.permute.xlu0 %3318
      %3320 = vrot.lane.b32.xlu0 %v2645, 40
      %v3321 = vpop.permute.xlu0 %3320
      %3322 = vrot.lane.b32.xlu0 %v2646, 40
      %v3323 = vpop.permute.xlu0 %3322
      %3324 = vrot.lane.b32.xlu0 %v2647, 40
      %v3325 = vpop.permute.xlu0 %3324
      %3326 = vrot.lane.b32.xlu0 %v2648, 40
      %v3327 = vpop.permute.xlu0 %3326
      %3328 = vrot.lane.b32.xlu0 %v2649, 40
      %v3329 = vpop.permute.xlu0 %3328
      %3330 = vrot.lane.b32.xlu0 %v2650, 40
      %v3331 = vpop.permute.xlu0 %3330
      %3332 = vrot.lane.b32.xlu0 %v2651, 40
      %v3333 = vpop.permute.xlu0 %3332
      %3334 = vrot.lane.b32.xlu0 %v2652, 40
      %v3335 = vpop.permute.xlu0 %3334
      %3336 = vrot.lane.b32.xlu0 %v2653, 40
      %v3337 = vpop.permute.xlu0 %3336
      %3338 = vrot.lane.b32.xlu0 %v2654, 40
      %v3339 = vpop.permute.xlu0 %3338
      %3340 = vrot.lane.b32.xlu0 %v2655, 40
      %v3341 = vpop.permute.xlu0 %3340
      %3342 = vrot.lane.b32.xlu0 %v2656, 40
      %v3343 = vpop.permute.xlu0 %3342
      %3344 = vrot.lane.b32.xlu0 %v2657, 40
      %v3345 = vpop.permute.xlu0 %3344
      %3346 = vrot.lane.b32.xlu0 %v2658, 40
      %v3347 = vpop.permute.xlu0 %3346
      %3348 = vrot.lane.b32.xlu0 %v2659, 40
      %v3349 = vpop.permute.xlu0 %3348
      %3350 = vrot.lane.b32.xlu0 %v2660, 40
      %v3351 = vpop.permute.xlu0 %3350
      %3352 = vrot.lane.b32.xlu0 %v2661, 40
      %v3353 = vpop.permute.xlu0 %3352
      %3354 = vrot.lane.b32.xlu0 %v2662, 40
      %v3355 = vpop.permute.xlu0 %3354
      %3356 = vrot.lane.b32.xlu0 %v2663, 40
      %v3357 = vpop.permute.xlu0 %3356
      %3358 = vrot.lane.b32.xlu0 %v2664, 40
      %v3359 = vpop.permute.xlu0 %3358
      %3360 = vrot.lane.b32.xlu0 %v2665, 40
      %v3361 = vpop.permute.xlu0 %3360
      %3362 = vrot.lane.b32.xlu0 %v2666, 40
      %v3363 = vpop.permute.xlu0 %3362
      %3364 = vrot.lane.b32.xlu0 %v2667, 40
      %v3365 = vpop.permute.xlu0 %3364
      %3366 = vrot.lane.b32.xlu0 %v2668, 40
      %v3367 = vpop.permute.xlu0 %3366
      %3368 = vrot.lane.b32.xlu0 %v2669, 40
      %v3369 = vpop.permute.xlu0 %3368
      %3370 = vrot.lane.b32.xlu0 %v2670, 40
      %v3371 = vpop.permute.xlu0 %3370
      %3372 = vrot.lane.b32.xlu0 %v2671, 40
      %v3373 = vpop.permute.xlu0 %3372
      %3374 = vrot.lane.b32.xlu0 %v2672, 40
      %v3375 = vpop.permute.xlu0 %3374
      %3376 = vrot.lane.b32.xlu0 %v2673, 40
      %v3377 = vpop.permute.xlu0 %3376
      %3378 = vrot.lane.b32.xlu0 %v2674, 40
      %v3379 = vpop.permute.xlu0 %3378
      %3444 = vrot.lane.b32.xlu0 %v2676, 48
      %v3445 = vpop.permute.xlu0 %3444
      %3446 = vrot.lane.b32.xlu0 %v2677, 48
      %v3447 = vpop.permute.xlu0 %3446
      %3448 = vrot.lane.b32.xlu0 %v2678, 48
      %v3449 = vpop.permute.xlu0 %3448
      %3450 = vrot.lane.b32.xlu0 %v2679, 48
      %v3451 = vpop.permute.xlu0 %3450
      %3452 = vrot.lane.b32.xlu0 %v2680, 48
      %v3453 = vpop.permute.xlu0 %3452
      %3454 = vrot.lane.b32.xlu0 %v2681, 48
      %v3455 = vpop.permute.xlu0 %3454
      %3456 = vrot.lane.b32.xlu0 %v2682, 48
      %v3457 = vpop.permute.xlu0 %3456
      %3458 = vrot.lane.b32.xlu0 %v2683, 48
      %v3459 = vpop.permute.xlu0 %3458
      %3460 = vrot.lane.b32.xlu0 %v2684, 48
      %v3461 = vpop.permute.xlu0 %3460
      %3462 = vrot.lane.b32.xlu0 %v2685, 48
      %v3463 = vpop.permute.xlu0 %3462
      %3464 = vrot.lane.b32.xlu0 %v2686, 48
      %v3465 = vpop.permute.xlu0 %3464
      %3466 = vrot.lane.b32.xlu0 %v2687, 48
      %v3467 = vpop.permute.xlu0 %3466
      %3468 = vrot.lane.b32.xlu0 %v2688, 48
      %v3469 = vpop.permute.xlu0 %3468
      %3470 = vrot.lane.b32.xlu0 %v2689, 48
      %v3471 = vpop.permute.xlu0 %3470
      %3472 = vrot.lane.b32.xlu0 %v2690, 48
      %v3473 = vpop.permute.xlu0 %3472
      %3474 = vrot.lane.b32.xlu0 %v2691, 48
      %v3475 = vpop.permute.xlu0 %3474
      %3476 = vrot.lane.b32.xlu0 %v2692, 48
      %v3477 = vpop.permute.xlu0 %3476
      %3478 = vrot.lane.b32.xlu0 %v2693, 48
      %v3479 = vpop.permute.xlu0 %3478
      %3480 = vrot.lane.b32.xlu0 %v2694, 48
      %v3481 = vpop.permute.xlu0 %3480
      %3482 = vrot.lane.b32.xlu0 %v2695, 48
      %v3483 = vpop.permute.xlu0 %3482
      %3484 = vrot.lane.b32.xlu0 %v2696, 48
      %v3485 = vpop.permute.xlu0 %3484
      %3486 = vrot.lane.b32.xlu0 %v2697, 48
      %v3487 = vpop.permute.xlu0 %3486
      %3488 = vrot.lane.b32.xlu0 %v2698, 48
      %v3489 = vpop.permute.xlu0 %3488
      %3490 = vrot.lane.b32.xlu0 %v2699, 48
      %v3491 = vpop.permute.xlu0 %3490
      %3492 = vrot.lane.b32.xlu0 %v2700, 48
      %v3493 = vpop.permute.xlu0 %3492
      %3494 = vrot.lane.b32.xlu0 %v2701, 48
      %v3495 = vpop.permute.xlu0 %3494
      %3496 = vrot.lane.b32.xlu0 %v2702, 48
      %v3497 = vpop.permute.xlu0 %3496
      %3498 = vrot.lane.b32.xlu0 %v2703, 48
      %v3499 = vpop.permute.xlu0 %3498
      %3500 = vrot.lane.b32.xlu0 %v2704, 48
      %v3501 = vpop.permute.xlu0 %3500
      %3502 = vrot.lane.b32.xlu0 %v2705, 48
      %v3503 = vpop.permute.xlu0 %3502
      %3504 = vrot.lane.b32.xlu0 %v2706, 48
      %v3505 = vpop.permute.xlu0 %3504
      %3506 = vrot.lane.b32.xlu0 %v2707, 48
      %v3507 = vpop.permute.xlu0 %3506
      %3572 = vrot.lane.b32.xlu0 %v2708, 56
      %v3573 = vpop.permute.xlu0 %3572
      %3574 = vrot.lane.b32.xlu0 %v2709, 56
      %v3575 = vpop.permute.xlu0 %3574
      %3576 = vrot.lane.b32.xlu0 %v2710, 56
      %v3577 = vpop.permute.xlu0 %3576
      %3578 = vrot.lane.b32.xlu0 %v2711, 56
      %v3579 = vpop.permute.xlu0 %3578
      %3580 = vrot.lane.b32.xlu0 %v2712, 56
      %v3581 = vpop.permute.xlu0 %3580
      %3582 = vrot.lane.b32.xlu0 %v2713, 56
      %v3583 = vpop.permute.xlu0 %3582
      %3584 = vrot.lane.b32.xlu0 %v2714, 56
      %v3585 = vpop.permute.xlu0 %3584
      %3586 = vrot.lane.b32.xlu0 %v2715, 56
      %v3587 = vpop.permute.xlu0 %3586
      %3588 = vrot.lane.b32.xlu0 %v2716, 56
      %v3589 = vpop.permute.xlu0 %3588
      %3590 = vrot.lane.b32.xlu0 %v2717, 56
      %v3591 = vpop.permute.xlu0 %3590
      %3592 = vrot.lane.b32.xlu0 %v2718, 56
      %v3593 = vpop.permute.xlu0 %3592
      %3594 = vrot.lane.b32.xlu0 %v2719, 56
      %v3595 = vpop.permute.xlu0 %3594
      %3596 = vrot.lane.b32.xlu0 %v2720, 56
      %v3597 = vpop.permute.xlu0 %3596
      %3598 = vrot.lane.b32.xlu0 %v2721, 56
      %v3599 = vpop.permute.xlu0 %3598
      %3600 = vrot.lane.b32.xlu0 %v2722, 56
      %v3601 = vpop.permute.xlu0 %3600
      %3602 = vrot.lane.b32.xlu0 %v2723, 56
      %v3603 = vpop.permute.xlu0 %3602
      %3604 = vrot.lane.b32.xlu0 %v2724, 56
      %v3605 = vpop.permute.xlu0 %3604
      %3606 = vrot.lane.b32.xlu0 %v2725, 56
      %v3607 = vpop.permute.xlu0 %3606
      %3608 = vrot.lane.b32.xlu0 %v2726, 56
      %v3609 = vpop.permute.xlu0 %3608
      %3610 = vrot.lane.b32.xlu0 %v2727, 56
      %v3611 = vpop.permute.xlu0 %3610
      %3612 = vrot.lane.b32.xlu0 %v2728, 56
      %v3613 = vpop.permute.xlu0 %3612
      %3614 = vrot.lane.b32.xlu0 %v2729, 56
      %v3615 = vpop.permute.xlu0 %3614
      %3616 = vrot.lane.b32.xlu0 %v2730, 56
      %v3617 = vpop.permute.xlu0 %3616
      %3618 = vrot.lane.b32.xlu0 %v2731, 56
      %v3619 = vpop.permute.xlu0 %3618
      %3620 = vrot.lane.b32.xlu0 %v2732, 56
      %v3621 = vpop.permute.xlu0 %3620
      %3622 = vrot.lane.b32.xlu0 %v2733, 56
      %v3623 = vpop.permute.xlu0 %3622
      %3624 = vrot.lane.b32.xlu0 %v2734, 56
      %v3625 = vpop.permute.xlu0 %3624
      %3626 = vrot.lane.b32.xlu0 %v2735, 56
      %v3627 = vpop.permute.xlu0 %3626
      %3628 = vrot.lane.b32.xlu0 %v2736, 56
      %v3629 = vpop.permute.xlu0 %3628
      %3630 = vrot.lane.b32.xlu0 %v2737, 56
      %v3631 = vpop.permute.xlu0 %3630
      %3632 = vrot.lane.b32.xlu0 %v2738, 56
      %v3633 = vpop.permute.xlu0 %3632
      %3634 = vrot.lane.b32.xlu0 %v2739, 56
      %v3635 = vpop.permute.xlu0 %3634
      %3700 = vrot.lane.b32.xlu0 %v2740, 64
      %v3701 = vpop.permute.xlu0 %3700
      %3702 = vrot.lane.b32.xlu0 %v2741, 64
      %v3703 = vpop.permute.xlu0 %3702
      %3704 = vrot.lane.b32.xlu0 %v2742, 64
      %v3705 = vpop.permute.xlu0 %3704
      %3706 = vrot.lane.b32.xlu0 %v2743, 64
      %v3707 = vpop.permute.xlu0 %3706
      %3708 = vrot.lane.b32.xlu0 %v2744, 64
      %v3709 = vpop.permute.xlu0 %3708
      %3710 = vrot.lane.b32.xlu0 %v2745, 64
      %v3711 = vpop.permute.xlu0 %3710
      %3712 = vrot.lane.b32.xlu0 %v2746, 64
      %v3713 = vpop.permute.xlu0 %3712
      %3714 = vrot.lane.b32.xlu0 %v2747, 64
      %v3715 = vpop.permute.xlu0 %3714
      %3716 = vrot.lane.b32.xlu0 %v2748, 64
      %v3717 = vpop.permute.xlu0 %3716
      %3718 = vrot.lane.b32.xlu0 %v2749, 64
      %v3719 = vpop.permute.xlu0 %3718
      %3720 = vrot.lane.b32.xlu0 %v2750, 64
      %v3721 = vpop.permute.xlu0 %3720
      %3722 = vrot.lane.b32.xlu0 %v2751, 64
      %v3723 = vpop.permute.xlu0 %3722
      %3724 = vrot.lane.b32.xlu0 %v2752, 64
      %v3725 = vpop.permute.xlu0 %3724
      %3726 = vrot.lane.b32.xlu0 %v2753, 64
      %v3727 = vpop.permute.xlu0 %3726
      %3728 = vrot.lane.b32.xlu0 %v2754, 64
      %v3729 = vpop.permute.xlu0 %3728
      %3730 = vrot.lane.b32.xlu0 %v2755, 64
      %v3731 = vpop.permute.xlu0 %3730
      %3732 = vrot.lane.b32.xlu0 %v2756, 64
      %v3733 = vpop.permute.xlu0 %3732
      %3734 = vrot.lane.b32.xlu0 %v2757, 64
      %v3735 = vpop.permute.xlu0 %3734
      %3736 = vrot.lane.b32.xlu0 %v2758, 64
      %v3737 = vpop.permute.xlu0 %3736
      %3738 = vrot.lane.b32.xlu0 %v2759, 64
      %v3739 = vpop.permute.xlu0 %3738
      %3740 = vrot.lane.b32.xlu0 %v2760, 64
      %v3741 = vpop.permute.xlu0 %3740
      %3742 = vrot.lane.b32.xlu0 %v2761, 64
      %v3743 = vpop.permute.xlu0 %3742
      %3744 = vrot.lane.b32.xlu0 %v2762, 64
      %v3745 = vpop.permute.xlu0 %3744
      %3746 = vrot.lane.b32.xlu0 %v2763, 64
      %v3747 = vpop.permute.xlu0 %3746
      %3748 = vrot.lane.b32.xlu0 %v2764, 64
      %v3749 = vpop.permute.xlu0 %3748
      %3750 = vrot.lane.b32.xlu0 %v2765, 64
      %v3751 = vpop.permute.xlu0 %3750
      %3752 = vrot.lane.b32.xlu0 %v2766, 64
      %v3753 = vpop.permute.xlu0 %3752
      %3754 = vrot.lane.b32.xlu0 %v2767, 64
      %v3755 = vpop.permute.xlu0 %3754
      %3756 = vrot.lane.b32.xlu0 %v2768, 64
      %v3757 = vpop.permute.xlu0 %3756
      %3758 = vrot.lane.b32.xlu0 %v2769, 64
      %v3759 = vpop.permute.xlu0 %3758
      %3760 = vrot.lane.b32.xlu0 %v2770, 64
      %v3761 = vpop.permute.xlu0 %3760
      %3762 = vrot.lane.b32.xlu0 %v2771, 64
      %v3763 = vpop.permute.xlu0 %3762
      %v3796 = vsel %vm310, %v2483, %v2805
      %v3797 = vsel %vm310, %v2484, %v2807
      %v3798 = vsel %vm310, %v2485, %v2809
      %v3799 = vsel %vm310, %v2486, %v2811
      %v3800 = vsel %vm310, %v2487, %v2813
      %v3801 = vsel %vm310, %v2488, %v2815
      %v3802 = vsel %vm310, %v2489, %v2817
      %v3803 = vsel %vm310, %v2490, %v2819
      %v3804 = vsel %vm310, %v2491, %v2821
      %v3805 = vsel %vm310, %v2492, %v2823
      %v3806 = vsel %vm310, %v2493, %v2825
      %v3807 = vsel %vm310, %v2494, %v2827
      %v3808 = vsel %vm310, %v2495, %v2829
      %v3809 = vsel %vm310, %v2496, %v2831
      %v3810 = vsel %vm310, %v2497, %v2833
      %v3811 = vsel %vm310, %v2498, %v2835
      %v3812 = vsel %vm310, %v2499, %v2837
      %v3813 = vsel %vm310, %v2500, %v2839
      %v3814 = vsel %vm310, %v2501, %v2841
      %v3815 = vsel %vm310, %v2502, %v2843
      %v3816 = vsel %vm310, %v2503, %v2845
      %v3817 = vsel %vm310, %v2504, %v2847
      %v3818 = vsel %vm310, %v2505, %v2849
      %v3819 = vsel %vm310, %v2506, %v2851
      %v3820 = vsel %vm310, %v2507, %v2853
      %v3821 = vsel %vm310, %v2508, %v2855
      %v3822 = vsel %vm310, %v2509, %v2857
      %v3823 = vsel %vm310, %v2510, %v2859
      %v3824 = vsel %vm310, %v2511, %v2861
      %v3825 = vsel %vm310, %v2512, %v2863
      %v3826 = vsel %vm310, %v2513, %v2865
      %v3827 = vsel %vm310, %v2514, %v2867
      %vm3828 = vcmask 130048
      %v3829 = vsel %vm3828, %v3796, %v2933
      %v3830 = vsel %vm3828, %v3797, %v2935
      %v3831 = vsel %vm3828, %v3798, %v2937
      %v3832 = vsel %vm3828, %v3799, %v2939
      %v3833 = vsel %vm3828, %v3800, %v2941
      %v3834 = vsel %vm3828, %v3801, %v2943
      %v3835 = vsel %vm3828, %v3802, %v2945
      %v3836 = vsel %vm3828, %v3803, %v2947
      %v3837 = vsel %vm3828, %v3804, %v2949
      %v3838 = vsel %vm3828, %v3805, %v2951
      %v3839 = vsel %vm3828, %v3806, %v2953
      %v3840 = vsel %vm3828, %v3807, %v2955
      %v3841 = vsel %vm3828, %v3808, %v2957
      %v3842 = vsel %vm3828, %v3809, %v2959
      %v3843 = vsel %vm3828, %v3810, %v2961
      %v3844 = vsel %vm3828, %v3811, %v2963
      %v3845 = vsel %vm3828, %v3812, %v2965
      %v3846 = vsel %vm3828, %v3813, %v2967
      %v3847 = vsel %vm3828, %v3814, %v2969
      %v3848 = vsel %vm3828, %v3815, %v2971
      %v3849 = vsel %vm3828, %v3816, %v2973
      %v3850 = vsel %vm3828, %v3817, %v2975
      %v3851 = vsel %vm3828, %v3818, %v2977
      %v3852 = vsel %vm3828, %v3819, %v2979
      %v3853 = vsel %vm3828, %v3820, %v2981
      %v3854 = vsel %vm3828, %v3821, %v2983
      %v3855 = vsel %vm3828, %v3822, %v2985
      %v3856 = vsel %vm3828, %v3823, %v2987
      %v3857 = vsel %vm3828, %v3824, %v2989
      %v3858 = vsel %vm3828, %v3825, %v2991
      %v3859 = vsel %vm3828, %v3826, %v2993
      %v3860 = vsel %vm3828, %v3827, %v2995
      %vm3861 = vcmask 195584
      %v3862 = vsel %vm3861, %v3829, %v3061
      %v3863 = vsel %vm3861, %v3830, %v3063
      %v3864 = vsel %vm3861, %v3831, %v3065
      %v3865 = vsel %vm3861, %v3832, %v3067
      %v3866 = vsel %vm3861, %v3833, %v3069
      %v3867 = vsel %vm3861, %v3834, %v3071
      %v3868 = vsel %vm3861, %v3835, %v3073
      %v3869 = vsel %vm3861, %v3836, %v3075
      %v3870 = vsel %vm3861, %v3837, %v3077
      %v3871 = vsel %vm3861, %v3838, %v3079
      %v3872 = vsel %vm3861, %v3839, %v3081
      %v3873 = vsel %vm3861, %v3840, %v3083
      %v3874 = vsel %vm3861, %v3841, %v3085
      %v3875 = vsel %vm3861, %v3842, %v3087
      %v3876 = vsel %vm3861, %v3843, %v3089
      %v3877 = vsel %vm3861, %v3844, %v3091
      %v3878 = vsel %vm3861, %v3845, %v3093
      %v3879 = vsel %vm3861, %v3846, %v3095
      %v3880 = vsel %vm3861, %v3847, %v3097
      %v3881 = vsel %vm3861, %v3848, %v3099
      %v3882 = vsel %vm3861, %v3849, %v3101
      %v3883 = vsel %vm3861, %v3850, %v3103
      %v3884 = vsel %vm3861, %v3851, %v3105
      %v3885 = vsel %vm3861, %v3852, %v3107
      %v3886 = vsel %vm3861, %v3853, %v3109
      %v3887 = vsel %vm3861, %v3854, %v3111
      %v3888 = vsel %vm3861, %v3855, %v3113
      %v3889 = vsel %vm3861, %v3856, %v3115
      %v3890 = vsel %vm3861, %v3857, %v3117
      %v3891 = vsel %vm3861, %v3858, %v3119
      %v3892 = vsel %vm3861, %v3859, %v3121
      %v3893 = vsel %vm3861, %v3860, %v3123
      %vm3894 = vcmask 261120
      %v3895 = vsel %vm3894, %v3862, %v3189
      %v3896 = vsel %vm3894, %v3863, %v3191
      %v3897 = vsel %vm3894, %v3864, %v3193
      %v3898 = vsel %vm3894, %v3865, %v3195
      %v3899 = vsel %vm3894, %v3866, %v3197
      %v3900 = vsel %vm3894, %v3867, %v3199
      %v3901 = vsel %vm3894, %v3868, %v3201
      %v3902 = vsel %vm3894, %v3869, %v3203
      %v3903 = vsel %vm3894, %v3870, %v3205
      %v3904 = vsel %vm3894, %v3871, %v3207
      %v3905 = vsel %vm3894, %v3872, %v3209
      %v3906 = vsel %vm3894, %v3873, %v3211
      %v3907 = vsel %vm3894, %v3874, %v3213
      %v3908 = vsel %vm3894, %v3875, %v3215
      %v3909 = vsel %vm3894, %v3876, %v3217
      %v3910 = vsel %vm3894, %v3877, %v3219
      %v3911 = vsel %vm3894, %v3878, %v3221
      %v3912 = vsel %vm3894, %v3879, %v3223
      %v3913 = vsel %vm3894, %v3880, %v3225
      %v3914 = vsel %vm3894, %v3881, %v3227
      %v3915 = vsel %vm3894, %v3882, %v3229
      %v3916 = vsel %vm3894, %v3883, %v3231
      %v3917 = vsel %vm3894, %v3884, %v3233
      %v3918 = vsel %vm3894, %v3885, %v3235
      %v3919 = vsel %vm3894, %v3886, %v3237
      %v3920 = vsel %vm3894, %v3887, %v3239
      %v3921 = vsel %vm3894, %v3888, %v3241
      %v3922 = vsel %vm3894, %v3889, %v3243
      %v3923 = vsel %vm3894, %v3890, %v3245
      %v3924 = vsel %vm3894, %v3891, %v3247
      %v3925 = vsel %vm3894, %v3892, %v3249
      %v3926 = vsel %vm3894, %v3893, %v3251
      %vm3927 = vcmask 326656
      %v3928 = vsel %vm3927, %v3895, %v3317
      %v3929 = vsel %vm3927, %v3896, %v3319
      %v3930 = vsel %vm3927, %v3897, %v3321
      %v3931 = vsel %vm3927, %v3898, %v3323
      %v3932 = vsel %vm3927, %v3899, %v3325
      %v3933 = vsel %vm3927, %v3900, %v3327
      %v3934 = vsel %vm3927, %v3901, %v3329
      %v3935 = vsel %vm3927, %v3902, %v3331
      %v3936 = vsel %vm3927, %v3903, %v3333
      %v3937 = vsel %vm3927, %v3904, %v3335
      %v3938 = vsel %vm3927, %v3905, %v3337
      %v3939 = vsel %vm3927, %v3906, %v3339
      %v3940 = vsel %vm3927, %v3907, %v3341
      %v3941 = vsel %vm3927, %v3908, %v3343
      %v3942 = vsel %vm3927, %v3909, %v3345
      %v3943 = vsel %vm3927, %v3910, %v3347
      %v3944 = vsel %vm3927, %v3911, %v3349
      %v3945 = vsel %vm3927, %v3912, %v3351
      %v3946 = vsel %vm3927, %v3913, %v3353
      %v3947 = vsel %vm3927, %v3914, %v3355
      %v3948 = vsel %vm3927, %v3915, %v3357
      %v3949 = vsel %vm3927, %v3916, %v3359
      %v3950 = vsel %vm3927, %v3917, %v3361
      %v3951 = vsel %vm3927, %v3918, %v3363
      %v3952 = vsel %vm3927, %v3919, %v3365
      %v3953 = vsel %vm3927, %v3920, %v3367
      %v3954 = vsel %vm3927, %v3921, %v3369
      %v3955 = vsel %vm3927, %v3922, %v3371
      %v3956 = vsel %vm3927, %v3923, %v3373
      %v3957 = vsel %vm3927, %v3924, %v3375
      %v3958 = vsel %vm3927, %v3925, %v3377
      %v3959 = vsel %vm3927, %v3926, %v3379
      %vm3960 = vcmask 392192
      %v3961 = vsel %vm3960, %v3928, %v3445
      %v3962 = vsel %vm3960, %v3929, %v3447
      %v3963 = vsel %vm3960, %v3930, %v3449
      %v3964 = vsel %vm3960, %v3931, %v3451
      %v3965 = vsel %vm3960, %v3932, %v3453
      %v3966 = vsel %vm3960, %v3933, %v3455
      %v3967 = vsel %vm3960, %v3934, %v3457
      %v3968 = vsel %vm3960, %v3935, %v3459
      %v3969 = vsel %vm3960, %v3936, %v3461
      %v3970 = vsel %vm3960, %v3937, %v3463
      %v3971 = vsel %vm3960, %v3938, %v3465
      %v3972 = vsel %vm3960, %v3939, %v3467
      %v3973 = vsel %vm3960, %v3940, %v3469
      %v3974 = vsel %vm3960, %v3941, %v3471
      %v3975 = vsel %vm3960, %v3942, %v3473
      %v3976 = vsel %vm3960, %v3943, %v3475
      %v3977 = vsel %vm3960, %v3944, %v3477
      %v3978 = vsel %vm3960, %v3945, %v3479
      %v3979 = vsel %vm3960, %v3946, %v3481
      %v3980 = vsel %vm3960, %v3947, %v3483
      %v3981 = vsel %vm3960, %v3948, %v3485
      %v3982 = vsel %vm3960, %v3949, %v3487
      %v3983 = vsel %vm3960, %v3950, %v3489
      %v3984 = vsel %vm3960, %v3951, %v3491
      %v3985 = vsel %vm3960, %v3952, %v3493
      %v3986 = vsel %vm3960, %v3953, %v3495
      %v3987 = vsel %vm3960, %v3954, %v3497
      %v3988 = vsel %vm3960, %v3955, %v3499
      %v3989 = vsel %vm3960, %v3956, %v3501
      %v3990 = vsel %vm3960, %v3957, %v3503
      %v3991 = vsel %vm3960, %v3958, %v3505
      %v3992 = vsel %vm3960, %v3959, %v3507
      %vm3993 = vcmask 457728
      %v3994 = vsel %vm3993, %v3961, %v3573
      %v3995 = vsel %vm3993, %v3962, %v3575
      %v3996 = vsel %vm3993, %v3963, %v3577
      %v3997 = vsel %vm3993, %v3964, %v3579
      %v3998 = vsel %vm3993, %v3965, %v3581
      %v3999 = vsel %vm3993, %v3966, %v3583
      %v4000 = vsel %vm3993, %v3967, %v3585
      %v4001 = vsel %vm3993, %v3968, %v3587
      %v4002 = vsel %vm3993, %v3969, %v3589
      %v4003 = vsel %vm3993, %v3970, %v3591
      %v4004 = vsel %vm3993, %v3971, %v3593
      %v4005 = vsel %vm3993, %v3972, %v3595
      %v4006 = vsel %vm3993, %v3973, %v3597
      %v4007 = vsel %vm3993, %v3974, %v3599
      %v4008 = vsel %vm3993, %v3975, %v3601
      %v4009 = vsel %vm3993, %v3976, %v3603
      %v4010 = vsel %vm3993, %v3977, %v3605
      %v4011 = vsel %vm3993, %v3978, %v3607
      %v4012 = vsel %vm3993, %v3979, %v3609
      %v4013 = vsel %vm3993, %v3980, %v3611
      %v4014 = vsel %vm3993, %v3981, %v3613
      %v4015 = vsel %vm3993, %v3982, %v3615
      %v4016 = vsel %vm3993, %v3983, %v3617
      %v4017 = vsel %vm3993, %v3984, %v3619
      %v4018 = vsel %vm3993, %v3985, %v3621
      %v4019 = vsel %vm3993, %v3986, %v3623
      %v4020 = vsel %vm3993, %v3987, %v3625
      %v4021 = vsel %vm3993, %v3988, %v3627
      %v4022 = vsel %vm3993, %v3989, %v3629
      %v4023 = vsel %vm3993, %v3990, %v3631
      %v4024 = vsel %vm3993, %v3991, %v3633
      %v4025 = vsel %vm3993, %v3992, %v3635
      %vm4026 = vcmask 523264
      %v4027 = vsel %vm4026, %v3994, %v3701
      %v4028 = vsel %vm4026, %v3995, %v3703
      %v4029 = vsel %vm4026, %v3996, %v3705
      %v4030 = vsel %vm4026, %v3997, %v3707
      %v4031 = vsel %vm4026, %v3998, %v3709
      %v4032 = vsel %vm4026, %v3999, %v3711
      %v4033 = vsel %vm4026, %v4000, %v3713
      %v4034 = vsel %vm4026, %v4001, %v3715
      %v4035 = vsel %vm4026, %v4002, %v3717
      %v4036 = vsel %vm4026, %v4003, %v3719
      %v4037 = vsel %vm4026, %v4004, %v3721
      %v4038 = vsel %vm4026, %v4005, %v3723
      %v4039 = vsel %vm4026, %v4006, %v3725
      %v4040 = vsel %vm4026, %v4007, %v3727
      %v4041 = vsel %vm4026, %v4008, %v3729
      %v4042 = vsel %vm4026, %v4009, %v3731
      %v4043 = vsel %vm4026, %v4010, %v3733
      %v4044 = vsel %vm4026, %v4011, %v3735
      %v4045 = vsel %vm4026, %v4012, %v3737
      %v4046 = vsel %vm4026, %v4013, %v3739
      %v4047 = vsel %vm4026, %v4014, %v3741
      %v4048 = vsel %vm4026, %v4015, %v3743
      %v4049 = vsel %vm4026, %v4016, %v3745
      %v4050 = vsel %vm4026, %v4017, %v3747
      %v4051 = vsel %vm4026, %v4018, %v3749
      %v4052 = vsel %vm4026, %v4019, %v3751
      %v4053 = vsel %vm4026, %v4020, %v3753
      %v4054 = vsel %vm4026, %v4021, %v3755
      %v4055 = vsel %vm4026, %v4022, %v3757
      %v4056 = vsel %vm4026, %v4023, %v3759
      %v4057 = vsel %vm4026, %v4024, %v3761
      %v4058 = vsel %vm4026, %v4025, %v3763
      %v4059 = vld [vmem:[%s4] sm:$0xff]
      %v4060 = vld [vmem:[%s4 + $0x8] sm:$0xff]
      %v4061 = vld [vmem:[%s4 + $0x10] sm:$0xff]
      %v4062 = vld [vmem:[%s4 + $0x18] sm:$0xff]
      %v4063 = vld [vmem:[%s4 + $0x20] sm:$0xff]
      %v4064 = vld [vmem:[%s4 + $0x28] sm:$0xff]
      %v4065 = vld [vmem:[%s4 + $0x30] sm:$0xff]
      %v4066 = vld [vmem:[%s4 + $0x38] sm:$0xff]
      %v4067 = vld [vmem:[%s4 + $0x40] sm:$0xff]
      %v4068 = vld [vmem:[%s5] sm:$0x1]
      %v4070 = vlaneseq
      %v4071 = vshrl.u32 %v4070, 7
      %v4072 = vsub.s32 0, %v4071
      %v4073 = vrot.slane %v4068, %v4072
      %vm4075 = vcmask 588800
      %v4077 = vsel %vm4075, %v4027, 0
      %v4080 = vsel %vm4075, %v4028, 0
      %v4083 = vsel %vm4075, %v4029, 0
      %v4086 = vsel %vm4075, %v4030, 0
      %v4089 = vsel %vm4075, %v4031, 0
      %v4092 = vsel %vm4075, %v4032, 0
      %v4095 = vsel %vm4075, %v4033, 0
      %v4098 = vsel %vm4075, %v4034, 0
      %v4101 = vsel %vm4075, %v4035, 0
      %v4104 = vsel %vm4075, %v4036, 0
      %v4107 = vsel %vm4075, %v4037, 0
      %v4110 = vsel %vm4075, %v4038, 0
      %v4113 = vsel %vm4075, %v4039, 0
      %v4116 = vsel %vm4075, %v4040, 0
      %v4119 = vsel %vm4075, %v4041, 0
      %v4122 = vsel %vm4075, %v4042, 0
      %v4125 = vsel %vm4075, %v4043, 0
      %v4128 = vsel %vm4075, %v4044, 0
      %v4131 = vsel %vm4075, %v4045, 0
      %v4134 = vsel %vm4075, %v4046, 0
      %v4137 = vsel %vm4075, %v4047, 0
      %v4140 = vsel %vm4075, %v4048, 0
      %v4143 = vsel %vm4075, %v4049, 0
      %v4146 = vsel %vm4075, %v4050, 0
      %v4149 = vsel %vm4075, %v4051, 0
      %v4152 = vsel %vm4075, %v4052, 0
      %v4155 = vsel %vm4075, %v4053, 0
      %v4158 = vsel %vm4075, %v4054, 0
      %v4161 = vsel %vm4075, %v4055, 0
      %v4164 = vsel %vm4075, %v4056, 0
      %v4167 = vsel %vm4075, %v4057, 0
      %v4170 = vsel %vm4075, %v4058, 0
      %4172 = vmatprep.subr.mxu0 0.0
      %4173 = vmatpush1.msra.mxu0 %v4059
      %4174 = vmatprep.subr.mxu0 0.0
      %4175 = vmatpush1.msra.mxu0 %v4060
      %4176 = vmatprep.subr.mxu0 0.0
      %4177 = vmatpush1.msra.mxu0 %v4061
      %4178 = vmatprep.subr.mxu0 0.0
      %4179 = vmatpush1.msra.mxu0 %v4062
      %4180 = vmatprep.subr.mxu0 0.0
      %4181 = vmatpush1.msra.mxu0 %v4063
      %4182 = vmatprep.subr.mxu0 0.0
      %4183 = vmatpush1.msra.mxu0 %v4064
      %4184 = vmatprep.subr.mxu0 0.0
      %4185 = vmatpush1.msra.mxu0 %v4065
      %4186 = vmatprep.subr.mxu0 0.0
      %4187 = vmatpush1.msra.mxu0 %v4066
      %4188 = vmatprep.subr.mxu0 0.0
      %4189 = vmatpush1.msra.mxu0 %v4067
      %4190 = vmatprep.subr.mxu0 0.0
      %4191 = vmatpush1.msra.mxu0 0.0
      %4192 = vmatprep.subr.mxu0 0.0
      %4193 = vmatpush1.msra.mxu0 0.0
      %4194 = vmatprep.subr.mxu0 0.0
      %4195 = vmatpush1.msra.mxu0 0.0
      %4196 = vmatprep.subr.mxu0 0.0
      %4197 = vmatpush1.msra.mxu0 0.0
      %4198 = vmatprep.subr.mxu0 0.0
      %4199 = vmatpush1.msra.mxu0 0.0
      %4200 = vmatprep.subr.mxu0 0.0
      %4201 = vmatpush1.msra.mxu0 0.0
      %4202 = vmatprep.subr.mxu0 0.0
      %4203 = vmatpush1.msra.mxu0 0.0
      %4204 = vmatprep.subr.mxu0 0.0
      %4205 = vmatpush1.msra.mxu0 0.0
      %4206 = vmatprep.subr.mxu0 0.0
      %4207 = vmatpush1.msra.mxu0 0.0
      %4208 = vmatprep.subr.mxu0 0.0
      %4209 = vmatpush1.msra.mxu0 0.0
      %4210 = vmatprep.subr.mxu0 0.0
      %4211 = vmatpush1.msra.mxu0 0.0
      %4212 = vmatprep.subr.mxu0 0.0
      %4213 = vmatpush1.msra.mxu0 0.0
      %4214 = vmatprep.subr.mxu0 0.0
      %4215 = vmatpush1.msra.mxu0 0.0
      %4216 = vmatprep.subr.mxu0 0.0
      %4217 = vmatpush1.msra.mxu0 0.0
      %4218 = vmatprep.subr.mxu0 0.0
      %4219 = vmatpush1.msra.mxu0 0.0
      %4220 = vmatprep.subr.mxu0 0.0
      %4221 = vmatpush1.msra.mxu0 0.0
      %4222 = vmatprep.subr.mxu0 0.0
      %4223 = vmatpush1.msra.mxu0 0.0
      %4224 = vmatprep.subr.mxu0 0.0
      %4225 = vmatpush1.msra.mxu0 0.0
      %4226 = vmatprep.subr.mxu0 0.0
      %4227 = vmatpush1.msra.mxu0 0.0
      %4228 = vmatprep.subr.mxu0 0.0
      %4229 = vmatpush1.msra.mxu0 0.0
      %4230 = vmatprep.subr.mxu0 0.0
      %4231 = vmatpush1.msra.mxu0 0.0
      %4232 = vmatprep.subr.mxu0 0.0
      %4233 = vmatpush1.msra.mxu0 0.0
      %4234 = vmatprep.subr.mxu0 0.0
      %4235 = vmatpush1.msra.mxu0 0.0
      %4236 = vmatprep.mubr.f32.mxu0 0.0
      %4237 = vmatmul.mubr.f32.gmra.mrb[0].mxu0 %v4077
      %v4238 = vpop.f32.mrb[0].mxu0
      %v4239 = vadd.f32 %v4073, %v4238
      %v4240 = vpop.f32.mrb[0].mxu0
      %4241 = vmatprep.mubr.f32.mxu0 0.0
      %4242 = vmatmul.mubr.f32.gmra.mrb[0].mxu0 %v4080
      %v4243 = vpop.f32.mrb[0].mxu0
      %v4244 = vadd.f32 %v4073, %v4243
      %v4245 = vpop.f32.mrb[0].mxu0
      %4246 = vmatprep.mubr.f32.mxu0 0.0
      %4247 = vmatmul.mubr.f32.gmra.mrb[0].mxu0 %v4083
      %v4248 = vpop.f32.mrb[0].mxu0
      %v4249 = vadd.f32 %v4073, %v4248
      %v4250 = vpop.f32.mrb[0].mxu0
      %4251 = vmatprep.mubr.f32.mxu0 0.0
      %4252 = vmatmul.mubr.f32.gmra.mrb[0].mxu0 %v4086
      %v4253 = vpop.f32.mrb[0].mxu0
      %v4254 = vadd.f32 %v4073, %v4253
      %v4255 = vpop.f32.mrb[0].mxu0
      %4256 = vmatprep.mubr.f32.mxu0 0.0
      %4257 = vmatmul.mubr.f32.gmra.mrb[0].mxu0 %v4089
      %v4258 = vpop.f32.mrb[0].mxu0
      %v4259 = vadd.f32 %v4073, %v4258
      %v4260 = vpop.f32.mrb[0].mxu0
      %4261 = vmatprep.mubr.f32.mxu0 0.0
      %4262 = vmatmul.mubr.f32.gmra.mrb[0].mxu0 %v4092
      %v4263 = vpop.f32.mrb[0].mxu0
      %v4264 = vadd.f32 %v4073, %v4263
      %v4265 = vpop.f32.mrb[0].mxu0
      %4266 = vmatprep.mubr.f32.mxu0 0.0
      %4267 = vmatmul.mubr.f32.gmra.mrb[0].mxu0 %v4095
      %v4268 = vpop.f32.mrb[0].mxu0
      %v4269 = vadd.f32 %v4073, %v4268
      %v4270 = vpop.f32.mrb[0].mxu0
      %4271 = vmatprep.mubr.f32.mxu0 0.0
      %4272 = vmatmul.mubr.f32.gmra.mrb[0].mxu0 %v4098
      %v4273 = vpop.f32.mrb[0].mxu0
      %v4274 = vadd.f32 %v4073, %v4273
      %v4275 = vpop.f32.mrb[0].mxu0
      %4276 = vmatprep.mubr.f32.mxu0 0.0
      %4277 = vmatmul.mubr.f32.gmra.mrb[0].mxu0 %v4101
      %v4278 = vpop.f32.mrb[0].mxu0
      %v4279 = vadd.f32 %v4073, %v4278
      %v4280 = vpop.f32.mrb[0].mxu0
      %4281 = vmatprep.mubr.f32.mxu0 0.0
      %4282 = vmatmul.mubr.f32.gmra.mrb[0].mxu0 %v4104
      %v4283 = vpop.f32.mrb[0].mxu0
      %v4284 = vadd.f32 %v4073, %v4283
      %v4285 = vpop.f32.mrb[0].mxu0
      %4286 = vmatprep.mubr.f32.mxu0 0.0
      %4287 = vmatmul.mubr.f32.gmra.mrb[0].mxu0 %v4107
      %v4288 = vpop.f32.mrb[0].mxu0
      %v4289 = vadd.f32 %v4073, %v4288
      %v4290 = vpop.f32.mrb[0].mxu0
      %4291 = vmatprep.mubr.f32.mxu0 0.0
      %4292 = vmatmul.mubr.f32.gmra.mrb[0].mxu0 %v4110
      %v4293 = vpop.f32.mrb[0].mxu0
      %v4294 = vadd.f32 %v4073, %v4293
      %v4295 = vpop.f32.mrb[0].mxu0
      %4296 = vmatprep.mubr.f32.mxu0 0.0
      %4297 = vmatmul.mubr.f32.gmra.mrb[0].mxu0 %v4113
      %v4298 = vpop.f32.mrb[0].mxu0
      %v4299 = vadd.f32 %v4073, %v4298
      %v4300 = vpop.f32.mrb[0].mxu0
      %4301 = vmatprep.mubr.f32.mxu0 0.0
      %4302 = vmatmul.mubr.f32.gmra.mrb[0].mxu0 %v4116
      %v4303 = vpop.f32.mrb[0].mxu0
      %v4304 = vadd.f32 %v4073, %v4303
      %v4305 = vpop.f32.mrb[0].mxu0
      %4306 = vmatprep.mubr.f32.mxu0 0.0
      %4307 = vmatmul.mubr.f32.gmra.mrb[0].mxu0 %v4119
      %v4308 = vpop.f32.mrb[0].mxu0
      %v4309 = vadd.f32 %v4073, %v4308
      %v4310 = vpop.f32.mrb[0].mxu0
      %4311 = vmatprep.mubr.f32.mxu0 0.0
      %4312 = vmatmul.mubr.f32.gmra.mrb[0].mxu0 %v4122
      %v4313 = vpop.f32.mrb[0].mxu0
      %v4314 = vadd.f32 %v4073, %v4313
      %v4315 = vpop.f32.mrb[0].mxu0
      %4316 = vmatprep.mubr.f32.mxu0 0.0
      %4317 = vmatmul.mubr.f32.gmra.mrb[0].mxu0 %v4125
      %v4318 = vpop.f32.mrb[0].mxu0
      %v4319 = vadd.f32 %v4073, %v4318
      %v4320 = vpop.f32.mrb[0].mxu0
      %4321 = vmatprep.mubr.f32.mxu0 0.0
      %4322 = vmatmul.mubr.f32.gmra.mrb[0].mxu0 %v4128
      %v4323 = vpop.f32.mrb[0].mxu0
      %v4324 = vadd.f32 %v4073, %v4323
      %v4325 = vpop.f32.mrb[0].mxu0
      %4326 = vmatprep.mubr.f32.mxu0 0.0
      %4327 = vmatmul.mubr.f32.gmra.mrb[0].mxu0 %v4131
      %v4328 = vpop.f32.mrb[0].mxu0
      %v4329 = vadd.f32 %v4073, %v4328
      %v4330 = vpop.f32.mrb[0].mxu0
      %4331 = vmatprep.mubr.f32.mxu0 0.0
      %4332 = vmatmul.mubr.f32.gmra.mrb[0].mxu0 %v4134
      %v4333 = vpop.f32.mrb[0].mxu0
      %v4334 = vadd.f32 %v4073, %v4333
      %v4335 = vpop.f32.mrb[0].mxu0
      %4336 = vmatprep.mubr.f32.mxu0 0.0
      %4337 = vmatmul.mubr.f32.gmra.mrb[0].mxu0 %v4137
      %v4338 = vpop.f32.mrb[0].mxu0
      %v4339 = vadd.f32 %v4073, %v4338
      %v4340 = vpop.f32.mrb[0].mxu0
      %4341 = vmatprep.mubr.f32.mxu0 0.0
      %4342 = vmatmul.mubr.f32.gmra.mrb[0].mxu0 %v4140
      %v4343 = vpop.f32.mrb[0].mxu0
      %v4344 = vadd.f32 %v4073, %v4343
      %v4345 = vpop.f32.mrb[0].mxu0
      %4346 = vmatprep.mubr.f32.mxu0 0.0
      %4347 = vmatmul.mubr.f32.gmra.mrb[0].mxu0 %v4143
      %v4348 = vpop.f32.mrb[0].mxu0
      %v4349 = vadd.f32 %v4073, %v4348
      %v4350 = vpop.f32.mrb[0].mxu0
      %4351 = vmatprep.mubr.f32.mxu0 0.0
      %4352 = vmatmul.mubr.f32.gmra.mrb[0].mxu0 %v4146
      %v4353 = vpop.f32.mrb[0].mxu0
      %v4354 = vadd.f32 %v4073, %v4353
      %v4355 = vpop.f32.mrb[0].mxu0
      %4356 = vmatprep.mubr.f32.mxu0 0.0
      %4357 = vmatmul.mubr.f32.gmra.mrb[0].mxu0 %v4149
      %v4358 = vpop.f32.mrb[0].mxu0
      %v4359 = vadd.f32 %v4073, %v4358
      %v4360 = vpop.f32.mrb[0].mxu0
      %4361 = vmatprep.mubr.f32.mxu0 0.0
      %4362 = vmatmul.mubr.f32.gmra.mrb[0].mxu0 %v4152
      %v4363 = vpop.f32.mrb[0].mxu0
      %v4364 = vadd.f32 %v4073, %v4363
      %v4365 = vpop.f32.mrb[0].mxu0
      %4366 = vmatprep.mubr.f32.mxu0 0.0
      %4367 = vmatmul.mubr.f32.gmra.mrb[0].mxu0 %v4155
      %v4368 = vpop.f32.mrb[0].mxu0
      %v4369 = vadd.f32 %v4073, %v4368
      %v4370 = vpop.f32.mrb[0].mxu0
      %4371 = vmatprep.mubr.f32.mxu0 0.0
      %4372 = vmatmul.mubr.f32.gmra.mrb[0].mxu0 %v4158
      %v4373 = vpop.f32.mrb[0].mxu0
      %v4374 = vadd.f32 %v4073, %v4373
      %v4375 = vpop.f32.mrb[0].mxu0
      %4376 = vmatprep.mubr.f32.mxu0 0.0
      %4377 = vmatmul.mubr.f32.gmra.mrb[0].mxu0 %v4161
      %v4378 = vpop.f32.mrb[0].mxu0
      %v4379 = vadd.f32 %v4073, %v4378
      %v4380 = vpop.f32.mrb[0].mxu0
      %4381 = vmatprep.mubr.f32.mxu0 0.0
      %4382 = vmatmul.mubr.f32.gmra.mrb[0].mxu0 %v4164
      %v4383 = vpop.f32.mrb[0].mxu0
      %v4384 = vadd.f32 %v4073, %v4383
      %v4385 = vpop.f32.mrb[0].mxu0
      %4386 = vmatprep.mubr.f32.mxu0 0.0
      %4387 = vmatmul.mubr.f32.gmra.mrb[0].mxu0 %v4167
      %v4388 = vpop.f32.mrb[0].mxu0
      %v4389 = vadd.f32 %v4073, %v4388
      %v4390 = vpop.f32.mrb[0].mxu0
      %4391 = vmatprep.mubr.f32.mxu0 0.0
      %4392 = vmatmul.mubr.f32.gmra.mrb[0].mxu0 %v4170
      %v4393 = vpop.f32.mrb[0].mxu0
      %v4394 = vadd.f32 %v4073, %v4393
      %v4395 = vpop.f32.mrb[0].mxu0
      %4396 = vdwg.mxu0
      %4397 = vmatprep.subr.mxu0 0.0
      %4398 = vmatpush1.msra.mxu0 %v4239
      %4399 = vmatprep.subr.mxu0 0.0
      %4400 = vmatpush1.msra.mxu0 %v4244
      %4401 = vmatprep.subr.mxu0 0.0
      %4402 = vmatpush1.msra.mxu0 %v4249
      %4403 = vmatprep.subr.mxu0 0.0
      %4404 = vmatpush1.msra.mxu0 %v4254
      %4405 = vmatprep.subr.mxu0 0.0
      %4406 = vmatpush1.msra.mxu0 %v4259
      %4407 = vmatprep.subr.mxu0 0.0
      %4408 = vmatpush1.msra.mxu0 %v4264
      %4409 = vmatprep.subr.mxu0 0.0
      %4410 = vmatpush1.msra.mxu0 %v4269
      %4411 = vmatprep.subr.mxu0 0.0
      %4412 = vmatpush1.msra.mxu0 %v4274
      %4413 = vmatprep.subr.mxu0 0.0
      %4414 = vmatpush1.msra.mxu0 %v4279
      %4415 = vmatprep.subr.mxu0 0.0
      %4416 = vmatpush1.msra.mxu0 %v4284
      %4417 = vmatprep.subr.mxu0 0.0
      %4418 = vmatpush1.msra.mxu0 %v4289
      %4419 = vmatprep.subr.mxu0 0.0
      %4420 = vmatpush1.msra.mxu0 %v4294
      %4421 = vmatprep.subr.mxu0 0.0
      %4422 = vmatpush1.msra.mxu0 %v4299
      %4423 = vmatprep.subr.mxu0 0.0
      %4424 = vmatpush1.msra.mxu0 %v4304
      %4425 = vmatprep.subr.mxu0 0.0
      %4426 = vmatpush1.msra.mxu0 %v4309
      %4427 = vmatprep.subr.mxu0 0.0
      %4428 = vmatpush1.msra.mxu0 %v4314
      %4429 = vmatprep.subr.mxu0 0.0
      %4430 = vmatpush1.msra.mxu0 %v4319
      %4431 = vmatprep.subr.mxu0 0.0
      %4432 = vmatpush1.msra.mxu0 %v4324
      %4433 = vmatprep.subr.mxu0 0.0
      %4434 = vmatpush1.msra.mxu0 %v4329
      %4435 = vmatprep.subr.mxu0 0.0
      %4436 = vmatpush1.msra.mxu0 %v4334
      %4437 = vmatprep.subr.mxu0 0.0
      %4438 = vmatpush1.msra.mxu0 %v4339
      %4439 = vmatprep.subr.mxu0 0.0
      %4440 = vmatpush1.msra.mxu0 %v4344
      %4441 = vmatprep.subr.mxu0 0.0
      %4442 = vmatpush1.msra.mxu0 %v4349
      %4443 = vmatprep.subr.mxu0 0.0
      %4444 = vmatpush1.msra.mxu0 %v4354
      %4445 = vmatprep.subr.mxu0 0.0
      %4446 = vmatpush1.msra.mxu0 %v4359
      %4447 = vmatprep.subr.mxu0 0.0
      %4448 = vmatpush1.msra.mxu0 %v4364
      %4449 = vmatprep.subr.mxu0 0.0
      %4450 = vmatpush1.msra.mxu0 %v4369
      %4451 = vmatprep.subr.mxu0 0.0
      %4452 = vmatpush1.msra.mxu0 %v4374
      %4453 = vmatprep.subr.mxu0 0.0
      %4454 = vmatpush1.msra.mxu0 %v4379
      %4455 = vmatprep.subr.mxu0 0.0
      %4456 = vmatpush1.msra.mxu0 %v4384
      %4457 = vmatprep.subr.mxu0 0.0
      %4458 = vmatpush1.msra.mxu0 %v4389
      %4459 = vmatprep.subr.mxu0 0.0
      %4460 = vmatpush1.msra.mxu0 %v4394
      %4461 = vmatprep.mubr.f32.mxu0 1.0
      %4462 = vmatmul.mubr.f32.gmra.mrb[0].mxu0 1.0
      %v4463 = vpop.f32.mrb[0].mxu0
      %v4464 = vadd.f32 0.0, %v4463
      %v4465 = vpop.f32.mrb[0].mxu0
      %4466 = vdwg.mxu0
      %v4467 = vmul.f32 %v4239, %v4239
      %v4468 = vmul.f32 %v4244, %v4244
      %v4469 = vmul.f32 %v4249, %v4249
      %v4470 = vmul.f32 %v4254, %v4254
      %v4471 = vmul.f32 %v4259, %v4259
      %v4472 = vmul.f32 %v4264, %v4264
      %v4473 = vmul.f32 %v4269, %v4269
      %v4474 = vmul.f32 %v4274, %v4274
      %v4475 = vmul.f32 %v4279, %v4279
      %v4476 = vmul.f32 %v4284, %v4284
      %v4477 = vmul.f32 %v4289, %v4289
      %v4478 = vmul.f32 %v4294, %v4294
      %v4479 = vmul.f32 %v4299, %v4299
      %v4480 = vmul.f32 %v4304, %v4304
      %v4481 = vmul.f32 %v4309, %v4309
      %v4482 = vmul.f32 %v4314, %v4314
      %v4483 = vmul.f32 %v4319, %v4319
      %v4484 = vmul.f32 %v4324, %v4324
      %v4485 = vmul.f32 %v4329, %v4329
      %v4486 = vmul.f32 %v4334, %v4334
      %v4487 = vmul.f32 %v4339, %v4339
      %v4488 = vmul.f32 %v4344, %v4344
      %v4489 = vmul.f32 %v4349, %v4349
      %v4490 = vmul.f32 %v4354, %v4354
      %v4491 = vmul.f32 %v4359, %v4359
      %v4492 = vmul.f32 %v4364, %v4364
      %v4493 = vmul.f32 %v4369, %v4369
      %v4494 = vmul.f32 %v4374, %v4374
      %v4495 = vmul.f32 %v4379, %v4379
      %v4496 = vmul.f32 %v4384, %v4384
      %v4497 = vmul.f32 %v4389, %v4389
      %v4498 = vmul.f32 %v4394, %v4394
      %4499 = vmatprep.subr.mxu0 0.0
      %4500 = vmatpush1.msra.mxu0 %v4467
      %4501 = vmatprep.subr.mxu0 0.0
      %4502 = vmatpush1.msra.mxu0 %v4468
      %4503 = vmatprep.subr.mxu0 0.0
      %4504 = vmatpush1.msra.mxu0 %v4469
      %4505 = vmatprep.subr.mxu0 0.0
      %4506 = vmatpush1.msra.mxu0 %v4470
      %4507 = vmatprep.subr.mxu0 0.0
      %4508 = vmatpush1.msra.mxu0 %v4471
      %4509 = vmatprep.subr.mxu0 0.0
      %4510 = vmatpush1.msra.mxu0 %v4472
      %4511 = vmatprep.subr.mxu0 0.0
      %4512 = vmatpush1.msra.mxu0 %v4473
      %4513 = vmatprep.subr.mxu0 0.0
      %4514 = vmatpush1.msra.mxu0 %v4474
      %4515 = vmatprep.subr.mxu0 0.0
      %4516 = vmatpush1.msra.mxu0 %v4475
      %4517 = vmatprep.subr.mxu0 0.0
      %4518 = vmatpush1.msra.mxu0 %v4476
      %4519 = vmatprep.subr.mxu0 0.0
      %4520 = vmatpush1.msra.mxu0 %v4477
      %4521 = vmatprep.subr.mxu0 0.0
      %4522 = vmatpush1.msra.mxu0 %v4478
      %4523 = vmatprep.subr.mxu0 0.0
      %4524 = vmatpush1.msra.mxu0 %v4479
      %4525 = vmatprep.subr.mxu0 0.0
      %4526 = vmatpush1.msra.mxu0 %v4480
      %4527 = vmatprep.subr.mxu0 0.0
      %4528 = vmatpush1.msra.mxu0 %v4481
      %4529 = vmatprep.subr.mxu0 0.0
      %4530 = vmatpush1.msra.mxu0 %v4482
      %4531 = vmatprep.subr.mxu0 0.0
      %4532 = vmatpush1.msra.mxu0 %v4483
      %4533 = vmatprep.subr.mxu0 0.0
      %4534 = vmatpush1.msra.mxu0 %v4484
      %4535 = vmatprep.subr.mxu0 0.0
      %4536 = vmatpush1.msra.mxu0 %v4485
      %4537 = vmatprep.subr.mxu0 0.0
      %4538 = vmatpush1.msra.mxu0 %v4486
      %4539 = vmatprep.subr.mxu0 0.0
      %4540 = vmatpush1.msra.mxu0 %v4487
      %4541 = vmatprep.subr.mxu0 0.0
      %4542 = vmatpush1.msra.mxu0 %v4488
      %4543 = vmatprep.subr.mxu0 0.0
      %4544 = vmatpush1.msra.mxu0 %v4489
      %4545 = vmatprep.subr.mxu0 0.0
      %4546 = vmatpush1.msra.mxu0 %v4490
      %4547 = vmatprep.subr.mxu0 0.0
      %4548 = vmatpush1.msra.mxu0 %v4491
      %4549 = vmatprep.subr.mxu0 0.0
      %4550 = vmatpush1.msra.mxu0 %v4492
      %4551 = vmatprep.subr.mxu0 0.0
      %4552 = vmatpush1.msra.mxu0 %v4493
      %4553 = vmatprep.subr.mxu0 0.0
      %4554 = vmatpush1.msra.mxu0 %v4494
      %4555 = vmatprep.subr.mxu0 0.0
      %4556 = vmatpush1.msra.mxu0 %v4495
      %4557 = vmatprep.subr.mxu0 0.0
      %4558 = vmatpush1.msra.mxu0 %v4496
      %4559 = vmatprep.subr.mxu0 0.0
      %4560 = vmatpush1.msra.mxu0 %v4497
      %4561 = vmatprep.subr.mxu0 0.0
      %4562 = vmatpush1.msra.mxu0 %v4498
      %4563 = vmatprep.mubr.f32.mxu0 1.0
      %4564 = vmatmul.mubr.f32.gmra.mrb[0].mxu0 1.0
      %v4565 = vpop.f32.mrb[0].mxu0
      %v4566 = vadd.f32 0.0, %v4565
      %v4567 = vpop.f32.mrb[0].mxu0
      %4568 = vdwg.mxu0
      %v4570 = vrot.slane %v4566, 7
      %v4572 = vsel %vm1617, %v4464, %v4570
      %vm4573 = vcmask 25600
      %4574 = vst.msk [vmem:[%s309] sm:$0x3] %vm4573, %v4572
      %4575 = vst.msk [vmem:[%s305] sm:$0xff] %vm2450, %v4239
      %4576 = vst.msk [vmem:[%s305 + $0x8] sm:$0xff] %vm2450, %v4244
      %4577 = vst.msk [vmem:[%s305 + $0x10] sm:$0xff] %vm2450, %v4249
      %4578 = vst.msk [vmem:[%s305 + $0x18] sm:$0xff] %vm2450, %v4254
      %4579 = vst.msk [vmem:[%s305 + $0x20] sm:$0xff] %vm2450, %v4259
      %4580 = vst.msk [vmem:[%s305 + $0x28] sm:$0xff] %vm2450, %v4264
      %4581 = vst.msk [vmem:[%s305 + $0x30] sm:$0xff] %vm2450, %v4269
      %4582 = vst.msk [vmem:[%s305 + $0x38] sm:$0xff] %vm2450, %v4274
      %4583 = vst.msk [vmem:[%s305 + $0x40] sm:$0xff] %vm2450, %v4279
      %4584 = vst.msk [vmem:[%s305 + $0x48] sm:$0xff] %vm2450, %v4284
      %4585 = vst.msk [vmem:[%s305 + $0x50] sm:$0xff] %vm2450, %v4289
      %4586 = vst.msk [vmem:[%s305 + $0x58] sm:$0xff] %vm2450, %v4294
      %4587 = vst.msk [vmem:[%s305 + $0x60] sm:$0xff] %vm2450, %v4299
      %4588 = vst.msk [vmem:[%s305 + $0x68] sm:$0xff] %vm2450, %v4304
      %4589 = vst.msk [vmem:[%s305 + $0x70] sm:$0xff] %vm2450, %v4309
      %4590 = vst.msk [vmem:[%s305 + $0x78] sm:$0xff] %vm2450, %v4314
      %4591 = vst.msk [vmem:[%s305 + $0x80] sm:$0xff] %vm2450, %v4319
      %4592 = vst.msk [vmem:[%s305 + $0x88] sm:$0xff] %vm2450, %v4324
      %4593 = vst.msk [vmem:[%s305 + $0x90] sm:$0xff] %vm2450, %v4329
      %4594 = vst.msk [vmem:[%s305 + $0x98] sm:$0xff] %vm2450, %v4334
      %4595 = vst.msk [vmem:[%s305 + $0xa0] sm:$0xff] %vm2450, %v4339
      %4596 = vst.msk [vmem:[%s305 + $0xa8] sm:$0xff] %vm2450, %v4344
      %4597 = vst.msk [vmem:[%s305 + $0xb0] sm:$0xff] %vm2450, %v4349
      %4598 = vst.msk [vmem:[%s305 + $0xb8] sm:$0xff] %vm2450, %v4354
      %4599 = vst.msk [vmem:[%s305 + $0xc0] sm:$0xff] %vm2450, %v4359
      %4600 = vst.msk [vmem:[%s305 + $0xc8] sm:$0xff] %vm2450, %v4364
      %4601 = vst.msk [vmem:[%s305 + $0xd0] sm:$0xff] %vm2450, %v4369
      %4602 = vst.msk [vmem:[%s305 + $0xd8] sm:$0xff] %vm2450, %v4374
      %4603 = vst.msk [vmem:[%s305 + $0xe0] sm:$0xff] %vm2450, %v4379
      %4604 = vst.msk [vmem:[%s305 + $0xe8] sm:$0xff] %vm2450, %v4384
      %4605 = vst.msk [vmem:[%s305 + $0xf0] sm:$0xff] %vm2450, %v4389
      %4606 = vst.msk [vmem:[%s305 + $0xf8] sm:$0xff] %vm2450, %v4394
      %p4607 = scmp.lt.s32.totalorder %s19, 1
      %s4608 = scalar_select %p4607, %s19, 1
      %s4609 = smul.addr %s4608, 32
      %s4610 = smul.addr %s4609, 8
      %s4611 = scalar_lea.vmem %s6, %s4610
      %p4612 = scmp.lt.s32.totalorder %s19, 1
      %s4613 = scalar_select %p4612, %s19, 1
      %s4614 = smul.addr %s4613, 2
      %s4615 = scalar_lea.vmem %s7, %s4614
      // Predicated region
      $region45: #{up_block_forward.3} parent=43 // pred_check
        %p4616 = pneg %p173
      $region46: #{up_block_forward.3} parent=43 // pred_check_branch
        %4618 = sbr.rel (%p4616) target = $region48
      $region47: #{up_block_forward.3} parent=43 // pred_region
        _
      $region48: #{up_block_forward.3} parent=43 // pred_fallthru
        _
      // Predicated region
      $region49: #{up_block_forward.3} parent=43 // pred_check
        %p4619 = pneg %p199
      $region50: #{up_block_forward.3} parent=43 // pred_check_branch
        %4621 = sbr.rel (%p4619) target = $region52
      $region51: #{up_block_forward.3} parent=43 // pred_region
        _
      $region52: #{up_block_forward.3} parent=43 // pred_fallthru
        _
    $region44: #{up_block_forward.3} parent=5 // pred_fallthru
      _
    %p4622 = scmp.le.s32.totalorder 2, %s14
    // Predicated region
    $region53: #{up_block_forward.3} parent=5 // pred_check
      %p4623 = pneg %p4622
    $region54: #{up_block_forward.3} parent=5 // pred_check_branch
      %4625 = sbr.rel (%p4623) target = $region56
    $region55: #{up_block_forward.3} parent=5 // pred_region
      %s4626 = ssub.s32 %s14, 2
      // Predicated region
      $region57: #{up_block_forward.3} parent=55 // pred_check
        %p4627 = pneg %p179
      $region58: #{up_block_forward.3} parent=55 // pred_check_branch
        %4629 = sbr.rel (%p4627) target = $region60
      $region59: #{up_block_forward.3} parent=55 // pred_region
        %p4630 = scmp.lt.s32.totalorder %s20, 1
        %s4631 = scalar_select %p4630, %s20, 1
        %s4632 = smul.addr %s4631, 32
        %s4633 = smul.addr %s4632, 8
        %s4634 = scalar_lea.vmem %s6, %s4633
      $region60: #{up_block_forward.3} parent=55 // pred_fallthru
        _
      // Predicated region
      $region61: #{up_block_forward.3} parent=55 // pred_check
        %p4635 = pneg %p205
      $region62: #{up_block_forward.3} parent=55 // pred_check_branch
        %4637 = sbr.rel (%p4635) target = $region64
      $region63: #{up_block_forward.3} parent=55 // pred_region
        %p4638 = scmp.lt.s32.totalorder %s20, 1
        %s4639 = scalar_select %p4638, %s20, 1
        %s4640 = smul.addr %s4639, 2
        %s4641 = scalar_lea.vmem %s7, %s4640
      $region64: #{up_block_forward.3} parent=55 // pred_fallthru
        _
    $region56: #{up_block_forward.3} parent=5 // pred_fallthru
      _
  $region6: #{up_block_forward.3} parent=0 // loop_footer
    %s18 = sadd.s32 1, %s14
  $region7: #{up_block_forward.3} parent=0 // loop_footer_branch
    %13 = sbr.rel target = $region3
  $region8: #{up_block_forward.3} parent=0 // loop_exit
    _

</llo_original>
